<compile_context>
chip_gen: v6e
topology: v6e:2x2x1
jax: 0.10.0
libtpu: 0.0.40
codegen_flags: <defaults>
</compile_context>

<pallas_src>
import functools

import jax
import jax.numpy as jnp
from jax.experimental import pallas as pl
from jax.experimental.pallas import tpu as pltpu

LRELU_SLOPE = 0.05  # IMDN-style block.py default for act_type='lrelu'


def _lrelu(x):
    return jnp.where(x >= 0, x, LRELU_SLOPE * x)


def _conv3x3_folded(pad_ref, center_hwc, w_folded, H, W):
    """3x3 'same' conv as a single folded MXU contraction.

    pad_ref    : VMEM scratch ref, (H+2, W+2, C), compute dtype
    center_hwc : (H, W, C) activation tile (compute dtype)
    w_folded   : (9*C, Cout) folded weight (compute dtype)
    returns    : (H*W, Cout) float32 accumulator
    """
    C = center_hwc.shape[-1]
    # zero 'same' padding, done entirely in VMEM (no HBM im2col).
    pad_ref[...] = jnp.zeros_like(pad_ref)
    pad_ref[1:H + 1, 1:W + 1, :] = center_hwc
    # fold the 9 kernel taps into the contraction dimension: (H*W, 9*C)
    lhs = jnp.concatenate(
        [pad_ref[dy:dy + H, dx:dx + W, :].reshape(H * W, C)
         for dy in range(3) for dx in range(3)],
        axis=1)
    return jnp.dot(lhs, w_folded, preferred_element_type=jnp.float32)


# ----------------------------------------------------------------------------- kernels
def _fea_irb1a_kernel(x_ref, wfea_ref, bfea_ref, w1_ref, b1_ref,
                      fea_ref, t_ref, pad_ref, *, H, W, cdt):
    nf = wfea_ref.shape[1]
    # fea_conv: 1x1 conv == plain per-pixel matmul.
    fea = jnp.dot(x_ref[...], wfea_ref[...],
                  preferred_element_type=jnp.float32) + bfea_ref[...]
    fea_ref[...] = fea.astype(fea_ref.dtype)
    # IRB1 conv1: 3x3 + LeakyReLU, single folded dot.
    acc = _conv3x3_folded(pad_ref, fea.astype(cdt).reshape(H, W, nf),
                          w1_ref[...], H, W) + b1_ref[...]
    t_ref[...] = _lrelu(acc).astype(t_ref.dtype)


def _irb1b_c_kernel(t_ref, fea_ref, w2_ref, b2_ref, wc_ref, bc_ref,
                    o_ref, pad_ref, *, H, W, cdt):
    nf = w2_ref.shape[1]
    # IRB1 conv2 (3x3) + identity skip.
    b1 = _conv3x3_folded(pad_ref, t_ref[...].reshape(H, W, nf),
                         w2_ref[...], H, W) + b2_ref[...]
    b1 = b1 + fea_ref[...].astype(jnp.float32)
    # c: 1x1 conv + LeakyReLU, fused (b1 never round-trips through HBM).
    out_b = jnp.dot(b1.astype(cdt), wc_ref[...],
                    preferred_element_type=jnp.float32) + bc_ref[...]
    o_ref[...] = _lrelu(out_b).astype(o_ref.dtype)


def _lr_kernel(x_ref, fea_ref, w_ref, b_ref, o_ref, pad_ref, *, H, W):
    nf = w_ref.shape[1]
    acc = _conv3x3_folded(pad_ref, x_ref[...].reshape(H, W, nf),
                          w_ref[...], H, W) + b_ref[...]
    o_ref[...] = (acc + fea_ref[...].astype(jnp.float32)).astype(o_ref.dtype)


def _up_kernel(x_ref, w_ref, b_ref, o_ref, pad_ref, *, H, W):
    nf = x_ref.shape[-1]
    acc = _conv3x3_folded(pad_ref, x_ref[...].reshape(H, W, nf),
                          w_ref[...], H, W) + b_ref[...]
    o_ref[...] = acc.astype(o_ref.dtype)


# ----------------------------------------------------------------------------- forward
def irnet1_forward(x_nchw, p, *, compute_dtype=jnp.bfloat16):
    N, in_nc, H, W = x_nchw.shape
    nf = p["fea_w"].shape[-1]
    out_nc = p["up_w"].shape[-1]
    M = H * W
    cdt = compute_dtype

    # NCHW -> flat channels-last pixel slab (N, H*W, C); lane-friendly on TPU.
    x = jnp.transpose(x_nchw, (0, 2, 3, 1)).reshape(N, M, in_nc).astype(cdt)

    def fold3x3(w):  # HWIO (3,3,Cin,Cout) -> folded (9*Cin, Cout)
        return w.reshape(-1, w.shape[-1]).astype(cdt)

    wfea = p["fea_w"].reshape(in_nc, nf).astype(cdt)
    w1, w2 = fold3x3(p["irb1_w1"]), fold3x3(p["irb1_w2"])
    wc = p["c_w"].reshape(nf, nf).astype(cdt)
    wlr, wup = fold3x3(p["lr_w"]), fold3x3(p["up_w"])
    bfea = p["fea_b"].reshape(1, nf).astype(jnp.float32)
    b1b = p["irb1_b1"].reshape(1, nf).astype(jnp.float32)
    b2b = p["irb1_b2"].reshape(1, nf).astype(jnp.float32)
    bc = p["c_b"].reshape(1, nf).astype(jnp.float32)
    blr = p["lr_b"].reshape(1, nf).astype(jnp.float32)
    bup = p["up_b"].reshape(1, out_nc).astype(jnp.float32)

    def act_spec(c):  # one whole image per grid step, batch dim squeezed
        return pl.BlockSpec((None, M, c), lambda n: (n, 0, 0))

    def const_spec(a):  # weights/biases: constant index_map -> VMEM resident
        return pl.BlockSpec(a.shape, lambda n: (0,) * a.ndim)

    cp = pltpu.CompilerParams(dimension_semantics=("parallel",))
    pad_scratch = [pltpu.VMEM((H + 2, W + 2, nf), cdt)]

    # --- call 1: fea_conv (1x1) + IRB1 conv1 (3x3 + lrelu) --------------------
    fea, t = pl.pallas_call(
        functools.partial(_fea_irb1a_kernel, H=H, W=W, cdt=cdt),
        grid=(N,),
        in_specs=[act_spec(in_nc), const_spec(wfea), const_spec(bfea),
                  const_spec(w1), const_spec(b1b)],
        out_specs=(act_spec(nf), act_spec(nf)),
        out_shape=(jax.ShapeDtypeStruct((N, M, nf), cdt),
                   jax.ShapeDtypeStruct((N, M, nf), cdt)),
        scratch_shapes=pad_scratch,
        compiler_params=cp,
    )(x, wfea, bfea, w1, b1b)

    # --- call 2: IRB1 conv2 (3x3) + skip + c (1x1 + lrelu) --------------------
    out_b = pl.pallas_call(
        functools.partial(_irb1b_c_kernel, H=H, W=W, cdt=cdt),
        grid=(N,),
        in_specs=[act_spec(nf), act_spec(nf), const_spec(w2), const_spec(b2b),
                  const_spec(wc), const_spec(bc)],
        out_specs=act_spec(nf),
        out_shape=jax.ShapeDtypeStruct((N, M, nf), cdt),
        scratch_shapes=pad_scratch,
        compiler_params=cp,
    )(t, fea, w2, b2b, wc, bc)

    # --- call 3: LR_conv (3x3) + fea skip --------------------------------------
    out_lr = pl.pallas_call(
        functools.partial(_lr_kernel, H=H, W=W),
        grid=(N,),
        in_specs=[act_spec(nf), act_spec(nf), const_spec(wlr), const_spec(blr)],
        out_specs=act_spec(nf),
        out_shape=jax.ShapeDtypeStruct((N, M, nf), cdt),
        scratch_shapes=pad_scratch,
        compiler_params=cp,
    )(out_b, fea, wlr, blr)

    # --- call 4: upsampler (3x3) ------------------------------------------------
    out = pl.pallas_call(
        functools.partial(_up_kernel, H=H, W=W),
        grid=(N,),
        in_specs=[act_spec(nf), const_spec(wup), const_spec(bup)],
        out_specs=act_spec(out_nc),
        out_shape=jax.ShapeDtypeStruct((N, M, out_nc), jnp.float32),
        scratch_shapes=pad_scratch,
        compiler_params=cp,
    )(out_lr, wup, bup)

    return jnp.transpose(out.reshape(N, H, W, out_nc), (0, 3, 1, 2))


# ----------------------------------------------------------------------------- params
def init_params(key, in_nc=3, nf=32, out_nc=3):
    ks = jax.random.split(key, 6)

    def conv_params(k, kh, kw, cin, cout):
        kw_, kb_ = jax.random.split(k)
        scale = 1.0 / jnp.sqrt(kh * kw * cin)
        w = jax.random.normal(kw_, (kh, kw, cin, cout), jnp.float32) * scale
        bb = jax.random.normal(kb_, (cout,), jnp.float32) * scale
        return w, bb

    p = {}
    p["fea_w"], p["fea_b"] = conv_params(ks[0], 1, 1, in_nc, nf)    # fea_conv
    p["irb1_w1"], p["irb1_b1"] = conv_params(ks[1], 3, 3, nf, nf)   # IRB1 conv1
    p["irb1_w2"], p["irb1_b2"] = conv_params(ks[2], 3, 3, nf, nf)   # IRB1 conv2
    p["c_w"], p["c_b"] = conv_params(ks[3], 1, 1, nf, nf)           # c (1x1 + lrelu)
    p["lr_w"], p["lr_b"] = conv_params(ks[4], 3, 3, nf, nf)         # LR_conv
    p["up_w"], p["up_b"] = conv_params(ks[5], 3, 3, nf, out_nc)     # upsampler
    return p


# ----------------------------------------------------------------------------- reference
def irnet1_ref(x_nchw, p):
    x = jnp.transpose(x_nchw, (0, 2, 3, 1))

    def conv(y, w, b, act=None):
        o = jax.lax.conv_general_dilated(
            y, w, (1, 1), "SAME", dimension_numbers=("NHWC", "HWIO", "NHWC")) + b
        if act is not None:
            o = jnp.where(o >= 0, o, act * o)
        return o

    fea = conv(x, p["fea_w"], p["fea_b"])
    t = conv(fea, p["irb1_w1"], p["irb1_b1"], LRELU_SLOPE)
    b1 = conv(t, p["irb1_w2"], p["irb1_b2"]) + fea
    out_b = conv(b1, p["c_w"], p["c_b"], LRELU_SLOPE)
    out_lr = conv(out_b, p["lr_w"], p["lr_b"]) + fea
    out = conv(out_lr, p["up_w"], p["up_b"])
    return jnp.transpose(out, (0, 3, 1, 2))


# ----------------------------------------------------------------------------- main
if __name__ == "__main__":
    N, IN_NC, NF, H, W = 2, 3, 32, 16, 16
    key = jax.random.PRNGKey(0)
    k_x, k_p = jax.random.split(key)

    x = jax.random.normal(k_x, (N, IN_NC, H, W), jnp.float32)  # NCHW like PyTorch
    params = init_params(k_p, in_nc=IN_NC, nf=NF, out_nc=3)

    ref = jax.block_until_ready(irnet1_ref(x, params))

    # f32 compute path: strict numerical validation against the XLA conv ref.
    out_f32 = jax.block_until_ready(
        jax.jit(functools.partial(irnet1_forward, compute_dtype=jnp.float32))(x, params))
    assert out_f32.shape == (N, 3, H, W), out_f32.shape
    assert jnp.allclose(out_f32, ref, atol=1e-4, rtol=1e-4), \
        float(jnp.max(jnp.abs(out_f32 - ref)))

    # bf16 MXU path (default; f32 accumulation, bf16 activation storage):
    # tolerance reflects bf16 operand rounding over 6 conv stages.
    out_bf16 = jax.block_until_ready(jax.jit(irnet1_forward)(x, params))
    assert out_bf16.shape == (N, 3, H, W), out_bf16.shape
    assert jnp.allclose(out_bf16, ref, atol=5e-2, rtol=5e-2), \
        float(jnp.max(jnp.abs(out_bf16 - ref)))

    print("KERNEL_OK")
</pallas_src>

<mosaic_0001>
module attributes {stable_mosaic.version = 11 : i64} {
  func.func @_irb1b_c_kernel(%arg0: i32, %arg1: memref<1x256x32xf32, #tpu.memory_space<vmem>>, %arg2: memref<1x256x32xf32, #tpu.memory_space<vmem>>, %arg3: memref<288x32xf32, #tpu.memory_space<vmem>>, %arg4: memref<1x32xf32, #tpu.memory_space<vmem>>, %arg5: memref<32x32xf32, #tpu.memory_space<vmem>>, %arg6: memref<1x32xf32, #tpu.memory_space<vmem>>, %arg7: memref<1x256x32xf32, #tpu.memory_space<vmem>>, %arg8: memref<18x18x32xf32, #tpu.memory_space<vmem>>) attributes {dimension_semantics = [#tpu.dimension_semantics<parallel>], iteration_bounds = array<i64: 2>, scalar_prefetch = 0 : i64, scratch_operands = 1 : i64, tpu.core_type = #tpu.core_type<tc>, window_params = [{transform_indices = @transform_0, window_bounds = array<i64: 1, 256, 32>}, {transform_indices = @transform_1, window_bounds = array<i64: 1, 256, 32>}, {pipeline_mode = #tpu.pipeline_mode<synchronous>, transform_indices = @transform_2, window_bounds = array<i64: 288, 32>}, {pipeline_mode = #tpu.pipeline_mode<synchronous>, transform_indices = @transform_3, window_bounds = array<i64: 1, 32>}, {pipeline_mode = #tpu.pipeline_mode<synchronous>, transform_indices = @transform_4, window_bounds = array<i64: 32, 32>}, {pipeline_mode = #tpu.pipeline_mode<synchronous>, transform_indices = @transform_5, window_bounds = array<i64: 1, 32>}, {transform_indices = @transform_6, window_bounds = array<i64: 1, 256, 32>}]} {
    %c0 = arith.constant 0 : index
    %c0_0 = arith.constant 0 : index
    %c0_1 = arith.constant 0 : index
    %0 = vector.load %arg1[%c0, %c0_0, %c0_1] : memref<1x256x32xf32, #tpu.memory_space<vmem>>, vector<1x256x32xf32>
    %1 = vector.shape_cast %0 : vector<1x256x32xf32> to vector<256x32xf32>
    %2 = vector.shape_cast %1 : vector<256x32xf32> to vector<16x16x32xf32>
    %c0_2 = arith.constant 0 : index
    %c0_3 = arith.constant 0 : index
    %3 = vector.load %arg3[%c0_2, %c0_3] : memref<288x32xf32, #tpu.memory_space<vmem>>, vector<288x32xf32>
    %cst = arith.constant 0.000000e+00 : f32
    %4 = vector.broadcast %cst : f32 to vector<18x18x32xf32>
    %c0_4 = arith.constant 0 : index
    %c0_5 = arith.constant 0 : index
    %c0_6 = arith.constant 0 : index
    %5 = vector.load %arg8[%c0_4, %c0_5, %c0_6] : memref<18x18x32xf32, #tpu.memory_space<vmem>>, vector<18x18x32xf32>
    tpu.vector_store %arg8[%c0_4, %c0_5, %c0_6], %4 {strides = array<i32>} : memref<18x18x32xf32, #tpu.memory_space<vmem>>, vector<18x18x32xf32>,
    %c1 = arith.constant 1 : index
    %c1_7 = arith.constant 1 : index
    %c0_8 = arith.constant 0 : index
    %6 = vector.load %arg8[%c1, %c1_7, %c0_8] : memref<18x18x32xf32, #tpu.memory_space<vmem>>, vector<16x16x32xf32>
    tpu.vector_store %arg8[%c1, %c1_7, %c0_8], %2 {strides = array<i32>} : memref<18x18x32xf32, #tpu.memory_space<vmem>>, vector<16x16x32xf32>,
    %c0_9 = arith.constant 0 : index
    %c0_10 = arith.constant 0 : index
    %c0_11 = arith.constant 0 : index
    %7 = vector.load %arg8[%c0_9, %c0_10, %c0_11] : memref<18x18x32xf32, #tpu.memory_space<vmem>>, vector<16x16x32xf32>
    %8 = vector.shape_cast %7 : vector<16x16x32xf32> to vector<256x32xf32>
    %c0_12 = arith.constant 0 : index
    %c1_13 = arith.constant 1 : index
    %c0_14 = arith.constant 0 : index
    %9 = vector.load %arg8[%c0_12, %c1_13, %c0_14] : memref<18x18x32xf32, #tpu.memory_space<vmem>>, vector<16x16x32xf32>
    %10 = vector.shape_cast %9 : vector<16x16x32xf32> to vector<256x32xf32>
    %c0_15 = arith.constant 0 : index
    %c2 = arith.constant 2 : index
    %c0_16 = arith.constant 0 : index
    %11 = vector.load %arg8[%c0_15, %c2, %c0_16] : memref<18x18x32xf32, #tpu.memory_space<vmem>>, vector<16x16x32xf32>
    %12 = vector.shape_cast %11 : vector<16x16x32xf32> to vector<256x32xf32>
    %c1_17 = arith.constant 1 : index
    %c0_18 = arith.constant 0 : index
    %c0_19 = arith.constant 0 : index
    %13 = vector.load %arg8[%c1_17, %c0_18, %c0_19] : memref<18x18x32xf32, #tpu.memory_space<vmem>>, vector<16x16x32xf32>
    %14 = vector.shape_cast %13 : vector<16x16x32xf32> to vector<256x32xf32>
    %c1_20 = arith.constant 1 : index
    %c1_21 = arith.constant 1 : index
    %c0_22 = arith.constant 0 : index
    %15 = vector.load %arg8[%c1_20, %c1_21, %c0_22] : memref<18x18x32xf32, #tpu.memory_space<vmem>>, vector<16x16x32xf32>
    %16 = vector.shape_cast %15 : vector<16x16x32xf32> to vector<256x32xf32>
    %c1_23 = arith.constant 1 : index
    %c2_24 = arith.constant 2 : index
    %c0_25 = arith.constant 0 : index
    %17 = vector.load %arg8[%c1_23, %c2_24, %c0_25] : memref<18x18x32xf32, #tpu.memory_space<vmem>>, vector<16x16x32xf32>
    %18 = vector.shape_cast %17 : vector<16x16x32xf32> to vector<256x32xf32>
    %c2_26 = arith.constant 2 : index
    %c0_27 = arith.constant 0 : index
    %c0_28 = arith.constant 0 : index
    %19 = vector.load %arg8[%c2_26, %c0_27, %c0_28] : memref<18x18x32xf32, #tpu.memory_space<vmem>>, vector<16x16x32xf32>
    %20 = vector.shape_cast %19 : vector<16x16x32xf32> to vector<256x32xf32>
    %c2_29 = arith.constant 2 : index
    %c1_30 = arith.constant 1 : index
    %c0_31 = arith.constant 0 : index
    %21 = vector.load %arg8[%c2_29, %c1_30, %c0_31] : memref<18x18x32xf32, #tpu.memory_space<vmem>>, vector<16x16x32xf32>
    %22 = vector.shape_cast %21 : vector<16x16x32xf32> to vector<256x32xf32>
    %c2_32 = arith.constant 2 : index
    %c2_33 = arith.constant 2 : index
    %c0_34 = arith.constant 0 : index
    %23 = vector.load %arg8[%c2_32, %c2_33, %c0_34] : memref<18x18x32xf32, #tpu.memory_space<vmem>>, vector<16x16x32xf32>
    %24 = vector.shape_cast %23 : vector<16x16x32xf32> to vector<256x32xf32>
    %25 = tpu.concatenate %8, %10, %12, %14, %16, %18, %20, %22, %24 in 1 : vector<256x32xf32>, vector<256x32xf32>, vector<256x32xf32>, vector<256x32xf32>, vector<256x32xf32>, vector<256x32xf32>, vector<256x32xf32>, vector<256x32xf32>, vector<256x32xf32> -> vector<256x288xf32>
    %cst_35 = arith.constant dense<0.000000e+00> : vector<256x32xf32>
    %26 = tpu.matmul %25, %3, %cst_35 {dimension_numbers = #tpu.dot_dimension_numbers<[1], [0], [0], [1], [0, 0, 1, 1], [], []>} : vector<256x288xf32>, vector<288x32xf32>, vector<256x32xf32> -> vector<256x32xf32>
    %c0_36 = arith.constant 0 : index
    %c0_37 = arith.constant 0 : index
    %27 = vector.load %arg4[%c0_36, %c0_37] : memref<1x32xf32, #tpu.memory_space<vmem>>, vector<1x32xf32>
    %28 = vector.broadcast %27 : vector<1x32xf32> to vector<256x32xf32>
    %29 = arith.addf %26, %28 : vector<256x32xf32>
    %c0_38 = arith.constant 0 : index
    %c0_39 = arith.constant 0 : index
    %c0_40 = arith.constant 0 : index
    %30 = vector.load %arg2[%c0_38, %c0_39, %c0_40] : memref<1x256x32xf32, #tpu.memory_space<vmem>>, vector<1x256x32xf32>
    %31 = vector.shape_cast %30 : vector<1x256x32xf32> to vector<256x32xf32>
    %32 = arith.addf %29, %31 : vector<256x32xf32>
    %c0_41 = arith.constant 0 : index
    %c0_42 = arith.constant 0 : index
    %33 = vector.load %arg5[%c0_41, %c0_42] : memref<32x32xf32, #tpu.memory_space<vmem>>, vector<32x32xf32>
    %cst_43 = arith.constant dense<0.000000e+00> : vector<256x32xf32>
    %34 = tpu.matmul %32, %33, %cst_43 {dimension_numbers = #tpu.dot_dimension_numbers<[1], [0], [0], [1], [0, 0, 1, 1], [], []>} : vector<256x32xf32>, vector<32x32xf32>, vector<256x32xf32> -> vector<256x32xf32>
    %c0_44 = arith.constant 0 : index
    %c0_45 = arith.constant 0 : index
    %35 = vector.load %arg6[%c0_44, %c0_45] : memref<1x32xf32, #tpu.memory_space<vmem>>, vector<1x32xf32>
    %36 = vector.broadcast %35 : vector<1x32xf32> to vector<256x32xf32>
    %37 = arith.addf %34, %36 : vector<256x32xf32>
    %cst_46 = arith.constant 0.000000e+00 : f32
    %38 = vector.broadcast %cst_46 : f32 to vector<256x32xf32>
    %39 = arith.cmpf oge, %37, %38 : vector<256x32xf32>
    %cst_47 = arith.constant 5.000000e-02 : f32
    %40 = vector.broadcast %cst_47 : f32 to vector<256x32xf32>
    %41 = arith.mulf %40, %37 : vector<256x32xf32>
    %42 = arith.select %39, %37, %41 : vector<256x32xi1>, vector<256x32xf32>
    %c0_48 = arith.constant 0 : index
    %c0_49 = arith.constant 0 : index
    %c0_50 = arith.constant 0 : index
    %43 = vector.load %arg7[%c0_48, %c0_49, %c0_50] : memref<1x256x32xf32, #tpu.memory_space<vmem>>, vector<1x256x32xf32>
    %44 = vector.shape_cast %43 : vector<1x256x32xf32> to vector<256x32xf32>
    %45 = vector.shape_cast %42 : vector<256x32xf32> to vector<1x256x32xf32>
    tpu.vector_store %arg7[%c0_48, %c0_49, %c0_50], %45 {strides = array<i32>} : memref<1x256x32xf32, #tpu.memory_space<vmem>>, vector<1x256x32xf32>,
    return
  }
  func.func @transform_0(%arg0: i32) -> (i32, i32, i32) {
    %c0_i32 = arith.constant 0 : i32
    %c0_i32_0 = arith.constant 0 : i32
    %c0_i32_1 = arith.constant 0 : i32
    return %arg0, %c0_i32, %c0_i32_0 : i32, i32, i32
  }
  func.func @transform_1(%arg0: i32) -> (i32, i32, i32) {
    %c0_i32 = arith.constant 0 : i32
    %c0_i32_0 = arith.constant 0 : i32
    %c0_i32_1 = arith.constant 0 : i32
    return %arg0, %c0_i32, %c0_i32_0 : i32, i32, i32
  }
  func.func @transform_2(%arg0: i32) -> (i32, i32) {
    %c0_i32 = arith.constant 0 : i32
    %c0_i32_0 = arith.constant 0 : i32
    %c0_i32_1 = arith.constant 0 : i32
    return %c0_i32, %c0_i32_0 : i32, i32
  }
  func.func @transform_3(%arg0: i32) -> (i32, i32) {
    %c0_i32 = arith.constant 0 : i32
    %c0_i32_0 = arith.constant 0 : i32
    %c0_i32_1 = arith.constant 0 : i32
    return %c0_i32, %c0_i32_0 : i32, i32
  }
  func.func @transform_4(%arg0: i32) -> (i32, i32) {
    %c0_i32 = arith.constant 0 : i32
    %c0_i32_0 = arith.constant 0 : i32
    %c0_i32_1 = arith.constant 0 : i32
    return %c0_i32, %c0_i32_0 : i32, i32
  }
  func.func @transform_5(%arg0: i32) -> (i32, i32) {
    %c0_i32 = arith.constant 0 : i32
    %c0_i32_0 = arith.constant 0 : i32
    %c0_i32_1 = arith.constant 0 : i32
    return %c0_i32, %c0_i32_0 : i32, i32
  }
  func.func @transform_6(%arg0: i32) -> (i32, i32, i32) {
    %c0_i32 = arith.constant 0 : i32
    %c0_i32_0 = arith.constant 0 : i32
    %c0_i32_1 = arith.constant 0 : i32
    return %arg0, %c0_i32, %c0_i32_0 : i32, i32, i32
  }
}

module attributes {stable_mosaic.version = 11 : i64} {
  func.func @_fea_irb1a_kernel(%arg0: i32, %arg1: memref<1x256x3xf32, #tpu.memory_space<vmem>>, %arg2: memref<3x32xf32, #tpu.memory_space<vmem>>, %arg3: memref<1x32xf32, #tpu.memory_space<vmem>>, %arg4: memref<288x32xf32, #tpu.memory_space<vmem>>, %arg5: memref<1x32xf32, #tpu.memory_space<vmem>>, %arg6: memref<1x256x32xf32, #tpu.memory_space<vmem>>, %arg7: memref<1x256x32xf32, #tpu.memory_space<vmem>>, %arg8: memref<18x18x32xf32, #tpu.memory_space<vmem>>) attributes {dimension_semantics = [#tpu.dimension_semantics<parallel>], iteration_bounds = array<i64: 2>, scalar_prefetch = 0 : i64, scratch_operands = 1 : i64, tpu.core_type = #tpu.core_type<tc>, window_params = [{transform_indices = @transform_0, window_bounds = array<i64: 1, 256, 3>}, {pipeline_mode = #tpu.pipeline_mode<synchronous>, transform_indices = @transform_1, window_bounds = array<i64: 3, 32>}, {pipeline_mode = #tpu.pipeline_mode<synchronous>, transform_indices = @transform_2, window_bounds = array<i64: 1, 32>}, {pipeline_mode = #tpu.pipeline_mode<synchronous>, transform_indices = @transform_3, window_bounds = array<i64: 288, 32>}, {pipeline_mode = #tpu.pipeline_mode<synchronous>, transform_indices = @transform_4, window_bounds = array<i64: 1, 32>}, {transform_indices = @transform_5, window_bounds = array<i64: 1, 256, 32>}, {transform_indices = @transform_6, window_bounds = array<i64: 1, 256, 32>}]} {
    %c0 = arith.constant 0 : index
    %c0_0 = arith.constant 0 : index
    %c0_1 = arith.constant 0 : index
    %0 = vector.load %arg1[%c0, %c0_0, %c0_1] : memref<1x256x3xf32, #tpu.memory_space<vmem>>, vector<1x256x3xf32>
    %1 = vector.shape_cast %0 : vector<1x256x3xf32> to vector<256x3xf32>
    %c0_2 = arith.constant 0 : index
    %c0_3 = arith.constant 0 : index
    %2 = vector.load %arg2[%c0_2, %c0_3] : memref<3x32xf32, #tpu.memory_space<vmem>>, vector<3x32xf32>
    %cst = arith.constant dense<0.000000e+00> : vector<256x32xf32>
    %3 = tpu.matmul %1, %2, %cst {dimension_numbers = #tpu.dot_dimension_numbers<[1], [0], [0], [1], [0, 0, 1, 1], [], []>} : vector<256x3xf32>, vector<3x32xf32>, vector<256x32xf32> -> vector<256x32xf32>
    %c0_4 = arith.constant 0 : index
    %c0_5 = arith.constant 0 : index
    %4 = vector.load %arg3[%c0_4, %c0_5] : memref<1x32xf32, #tpu.memory_space<vmem>>, vector<1x32xf32>
    %5 = vector.broadcast %4 : vector<1x32xf32> to vector<256x32xf32>
    %6 = arith.addf %3, %5 : vector<256x32xf32>
    %c0_6 = arith.constant 0 : index
    %c0_7 = arith.constant 0 : index
    %c0_8 = arith.constant 0 : index
    %7 = vector.load %arg6[%c0_6, %c0_7, %c0_8] : memref<1x256x32xf32, #tpu.memory_space<vmem>>, vector<1x256x32xf32>
    %8 = vector.shape_cast %7 : vector<1x256x32xf32> to vector<256x32xf32>
    %9 = vector.shape_cast %6 : vector<256x32xf32> to vector<1x256x32xf32>
    tpu.vector_store %arg6[%c0_6, %c0_7, %c0_8], %9 {strides = array<i32>} : memref<1x256x32xf32, #tpu.memory_space<vmem>>, vector<1x256x32xf32>,
    %10 = vector.shape_cast %6 : vector<256x32xf32> to vector<16x16x32xf32>
    %c0_9 = arith.constant 0 : index
    %c0_10 = arith.constant 0 : index
    %11 = vector.load %arg4[%c0_9, %c0_10] : memref<288x32xf32, #tpu.memory_space<vmem>>, vector<288x32xf32>
    %cst_11 = arith.constant 0.000000e+00 : f32
    %12 = vector.broadcast %cst_11 : f32 to vector<18x18x32xf32>
    %c0_12 = arith.constant 0 : index
    %c0_13 = arith.constant 0 : index
    %c0_14 = arith.constant 0 : index
    %13 = vector.load %arg8[%c0_12, %c0_13, %c0_14] : memref<18x18x32xf32, #tpu.memory_space<vmem>>, vector<18x18x32xf32>
    tpu.vector_store %arg8[%c0_12, %c0_13, %c0_14], %12 {strides = array<i32>} : memref<18x18x32xf32, #tpu.memory_space<vmem>>, vector<18x18x32xf32>,
    %c1 = arith.constant 1 : index
    %c1_15 = arith.constant 1 : index
    %c0_16 = arith.constant 0 : index
    %14 = vector.load %arg8[%c1, %c1_15, %c0_16] : memref<18x18x32xf32, #tpu.memory_space<vmem>>, vector<16x16x32xf32>
    tpu.vector_store %arg8[%c1, %c1_15, %c0_16], %10 {strides = array<i32>} : memref<18x18x32xf32, #tpu.memory_space<vmem>>, vector<16x16x32xf32>,
    %c0_17 = arith.constant 0 : index
    %c0_18 = arith.constant 0 : index
    %c0_19 = arith.constant 0 : index
    %15 = vector.load %arg8[%c0_17, %c0_18, %c0_19] : memref<18x18x32xf32, #tpu.memory_space<vmem>>, vector<16x16x32xf32>
    %16 = vector.shape_cast %15 : vector<16x16x32xf32> to vector<256x32xf32>
    %c0_20 = arith.constant 0 : index
    %c1_21 = arith.constant 1 : index
    %c0_22 = arith.constant 0 : index
    %17 = vector.load %arg8[%c0_20, %c1_21, %c0_22] : memref<18x18x32xf32, #tpu.memory_space<vmem>>, vector<16x16x32xf32>
    %18 = vector.shape_cast %17 : vector<16x16x32xf32> to vector<256x32xf32>
    %c0_23 = arith.constant 0 : index
    %c2 = arith.constant 2 : index
    %c0_24 = arith.constant 0 : index
    %19 = vector.load %arg8[%c0_23, %c2, %c0_24] : memref<18x18x32xf32, #tpu.memory_space<vmem>>, vector<16x16x32xf32>
    %20 = vector.shape_cast %19 : vector<16x16x32xf32> to vector<256x32xf32>
    %c1_25 = arith.constant 1 : index
    %c0_26 = arith.constant 0 : index
    %c0_27 = arith.constant 0 : index
    %21 = vector.load %arg8[%c1_25, %c0_26, %c0_27] : memref<18x18x32xf32, #tpu.memory_space<vmem>>, vector<16x16x32xf32>
    %22 = vector.shape_cast %21 : vector<16x16x32xf32> to vector<256x32xf32>
    %c1_28 = arith.constant 1 : index
    %c1_29 = arith.constant 1 : index
    %c0_30 = arith.constant 0 : index
    %23 = vector.load %arg8[%c1_28, %c1_29, %c0_30] : memref<18x18x32xf32, #tpu.memory_space<vmem>>, vector<16x16x32xf32>
    %24 = vector.shape_cast %23 : vector<16x16x32xf32> to vector<256x32xf32>
    %c1_31 = arith.constant 1 : index
    %c2_32 = arith.constant 2 : index
    %c0_33 = arith.constant 0 : index
    %25 = vector.load %arg8[%c1_31, %c2_32, %c0_33] : memref<18x18x32xf32, #tpu.memory_space<vmem>>, vector<16x16x32xf32>
    %26 = vector.shape_cast %25 : vector<16x16x32xf32> to vector<256x32xf32>
    %c2_34 = arith.constant 2 : index
    %c0_35 = arith.constant 0 : index
    %c0_36 = arith.constant 0 : index
    %27 = vector.load %arg8[%c2_34, %c0_35, %c0_36] : memref<18x18x32xf32, #tpu.memory_space<vmem>>, vector<16x16x32xf32>
    %28 = vector.shape_cast %27 : vector<16x16x32xf32> to vector<256x32xf32>
    %c2_37 = arith.constant 2 : index
    %c1_38 = arith.constant 1 : index
    %c0_39 = arith.constant 0 : index
    %29 = vector.load %arg8[%c2_37, %c1_38, %c0_39] : memref<18x18x32xf32, #tpu.memory_space<vmem>>, vector<16x16x32xf32>
    %30 = vector.shape_cast %29 : vector<16x16x32xf32> to vector<256x32xf32>
    %c2_40 = arith.constant 2 : index
    %c2_41 = arith.constant 2 : index
    %c0_42 = arith.constant 0 : index
    %31 = vector.load %arg8[%c2_40, %c2_41, %c0_42] : memref<18x18x32xf32, #tpu.memory_space<vmem>>, vector<16x16x32xf32>
    %32 = vector.shape_cast %31 : vector<16x16x32xf32> to vector<256x32xf32>
    %33 = tpu.concatenate %16, %18, %20, %22, %24, %26, %28, %30, %32 in 1 : vector<256x32xf32>, vector<256x32xf32>, vector<256x32xf32>, vector<256x32xf32>, vector<256x32xf32>, vector<256x32xf32>, vector<256x32xf32>, vector<256x32xf32>, vector<256x32xf32> -> vector<256x288xf32>
    %cst_43 = arith.constant dense<0.000000e+00> : vector<256x32xf32>
    %34 = tpu.matmul %33, %11, %cst_43 {dimension_numbers = #tpu.dot_dimension_numbers<[1], [0], [0], [1], [0, 0, 1, 1], [], []>} : vector<256x288xf32>, vector<288x32xf32>, vector<256x32xf32> -> vector<256x32xf32>
    %c0_44 = arith.constant 0 : index
    %c0_45 = arith.constant 0 : index
    %35 = vector.load %arg5[%c0_44, %c0_45] : memref<1x32xf32, #tpu.memory_space<vmem>>, vector<1x32xf32>
    %36 = vector.broadcast %35 : vector<1x32xf32> to vector<256x32xf32>
    %37 = arith.addf %34, %36 : vector<256x32xf32>
    %cst_46 = arith.constant 0.000000e+00 : f32
    %38 = vector.broadcast %cst_46 : f32 to vector<256x32xf32>
    %39 = arith.cmpf oge, %37, %38 : vector<256x32xf32>
    %cst_47 = arith.constant 5.000000e-02 : f32
    %40 = vector.broadcast %cst_47 : f32 to vector<256x32xf32>
    %41 = arith.mulf %40, %37 : vector<256x32xf32>
    %42 = arith.select %39, %37, %41 : vector<256x32xi1>, vector<256x32xf32>
    %c0_48 = arith.constant 0 : index
    %c0_49 = arith.constant 0 : index
    %c0_50 = arith.constant 0 : index
    %43 = vector.load %arg7[%c0_48, %c0_49, %c0_50] : memref<1x256x32xf32, #tpu.memory_space<vmem>>, vector<1x256x32xf32>
    %44 = vector.shape_cast %43 : vector<1x256x32xf32> to vector<256x32xf32>
    %45 = vector.shape_cast %42 : vector<256x32xf32> to vector<1x256x32xf32>
    tpu.vector_store %arg7[%c0_48, %c0_49, %c0_50], %45 {strides = array<i32>} : memref<1x256x32xf32, #tpu.memory_space<vmem>>, vector<1x256x32xf32>,
    return
  }
  func.func @transform_0(%arg0: i32) -> (i32, i32, i32) {
    %c0_i32 = arith.constant 0 : i32
    %c0_i32_0 = arith.constant 0 : i32
    %c0_i32_1 = arith.constant 0 : i32
    return %arg0, %c0_i32, %c0_i32_0 : i32, i32, i32
  }
  func.func @transform_1(%arg0: i32) -> (i32, i32) {
    %c0_i32 = arith.constant 0 : i32
    %c0_i32_0 = arith.constant 0 : i32
    %c0_i32_1 = arith.constant 0 : i32
    return %c0_i32, %c0_i32_0 : i32, i32
  }
  func.func @transform_2(%arg0: i32) -> (i32, i32) {
    %c0_i32 = arith.constant 0 : i32
    %c0_i32_0 = arith.constant 0 : i32
    %c0_i32_1 = arith.constant 0 : i32
    return %c0_i32, %c0_i32_0 : i32, i32
  }
  func.func @transform_3(%arg0: i32) -> (i32, i32) {
    %c0_i32 = arith.constant 0 : i32
    %c0_i32_0 = arith.constant 0 : i32
    %c0_i32_1 = arith.constant 0 : i32
    return %c0_i32, %c0_i32_0 : i32, i32
  }
  func.func @transform_4(%arg0: i32) -> (i32, i32) {
    %c0_i32 = arith.constant 0 : i32
    %c0_i32_0 = arith.constant 0 : i32
    %c0_i32_1 = arith.constant 0 : i32
    return %c0_i32, %c0_i32_0 : i32, i32
  }
  func.func @transform_5(%arg0: i32) -> (i32, i32, i32) {
    %c0_i32 = arith.constant 0 : i32
    %c0_i32_0 = arith.constant 0 : i32
    %c0_i32_1 = arith.constant 0 : i32
    return %arg0, %c0_i32, %c0_i32_0 : i32, i32, i32
  }
  func.func @transform_6(%arg0: i32) -> (i32, i32, i32) {
    %c0_i32 = arith.constant 0 : i32
    %c0_i32_0 = arith.constant 0 : i32
    %c0_i32_1 = arith.constant 0 : i32
    return %arg0, %c0_i32, %c0_i32_0 : i32, i32, i32
  }
}

module attributes {stable_mosaic.version = 11 : i64} {
  func.func @_lr_kernel(%arg0: i32, %arg1: memref<1x256x32xf32, #tpu.memory_space<vmem>>, %arg2: memref<1x256x32xf32, #tpu.memory_space<vmem>>, %arg3: memref<288x32xf32, #tpu.memory_space<vmem>>, %arg4: memref<1x32xf32, #tpu.memory_space<vmem>>, %arg5: memref<1x256x32xf32, #tpu.memory_space<vmem>>, %arg6: memref<18x18x32xf32, #tpu.memory_space<vmem>>) attributes {dimension_semantics = [#tpu.dimension_semantics<parallel>], iteration_bounds = array<i64: 2>, scalar_prefetch = 0 : i64, scratch_operands = 1 : i64, tpu.core_type = #tpu.core_type<tc>, window_params = [{transform_indices = @transform_0, window_bounds = array<i64: 1, 256, 32>}, {transform_indices = @transform_1, window_bounds = array<i64: 1, 256, 32>}, {pipeline_mode = #tpu.pipeline_mode<synchronous>, transform_indices = @transform_2, window_bounds = array<i64: 288, 32>}, {pipeline_mode = #tpu.pipeline_mode<synchronous>, transform_indices = @transform_3, window_bounds = array<i64: 1, 32>}, {transform_indices = @transform_4, window_bounds = array<i64: 1, 256, 32>}]} {
    %c0 = arith.constant 0 : index
    %c0_0 = arith.constant 0 : index
    %c0_1 = arith.constant 0 : index
    %0 = vector.load %arg1[%c0, %c0_0, %c0_1] : memref<1x256x32xf32, #tpu.memory_space<vmem>>, vector<1x256x32xf32>
    %1 = vector.shape_cast %0 : vector<1x256x32xf32> to vector<256x32xf32>
    %2 = vector.shape_cast %1 : vector<256x32xf32> to vector<16x16x32xf32>
    %c0_2 = arith.constant 0 : index
    %c0_3 = arith.constant 0 : index
    %3 = vector.load %arg3[%c0_2, %c0_3] : memref<288x32xf32, #tpu.memory_space<vmem>>, vector<288x32xf32>
    %cst = arith.constant 0.000000e+00 : f32
    %4 = vector.broadcast %cst : f32 to vector<18x18x32xf32>
    %c0_4 = arith.constant 0 : index
    %c0_5 = arith.constant 0 : index
    %c0_6 = arith.constant 0 : index
    %5 = vector.load %arg6[%c0_4, %c0_5, %c0_6] : memref<18x18x32xf32, #tpu.memory_space<vmem>>, vector<18x18x32xf32>
    tpu.vector_store %arg6[%c0_4, %c0_5, %c0_6], %4 {strides = array<i32>} : memref<18x18x32xf32, #tpu.memory_space<vmem>>, vector<18x18x32xf32>,
    %c1 = arith.constant 1 : index
    %c1_7 = arith.constant 1 : index
    %c0_8 = arith.constant 0 : index
    %6 = vector.load %arg6[%c1, %c1_7, %c0_8] : memref<18x18x32xf32, #tpu.memory_space<vmem>>, vector<16x16x32xf32>
    tpu.vector_store %arg6[%c1, %c1_7, %c0_8], %2 {strides = array<i32>} : memref<18x18x32xf32, #tpu.memory_space<vmem>>, vector<16x16x32xf32>,
    %c0_9 = arith.constant 0 : index
    %c0_10 = arith.constant 0 : index
    %c0_11 = arith.constant 0 : index
    %7 = vector.load %arg6[%c0_9, %c0_10, %c0_11] : memref<18x18x32xf32, #tpu.memory_space<vmem>>, vector<16x16x32xf32>
    %8 = vector.shape_cast %7 : vector<16x16x32xf32> to vector<256x32xf32>
    %c0_12 = arith.constant 0 : index
    %c1_13 = arith.constant 1 : index
    %c0_14 = arith.constant 0 : index
    %9 = vector.load %arg6[%c0_12, %c1_13, %c0_14] : memref<18x18x32xf32, #tpu.memory_space<vmem>>, vector<16x16x32xf32>
    %10 = vector.shape_cast %9 : vector<16x16x32xf32> to vector<256x32xf32>
    %c0_15 = arith.constant 0 : index
    %c2 = arith.constant 2 : index
    %c0_16 = arith.constant 0 : index
    %11 = vector.load %arg6[%c0_15, %c2, %c0_16] : memref<18x18x32xf32, #tpu.memory_space<vmem>>, vector<16x16x32xf32>
    %12 = vector.shape_cast %11 : vector<16x16x32xf32> to vector<256x32xf32>
    %c1_17 = arith.constant 1 : index
    %c0_18 = arith.constant 0 : index
    %c0_19 = arith.constant 0 : index
    %13 = vector.load %arg6[%c1_17, %c0_18, %c0_19] : memref<18x18x32xf32, #tpu.memory_space<vmem>>, vector<16x16x32xf32>
    %14 = vector.shape_cast %13 : vector<16x16x32xf32> to vector<256x32xf32>
    %c1_20 = arith.constant 1 : index
    %c1_21 = arith.constant 1 : index
    %c0_22 = arith.constant 0 : index
    %15 = vector.load %arg6[%c1_20, %c1_21, %c0_22] : memref<18x18x32xf32, #tpu.memory_space<vmem>>, vector<16x16x32xf32>
    %16 = vector.shape_cast %15 : vector<16x16x32xf32> to vector<256x32xf32>
    %c1_23 = arith.constant 1 : index
    %c2_24 = arith.constant 2 : index
    %c0_25 = arith.constant 0 : index
    %17 = vector.load %arg6[%c1_23, %c2_24, %c0_25] : memref<18x18x32xf32, #tpu.memory_space<vmem>>, vector<16x16x32xf32>
    %18 = vector.shape_cast %17 : vector<16x16x32xf32> to vector<256x32xf32>
    %c2_26 = arith.constant 2 : index
    %c0_27 = arith.constant 0 : index
    %c0_28 = arith.constant 0 : index
    %19 = vector.load %arg6[%c2_26, %c0_27, %c0_28] : memref<18x18x32xf32, #tpu.memory_space<vmem>>, vector<16x16x32xf32>
    %20 = vector.shape_cast %19 : vector<16x16x32xf32> to vector<256x32xf32>
    %c2_29 = arith.constant 2 : index
    %c1_30 = arith.constant 1 : index
    %c0_31 = arith.constant 0 : index
    %21 = vector.load %arg6[%c2_29, %c1_30, %c0_31] : memref<18x18x32xf32, #tpu.memory_space<vmem>>, vector<16x16x32xf32>
    %22 = vector.shape_cast %21 : vector<16x16x32xf32> to vector<256x32xf32>
    %c2_32 = arith.constant 2 : index
    %c2_33 = arith.constant 2 : index
    %c0_34 = arith.constant 0 : index
    %23 = vector.load %arg6[%c2_32, %c2_33, %c0_34] : memref<18x18x32xf32, #tpu.memory_space<vmem>>, vector<16x16x32xf32>
    %24 = vector.shape_cast %23 : vector<16x16x32xf32> to vector<256x32xf32>
    %25 = tpu.concatenate %8, %10, %12, %14, %16, %18, %20, %22, %24 in 1 : vector<256x32xf32>, vector<256x32xf32>, vector<256x32xf32>, vector<256x32xf32>, vector<256x32xf32>, vector<256x32xf32>, vector<256x32xf32>, vector<256x32xf32>, vector<256x32xf32> -> vector<256x288xf32>
    %cst_35 = arith.constant dense<0.000000e+00> : vector<256x32xf32>
    %26 = tpu.matmul %25, %3, %cst_35 {dimension_numbers = #tpu.dot_dimension_numbers<[1], [0], [0], [1], [0, 0, 1, 1], [], []>} : vector<256x288xf32>, vector<288x32xf32>, vector<256x32xf32> -> vector<256x32xf32>
    %c0_36 = arith.constant 0 : index
    %c0_37 = arith.constant 0 : index
    %27 = vector.load %arg4[%c0_36, %c0_37] : memref<1x32xf32, #tpu.memory_space<vmem>>, vector<1x32xf32>
    %28 = vector.broadcast %27 : vector<1x32xf32> to vector<256x32xf32>
    %29 = arith.addf %26, %28 : vector<256x32xf32>
    %c0_38 = arith.constant 0 : index
    %c0_39 = arith.constant 0 : index
    %c0_40 = arith.constant 0 : index
    %30 = vector.load %arg2[%c0_38, %c0_39, %c0_40] : memref<1x256x32xf32, #tpu.memory_space<vmem>>, vector<1x256x32xf32>
    %31 = vector.shape_cast %30 : vector<1x256x32xf32> to vector<256x32xf32>
    %32 = arith.addf %29, %31 : vector<256x32xf32>
    %c0_41 = arith.constant 0 : index
    %c0_42 = arith.constant 0 : index
    %c0_43 = arith.constant 0 : index
    %33 = vector.load %arg5[%c0_41, %c0_42, %c0_43] : memref<1x256x32xf32, #tpu.memory_space<vmem>>, vector<1x256x32xf32>
    %34 = vector.shape_cast %33 : vector<1x256x32xf32> to vector<256x32xf32>
    %35 = vector.shape_cast %32 : vector<256x32xf32> to vector<1x256x32xf32>
    tpu.vector_store %arg5[%c0_41, %c0_42, %c0_43], %35 {strides = array<i32>} : memref<1x256x32xf32, #tpu.memory_space<vmem>>, vector<1x256x32xf32>,
    return
  }
  func.func @transform_0(%arg0: i32) -> (i32, i32, i32) {
    %c0_i32 = arith.constant 0 : i32
    %c0_i32_0 = arith.constant 0 : i32
    %c0_i32_1 = arith.constant 0 : i32
    return %arg0, %c0_i32, %c0_i32_0 : i32, i32, i32
  }
  func.func @transform_1(%arg0: i32) -> (i32, i32, i32) {
    %c0_i32 = arith.constant 0 : i32
    %c0_i32_0 = arith.constant 0 : i32
    %c0_i32_1 = arith.constant 0 : i32
    return %arg0, %c0_i32, %c0_i32_0 : i32, i32, i32
  }
  func.func @transform_2(%arg0: i32) -> (i32, i32) {
    %c0_i32 = arith.constant 0 : i32
    %c0_i32_0 = arith.constant 0 : i32
    %c0_i32_1 = arith.constant 0 : i32
    return %c0_i32, %c0_i32_0 : i32, i32
  }
  func.func @transform_3(%arg0: i32) -> (i32, i32) {
    %c0_i32 = arith.constant 0 : i32
    %c0_i32_0 = arith.constant 0 : i32
    %c0_i32_1 = arith.constant 0 : i32
    return %c0_i32, %c0_i32_0 : i32, i32
  }
  func.func @transform_4(%arg0: i32) -> (i32, i32, i32) {
    %c0_i32 = arith.constant 0 : i32
    %c0_i32_0 = arith.constant 0 : i32
    %c0_i32_1 = arith.constant 0 : i32
    return %arg0, %c0_i32, %c0_i32_0 : i32, i32, i32
  }
}

module attributes {stable_mosaic.version = 11 : i64} {
  func.func @_up_kernel(%arg0: i32, %arg1: memref<1x256x32xf32, #tpu.memory_space<vmem>>, %arg2: memref<288x3xf32, #tpu.memory_space<vmem>>, %arg3: memref<1x3xf32, #tpu.memory_space<vmem>>, %arg4: memref<1x256x3xf32, #tpu.memory_space<vmem>>, %arg5: memref<18x18x32xf32, #tpu.memory_space<vmem>>) attributes {dimension_semantics = [#tpu.dimension_semantics<parallel>], iteration_bounds = array<i64: 2>, scalar_prefetch = 0 : i64, scratch_operands = 1 : i64, tpu.core_type = #tpu.core_type<tc>, window_params = [{transform_indices = @transform_0, window_bounds = array<i64: 1, 256, 32>}, {pipeline_mode = #tpu.pipeline_mode<synchronous>, transform_indices = @transform_1, window_bounds = array<i64: 288, 3>}, {pipeline_mode = #tpu.pipeline_mode<synchronous>, transform_indices = @transform_2, window_bounds = array<i64: 1, 3>}, {transform_indices = @transform_3, window_bounds = array<i64: 1, 256, 3>}]} {
    %c0 = arith.constant 0 : index
    %c0_0 = arith.constant 0 : index
    %c0_1 = arith.constant 0 : index
    %0 = vector.load %arg1[%c0, %c0_0, %c0_1] : memref<1x256x32xf32, #tpu.memory_space<vmem>>, vector<1x256x32xf32>
    %1 = vector.shape_cast %0 : vector<1x256x32xf32> to vector<256x32xf32>
    %2 = vector.shape_cast %1 : vector<256x32xf32> to vector<16x16x32xf32>
    %c0_2 = arith.constant 0 : index
    %c0_3 = arith.constant 0 : index
    %3 = vector.load %arg2[%c0_2, %c0_3] : memref<288x3xf32, #tpu.memory_space<vmem>>, vector<288x3xf32>
    %cst = arith.constant 0.000000e+00 : f32
    %4 = vector.broadcast %cst : f32 to vector<18x18x32xf32>
    %c0_4 = arith.constant 0 : index
    %c0_5 = arith.constant 0 : index
    %c0_6 = arith.constant 0 : index
    %5 = vector.load %arg5[%c0_4, %c0_5, %c0_6] : memref<18x18x32xf32, #tpu.memory_space<vmem>>, vector<18x18x32xf32>
    tpu.vector_store %arg5[%c0_4, %c0_5, %c0_6], %4 {strides = array<i32>} : memref<18x18x32xf32, #tpu.memory_space<vmem>>, vector<18x18x32xf32>,
    %c1 = arith.constant 1 : index
    %c1_7 = arith.constant 1 : index
    %c0_8 = arith.constant 0 : index
    %6 = vector.load %arg5[%c1, %c1_7, %c0_8] : memref<18x18x32xf32, #tpu.memory_space<vmem>>, vector<16x16x32xf32>
    tpu.vector_store %arg5[%c1, %c1_7, %c0_8], %2 {strides = array<i32>} : memref<18x18x32xf32, #tpu.memory_space<vmem>>, vector<16x16x32xf32>,
    %c0_9 = arith.constant 0 : index
    %c0_10 = arith.constant 0 : index
    %c0_11 = arith.constant 0 : index
    %7 = vector.load %arg5[%c0_9, %c0_10, %c0_11] : memref<18x18x32xf32, #tpu.memory_space<vmem>>, vector<16x16x32xf32>
    %8 = vector.shape_cast %7 : vector<16x16x32xf32> to vector<256x32xf32>
    %c0_12 = arith.constant 0 : index
    %c1_13 = arith.constant 1 : index
    %c0_14 = arith.constant 0 : index
    %9 = vector.load %arg5[%c0_12, %c1_13, %c0_14] : memref<18x18x32xf32, #tpu.memory_space<vmem>>, vector<16x16x32xf32>
    %10 = vector.shape_cast %9 : vector<16x16x32xf32> to vector<256x32xf32>
    %c0_15 = arith.constant 0 : index
    %c2 = arith.constant 2 : index
    %c0_16 = arith.constant 0 : index
    %11 = vector.load %arg5[%c0_15, %c2, %c0_16] : memref<18x18x32xf32, #tpu.memory_space<vmem>>, vector<16x16x32xf32>
    %12 = vector.shape_cast %11 : vector<16x16x32xf32> to vector<256x32xf32>
    %c1_17 = arith.constant 1 : index
    %c0_18 = arith.constant 0 : index
    %c0_19 = arith.constant 0 : index
    %13 = vector.load %arg5[%c1_17, %c0_18, %c0_19] : memref<18x18x32xf32, #tpu.memory_space<vmem>>, vector<16x16x32xf32>
    %14 = vector.shape_cast %13 : vector<16x16x32xf32> to vector<256x32xf32>
    %c1_20 = arith.constant 1 : index
    %c1_21 = arith.constant 1 : index
    %c0_22 = arith.constant 0 : index
    %15 = vector.load %arg5[%c1_20, %c1_21, %c0_22] : memref<18x18x32xf32, #tpu.memory_space<vmem>>, vector<16x16x32xf32>
    %16 = vector.shape_cast %15 : vector<16x16x32xf32> to vector<256x32xf32>
    %c1_23 = arith.constant 1 : index
    %c2_24 = arith.constant 2 : index
    %c0_25 = arith.constant 0 : index
    %17 = vector.load %arg5[%c1_23, %c2_24, %c0_25] : memref<18x18x32xf32, #tpu.memory_space<vmem>>, vector<16x16x32xf32>
    %18 = vector.shape_cast %17 : vector<16x16x32xf32> to vector<256x32xf32>
    %c2_26 = arith.constant 2 : index
    %c0_27 = arith.constant 0 : index
    %c0_28 = arith.constant 0 : index
    %19 = vector.load %arg5[%c2_26, %c0_27, %c0_28] : memref<18x18x32xf32, #tpu.memory_space<vmem>>, vector<16x16x32xf32>
    %20 = vector.shape_cast %19 : vector<16x16x32xf32> to vector<256x32xf32>
    %c2_29 = arith.constant 2 : index
    %c1_30 = arith.constant 1 : index
    %c0_31 = arith.constant 0 : index
    %21 = vector.load %arg5[%c2_29, %c1_30, %c0_31] : memref<18x18x32xf32, #tpu.memory_space<vmem>>, vector<16x16x32xf32>
    %22 = vector.shape_cast %21 : vector<16x16x32xf32> to vector<256x32xf32>
    %c2_32 = arith.constant 2 : index
    %c2_33 = arith.constant 2 : index
    %c0_34 = arith.constant 0 : index
    %23 = vector.load %arg5[%c2_32, %c2_33, %c0_34] : memref<18x18x32xf32, #tpu.memory_space<vmem>>, vector<16x16x32xf32>
    %24 = vector.shape_cast %23 : vector<16x16x32xf32> to vector<256x32xf32>
    %25 = tpu.concatenate %8, %10, %12, %14, %16, %18, %20, %22, %24 in 1 : vector<256x32xf32>, vector<256x32xf32>, vector<256x32xf32>, vector<256x32xf32>, vector<256x32xf32>, vector<256x32xf32>, vector<256x32xf32>, vector<256x32xf32>, vector<256x32xf32> -> vector<256x288xf32>
    %cst_35 = arith.constant dense<0.000000e+00> : vector<256x3xf32>
    %26 = tpu.matmul %25, %3, %cst_35 {dimension_numbers = #tpu.dot_dimension_numbers<[1], [0], [0], [1], [0, 0, 1, 1], [], []>} : vector<256x288xf32>, vector<288x3xf32>, vector<256x3xf32> -> vector<256x3xf32>
    %c0_36 = arith.constant 0 : index
    %c0_37 = arith.constant 0 : index
    %27 = vector.load %arg3[%c0_36, %c0_37] : memref<1x3xf32, #tpu.memory_space<vmem>>, vector<1x3xf32>
    %28 = vector.broadcast %27 : vector<1x3xf32> to vector<256x3xf32>
    %29 = arith.addf %26, %28 : vector<256x3xf32>
    %c0_38 = arith.constant 0 : index
    %c0_39 = arith.constant 0 : index
    %c0_40 = arith.constant 0 : index
    %30 = vector.load %arg4[%c0_38, %c0_39, %c0_40] : memref<1x256x3xf32, #tpu.memory_space<vmem>>, vector<1x256x3xf32>
    %31 = vector.shape_cast %30 : vector<1x256x3xf32> to vector<256x3xf32>
    %32 = vector.shape_cast %29 : vector<256x3xf32> to vector<1x256x3xf32>
    tpu.vector_store %arg4[%c0_38, %c0_39, %c0_40], %32 {strides = array<i32>} : memref<1x256x3xf32, #tpu.memory_space<vmem>>, vector<1x256x3xf32>,
    return
  }
  func.func @transform_0(%arg0: i32) -> (i32, i32, i32) {
    %c0_i32 = arith.constant 0 : i32
    %c0_i32_0 = arith.constant 0 : i32
    %c0_i32_1 = arith.constant 0 : i32
    return %arg0, %c0_i32, %c0_i32_0 : i32, i32, i32
  }
  func.func @transform_1(%arg0: i32) -> (i32, i32) {
    %c0_i32 = arith.constant 0 : i32
    %c0_i32_0 = arith.constant 0 : i32
    %c0_i32_1 = arith.constant 0 : i32
    return %c0_i32, %c0_i32_0 : i32, i32
  }
  func.func @transform_2(%arg0: i32) -> (i32, i32) {
    %c0_i32 = arith.constant 0 : i32
    %c0_i32_0 = arith.constant 0 : i32
    %c0_i32_1 = arith.constant 0 : i32
    return %c0_i32, %c0_i32_0 : i32, i32
  }
  func.func @transform_3(%arg0: i32) -> (i32, i32, i32) {
    %c0_i32 = arith.constant 0 : i32
    %c0_i32_0 = arith.constant 0 : i32
    %c0_i32_1 = arith.constant 0 : i32
    return %arg0, %c0_i32, %c0_i32_0 : i32, i32, i32
  }
}

</mosaic_0001>

<llo_original>
// kernel: irnet1_forward.7
$region0: #{irnet1_forward.7}
  #allocation0 [shape = 'u32[]', space=smem, size = 0x4, offset = 0x4, fixed_abs, tag = 'smem constant byte address 0x4 - core index']
  #allocation1 [shape = 'u32[144,128]{1,0:T(1,128)}', space=vmem, size = 0x12000, scoped, tag = 'internal scratch']
  #allocation2 [shape = 'f32[18,18,32]{2,1,0:T(8,128)}', space=vmem, size = 0x36000, scoped, tag = 'scratch operand']
  %s0 = inlined_call_operand.vmem [shape: f32[2,256,32], index: 0, kind: input, shape index: {}]
  %s1 = inlined_call_operand.vmem [shape: f32[288,3], index: 1, kind: input, shape index: {}]
  %s2 = inlined_call_operand.vmem [shape: f32[1,3], index: 2, kind: input, shape index: {}]
  %s3 = inlined_call_operand.vmem [shape: f32[2,256,3], index: 3, kind: output, shape index: {}]
  %s4 = sld [smem:[#allocation0]]
  $region45: #{irnet1_forward.7} parent=0
    _
  %s6 = ssub.s32 1, %s4
  %s7 = scalar_select 0, %s6, %s4
  loop: start=0, step=1, limit=4
  $region2: #{irnet1_forward.7} parent=0 // loop_pre_header
    _
  $region3: #{irnet1_forward.7} parent=0 // loop_header
    %s9 = sphi 0, %s13
    %p10 = scmp.ge.s32.totalorder %s9, 4
    %s19 = sphi 0, %s21
    %s22 = sphi 0, %s19
    %s23 = sphi 0, %s22
    %s39 = sphi 0, %s23
    %s43 = sphi 0, %s43
    %s45 = sphi 0, %s43
    %s46 = sphi 0, %s45
    %s60 = sphi 0, %s46
    %s64 = sphi 0, %s64
    %s66 = sphi 0, %s64
    %s67 = sphi 0, %s66
    %s81 = sphi 0, %s67
    %s87 = sphi 0, %s89
    %s90 = sphi 0, %s87
    %s91 = sphi 0, %s90
    %s107 = sphi 0, %s91
  $region4: #{irnet1_forward.7} parent=0 // loop_header_branch
    %12 = sbr.rel (%p10) target = $region8
  $region5: #{irnet1_forward.7} parent=0 // loop_body
    %s14 = ssub.s32 %s9, 1
    %s15 = ssub.s32 %s9, 2
    %s16 = sadd.s32 %s9, 1
    %s17 = ssub.s32 %s9, %s16
    %p18 = scmp.eq.s32.totalorder %s17, 0
    %s20 = sadd.s32 %s19, 1
    %s21 = scalar_select %p18, %s19, %s20
    %p24 = pneg %p18
    %p25 = scmp.eq.s32.totalorder %s9, 1
    %p26 = por %p24, %p25
    %p27 = scmp.ne.s32.totalorder %s19, %s22
    %p28 = scmp.eq.s32.totalorder %s9, 0
    %p29 = por %p27, %p28
    %p30 = scmp.ne.s32.totalorder %s19, %s22
    %p31 = scmp.eq.s32.totalorder %s14, 1
    %p32 = por %p30, %p31
    %p33 = scmp.ne.s32.totalorder %s22, %s23
    %p34 = scmp.eq.s32.totalorder %s14, 0
    %p35 = por %p33, %p34
    %p36 = scmp.ne.s32.totalorder %s22, %s23
    %p37 = scmp.eq.s32.totalorder %s15, 1
    %p38 = por %p36, %p37
    %p40 = scmp.ne.s32.totalorder %s23, %s39
    %p41 = scmp.eq.s32.totalorder %s15, 0
    %p42 = por %p40, %p41
    %s44 = sadd.s32 %s43, 1
    %p47 = scmp.eq.s32.totalorder %s9, 1
    %p48 = scmp.ne.s32.totalorder %s43, %s45
    %p49 = scmp.eq.s32.totalorder %s9, 0
    %p50 = por %p48, %p49
    %p51 = scmp.ne.s32.totalorder %s43, %s45
    %p52 = scmp.eq.s32.totalorder %s14, 1
    %p53 = por %p51, %p52
    %p54 = scmp.ne.s32.totalorder %s45, %s46
    %p55 = scmp.eq.s32.totalorder %s14, 0
    %p56 = por %p54, %p55
    %p57 = scmp.ne.s32.totalorder %s45, %s46
    %p58 = scmp.eq.s32.totalorder %s15, 1
    %p59 = por %p57, %p58
    %p61 = scmp.ne.s32.totalorder %s46, %s60
    %p62 = scmp.eq.s32.totalorder %s15, 0
    %p63 = por %p61, %p62
    %s65 = sadd.s32 %s64, 1
    %p68 = scmp.eq.s32.totalorder %s9, 1
    %p69 = scmp.ne.s32.totalorder %s64, %s66
    %p70 = scmp.eq.s32.totalorder %s9, 0
    %p71 = por %p69, %p70
    %p72 = scmp.ne.s32.totalorder %s64, %s66
    %p73 = scmp.eq.s32.totalorder %s14, 1
    %p74 = por %p72, %p73
    %p75 = scmp.ne.s32.totalorder %s66, %s67
    %p76 = scmp.eq.s32.totalorder %s14, 0
    %p77 = por %p75, %p76
    %p78 = scmp.ne.s32.totalorder %s66, %s67
    %p79 = scmp.eq.s32.totalorder %s15, 1
    %p80 = por %p78, %p79
    %p82 = scmp.ne.s32.totalorder %s67, %s81
    %p83 = scmp.eq.s32.totalorder %s15, 0
    %p84 = por %p82, %p83
    %s85 = ssub.s32 %s9, %s16
    %p86 = scmp.eq.s32.totalorder %s85, 0
    %s88 = sadd.s32 %s87, 1
    %s89 = scalar_select %p86, %s87, %s88
    %p92 = pneg %p86
    %p93 = scmp.eq.s32.totalorder %s9, 1
    %p94 = por %p92, %p93
    %p95 = scmp.ne.s32.totalorder %s87, %s90
    %p96 = scmp.eq.s32.totalorder %s9, 0
    %p97 = por %p95, %p96
    %p98 = scmp.ne.s32.totalorder %s87, %s90
    %p99 = scmp.eq.s32.totalorder %s14, 1
    %p100 = por %p98, %p99
    %p101 = scmp.ne.s32.totalorder %s90, %s91
    %p102 = scmp.eq.s32.totalorder %s14, 0
    %p103 = por %p101, %p102
    %p104 = scmp.ne.s32.totalorder %s90, %s91
    %p105 = scmp.eq.s32.totalorder %s15, 1
    %p106 = por %p104, %p105
    %p108 = scmp.ne.s32.totalorder %s91, %s107
    %p109 = scmp.eq.s32.totalorder %s15, 0
    %p110 = por %p108, %p109
    %p111 = scmp.le.s32.totalorder 1, %s9
    %p112 = scmp.lt.s32.totalorder %s9, 3
    %p113 = pnand %p111, %p112
    %p114 = pneg %p113
    // Predicated region
    $region9: #{irnet1_forward.7} parent=5 // pred_check
      _
    $region10: #{irnet1_forward.7} parent=5 // pred_check_branch
      %116 = sbr.rel (%p113) target = $region12
    $region11: #{irnet1_forward.7} parent=5 // pred_region
      %s117 = ssub.s32 %s9, 1
      // Predicated region
      $region13: #{irnet1_forward.7} parent=11 // pred_check
        %p118 = pneg %p56
      $region14: #{irnet1_forward.7} parent=11 // pred_check_branch
        %120 = sbr.rel (%p118) target = $region16
      $region15: #{irnet1_forward.7} parent=11 // pred_region
        _
      $region16: #{irnet1_forward.7} parent=11 // pred_fallthru
        _
      // Predicated region
      $region17: #{irnet1_forward.7} parent=11 // pred_check
        %p121 = pneg %p77
      $region18: #{irnet1_forward.7} parent=11 // pred_check_branch
        %123 = sbr.rel (%p121) target = $region20
      $region19: #{irnet1_forward.7} parent=11 // pred_region
        _
      $region20: #{irnet1_forward.7} parent=11 // pred_fallthru
        _
    $region12: #{irnet1_forward.7} parent=5 // pred_fallthru
      _
    %p124 = scmp.lt.s32.totalorder %s9, 2
    // Predicated region
    $region21: #{irnet1_forward.7} parent=5 // pred_check
      %p125 = pneg %p124
    $region22: #{irnet1_forward.7} parent=5 // pred_check_branch
      %127 = sbr.rel (%p125) target = $region24
    $region23: #{irnet1_forward.7} parent=5 // pred_region
      // Predicated region
      $region25: #{irnet1_forward.7} parent=23 // pred_check
        %p128 = pneg %p29
      $region26: #{irnet1_forward.7} parent=23 // pred_check_branch
        %130 = sbr.rel (%p128) target = $region28
      $region27: #{irnet1_forward.7} parent=23 // pred_region
        %p131 = scmp.lt.s32.totalorder %s9, 1
        %s132 = scalar_select %p131, %s9, 1
        %s133 = smul.addr %s132, 32
        %s134 = smul.addr %s133, 8
        %s135 = scalar_lea.vmem %s0, %s134
      $region28: #{irnet1_forward.7} parent=23 // pred_fallthru
        _
    $region24: #{irnet1_forward.7} parent=5 // pred_fallthru
      _
    %p136 = scmp.le.s32.totalorder 1, %s9
    %p137 = scmp.lt.s32.totalorder %s9, 3
    %p138 = pnand %p136, %p137
    %p139 = pneg %p138
    // Predicated region
    $region29: #{irnet1_forward.7} parent=5 // pred_check
      _
    $region30: #{irnet1_forward.7} parent=5 // pred_check_branch
      %141 = sbr.rel (%p138) target = $region32
    $region31: #{irnet1_forward.7} parent=5 // pred_region
      %s142 = ssub.s32 %s9, 1
      %p143 = scmp.lt.s32.totalorder %s14, 1
      %s144 = scalar_select %p143, %s14, 1
      %s145 = smul.addr %s144, 32
      %s146 = smul.addr %s145, 8
      %s147 = scalar_lea.vmem %s0, %s146
      %p148 = pneg %p35
      %p149 = pneg %p32
      %p150 = pneg %p56
      %p151 = pneg %p53
      %p152 = pneg %p77
      %p153 = pneg %p74
      %p154 = pneg %p103
      %p155 = pneg %p100
      %p156 = scmp.lt.s32.totalorder %s14, 1
      %s157 = scalar_select %p156, %s14, 1
      %s158 = smul.addr %s157, 32
      %s159 = smul.addr %s158, 8
      %s160 = scalar_lea.vmem %s3, %s159
      %p161 = scmp.lt.s32.totalorder %s14, 1
      %s162 = scalar_select %p161, %s14, 1
      %s163 = smul.addr %s162, 32
      %s164 = smul.addr %s163, 8
      %s165 = scalar_lea.vmem %s0, %s164
      %p166 = scmp.lt.s32.totalorder %s14, 1
      %s167 = scalar_select %p166, %s14, 1
      %s168 = smul.addr %s167, 32
      %s169 = smul.addr %s168, 8
      %s170 = scalar_lea.vmem %s3, %s169
      %v171 = vld [vmem:[%s165] sm:$0xff]
      %v172 = vld [vmem:[%s165 + $0x8] sm:$0xff]
      %v173 = vld [vmem:[%s165 + $0x10] sm:$0xff]
      %v174 = vld [vmem:[%s165 + $0x18] sm:$0xff]
      %v175 = vld [vmem:[%s165 + $0x20] sm:$0xff]
      %v176 = vld [vmem:[%s165 + $0x28] sm:$0xff]
      %v177 = vld [vmem:[%s165 + $0x30] sm:$0xff]
      %v178 = vld [vmem:[%s165 + $0x38] sm:$0xff]
      %v179 = vld [vmem:[%s165 + $0x40] sm:$0xff]
      %v180 = vld [vmem:[%s165 + $0x48] sm:$0xff]
      %v181 = vld [vmem:[%s165 + $0x50] sm:$0xff]
      %v182 = vld [vmem:[%s165 + $0x58] sm:$0xff]
      %v183 = vld [vmem:[%s165 + $0x60] sm:$0xff]
      %v184 = vld [vmem:[%s165 + $0x68] sm:$0xff]
      %v185 = vld [vmem:[%s165 + $0x70] sm:$0xff]
      %v186 = vld [vmem:[%s165 + $0x78] sm:$0xff]
      %v187 = vld [vmem:[%s165 + $0x80] sm:$0xff]
      %v188 = vld [vmem:[%s165 + $0x88] sm:$0xff]
      %v189 = vld [vmem:[%s165 + $0x90] sm:$0xff]
      %v190 = vld [vmem:[%s165 + $0x98] sm:$0xff]
      %v191 = vld [vmem:[%s165 + $0xa0] sm:$0xff]
      %v192 = vld [vmem:[%s165 + $0xa8] sm:$0xff]
      %v193 = vld [vmem:[%s165 + $0xb0] sm:$0xff]
      %v194 = vld [vmem:[%s165 + $0xb8] sm:$0xff]
      %v195 = vld [vmem:[%s165 + $0xc0] sm:$0xff]
      %v196 = vld [vmem:[%s165 + $0xc8] sm:$0xff]
      %v197 = vld [vmem:[%s165 + $0xd0] sm:$0xff]
      %v198 = vld [vmem:[%s165 + $0xd8] sm:$0xff]
      %v199 = vld [vmem:[%s165 + $0xe0] sm:$0xff]
      %v200 = vld [vmem:[%s165 + $0xe8] sm:$0xff]
      %v201 = vld [vmem:[%s165 + $0xf0] sm:$0xff]
      %v202 = vld [vmem:[%s165 + $0xf8] sm:$0xff]
      %v203 = vld [vmem:[%s1] sm:$0xff]
      %v204 = vld [vmem:[%s1 + $0x8] sm:$0xff]
      %v205 = vld [vmem:[%s1 + $0x10] sm:$0xff]
      %v206 = vld [vmem:[%s1 + $0x18] sm:$0xff]
      %v207 = vld [vmem:[%s1 + $0x20] sm:$0xff]
      %v208 = vld [vmem:[%s1 + $0x28] sm:$0xff]
      %v209 = vld [vmem:[%s1 + $0x30] sm:$0xff]
      %v210 = vld [vmem:[%s1 + $0x38] sm:$0xff]
      %v211 = vld [vmem:[%s1 + $0x40] sm:$0xff]
      %v212 = vld [vmem:[%s1 + $0x48] sm:$0xff]
      %v213 = vld [vmem:[%s1 + $0x50] sm:$0xff]
      %v214 = vld [vmem:[%s1 + $0x58] sm:$0xff]
      %v215 = vld [vmem:[%s1 + $0x60] sm:$0xff]
      %v216 = vld [vmem:[%s1 + $0x68] sm:$0xff]
      %v217 = vld [vmem:[%s1 + $0x70] sm:$0xff]
      %v218 = vld [vmem:[%s1 + $0x78] sm:$0xff]
      %v219 = vld [vmem:[%s1 + $0x80] sm:$0xff]
      %v220 = vld [vmem:[%s1 + $0x88] sm:$0xff]
      %v221 = vld [vmem:[%s1 + $0x90] sm:$0xff]
      %v222 = vld [vmem:[%s1 + $0x98] sm:$0xff]
      %v223 = vld [vmem:[%s1 + $0xa0] sm:$0xff]
      %v224 = vld [vmem:[%s1 + $0xa8] sm:$0xff]
      %v225 = vld [vmem:[%s1 + $0xb0] sm:$0xff]
      %v226 = vld [vmem:[%s1 + $0xb8] sm:$0xff]
      %v227 = vld [vmem:[%s1 + $0xc0] sm:$0xff]
      %v228 = vld [vmem:[%s1 + $0xc8] sm:$0xff]
      %v229 = vld [vmem:[%s1 + $0xd0] sm:$0xff]
      %v230 = vld [vmem:[%s1 + $0xd8] sm:$0xff]
      %v231 = vld [vmem:[%s1 + $0xe0] sm:$0xff]
      %v232 = vld [vmem:[%s1 + $0xe8] sm:$0xff]
      %v233 = vld [vmem:[%s1 + $0xf0] sm:$0xff]
      %v234 = vld [vmem:[%s1 + $0xf8] sm:$0xff]
      %v235 = vld [vmem:[%s1 + $0x100] sm:$0xff]
      %v236 = vld [vmem:[%s1 + $0x108] sm:$0xff]
      %v237 = vld [vmem:[%s1 + $0x110] sm:$0xff]
      %v238 = vld [vmem:[%s1 + $0x118] sm:$0xff]
      %vm239 = vcmask 261120
      %240 = vst.msk [vmem:[#allocation2] sm:$0xff] %vm239, 0.0
      %241 = vst.msk [vmem:[#allocation2 + $0x8] sm:$0xff] %vm239, 0.0
      %vm242 = vcmask 254976
      %243 = vst.msk [vmem:[#allocation2 + $0x10] sm:$0x3] %vm242, 0.0
      %244 = vst.msk [vmem:[#allocation2 + $0x18] sm:$0xff] %vm239, 0.0
      %245 = vst.msk [vmem:[#allocation2 + $0x20] sm:$0xff] %vm239, 0.0
      %246 = vst.msk [vmem:[#allocation2 + $0x28] sm:$0x3] %vm242, 0.0
      %247 = vst.msk [vmem:[#allocation2 + $0x30] sm:$0xff] %vm239, 0.0
      %248 = vst.msk [vmem:[#allocation2 + $0x38] sm:$0xff] %vm239, 0.0
      %249 = vst.msk [vmem:[#allocation2 + $0x40] sm:$0x3] %vm242, 0.0
      %250 = vst.msk [vmem:[#allocation2 + $0x48] sm:$0xff] %vm239, 0.0
      %251 = vst.msk [vmem:[#allocation2 + $0x50] sm:$0xff] %vm239, 0.0
      %252 = vst.msk [vmem:[#allocation2 + $0x58] sm:$0x3] %vm242, 0.0
      %253 = vst.msk [vmem:[#allocation2 + $0x60] sm:$0xff] %vm239, 0.0
      %254 = vst.msk [vmem:[#allocation2 + $0x68] sm:$0xff] %vm239, 0.0
      %255 = vst.msk [vmem:[#allocation2 + $0x70] sm:$0x3] %vm242, 0.0
      %256 = vst.msk [vmem:[#allocation2 + $0x78] sm:$0xff] %vm239, 0.0
      %257 = vst.msk [vmem:[#allocation2 + $0x80] sm:$0xff] %vm239, 0.0
      %258 = vst.msk [vmem:[#allocation2 + $0x88] sm:$0x3] %vm242, 0.0
      %259 = vst.msk [vmem:[#allocation2 + $0x90] sm:$0xff] %vm239, 0.0
      %260 = vst.msk [vmem:[#allocation2 + $0x98] sm:$0xff] %vm239, 0.0
      %261 = vst.msk [vmem:[#allocation2 + $0xa0] sm:$0x3] %vm242, 0.0
      %262 = vst.msk [vmem:[#allocation2 + $0xa8] sm:$0xff] %vm239, 0.0
      %263 = vst.msk [vmem:[#allocation2 + $0xb0] sm:$0xff] %vm239, 0.0
      %264 = vst.msk [vmem:[#allocation2 + $0xb8] sm:$0x3] %vm242, 0.0
      %265 = vst.msk [vmem:[#allocation2 + $0xc0] sm:$0xff] %vm239, 0.0
      %266 = vst.msk [vmem:[#allocation2 + $0xc8] sm:$0xff] %vm239, 0.0
      %267 = vst.msk [vmem:[#allocation2 + $0xd0] sm:$0x3] %vm242, 0.0
      %268 = vst.msk [vmem:[#allocation2 + $0xd8] sm:$0xff] %vm239, 0.0
      %269 = vst.msk [vmem:[#allocation2 + $0xe0] sm:$0xff] %vm239, 0.0
      %270 = vst.msk [vmem:[#allocation2 + $0xe8] sm:$0x3] %vm242, 0.0
      %271 = vst.msk [vmem:[#allocation2 + $0xf0] sm:$0xff] %vm239, 0.0
      %272 = vst.msk [vmem:[#allocation2 + $0xf8] sm:$0xff] %vm239, 0.0
      %273 = vst.msk [vmem:[#allocation2 + $0x100] sm:$0x3] %vm242, 0.0
      %274 = vst.msk [vmem:[#allocation2 + $0x108] sm:$0xff] %vm239, 0.0
      %275 = vst.msk [vmem:[#allocation2 + $0x110] sm:$0xff] %vm239, 0.0
      %276 = vst.msk [vmem:[#allocation2 + $0x118] sm:$0x3] %vm242, 0.0
      %277 = vst.msk [vmem:[#allocation2 + $0x120] sm:$0xff] %vm239, 0.0
      %278 = vst.msk [vmem:[#allocation2 + $0x128] sm:$0xff] %vm239, 0.0
      %279 = vst.msk [vmem:[#allocation2 + $0x130] sm:$0x3] %vm242, 0.0
      %280 = vst.msk [vmem:[#allocation2 + $0x138] sm:$0xff] %vm239, 0.0
      %281 = vst.msk [vmem:[#allocation2 + $0x140] sm:$0xff] %vm239, 0.0
      %282 = vst.msk [vmem:[#allocation2 + $0x148] sm:$0x3] %vm242, 0.0
      %283 = vst.msk [vmem:[#allocation2 + $0x150] sm:$0xff] %vm239, 0.0
      %284 = vst.msk [vmem:[#allocation2 + $0x158] sm:$0xff] %vm239, 0.0
      %285 = vst.msk [vmem:[#allocation2 + $0x160] sm:$0x3] %vm242, 0.0
      %286 = vst.msk [vmem:[#allocation2 + $0x168] sm:$0xff] %vm239, 0.0
      %287 = vst.msk [vmem:[#allocation2 + $0x170] sm:$0xff] %vm239, 0.0
      %288 = vst.msk [vmem:[#allocation2 + $0x178] sm:$0x3] %vm242, 0.0
      %289 = vst.msk [vmem:[#allocation2 + $0x180] sm:$0xff] %vm239, 0.0
      %290 = vst.msk [vmem:[#allocation2 + $0x188] sm:$0xff] %vm239, 0.0
      %291 = vst.msk [vmem:[#allocation2 + $0x190] sm:$0x3] %vm242, 0.0
      %292 = vst.msk [vmem:[#allocation2 + $0x198] sm:$0xff] %vm239, 0.0
      %293 = vst.msk [vmem:[#allocation2 + $0x1a0] sm:$0xff] %vm239, 0.0
      %294 = vst.msk [vmem:[#allocation2 + $0x1a8] sm:$0x3] %vm242, 0.0
      %s295 = scalar_lea.vmem [#allocation2], 24
      %296 = vst.msk [vmem:[%s295 + $0x1] sm:$0xff] %vm239, %v171
      %297 = vst.msk [vmem:[%s295 + $0x9] sm:$0xff] %vm239, %v172
      %298 = vst.msk [vmem:[%s295 + $0x19] sm:$0xff] %vm239, %v173
      %299 = vst.msk [vmem:[%s295 + $0x21] sm:$0xff] %vm239, %v174
      %300 = vst.msk [vmem:[%s295 + $0x31] sm:$0xff] %vm239, %v175
      %301 = vst.msk [vmem:[%s295 + $0x39] sm:$0xff] %vm239, %v176
      %302 = vst.msk [vmem:[%s295 + $0x49] sm:$0xff] %vm239, %v177
      %303 = vst.msk [vmem:[%s295 + $0x51] sm:$0xff] %vm239, %v178
      %304 = vst.msk [vmem:[%s295 + $0x61] sm:$0xff] %vm239, %v179
      %305 = vst.msk [vmem:[%s295 + $0x69] sm:$0xff] %vm239, %v180
      %306 = vst.msk [vmem:[%s295 + $0x79] sm:$0xff] %vm239, %v181
      %307 = vst.msk [vmem:[%s295 + $0x81] sm:$0xff] %vm239, %v182
      %308 = vst.msk [vmem:[%s295 + $0x91] sm:$0xff] %vm239, %v183
      %309 = vst.msk [vmem:[%s295 + $0x99] sm:$0xff] %vm239, %v184
      %310 = vst.msk [vmem:[%s295 + $0xa9] sm:$0xff] %vm239, %v185
      %311 = vst.msk [vmem:[%s295 + $0xb1] sm:$0xff] %vm239, %v186
      %312 = vst.msk [vmem:[%s295 + $0xc1] sm:$0xff] %vm239, %v187
      %313 = vst.msk [vmem:[%s295 + $0xc9] sm:$0xff] %vm239, %v188
      %314 = vst.msk [vmem:[%s295 + $0xd9] sm:$0xff] %vm239, %v189
      %315 = vst.msk [vmem:[%s295 + $0xe1] sm:$0xff] %vm239, %v190
      %316 = vst.msk [vmem:[%s295 + $0xf1] sm:$0xff] %vm239, %v191
      %317 = vst.msk [vmem:[%s295 + $0xf9] sm:$0xff] %vm239, %v192
      %318 = vst.msk [vmem:[%s295 + $0x109] sm:$0xff] %vm239, %v193
      %319 = vst.msk [vmem:[%s295 + $0x111] sm:$0xff] %vm239, %v194
      %320 = vst.msk [vmem:[%s295 + $0x121] sm:$0xff] %vm239, %v195
      %321 = vst.msk [vmem:[%s295 + $0x129] sm:$0xff] %vm239, %v196
      %322 = vst.msk [vmem:[%s295 + $0x139] sm:$0xff] %vm239, %v197
      %323 = vst.msk [vmem:[%s295 + $0x141] sm:$0xff] %vm239, %v198
      %324 = vst.msk [vmem:[%s295 + $0x151] sm:$0xff] %vm239, %v199
      %325 = vst.msk [vmem:[%s295 + $0x159] sm:$0xff] %vm239, %v200
      %326 = vst.msk [vmem:[%s295 + $0x169] sm:$0xff] %vm239, %v201
      %327 = vst.msk [vmem:[%s295 + $0x171] sm:$0xff] %vm239, %v202
      %v328 = vld [vmem:[#allocation2] sm:$0xff]
      %v329 = vld [vmem:[#allocation2 + $0x8] sm:$0xff]
      %v330 = vld [vmem:[#allocation2 + $0x18] sm:$0xff]
      %v331 = vld [vmem:[#allocation2 + $0x20] sm:$0xff]
      %v332 = vld [vmem:[#allocation2 + $0x30] sm:$0xff]
      %v333 = vld [vmem:[#allocation2 + $0x38] sm:$0xff]
      %v334 = vld [vmem:[#allocation2 + $0x48] sm:$0xff]
      %v335 = vld [vmem:[#allocation2 + $0x50] sm:$0xff]
      %v336 = vld [vmem:[#allocation2 + $0x60] sm:$0xff]
      %v337 = vld [vmem:[#allocation2 + $0x68] sm:$0xff]
      %v338 = vld [vmem:[#allocation2 + $0x78] sm:$0xff]
      %v339 = vld [vmem:[#allocation2 + $0x80] sm:$0xff]
      %v340 = vld [vmem:[#allocation2 + $0x90] sm:$0xff]
      %v341 = vld [vmem:[#allocation2 + $0x98] sm:$0xff]
      %v342 = vld [vmem:[#allocation2 + $0xa8] sm:$0xff]
      %v343 = vld [vmem:[#allocation2 + $0xb0] sm:$0xff]
      %v344 = vld [vmem:[#allocation2 + $0xc0] sm:$0xff]
      %v345 = vld [vmem:[#allocation2 + $0xc8] sm:$0xff]
      %v346 = vld [vmem:[#allocation2 + $0xd8] sm:$0xff]
      %v347 = vld [vmem:[#allocation2 + $0xe0] sm:$0xff]
      %v348 = vld [vmem:[#allocation2 + $0xf0] sm:$0xff]
      %v349 = vld [vmem:[#allocation2 + $0xf8] sm:$0xff]
      %v350 = vld [vmem:[#allocation2 + $0x108] sm:$0xff]
      %v351 = vld [vmem:[#allocation2 + $0x110] sm:$0xff]
      %v352 = vld [vmem:[#allocation2 + $0x120] sm:$0xff]
      %v353 = vld [vmem:[#allocation2 + $0x128] sm:$0xff]
      %v354 = vld [vmem:[#allocation2 + $0x138] sm:$0xff]
      %v355 = vld [vmem:[#allocation2 + $0x140] sm:$0xff]
      %v356 = vld [vmem:[#allocation2 + $0x150] sm:$0xff]
      %v357 = vld [vmem:[#allocation2 + $0x158] sm:$0xff]
      %v358 = vld [vmem:[#allocation2 + $0x168] sm:$0xff]
      %v359 = vld [vmem:[#allocation2 + $0x170] sm:$0xff]
      %v360 = vld [vmem:[#allocation2 + $0x1] sm:$0xff]
      %v361 = vld [vmem:[#allocation2 + $0x9] sm:$0xff]
      %v362 = vld [vmem:[#allocation2 + $0x19] sm:$0xff]
      %v363 = vld [vmem:[#allocation2 + $0x21] sm:$0xff]
      %v364 = vld [vmem:[#allocation2 + $0x31] sm:$0xff]
      %v365 = vld [vmem:[#allocation2 + $0x39] sm:$0xff]
      %v366 = vld [vmem:[#allocation2 + $0x49] sm:$0xff]
      %v367 = vld [vmem:[#allocation2 + $0x51] sm:$0xff]
      %v368 = vld [vmem:[#allocation2 + $0x61] sm:$0xff]
      %v369 = vld [vmem:[#allocation2 + $0x69] sm:$0xff]
      %v370 = vld [vmem:[#allocation2 + $0x79] sm:$0xff]
      %v371 = vld [vmem:[#allocation2 + $0x81] sm:$0xff]
      %v372 = vld [vmem:[#allocation2 + $0x91] sm:$0xff]
      %v373 = vld [vmem:[#allocation2 + $0x99] sm:$0xff]
      %v374 = vld [vmem:[#allocation2 + $0xa9] sm:$0xff]
      %v375 = vld [vmem:[#allocation2 + $0xb1] sm:$0xff]
      %v376 = vld [vmem:[#allocation2 + $0xc1] sm:$0xff]
      %v377 = vld [vmem:[#allocation2 + $0xc9] sm:$0xff]
      %v378 = vld [vmem:[#allocation2 + $0xd9] sm:$0xff]
      %v379 = vld [vmem:[#allocation2 + $0xe1] sm:$0xff]
      %v380 = vld [vmem:[#allocation2 + $0xf1] sm:$0xff]
      %v381 = vld [vmem:[#allocation2 + $0xf9] sm:$0xff]
      %v382 = vld [vmem:[#allocation2 + $0x109] sm:$0xff]
      %v383 = vld [vmem:[#allocation2 + $0x111] sm:$0xff]
      %v384 = vld [vmem:[#allocation2 + $0x121] sm:$0xff]
      %v385 = vld [vmem:[#allocation2 + $0x129] sm:$0xff]
      %v386 = vld [vmem:[#allocation2 + $0x139] sm:$0xff]
      %v387 = vld [vmem:[#allocation2 + $0x141] sm:$0xff]
      %v388 = vld [vmem:[#allocation2 + $0x151] sm:$0xff]
      %v389 = vld [vmem:[#allocation2 + $0x159] sm:$0xff]
      %v390 = vld [vmem:[#allocation2 + $0x169] sm:$0xff]
      %v391 = vld [vmem:[#allocation2 + $0x171] sm:$0xff]
      %v392 = vld [vmem:[#allocation2 + $0x2] sm:$0xff]
      %v393 = vld [vmem:[#allocation2 + $0xa] sm:$0xff]
      %v394 = vld [vmem:[#allocation2 + $0x1a] sm:$0xff]
      %v395 = vld [vmem:[#allocation2 + $0x22] sm:$0xff]
      %v396 = vld [vmem:[#allocation2 + $0x32] sm:$0xff]
      %v397 = vld [vmem:[#allocation2 + $0x3a] sm:$0xff]
      %v398 = vld [vmem:[#allocation2 + $0x4a] sm:$0xff]
      %v399 = vld [vmem:[#allocation2 + $0x52] sm:$0xff]
      %v400 = vld [vmem:[#allocation2 + $0x62] sm:$0xff]
      %v401 = vld [vmem:[#allocation2 + $0x6a] sm:$0xff]
      %v402 = vld [vmem:[#allocation2 + $0x7a] sm:$0xff]
      %v403 = vld [vmem:[#allocation2 + $0x82] sm:$0xff]
      %v404 = vld [vmem:[#allocation2 + $0x92] sm:$0xff]
      %v405 = vld [vmem:[#allocation2 + $0x9a] sm:$0xff]
      %v406 = vld [vmem:[#allocation2 + $0xaa] sm:$0xff]
      %v407 = vld [vmem:[#allocation2 + $0xb2] sm:$0xff]
      %v408 = vld [vmem:[#allocation2 + $0xc2] sm:$0xff]
      %v409 = vld [vmem:[#allocation2 + $0xca] sm:$0xff]
      %v410 = vld [vmem:[#allocation2 + $0xda] sm:$0xff]
      %v411 = vld [vmem:[#allocation2 + $0xe2] sm:$0xff]
      %v412 = vld [vmem:[#allocation2 + $0xf2] sm:$0xff]
      %v413 = vld [vmem:[#allocation2 + $0xfa] sm:$0xff]
      %v414 = vld [vmem:[#allocation2 + $0x10a] sm:$0xff]
      %v415 = vld [vmem:[#allocation2 + $0x112] sm:$0xff]
      %v416 = vld [vmem:[#allocation2 + $0x122] sm:$0xff]
      %v417 = vld [vmem:[#allocation2 + $0x12a] sm:$0xff]
      %v418 = vld [vmem:[#allocation2 + $0x13a] sm:$0xff]
      %v419 = vld [vmem:[#allocation2 + $0x142] sm:$0xff]
      %v420 = vld [vmem:[#allocation2 + $0x152] sm:$0xff]
      %v421 = vld [vmem:[#allocation2 + $0x15a] sm:$0xff]
      %v422 = vld [vmem:[#allocation2 + $0x16a] sm:$0xff]
      %v423 = vld [vmem:[#allocation2 + $0x172] sm:$0xff]
      %v424 = vld [vmem:[%s295] sm:$0xff]
      %v425 = vld [vmem:[%s295 + $0x8] sm:$0xff]
      %v426 = vld [vmem:[%s295 + $0x18] sm:$0xff]
      %v427 = vld [vmem:[%s295 + $0x20] sm:$0xff]
      %v428 = vld [vmem:[%s295 + $0x30] sm:$0xff]
      %v429 = vld [vmem:[%s295 + $0x38] sm:$0xff]
      %v430 = vld [vmem:[%s295 + $0x48] sm:$0xff]
      %v431 = vld [vmem:[%s295 + $0x50] sm:$0xff]
      %v432 = vld [vmem:[%s295 + $0x60] sm:$0xff]
      %v433 = vld [vmem:[%s295 + $0x68] sm:$0xff]
      %v434 = vld [vmem:[%s295 + $0x78] sm:$0xff]
      %v435 = vld [vmem:[%s295 + $0x80] sm:$0xff]
      %v436 = vld [vmem:[%s295 + $0x90] sm:$0xff]
      %v437 = vld [vmem:[%s295 + $0x98] sm:$0xff]
      %v438 = vld [vmem:[%s295 + $0xa8] sm:$0xff]
      %v439 = vld [vmem:[%s295 + $0xb0] sm:$0xff]
      %v440 = vld [vmem:[%s295 + $0xc0] sm:$0xff]
      %v441 = vld [vmem:[%s295 + $0xc8] sm:$0xff]
      %v442 = vld [vmem:[%s295 + $0xd8] sm:$0xff]
      %v443 = vld [vmem:[%s295 + $0xe0] sm:$0xff]
      %v444 = vld [vmem:[%s295 + $0xf0] sm:$0xff]
      %v445 = vld [vmem:[%s295 + $0xf8] sm:$0xff]
      %v446 = vld [vmem:[%s295 + $0x108] sm:$0xff]
      %v447 = vld [vmem:[%s295 + $0x110] sm:$0xff]
      %v448 = vld [vmem:[%s295 + $0x120] sm:$0xff]
      %v449 = vld [vmem:[%s295 + $0x128] sm:$0xff]
      %v450 = vld [vmem:[%s295 + $0x138] sm:$0xff]
      %v451 = vld [vmem:[%s295 + $0x140] sm:$0xff]
      %v452 = vld [vmem:[%s295 + $0x150] sm:$0xff]
      %v453 = vld [vmem:[%s295 + $0x158] sm:$0xff]
      %v454 = vld [vmem:[%s295 + $0x168] sm:$0xff]
      %v455 = vld [vmem:[%s295 + $0x170] sm:$0xff]
      %v456 = vld [vmem:[%s295 + $0x1] sm:$0xff]
      %v457 = vld [vmem:[%s295 + $0x9] sm:$0xff]
      %v458 = vld [vmem:[%s295 + $0x19] sm:$0xff]
      %v459 = vld [vmem:[%s295 + $0x21] sm:$0xff]
      %v460 = vld [vmem:[%s295 + $0x31] sm:$0xff]
      %v461 = vld [vmem:[%s295 + $0x39] sm:$0xff]
      %v462 = vld [vmem:[%s295 + $0x49] sm:$0xff]
      %v463 = vld [vmem:[%s295 + $0x51] sm:$0xff]
      %v464 = vld [vmem:[%s295 + $0x61] sm:$0xff]
      %v465 = vld [vmem:[%s295 + $0x69] sm:$0xff]
      %v466 = vld [vmem:[%s295 + $0x79] sm:$0xff]
      %v467 = vld [vmem:[%s295 + $0x81] sm:$0xff]
      %v468 = vld [vmem:[%s295 + $0x91] sm:$0xff]
      %v469 = vld [vmem:[%s295 + $0x99] sm:$0xff]
      %v470 = vld [vmem:[%s295 + $0xa9] sm:$0xff]
      %v471 = vld [vmem:[%s295 + $0xb1] sm:$0xff]
      %v472 = vld [vmem:[%s295 + $0xc1] sm:$0xff]
      %v473 = vld [vmem:[%s295 + $0xc9] sm:$0xff]
      %v474 = vld [vmem:[%s295 + $0xd9] sm:$0xff]
      %v475 = vld [vmem:[%s295 + $0xe1] sm:$0xff]
      %v476 = vld [vmem:[%s295 + $0xf1] sm:$0xff]
      %v477 = vld [vmem:[%s295 + $0xf9] sm:$0xff]
      %v478 = vld [vmem:[%s295 + $0x109] sm:$0xff]
      %v479 = vld [vmem:[%s295 + $0x111] sm:$0xff]
      %v480 = vld [vmem:[%s295 + $0x121] sm:$0xff]
      %v481 = vld [vmem:[%s295 + $0x129] sm:$0xff]
      %v482 = vld [vmem:[%s295 + $0x139] sm:$0xff]
      %v483 = vld [vmem:[%s295 + $0x141] sm:$0xff]
      %v484 = vld [vmem:[%s295 + $0x151] sm:$0xff]
      %v485 = vld [vmem:[%s295 + $0x159] sm:$0xff]
      %v486 = vld [vmem:[%s295 + $0x169] sm:$0xff]
      %v487 = vld [vmem:[%s295 + $0x171] sm:$0xff]
      %v488 = vld [vmem:[%s295 + $0x2] sm:$0xff]
      %v489 = vld [vmem:[%s295 + $0xa] sm:$0xff]
      %v490 = vld [vmem:[%s295 + $0x1a] sm:$0xff]
      %v491 = vld [vmem:[%s295 + $0x22] sm:$0xff]
      %v492 = vld [vmem:[%s295 + $0x32] sm:$0xff]
      %v493 = vld [vmem:[%s295 + $0x3a] sm:$0xff]
      %v494 = vld [vmem:[%s295 + $0x4a] sm:$0xff]
      %v495 = vld [vmem:[%s295 + $0x52] sm:$0xff]
      %v496 = vld [vmem:[%s295 + $0x62] sm:$0xff]
      %v497 = vld [vmem:[%s295 + $0x6a] sm:$0xff]
      %v498 = vld [vmem:[%s295 + $0x7a] sm:$0xff]
      %v499 = vld [vmem:[%s295 + $0x82] sm:$0xff]
      %v500 = vld [vmem:[%s295 + $0x92] sm:$0xff]
      %v501 = vld [vmem:[%s295 + $0x9a] sm:$0xff]
      %v502 = vld [vmem:[%s295 + $0xaa] sm:$0xff]
      %v503 = vld [vmem:[%s295 + $0xb2] sm:$0xff]
      %v504 = vld [vmem:[%s295 + $0xc2] sm:$0xff]
      %v505 = vld [vmem:[%s295 + $0xca] sm:$0xff]
      %v506 = vld [vmem:[%s295 + $0xda] sm:$0xff]
      %v507 = vld [vmem:[%s295 + $0xe2] sm:$0xff]
      %v508 = vld [vmem:[%s295 + $0xf2] sm:$0xff]
      %v509 = vld [vmem:[%s295 + $0xfa] sm:$0xff]
      %v510 = vld [vmem:[%s295 + $0x10a] sm:$0xff]
      %v511 = vld [vmem:[%s295 + $0x112] sm:$0xff]
      %v512 = vld [vmem:[%s295 + $0x122] sm:$0xff]
      %v513 = vld [vmem:[%s295 + $0x12a] sm:$0xff]
      %v514 = vld [vmem:[%s295 + $0x13a] sm:$0xff]
      %v515 = vld [vmem:[%s295 + $0x142] sm:$0xff]
      %v516 = vld [vmem:[%s295 + $0x152] sm:$0xff]
      %v517 = vld [vmem:[%s295 + $0x15a] sm:$0xff]
      %v518 = vld [vmem:[%s295 + $0x16a] sm:$0xff]
      %v519 = vld [vmem:[%s295 + $0x172] sm:$0xff]
      %s520 = scalar_lea.vmem [#allocation2], 48
      %v521 = vld [vmem:[%s520] sm:$0xff]
      %v522 = vld [vmem:[%s520 + $0x8] sm:$0xff]
      %v523 = vld [vmem:[%s520 + $0x18] sm:$0xff]
      %v524 = vld [vmem:[%s520 + $0x20] sm:$0xff]
      %v525 = vld [vmem:[%s520 + $0x30] sm:$0xff]
      %v526 = vld [vmem:[%s520 + $0x38] sm:$0xff]
      %v527 = vld [vmem:[%s520 + $0x48] sm:$0xff]
      %v528 = vld [vmem:[%s520 + $0x50] sm:$0xff]
      %v529 = vld [vmem:[%s520 + $0x60] sm:$0xff]
      %v530 = vld [vmem:[%s520 + $0x68] sm:$0xff]
      %v531 = vld [vmem:[%s520 + $0x78] sm:$0xff]
      %v532 = vld [vmem:[%s520 + $0x80] sm:$0xff]
      %v533 = vld [vmem:[%s520 + $0x90] sm:$0xff]
      %v534 = vld [vmem:[%s520 + $0x98] sm:$0xff]
      %v535 = vld [vmem:[%s520 + $0xa8] sm:$0xff]
      %v536 = vld [vmem:[%s520 + $0xb0] sm:$0xff]
      %v537 = vld [vmem:[%s520 + $0xc0] sm:$0xff]
      %v538 = vld [vmem:[%s520 + $0xc8] sm:$0xff]
      %v539 = vld [vmem:[%s520 + $0xd8] sm:$0xff]
      %v540 = vld [vmem:[%s520 + $0xe0] sm:$0xff]
      %v541 = vld [vmem:[%s520 + $0xf0] sm:$0xff]
      %v542 = vld [vmem:[%s520 + $0xf8] sm:$0xff]
      %v543 = vld [vmem:[%s520 + $0x108] sm:$0xff]
      %v544 = vld [vmem:[%s520 + $0x110] sm:$0xff]
      %v545 = vld [vmem:[%s520 + $0x120] sm:$0xff]
      %v546 = vld [vmem:[%s520 + $0x128] sm:$0xff]
      %v547 = vld [vmem:[%s520 + $0x138] sm:$0xff]
      %v548 = vld [vmem:[%s520 + $0x140] sm:$0xff]
      %v549 = vld [vmem:[%s520 + $0x150] sm:$0xff]
      %v550 = vld [vmem:[%s520 + $0x158] sm:$0xff]
      %v551 = vld [vmem:[%s520 + $0x168] sm:$0xff]
      %v552 = vld [vmem:[%s520 + $0x170] sm:$0xff]
      %v553 = vld [vmem:[%s520 + $0x1] sm:$0xff]
      %v554 = vld [vmem:[%s520 + $0x9] sm:$0xff]
      %v555 = vld [vmem:[%s520 + $0x19] sm:$0xff]
      %v556 = vld [vmem:[%s520 + $0x21] sm:$0xff]
      %v557 = vld [vmem:[%s520 + $0x31] sm:$0xff]
      %v558 = vld [vmem:[%s520 + $0x39] sm:$0xff]
      %v559 = vld [vmem:[%s520 + $0x49] sm:$0xff]
      %v560 = vld [vmem:[%s520 + $0x51] sm:$0xff]
      %v561 = vld [vmem:[%s520 + $0x61] sm:$0xff]
      %v562 = vld [vmem:[%s520 + $0x69] sm:$0xff]
      %v563 = vld [vmem:[%s520 + $0x79] sm:$0xff]
      %v564 = vld [vmem:[%s520 + $0x81] sm:$0xff]
      %v565 = vld [vmem:[%s520 + $0x91] sm:$0xff]
      %v566 = vld [vmem:[%s520 + $0x99] sm:$0xff]
      %v567 = vld [vmem:[%s520 + $0xa9] sm:$0xff]
      %v568 = vld [vmem:[%s520 + $0xb1] sm:$0xff]
      %v569 = vld [vmem:[%s520 + $0xc1] sm:$0xff]
      %v570 = vld [vmem:[%s520 + $0xc9] sm:$0xff]
      %v571 = vld [vmem:[%s520 + $0xd9] sm:$0xff]
      %v572 = vld [vmem:[%s520 + $0xe1] sm:$0xff]
      %v573 = vld [vmem:[%s520 + $0xf1] sm:$0xff]
      %v574 = vld [vmem:[%s520 + $0xf9] sm:$0xff]
      %v575 = vld [vmem:[%s520 + $0x109] sm:$0xff]
      %v576 = vld [vmem:[%s520 + $0x111] sm:$0xff]
      %v577 = vld [vmem:[%s520 + $0x121] sm:$0xff]
      %v578 = vld [vmem:[%s520 + $0x129] sm:$0xff]
      %v579 = vld [vmem:[%s520 + $0x139] sm:$0xff]
      %v580 = vld [vmem:[%s520 + $0x141] sm:$0xff]
      %v581 = vld [vmem:[%s520 + $0x151] sm:$0xff]
      %v582 = vld [vmem:[%s520 + $0x159] sm:$0xff]
      %v583 = vld [vmem:[%s520 + $0x169] sm:$0xff]
      %v584 = vld [vmem:[%s520 + $0x171] sm:$0xff]
      %v585 = vld [vmem:[%s520 + $0x2] sm:$0xff]
      %v586 = vld [vmem:[%s520 + $0xa] sm:$0xff]
      %v587 = vld [vmem:[%s520 + $0x1a] sm:$0xff]
      %v588 = vld [vmem:[%s520 + $0x22] sm:$0xff]
      %v589 = vld [vmem:[%s520 + $0x32] sm:$0xff]
      %v590 = vld [vmem:[%s520 + $0x3a] sm:$0xff]
      %v591 = vld [vmem:[%s520 + $0x4a] sm:$0xff]
      %v592 = vld [vmem:[%s520 + $0x52] sm:$0xff]
      %v593 = vld [vmem:[%s520 + $0x62] sm:$0xff]
      %v594 = vld [vmem:[%s520 + $0x6a] sm:$0xff]
      %v595 = vld [vmem:[%s520 + $0x7a] sm:$0xff]
      %v596 = vld [vmem:[%s520 + $0x82] sm:$0xff]
      %v597 = vld [vmem:[%s520 + $0x92] sm:$0xff]
      %v598 = vld [vmem:[%s520 + $0x9a] sm:$0xff]
      %v599 = vld [vmem:[%s520 + $0xaa] sm:$0xff]
      %v600 = vld [vmem:[%s520 + $0xb2] sm:$0xff]
      %v601 = vld [vmem:[%s520 + $0xc2] sm:$0xff]
      %v602 = vld [vmem:[%s520 + $0xca] sm:$0xff]
      %v603 = vld [vmem:[%s520 + $0xda] sm:$0xff]
      %v604 = vld [vmem:[%s520 + $0xe2] sm:$0xff]
      %v605 = vld [vmem:[%s520 + $0xf2] sm:$0xff]
      %v606 = vld [vmem:[%s520 + $0xfa] sm:$0xff]
      %v607 = vld [vmem:[%s520 + $0x10a] sm:$0xff]
      %v608 = vld [vmem:[%s520 + $0x112] sm:$0xff]
      %v609 = vld [vmem:[%s520 + $0x122] sm:$0xff]
      %v610 = vld [vmem:[%s520 + $0x12a] sm:$0xff]
      %v611 = vld [vmem:[%s520 + $0x13a] sm:$0xff]
      %v612 = vld [vmem:[%s520 + $0x142] sm:$0xff]
      %v613 = vld [vmem:[%s520 + $0x152] sm:$0xff]
      %v614 = vld [vmem:[%s520 + $0x15a] sm:$0xff]
      %v615 = vld [vmem:[%s520 + $0x16a] sm:$0xff]
      %v616 = vld [vmem:[%s520 + $0x172] sm:$0xff]
      %649 = vrot.lane.b32.xlu0 %v360, 32
      %v650 = vpop.permute.xlu0 %649
      %651 = vrot.lane.b32.xlu0 %v361, 32
      %v652 = vpop.permute.xlu0 %651
      %653 = vrot.lane.b32.xlu0 %v362, 32
      %v654 = vpop.permute.xlu0 %653
      %655 = vrot.lane.b32.xlu0 %v363, 32
      %v656 = vpop.permute.xlu0 %655
      %657 = vrot.lane.b32.xlu0 %v364, 32
      %v658 = vpop.permute.xlu0 %657
      %659 = vrot.lane.b32.xlu0 %v365, 32
      %v660 = vpop.permute.xlu0 %659
      %661 = vrot.lane.b32.xlu0 %v366, 32
      %v662 = vpop.permute.xlu0 %661
      %663 = vrot.lane.b32.xlu0 %v367, 32
      %v664 = vpop.permute.xlu0 %663
      %665 = vrot.lane.b32.xlu0 %v368, 32
      %v666 = vpop.permute.xlu0 %665
      %667 = vrot.lane.b32.xlu0 %v369, 32
      %v668 = vpop.permute.xlu0 %667
      %669 = vrot.lane.b32.xlu0 %v370, 32
      %v670 = vpop.permute.xlu0 %669
      %671 = vrot.lane.b32.xlu0 %v371, 32
      %v672 = vpop.permute.xlu0 %671
      %673 = vrot.lane.b32.xlu0 %v372, 32
      %v674 = vpop.permute.xlu0 %673
      %675 = vrot.lane.b32.xlu0 %v373, 32
      %v676 = vpop.permute.xlu0 %675
      %677 = vrot.lane.b32.xlu0 %v374, 32
      %v678 = vpop.permute.xlu0 %677
      %679 = vrot.lane.b32.xlu0 %v375, 32
      %v680 = vpop.permute.xlu0 %679
      %681 = vrot.lane.b32.xlu0 %v376, 32
      %v682 = vpop.permute.xlu0 %681
      %683 = vrot.lane.b32.xlu0 %v377, 32
      %v684 = vpop.permute.xlu0 %683
      %685 = vrot.lane.b32.xlu0 %v378, 32
      %v686 = vpop.permute.xlu0 %685
      %687 = vrot.lane.b32.xlu0 %v379, 32
      %v688 = vpop.permute.xlu0 %687
      %689 = vrot.lane.b32.xlu0 %v380, 32
      %v690 = vpop.permute.xlu0 %689
      %691 = vrot.lane.b32.xlu0 %v381, 32
      %v692 = vpop.permute.xlu0 %691
      %693 = vrot.lane.b32.xlu0 %v382, 32
      %v694 = vpop.permute.xlu0 %693
      %695 = vrot.lane.b32.xlu0 %v383, 32
      %v696 = vpop.permute.xlu0 %695
      %697 = vrot.lane.b32.xlu0 %v384, 32
      %v698 = vpop.permute.xlu0 %697
      %699 = vrot.lane.b32.xlu0 %v385, 32
      %v700 = vpop.permute.xlu0 %699
      %701 = vrot.lane.b32.xlu0 %v386, 32
      %v702 = vpop.permute.xlu0 %701
      %703 = vrot.lane.b32.xlu0 %v387, 32
      %v704 = vpop.permute.xlu0 %703
      %705 = vrot.lane.b32.xlu0 %v388, 32
      %v706 = vpop.permute.xlu0 %705
      %707 = vrot.lane.b32.xlu0 %v389, 32
      %v708 = vpop.permute.xlu0 %707
      %709 = vrot.lane.b32.xlu0 %v390, 32
      %v710 = vpop.permute.xlu0 %709
      %711 = vrot.lane.b32.xlu0 %v391, 32
      %v712 = vpop.permute.xlu0 %711
      %777 = vrot.lane.b32.xlu0 %v392, 64
      %v778 = vpop.permute.xlu0 %777
      %779 = vrot.lane.b32.xlu0 %v393, 64
      %v780 = vpop.permute.xlu0 %779
      %781 = vrot.lane.b32.xlu0 %v394, 64
      %v782 = vpop.permute.xlu0 %781
      %783 = vrot.lane.b32.xlu0 %v395, 64
      %v784 = vpop.permute.xlu0 %783
      %785 = vrot.lane.b32.xlu0 %v396, 64
      %v786 = vpop.permute.xlu0 %785
      %787 = vrot.lane.b32.xlu0 %v397, 64
      %v788 = vpop.permute.xlu0 %787
      %789 = vrot.lane.b32.xlu0 %v398, 64
      %v790 = vpop.permute.xlu0 %789
      %791 = vrot.lane.b32.xlu0 %v399, 64
      %v792 = vpop.permute.xlu0 %791
      %793 = vrot.lane.b32.xlu0 %v400, 64
      %v794 = vpop.permute.xlu0 %793
      %795 = vrot.lane.b32.xlu0 %v401, 64
      %v796 = vpop.permute.xlu0 %795
      %797 = vrot.lane.b32.xlu0 %v402, 64
      %v798 = vpop.permute.xlu0 %797
      %799 = vrot.lane.b32.xlu0 %v403, 64
      %v800 = vpop.permute.xlu0 %799
      %801 = vrot.lane.b32.xlu0 %v404, 64
      %v802 = vpop.permute.xlu0 %801
      %803 = vrot.lane.b32.xlu0 %v405, 64
      %v804 = vpop.permute.xlu0 %803
      %805 = vrot.lane.b32.xlu0 %v406, 64
      %v806 = vpop.permute.xlu0 %805
      %807 = vrot.lane.b32.xlu0 %v407, 64
      %v808 = vpop.permute.xlu0 %807
      %809 = vrot.lane.b32.xlu0 %v408, 64
      %v810 = vpop.permute.xlu0 %809
      %811 = vrot.lane.b32.xlu0 %v409, 64
      %v812 = vpop.permute.xlu0 %811
      %813 = vrot.lane.b32.xlu0 %v410, 64
      %v814 = vpop.permute.xlu0 %813
      %815 = vrot.lane.b32.xlu0 %v411, 64
      %v816 = vpop.permute.xlu0 %815
      %817 = vrot.lane.b32.xlu0 %v412, 64
      %v818 = vpop.permute.xlu0 %817
      %819 = vrot.lane.b32.xlu0 %v413, 64
      %v820 = vpop.permute.xlu0 %819
      %821 = vrot.lane.b32.xlu0 %v414, 64
      %v822 = vpop.permute.xlu0 %821
      %823 = vrot.lane.b32.xlu0 %v415, 64
      %v824 = vpop.permute.xlu0 %823
      %825 = vrot.lane.b32.xlu0 %v416, 64
      %v826 = vpop.permute.xlu0 %825
      %827 = vrot.lane.b32.xlu0 %v417, 64
      %v828 = vpop.permute.xlu0 %827
      %829 = vrot.lane.b32.xlu0 %v418, 64
      %v830 = vpop.permute.xlu0 %829
      %831 = vrot.lane.b32.xlu0 %v419, 64
      %v832 = vpop.permute.xlu0 %831
      %833 = vrot.lane.b32.xlu0 %v420, 64
      %v834 = vpop.permute.xlu0 %833
      %835 = vrot.lane.b32.xlu0 %v421, 64
      %v836 = vpop.permute.xlu0 %835
      %837 = vrot.lane.b32.xlu0 %v422, 64
      %v838 = vpop.permute.xlu0 %837
      %839 = vrot.lane.b32.xlu0 %v423, 64
      %v840 = vpop.permute.xlu0 %839
      %905 = vrot.lane.b32.xlu0 %v424, 96
      %v906 = vpop.permute.xlu0 %905
      %907 = vrot.lane.b32.xlu0 %v425, 96
      %v908 = vpop.permute.xlu0 %907
      %909 = vrot.lane.b32.xlu0 %v426, 96
      %v910 = vpop.permute.xlu0 %909
      %911 = vrot.lane.b32.xlu0 %v427, 96
      %v912 = vpop.permute.xlu0 %911
      %913 = vrot.lane.b32.xlu0 %v428, 96
      %v914 = vpop.permute.xlu0 %913
      %915 = vrot.lane.b32.xlu0 %v429, 96
      %v916 = vpop.permute.xlu0 %915
      %917 = vrot.lane.b32.xlu0 %v430, 96
      %v918 = vpop.permute.xlu0 %917
      %919 = vrot.lane.b32.xlu0 %v431, 96
      %v920 = vpop.permute.xlu0 %919
      %921 = vrot.lane.b32.xlu0 %v432, 96
      %v922 = vpop.permute.xlu0 %921
      %923 = vrot.lane.b32.xlu0 %v433, 96
      %v924 = vpop.permute.xlu0 %923
      %925 = vrot.lane.b32.xlu0 %v434, 96
      %v926 = vpop.permute.xlu0 %925
      %927 = vrot.lane.b32.xlu0 %v435, 96
      %v928 = vpop.permute.xlu0 %927
      %929 = vrot.lane.b32.xlu0 %v436, 96
      %v930 = vpop.permute.xlu0 %929
      %931 = vrot.lane.b32.xlu0 %v437, 96
      %v932 = vpop.permute.xlu0 %931
      %933 = vrot.lane.b32.xlu0 %v438, 96
      %v934 = vpop.permute.xlu0 %933
      %935 = vrot.lane.b32.xlu0 %v439, 96
      %v936 = vpop.permute.xlu0 %935
      %937 = vrot.lane.b32.xlu0 %v440, 96
      %v938 = vpop.permute.xlu0 %937
      %939 = vrot.lane.b32.xlu0 %v441, 96
      %v940 = vpop.permute.xlu0 %939
      %941 = vrot.lane.b32.xlu0 %v442, 96
      %v942 = vpop.permute.xlu0 %941
      %943 = vrot.lane.b32.xlu0 %v443, 96
      %v944 = vpop.permute.xlu0 %943
      %945 = vrot.lane.b32.xlu0 %v444, 96
      %v946 = vpop.permute.xlu0 %945
      %947 = vrot.lane.b32.xlu0 %v445, 96
      %v948 = vpop.permute.xlu0 %947
      %949 = vrot.lane.b32.xlu0 %v446, 96
      %v950 = vpop.permute.xlu0 %949
      %951 = vrot.lane.b32.xlu0 %v447, 96
      %v952 = vpop.permute.xlu0 %951
      %953 = vrot.lane.b32.xlu0 %v448, 96
      %v954 = vpop.permute.xlu0 %953
      %955 = vrot.lane.b32.xlu0 %v449, 96
      %v956 = vpop.permute.xlu0 %955
      %957 = vrot.lane.b32.xlu0 %v450, 96
      %v958 = vpop.permute.xlu0 %957
      %959 = vrot.lane.b32.xlu0 %v451, 96
      %v960 = vpop.permute.xlu0 %959
      %961 = vrot.lane.b32.xlu0 %v452, 96
      %v962 = vpop.permute.xlu0 %961
      %963 = vrot.lane.b32.xlu0 %v453, 96
      %v964 = vpop.permute.xlu0 %963
      %965 = vrot.lane.b32.xlu0 %v454, 96
      %v966 = vpop.permute.xlu0 %965
      %967 = vrot.lane.b32.xlu0 %v455, 96
      %v968 = vpop.permute.xlu0 %967
      %1033 = vrot.lane.b32.xlu0 %v488, 32
      %v1034 = vpop.permute.xlu0 %1033
      %1035 = vrot.lane.b32.xlu0 %v489, 32
      %v1036 = vpop.permute.xlu0 %1035
      %1037 = vrot.lane.b32.xlu0 %v490, 32
      %v1038 = vpop.permute.xlu0 %1037
      %1039 = vrot.lane.b32.xlu0 %v491, 32
      %v1040 = vpop.permute.xlu0 %1039
      %1041 = vrot.lane.b32.xlu0 %v492, 32
      %v1042 = vpop.permute.xlu0 %1041
      %1043 = vrot.lane.b32.xlu0 %v493, 32
      %v1044 = vpop.permute.xlu0 %1043
      %1045 = vrot.lane.b32.xlu0 %v494, 32
      %v1046 = vpop.permute.xlu0 %1045
      %1047 = vrot.lane.b32.xlu0 %v495, 32
      %v1048 = vpop.permute.xlu0 %1047
      %1049 = vrot.lane.b32.xlu0 %v496, 32
      %v1050 = vpop.permute.xlu0 %1049
      %1051 = vrot.lane.b32.xlu0 %v497, 32
      %v1052 = vpop.permute.xlu0 %1051
      %1053 = vrot.lane.b32.xlu0 %v498, 32
      %v1054 = vpop.permute.xlu0 %1053
      %1055 = vrot.lane.b32.xlu0 %v499, 32
      %v1056 = vpop.permute.xlu0 %1055
      %1057 = vrot.lane.b32.xlu0 %v500, 32
      %v1058 = vpop.permute.xlu0 %1057
      %1059 = vrot.lane.b32.xlu0 %v501, 32
      %v1060 = vpop.permute.xlu0 %1059
      %1061 = vrot.lane.b32.xlu0 %v502, 32
      %v1062 = vpop.permute.xlu0 %1061
      %1063 = vrot.lane.b32.xlu0 %v503, 32
      %v1064 = vpop.permute.xlu0 %1063
      %1065 = vrot.lane.b32.xlu0 %v504, 32
      %v1066 = vpop.permute.xlu0 %1065
      %1067 = vrot.lane.b32.xlu0 %v505, 32
      %v1068 = vpop.permute.xlu0 %1067
      %1069 = vrot.lane.b32.xlu0 %v506, 32
      %v1070 = vpop.permute.xlu0 %1069
      %1071 = vrot.lane.b32.xlu0 %v507, 32
      %v1072 = vpop.permute.xlu0 %1071
      %1073 = vrot.lane.b32.xlu0 %v508, 32
      %v1074 = vpop.permute.xlu0 %1073
      %1075 = vrot.lane.b32.xlu0 %v509, 32
      %v1076 = vpop.permute.xlu0 %1075
      %1077 = vrot.lane.b32.xlu0 %v510, 32
      %v1078 = vpop.permute.xlu0 %1077
      %1079 = vrot.lane.b32.xlu0 %v511, 32
      %v1080 = vpop.permute.xlu0 %1079
      %1081 = vrot.lane.b32.xlu0 %v512, 32
      %v1082 = vpop.permute.xlu0 %1081
      %1083 = vrot.lane.b32.xlu0 %v513, 32
      %v1084 = vpop.permute.xlu0 %1083
      %1085 = vrot.lane.b32.xlu0 %v514, 32
      %v1086 = vpop.permute.xlu0 %1085
      %1087 = vrot.lane.b32.xlu0 %v515, 32
      %v1088 = vpop.permute.xlu0 %1087
      %1089 = vrot.lane.b32.xlu0 %v516, 32
      %v1090 = vpop.permute.xlu0 %1089
      %1091 = vrot.lane.b32.xlu0 %v517, 32
      %v1092 = vpop.permute.xlu0 %1091
      %1093 = vrot.lane.b32.xlu0 %v518, 32
      %v1094 = vpop.permute.xlu0 %1093
      %1095 = vrot.lane.b32.xlu0 %v519, 32
      %v1096 = vpop.permute.xlu0 %1095
      %1161 = vrot.lane.b32.xlu0 %v521, 64
      %v1162 = vpop.permute.xlu0 %1161
      %1163 = vrot.lane.b32.xlu0 %v522, 64
      %v1164 = vpop.permute.xlu0 %1163
      %1165 = vrot.lane.b32.xlu0 %v523, 64
      %v1166 = vpop.permute.xlu0 %1165
      %1167 = vrot.lane.b32.xlu0 %v524, 64
      %v1168 = vpop.permute.xlu0 %1167
      %1169 = vrot.lane.b32.xlu0 %v525, 64
      %v1170 = vpop.permute.xlu0 %1169
      %1171 = vrot.lane.b32.xlu0 %v526, 64
      %v1172 = vpop.permute.xlu0 %1171
      %1173 = vrot.lane.b32.xlu0 %v527, 64
      %v1174 = vpop.permute.xlu0 %1173
      %1175 = vrot.lane.b32.xlu0 %v528, 64
      %v1176 = vpop.permute.xlu0 %1175
      %1177 = vrot.lane.b32.xlu0 %v529, 64
      %v1178 = vpop.permute.xlu0 %1177
      %1179 = vrot.lane.b32.xlu0 %v530, 64
      %v1180 = vpop.permute.xlu0 %1179
      %1181 = vrot.lane.b32.xlu0 %v531, 64
      %v1182 = vpop.permute.xlu0 %1181
      %1183 = vrot.lane.b32.xlu0 %v532, 64
      %v1184 = vpop.permute.xlu0 %1183
      %1185 = vrot.lane.b32.xlu0 %v533, 64
      %v1186 = vpop.permute.xlu0 %1185
      %1187 = vrot.lane.b32.xlu0 %v534, 64
      %v1188 = vpop.permute.xlu0 %1187
      %1189 = vrot.lane.b32.xlu0 %v535, 64
      %v1190 = vpop.permute.xlu0 %1189
      %1191 = vrot.lane.b32.xlu0 %v536, 64
      %v1192 = vpop.permute.xlu0 %1191
      %1193 = vrot.lane.b32.xlu0 %v537, 64
      %v1194 = vpop.permute.xlu0 %1193
      %1195 = vrot.lane.b32.xlu0 %v538, 64
      %v1196 = vpop.permute.xlu0 %1195
      %1197 = vrot.lane.b32.xlu0 %v539, 64
      %v1198 = vpop.permute.xlu0 %1197
      %1199 = vrot.lane.b32.xlu0 %v540, 64
      %v1200 = vpop.permute.xlu0 %1199
      %1201 = vrot.lane.b32.xlu0 %v541, 64
      %v1202 = vpop.permute.xlu0 %1201
      %1203 = vrot.lane.b32.xlu0 %v542, 64
      %v1204 = vpop.permute.xlu0 %1203
      %1205 = vrot.lane.b32.xlu0 %v543, 64
      %v1206 = vpop.permute.xlu0 %1205
      %1207 = vrot.lane.b32.xlu0 %v544, 64
      %v1208 = vpop.permute.xlu0 %1207
      %1209 = vrot.lane.b32.xlu0 %v545, 64
      %v1210 = vpop.permute.xlu0 %1209
      %1211 = vrot.lane.b32.xlu0 %v546, 64
      %v1212 = vpop.permute.xlu0 %1211
      %1213 = vrot.lane.b32.xlu0 %v547, 64
      %v1214 = vpop.permute.xlu0 %1213
      %1215 = vrot.lane.b32.xlu0 %v548, 64
      %v1216 = vpop.permute.xlu0 %1215
      %1217 = vrot.lane.b32.xlu0 %v549, 64
      %v1218 = vpop.permute.xlu0 %1217
      %1219 = vrot.lane.b32.xlu0 %v550, 64
      %v1220 = vpop.permute.xlu0 %1219
      %1221 = vrot.lane.b32.xlu0 %v551, 64
      %v1222 = vpop.permute.xlu0 %1221
      %1223 = vrot.lane.b32.xlu0 %v552, 64
      %v1224 = vpop.permute.xlu0 %1223
      %1289 = vrot.lane.b32.xlu0 %v553, 96
      %v1290 = vpop.permute.xlu0 %1289
      %1291 = vrot.lane.b32.xlu0 %v554, 96
      %v1292 = vpop.permute.xlu0 %1291
      %1293 = vrot.lane.b32.xlu0 %v555, 96
      %v1294 = vpop.permute.xlu0 %1293
      %1295 = vrot.lane.b32.xlu0 %v556, 96
      %v1296 = vpop.permute.xlu0 %1295
      %1297 = vrot.lane.b32.xlu0 %v557, 96
      %v1298 = vpop.permute.xlu0 %1297
      %1299 = vrot.lane.b32.xlu0 %v558, 96
      %v1300 = vpop.permute.xlu0 %1299
      %1301 = vrot.lane.b32.xlu0 %v559, 96
      %v1302 = vpop.permute.xlu0 %1301
      %1303 = vrot.lane.b32.xlu0 %v560, 96
      %v1304 = vpop.permute.xlu0 %1303
      %1305 = vrot.lane.b32.xlu0 %v561, 96
      %v1306 = vpop.permute.xlu0 %1305
      %1307 = vrot.lane.b32.xlu0 %v562, 96
      %v1308 = vpop.permute.xlu0 %1307
      %1309 = vrot.lane.b32.xlu0 %v563, 96
      %v1310 = vpop.permute.xlu0 %1309
      %1311 = vrot.lane.b32.xlu0 %v564, 96
      %v1312 = vpop.permute.xlu0 %1311
      %1313 = vrot.lane.b32.xlu0 %v565, 96
      %v1314 = vpop.permute.xlu0 %1313
      %1315 = vrot.lane.b32.xlu0 %v566, 96
      %v1316 = vpop.permute.xlu0 %1315
      %1317 = vrot.lane.b32.xlu0 %v567, 96
      %v1318 = vpop.permute.xlu0 %1317
      %1319 = vrot.lane.b32.xlu0 %v568, 96
      %v1320 = vpop.permute.xlu0 %1319
      %1321 = vrot.lane.b32.xlu0 %v569, 96
      %v1322 = vpop.permute.xlu0 %1321
      %1323 = vrot.lane.b32.xlu0 %v570, 96
      %v1324 = vpop.permute.xlu0 %1323
      %1325 = vrot.lane.b32.xlu0 %v571, 96
      %v1326 = vpop.permute.xlu0 %1325
      %1327 = vrot.lane.b32.xlu0 %v572, 96
      %v1328 = vpop.permute.xlu0 %1327
      %1329 = vrot.lane.b32.xlu0 %v573, 96
      %v1330 = vpop.permute.xlu0 %1329
      %1331 = vrot.lane.b32.xlu0 %v574, 96
      %v1332 = vpop.permute.xlu0 %1331
      %1333 = vrot.lane.b32.xlu0 %v575, 96
      %v1334 = vpop.permute.xlu0 %1333
      %1335 = vrot.lane.b32.xlu0 %v576, 96
      %v1336 = vpop.permute.xlu0 %1335
      %1337 = vrot.lane.b32.xlu0 %v577, 96
      %v1338 = vpop.permute.xlu0 %1337
      %1339 = vrot.lane.b32.xlu0 %v578, 96
      %v1340 = vpop.permute.xlu0 %1339
      %1341 = vrot.lane.b32.xlu0 %v579, 96
      %v1342 = vpop.permute.xlu0 %1341
      %1343 = vrot.lane.b32.xlu0 %v580, 96
      %v1344 = vpop.permute.xlu0 %1343
      %1345 = vrot.lane.b32.xlu0 %v581, 96
      %v1346 = vpop.permute.xlu0 %1345
      %1347 = vrot.lane.b32.xlu0 %v582, 96
      %v1348 = vpop.permute.xlu0 %1347
      %1349 = vrot.lane.b32.xlu0 %v583, 96
      %v1350 = vpop.permute.xlu0 %1349
      %1351 = vrot.lane.b32.xlu0 %v584, 96
      %v1352 = vpop.permute.xlu0 %1351
      %v1385 = vsel %vm239, %v328, %v650
      %v1386 = vsel %vm239, %v329, %v652
      %v1387 = vsel %vm239, %v330, %v654
      %v1388 = vsel %vm239, %v331, %v656
      %v1389 = vsel %vm239, %v332, %v658
      %v1390 = vsel %vm239, %v333, %v660
      %v1391 = vsel %vm239, %v334, %v662
      %v1392 = vsel %vm239, %v335, %v664
      %v1393 = vsel %vm239, %v336, %v666
      %v1394 = vsel %vm239, %v337, %v668
      %v1395 = vsel %vm239, %v338, %v670
      %v1396 = vsel %vm239, %v339, %v672
      %v1397 = vsel %vm239, %v340, %v674
      %v1398 = vsel %vm239, %v341, %v676
      %v1399 = vsel %vm239, %v342, %v678
      %v1400 = vsel %vm239, %v343, %v680
      %v1401 = vsel %vm239, %v344, %v682
      %v1402 = vsel %vm239, %v345, %v684
      %v1403 = vsel %vm239, %v346, %v686
      %v1404 = vsel %vm239, %v347, %v688
      %v1405 = vsel %vm239, %v348, %v690
      %v1406 = vsel %vm239, %v349, %v692
      %v1407 = vsel %vm239, %v350, %v694
      %v1408 = vsel %vm239, %v351, %v696
      %v1409 = vsel %vm239, %v352, %v698
      %v1410 = vsel %vm239, %v353, %v700
      %v1411 = vsel %vm239, %v354, %v702
      %v1412 = vsel %vm239, %v355, %v704
      %v1413 = vsel %vm239, %v356, %v706
      %v1414 = vsel %vm239, %v357, %v708
      %v1415 = vsel %vm239, %v358, %v710
      %v1416 = vsel %vm239, %v359, %v712
      %vm1417 = vcmask 523264
      %v1418 = vsel %vm1417, %v1385, %v778
      %v1419 = vsel %vm1417, %v1386, %v780
      %v1420 = vsel %vm1417, %v1387, %v782
      %v1421 = vsel %vm1417, %v1388, %v784
      %v1422 = vsel %vm1417, %v1389, %v786
      %v1423 = vsel %vm1417, %v1390, %v788
      %v1424 = vsel %vm1417, %v1391, %v790
      %v1425 = vsel %vm1417, %v1392, %v792
      %v1426 = vsel %vm1417, %v1393, %v794
      %v1427 = vsel %vm1417, %v1394, %v796
      %v1428 = vsel %vm1417, %v1395, %v798
      %v1429 = vsel %vm1417, %v1396, %v800
      %v1430 = vsel %vm1417, %v1397, %v802
      %v1431 = vsel %vm1417, %v1398, %v804
      %v1432 = vsel %vm1417, %v1399, %v806
      %v1433 = vsel %vm1417, %v1400, %v808
      %v1434 = vsel %vm1417, %v1401, %v810
      %v1435 = vsel %vm1417, %v1402, %v812
      %v1436 = vsel %vm1417, %v1403, %v814
      %v1437 = vsel %vm1417, %v1404, %v816
      %v1438 = vsel %vm1417, %v1405, %v818
      %v1439 = vsel %vm1417, %v1406, %v820
      %v1440 = vsel %vm1417, %v1407, %v822
      %v1441 = vsel %vm1417, %v1408, %v824
      %v1442 = vsel %vm1417, %v1409, %v826
      %v1443 = vsel %vm1417, %v1410, %v828
      %v1444 = vsel %vm1417, %v1411, %v830
      %v1445 = vsel %vm1417, %v1412, %v832
      %v1446 = vsel %vm1417, %v1413, %v834
      %v1447 = vsel %vm1417, %v1414, %v836
      %v1448 = vsel %vm1417, %v1415, %v838
      %v1449 = vsel %vm1417, %v1416, %v840
      %vm1450 = vcmask 785408
      %v1451 = vsel %vm1450, %v1418, %v906
      %v1452 = vsel %vm1450, %v1419, %v908
      %v1453 = vsel %vm1450, %v1420, %v910
      %v1454 = vsel %vm1450, %v1421, %v912
      %v1455 = vsel %vm1450, %v1422, %v914
      %v1456 = vsel %vm1450, %v1423, %v916
      %v1457 = vsel %vm1450, %v1424, %v918
      %v1458 = vsel %vm1450, %v1425, %v920
      %v1459 = vsel %vm1450, %v1426, %v922
      %v1460 = vsel %vm1450, %v1427, %v924
      %v1461 = vsel %vm1450, %v1428, %v926
      %v1462 = vsel %vm1450, %v1429, %v928
      %v1463 = vsel %vm1450, %v1430, %v930
      %v1464 = vsel %vm1450, %v1431, %v932
      %v1465 = vsel %vm1450, %v1432, %v934
      %v1466 = vsel %vm1450, %v1433, %v936
      %v1467 = vsel %vm1450, %v1434, %v938
      %v1468 = vsel %vm1450, %v1435, %v940
      %v1469 = vsel %vm1450, %v1436, %v942
      %v1470 = vsel %vm1450, %v1437, %v944
      %v1471 = vsel %vm1450, %v1438, %v946
      %v1472 = vsel %vm1450, %v1439, %v948
      %v1473 = vsel %vm1450, %v1440, %v950
      %v1474 = vsel %vm1450, %v1441, %v952
      %v1475 = vsel %vm1450, %v1442, %v954
      %v1476 = vsel %vm1450, %v1443, %v956
      %v1477 = vsel %vm1450, %v1444, %v958
      %v1478 = vsel %vm1450, %v1445, %v960
      %v1479 = vsel %vm1450, %v1446, %v962
      %v1480 = vsel %vm1450, %v1447, %v964
      %v1481 = vsel %vm1450, %v1448, %v966
      %v1482 = vsel %vm1450, %v1449, %v968
      %v1483 = vsel %vm239, %v456, %v1034
      %v1484 = vsel %vm239, %v457, %v1036
      %v1485 = vsel %vm239, %v458, %v1038
      %v1486 = vsel %vm239, %v459, %v1040
      %v1487 = vsel %vm239, %v460, %v1042
      %v1488 = vsel %vm239, %v461, %v1044
      %v1489 = vsel %vm239, %v462, %v1046
      %v1490 = vsel %vm239, %v463, %v1048
      %v1491 = vsel %vm239, %v464, %v1050
      %v1492 = vsel %vm239, %v465, %v1052
      %v1493 = vsel %vm239, %v466, %v1054
      %v1494 = vsel %vm239, %v467, %v1056
      %v1495 = vsel %vm239, %v468, %v1058
      %v1496 = vsel %vm239, %v469, %v1060
      %v1497 = vsel %vm239, %v470, %v1062
      %v1498 = vsel %vm239, %v471, %v1064
      %v1499 = vsel %vm239, %v472, %v1066
      %v1500 = vsel %vm239, %v473, %v1068
      %v1501 = vsel %vm239, %v474, %v1070
      %v1502 = vsel %vm239, %v475, %v1072
      %v1503 = vsel %vm239, %v476, %v1074
      %v1504 = vsel %vm239, %v477, %v1076
      %v1505 = vsel %vm239, %v478, %v1078
      %v1506 = vsel %vm239, %v479, %v1080
      %v1507 = vsel %vm239, %v480, %v1082
      %v1508 = vsel %vm239, %v481, %v1084
      %v1509 = vsel %vm239, %v482, %v1086
      %v1510 = vsel %vm239, %v483, %v1088
      %v1511 = vsel %vm239, %v484, %v1090
      %v1512 = vsel %vm239, %v485, %v1092
      %v1513 = vsel %vm239, %v486, %v1094
      %v1514 = vsel %vm239, %v487, %v1096
      %v1515 = vsel %vm1417, %v1483, %v1162
      %v1516 = vsel %vm1417, %v1484, %v1164
      %v1517 = vsel %vm1417, %v1485, %v1166
      %v1518 = vsel %vm1417, %v1486, %v1168
      %v1519 = vsel %vm1417, %v1487, %v1170
      %v1520 = vsel %vm1417, %v1488, %v1172
      %v1521 = vsel %vm1417, %v1489, %v1174
      %v1522 = vsel %vm1417, %v1490, %v1176
      %v1523 = vsel %vm1417, %v1491, %v1178
      %v1524 = vsel %vm1417, %v1492, %v1180
      %v1525 = vsel %vm1417, %v1493, %v1182
      %v1526 = vsel %vm1417, %v1494, %v1184
      %v1527 = vsel %vm1417, %v1495, %v1186
      %v1528 = vsel %vm1417, %v1496, %v1188
      %v1529 = vsel %vm1417, %v1497, %v1190
      %v1530 = vsel %vm1417, %v1498, %v1192
      %v1531 = vsel %vm1417, %v1499, %v1194
      %v1532 = vsel %vm1417, %v1500, %v1196
      %v1533 = vsel %vm1417, %v1501, %v1198
      %v1534 = vsel %vm1417, %v1502, %v1200
      %v1535 = vsel %vm1417, %v1503, %v1202
      %v1536 = vsel %vm1417, %v1504, %v1204
      %v1537 = vsel %vm1417, %v1505, %v1206
      %v1538 = vsel %vm1417, %v1506, %v1208
      %v1539 = vsel %vm1417, %v1507, %v1210
      %v1540 = vsel %vm1417, %v1508, %v1212
      %v1541 = vsel %vm1417, %v1509, %v1214
      %v1542 = vsel %vm1417, %v1510, %v1216
      %v1543 = vsel %vm1417, %v1511, %v1218
      %v1544 = vsel %vm1417, %v1512, %v1220
      %v1545 = vsel %vm1417, %v1513, %v1222
      %v1546 = vsel %vm1417, %v1514, %v1224
      %v1547 = vsel %vm1450, %v1515, %v1290
      %v1548 = vsel %vm1450, %v1516, %v1292
      %v1549 = vsel %vm1450, %v1517, %v1294
      %v1550 = vsel %vm1450, %v1518, %v1296
      %v1551 = vsel %vm1450, %v1519, %v1298
      %v1552 = vsel %vm1450, %v1520, %v1300
      %v1553 = vsel %vm1450, %v1521, %v1302
      %v1554 = vsel %vm1450, %v1522, %v1304
      %v1555 = vsel %vm1450, %v1523, %v1306
      %v1556 = vsel %vm1450, %v1524, %v1308
      %v1557 = vsel %vm1450, %v1525, %v1310
      %v1558 = vsel %vm1450, %v1526, %v1312
      %v1559 = vsel %vm1450, %v1527, %v1314
      %v1560 = vsel %vm1450, %v1528, %v1316
      %v1561 = vsel %vm1450, %v1529, %v1318
      %v1562 = vsel %vm1450, %v1530, %v1320
      %v1563 = vsel %vm1450, %v1531, %v1322
      %v1564 = vsel %vm1450, %v1532, %v1324
      %v1565 = vsel %vm1450, %v1533, %v1326
      %v1566 = vsel %vm1450, %v1534, %v1328
      %v1567 = vsel %vm1450, %v1535, %v1330
      %v1568 = vsel %vm1450, %v1536, %v1332
      %v1569 = vsel %vm1450, %v1537, %v1334
      %v1570 = vsel %vm1450, %v1538, %v1336
      %v1571 = vsel %vm1450, %v1539, %v1338
      %v1572 = vsel %vm1450, %v1540, %v1340
      %v1573 = vsel %vm1450, %v1541, %v1342
      %v1574 = vsel %vm1450, %v1542, %v1344
      %v1575 = vsel %vm1450, %v1543, %v1346
      %v1576 = vsel %vm1450, %v1544, %v1348
      %v1577 = vsel %vm1450, %v1545, %v1350
      %v1578 = vsel %vm1450, %v1546, %v1352
      %v1579 = vld [vmem:[%s2] sm:$0x1]
      %v1581 = vlaneseq
      %v1582 = vshrl.u32 %v1581, 7
      %v1583 = vsub.s32 0, %v1582
      %v1584 = vrot.slane %v1579, %v1583
      %v1587 = vsel %vm239, %v585, 0
      %v1590 = vsel %vm239, %v586, 0
      %v1593 = vsel %vm239, %v587, 0
      %v1596 = vsel %vm239, %v588, 0
      %v1599 = vsel %vm239, %v589, 0
      %v1602 = vsel %vm239, %v590, 0
      %v1605 = vsel %vm239, %v591, 0
      %v1608 = vsel %vm239, %v592, 0
      %v1611 = vsel %vm239, %v593, 0
      %v1614 = vsel %vm239, %v594, 0
      %v1617 = vsel %vm239, %v595, 0
      %v1620 = vsel %vm239, %v596, 0
      %v1623 = vsel %vm239, %v597, 0
      %v1626 = vsel %vm239, %v598, 0
      %v1629 = vsel %vm239, %v599, 0
      %v1632 = vsel %vm239, %v600, 0
      %v1635 = vsel %vm239, %v601, 0
      %v1638 = vsel %vm239, %v602, 0
      %v1641 = vsel %vm239, %v603, 0
      %v1644 = vsel %vm239, %v604, 0
      %v1647 = vsel %vm239, %v605, 0
      %v1650 = vsel %vm239, %v606, 0
      %v1653 = vsel %vm239, %v607, 0
      %v1656 = vsel %vm239, %v608, 0
      %v1659 = vsel %vm239, %v609, 0
      %v1662 = vsel %vm239, %v610, 0
      %v1665 = vsel %vm239, %v611, 0
      %v1668 = vsel %vm239, %v612, 0
      %v1671 = vsel %vm239, %v613, 0
      %v1674 = vsel %vm239, %v614, 0
      %v1677 = vsel %vm239, %v615, 0
      %v1680 = vsel %vm239, %v616, 0
      %1682 = vmatprep.subr.mxu0 0.0
      %1683 = vmatpush1.msra.mxu0 %v218
      %1684 = vmatprep.subr.mxu0 0.0
      %1685 = vmatpush1.msra.mxu0 %v217
      %1686 = vmatprep.subr.mxu0 0.0
      %1687 = vmatpush1.msra.mxu0 %v216
      %1688 = vmatprep.subr.mxu0 0.0
      %1689 = vmatpush1.msra.mxu0 %v215
      %1690 = vmatprep.subr.mxu0 0.0
      %1691 = vmatpush1.msra.mxu0 %v214
      %1692 = vmatprep.subr.mxu0 0.0
      %1693 = vmatpush1.msra.mxu0 %v213
      %1694 = vmatprep.subr.mxu0 0.0
      %1695 = vmatpush1.msra.mxu0 %v212
      %1696 = vmatprep.subr.mxu0 0.0
      %1697 = vmatpush1.msra.mxu0 %v211
      %1698 = vmatprep.subr.mxu0 0.0
      %1699 = vmatpush1.msra.mxu0 %v210
      %1700 = vmatprep.subr.mxu0 0.0
      %1701 = vmatpush1.msra.mxu0 %v209
      %1702 = vmatprep.subr.mxu0 0.0
      %1703 = vmatpush1.msra.mxu0 %v208
      %1704 = vmatprep.subr.mxu0 0.0
      %1705 = vmatpush1.msra.mxu0 %v207
      %1706 = vmatprep.subr.mxu0 0.0
      %1707 = vmatpush1.msra.mxu0 %v206
      %1708 = vmatprep.subr.mxu0 0.0
      %1709 = vmatpush1.msra.mxu0 %v205
      %1710 = vmatprep.subr.mxu0 0.0
      %1711 = vmatpush1.msra.mxu0 %v204
      %1712 = vmatprep.subr.mxu0 0.0
      %1713 = vmatpush1.msra.mxu0 %v203
      %1714 = vmatprep.subr.mxu0 0.0
      %1715 = vmatpush2.msra.mxu0 %v234
      %1716 = vmatprep.subr.mxu0 0.0
      %1717 = vmatpush2.msra.mxu0 %v233
      %1718 = vmatprep.subr.mxu0 0.0
      %1719 = vmatpush2.msra.mxu0 %v232
      %1720 = vmatprep.subr.mxu0 0.0
      %1721 = vmatpush2.msra.mxu0 %v231
      %1722 = vmatprep.subr.mxu0 0.0
      %1723 = vmatpush2.msra.mxu0 %v230
      %1724 = vmatprep.subr.mxu0 0.0
      %1725 = vmatpush2.msra.mxu0 %v229
      %1726 = vmatprep.subr.mxu0 0.0
      %1727 = vmatpush2.msra.mxu0 %v228
      %1728 = vmatprep.subr.mxu0 0.0
      %1729 = vmatpush2.msra.mxu0 %v227
      %1730 = vmatprep.subr.mxu0 0.0
      %1731 = vmatpush2.msra.mxu0 %v226
      %1732 = vmatprep.subr.mxu0 0.0
      %1733 = vmatpush2.msra.mxu0 %v225
      %1734 = vmatprep.subr.mxu0 0.0
      %1735 = vmatpush2.msra.mxu0 %v224
      %1736 = vmatprep.subr.mxu0 0.0
      %1737 = vmatpush2.msra.mxu0 %v223
      %1738 = vmatprep.subr.mxu0 0.0
      %1739 = vmatpush2.msra.mxu0 %v222
      %1740 = vmatprep.subr.mxu0 0.0
      %1741 = vmatpush2.msra.mxu0 %v221
      %1742 = vmatprep.subr.mxu0 0.0
      %1743 = vmatpush2.msra.mxu0 %v220
      %1744 = vmatprep.subr.mxu0 0.0
      %1745 = vmatpush2.msra.mxu0 %v219
      %1746 = vmatprep.mubr.f32.mxu0 %v1547
      %1747 = vmatmul.mubr.f32.gmra.mxu0 %v1451
      %v1748 = vpop.f32.mrf.mxu0
      %v1749 = vadd.f32 %v1584, %v1748
      %v1750 = vpop.f32.mrf.mxu0
      %1751 = vmatprep.mubr.f32.mxu0 %v1548
      %1752 = vmatmul.mubr.f32.gmra.mxu0 %v1452
      %v1753 = vpop.f32.mrf.mxu0
      %v1754 = vadd.f32 %v1584, %v1753
      %v1755 = vpop.f32.mrf.mxu0
      %1756 = vmatprep.mubr.f32.mxu0 %v1549
      %1757 = vmatmul.mubr.f32.gmra.mxu0 %v1453
      %v1758 = vpop.f32.mrf.mxu0
      %v1759 = vadd.f32 %v1584, %v1758
      %v1760 = vpop.f32.mrf.mxu0
      %1761 = vmatprep.mubr.f32.mxu0 %v1550
      %1762 = vmatmul.mubr.f32.gmra.mxu0 %v1454
      %v1763 = vpop.f32.mrf.mxu0
      %v1764 = vadd.f32 %v1584, %v1763
      %v1765 = vpop.f32.mrf.mxu0
      %1766 = vmatprep.mubr.f32.mxu0 %v1551
      %1767 = vmatmul.mubr.f32.gmra.mxu0 %v1455
      %v1768 = vpop.f32.mrf.mxu0
      %v1769 = vadd.f32 %v1584, %v1768
      %v1770 = vpop.f32.mrf.mxu0
      %1771 = vmatprep.mubr.f32.mxu0 %v1552
      %1772 = vmatmul.mubr.f32.gmra.mxu0 %v1456
      %v1773 = vpop.f32.mrf.mxu0
      %v1774 = vadd.f32 %v1584, %v1773
      %v1775 = vpop.f32.mrf.mxu0
      %1776 = vmatprep.mubr.f32.mxu0 %v1553
      %1777 = vmatmul.mubr.f32.gmra.mxu0 %v1457
      %v1778 = vpop.f32.mrf.mxu0
      %v1779 = vadd.f32 %v1584, %v1778
      %v1780 = vpop.f32.mrf.mxu0
      %1781 = vmatprep.mubr.f32.mxu0 %v1554
      %1782 = vmatmul.mubr.f32.gmra.mxu0 %v1458
      %v1783 = vpop.f32.mrf.mxu0
      %v1784 = vadd.f32 %v1584, %v1783
      %v1785 = vpop.f32.mrf.mxu0
      %1786 = vmatprep.mubr.f32.mxu0 %v1555
      %1787 = vmatmul.mubr.f32.gmra.mxu0 %v1459
      %v1788 = vpop.f32.mrf.mxu0
      %v1789 = vadd.f32 %v1584, %v1788
      %v1790 = vpop.f32.mrf.mxu0
      %1791 = vmatprep.mubr.f32.mxu0 %v1556
      %1792 = vmatmul.mubr.f32.gmra.mxu0 %v1460
      %v1793 = vpop.f32.mrf.mxu0
      %v1794 = vadd.f32 %v1584, %v1793
      %v1795 = vpop.f32.mrf.mxu0
      %1796 = vmatprep.mubr.f32.mxu0 %v1557
      %1797 = vmatmul.mubr.f32.gmra.mxu0 %v1461
      %v1798 = vpop.f32.mrf.mxu0
      %v1799 = vadd.f32 %v1584, %v1798
      %v1800 = vpop.f32.mrf.mxu0
      %1801 = vmatprep.mubr.f32.mxu0 %v1558
      %1802 = vmatmul.mubr.f32.gmra.mxu0 %v1462
      %v1803 = vpop.f32.mrf.mxu0
      %v1804 = vadd.f32 %v1584, %v1803
      %v1805 = vpop.f32.mrf.mxu0
      %1806 = vmatprep.mubr.f32.mxu0 %v1559
      %1807 = vmatmul.mubr.f32.gmra.mxu0 %v1463
      %v1808 = vpop.f32.mrf.mxu0
      %v1809 = vadd.f32 %v1584, %v1808
      %v1810 = vpop.f32.mrf.mxu0
      %1811 = vmatprep.mubr.f32.mxu0 %v1560
      %1812 = vmatmul.mubr.f32.gmra.mxu0 %v1464
      %v1813 = vpop.f32.mrf.mxu0
      %v1814 = vadd.f32 %v1584, %v1813
      %v1815 = vpop.f32.mrf.mxu0
      %1816 = vmatprep.mubr.f32.mxu0 %v1561
      %1817 = vmatmul.mubr.f32.gmra.mxu0 %v1465
      %v1818 = vpop.f32.mrf.mxu0
      %v1819 = vadd.f32 %v1584, %v1818
      %v1820 = vpop.f32.mrf.mxu0
      %1821 = vmatprep.mubr.f32.mxu0 %v1562
      %1822 = vmatmul.mubr.f32.gmra.mxu0 %v1466
      %v1823 = vpop.f32.mrf.mxu0
      %v1824 = vadd.f32 %v1584, %v1823
      %v1825 = vpop.f32.mrf.mxu0
      %1826 = vmatprep.mubr.f32.mxu0 %v1563
      %1827 = vmatmul.mubr.f32.gmra.mxu0 %v1467
      %v1828 = vpop.f32.mrf.mxu0
      %v1829 = vadd.f32 %v1584, %v1828
      %v1830 = vpop.f32.mrf.mxu0
      %1831 = vmatprep.mubr.f32.mxu0 %v1564
      %1832 = vmatmul.mubr.f32.gmra.mxu0 %v1468
      %v1833 = vpop.f32.mrf.mxu0
      %v1834 = vadd.f32 %v1584, %v1833
      %v1835 = vpop.f32.mrf.mxu0
      %1836 = vmatprep.mubr.f32.mxu0 %v1565
      %1837 = vmatmul.mubr.f32.gmra.mxu0 %v1469
      %v1838 = vpop.f32.mrf.mxu0
      %v1839 = vadd.f32 %v1584, %v1838
      %v1840 = vpop.f32.mrf.mxu0
      %1841 = vmatprep.mubr.f32.mxu0 %v1566
      %1842 = vmatmul.mubr.f32.gmra.mxu0 %v1470
      %v1843 = vpop.f32.mrf.mxu0
      %v1844 = vadd.f32 %v1584, %v1843
      %v1845 = vpop.f32.mrf.mxu0
      %1846 = vmatprep.mubr.f32.mxu0 %v1567
      %1847 = vmatmul.mubr.f32.gmra.mxu0 %v1471
      %v1848 = vpop.f32.mrf.mxu0
      %v1849 = vadd.f32 %v1584, %v1848
      %v1850 = vpop.f32.mrf.mxu0
      %1851 = vmatprep.mubr.f32.mxu0 %v1568
      %1852 = vmatmul.mubr.f32.gmra.mxu0 %v1472
      %v1853 = vpop.f32.mrf.mxu0
      %v1854 = vadd.f32 %v1584, %v1853
      %v1855 = vpop.f32.mrf.mxu0
      %1856 = vmatprep.mubr.f32.mxu0 %v1569
      %1857 = vmatmul.mubr.f32.gmra.mxu0 %v1473
      %v1858 = vpop.f32.mrf.mxu0
      %v1859 = vadd.f32 %v1584, %v1858
      %v1860 = vpop.f32.mrf.mxu0
      %1861 = vmatprep.mubr.f32.mxu0 %v1570
      %1862 = vmatmul.mubr.f32.gmra.mxu0 %v1474
      %v1863 = vpop.f32.mrf.mxu0
      %v1864 = vadd.f32 %v1584, %v1863
      %v1865 = vpop.f32.mrf.mxu0
      %1866 = vmatprep.mubr.f32.mxu0 %v1571
      %1867 = vmatmul.mubr.f32.gmra.mxu0 %v1475
      %v1868 = vpop.f32.mrf.mxu0
      %v1869 = vadd.f32 %v1584, %v1868
      %v1870 = vpop.f32.mrf.mxu0
      %1871 = vmatprep.mubr.f32.mxu0 %v1572
      %1872 = vmatmul.mubr.f32.gmra.mxu0 %v1476
      %v1873 = vpop.f32.mrf.mxu0
      %v1874 = vadd.f32 %v1584, %v1873
      %v1875 = vpop.f32.mrf.mxu0
      %1876 = vmatprep.mubr.f32.mxu0 %v1573
      %1877 = vmatmul.mubr.f32.gmra.mxu0 %v1477
      %v1878 = vpop.f32.mrf.mxu0
      %v1879 = vadd.f32 %v1584, %v1878
      %v1880 = vpop.f32.mrf.mxu0
      %1881 = vmatprep.mubr.f32.mxu0 %v1574
      %1882 = vmatmul.mubr.f32.gmra.mxu0 %v1478
      %v1883 = vpop.f32.mrf.mxu0
      %v1884 = vadd.f32 %v1584, %v1883
      %v1885 = vpop.f32.mrf.mxu0
      %1886 = vmatprep.mubr.f32.mxu0 %v1575
      %1887 = vmatmul.mubr.f32.gmra.mxu0 %v1479
      %v1888 = vpop.f32.mrf.mxu0
      %v1889 = vadd.f32 %v1584, %v1888
      %v1890 = vpop.f32.mrf.mxu0
      %1891 = vmatprep.mubr.f32.mxu0 %v1576
      %1892 = vmatmul.mubr.f32.gmra.mxu0 %v1480
      %v1893 = vpop.f32.mrf.mxu0
      %v1894 = vadd.f32 %v1584, %v1893
      %v1895 = vpop.f32.mrf.mxu0
      %1896 = vmatprep.mubr.f32.mxu0 %v1577
      %1897 = vmatmul.mubr.f32.gmra.mxu0 %v1481
      %v1898 = vpop.f32.mrf.mxu0
      %v1899 = vadd.f32 %v1584, %v1898
      %v1900 = vpop.f32.mrf.mxu0
      %1901 = vmatprep.mubr.f32.mxu0 %v1578
      %1902 = vmatmul.mubr.f32.gmra.mxu0 %v1482
      %v1903 = vpop.f32.mrf.mxu0
      %v1904 = vadd.f32 %v1584, %v1903
      %v1905 = vpop.f32.mrf.mxu0
      %1906 = vdwg.mxu0
      %1907 = vmatprep.subr.mxu0 0.0
      %1908 = vmatpush1.msra.mxu0 0.0
      %1909 = vmatprep.subr.mxu0 0.0
      %1910 = vmatpush1.msra.mxu0 0.0
      %1911 = vmatprep.subr.mxu0 0.0
      %1912 = vmatpush1.msra.mxu0 0.0
      %1913 = vmatprep.subr.mxu0 0.0
      %1914 = vmatpush1.msra.mxu0 0.0
      %1915 = vmatprep.subr.mxu0 0.0
      %1916 = vmatpush1.msra.mxu0 0.0
      %1917 = vmatprep.subr.mxu0 0.0
      %1918 = vmatpush1.msra.mxu0 0.0
      %1919 = vmatprep.subr.mxu0 0.0
      %1920 = vmatpush1.msra.mxu0 0.0
      %1921 = vmatprep.subr.mxu0 0.0
      %1922 = vmatpush1.msra.mxu0 0.0
      %1923 = vmatprep.subr.mxu0 0.0
      %1924 = vmatpush1.msra.mxu0 0.0
      %1925 = vmatprep.subr.mxu0 0.0
      %1926 = vmatpush1.msra.mxu0 0.0
      %1927 = vmatprep.subr.mxu0 0.0
      %1928 = vmatpush1.msra.mxu0 0.0
      %1929 = vmatprep.subr.mxu0 0.0
      %1930 = vmatpush1.msra.mxu0 0.0
      %1931 = vmatprep.subr.mxu0 0.0
      %1932 = vmatpush1.msra.mxu0 %v238
      %1933 = vmatprep.subr.mxu0 0.0
      %1934 = vmatpush1.msra.mxu0 %v237
      %1935 = vmatprep.subr.mxu0 0.0
      %1936 = vmatpush1.msra.mxu0 %v236
      %1937 = vmatprep.subr.mxu0 0.0
      %1938 = vmatpush1.msra.mxu0 %v235
      %1939 = vmatprep.subr.mxu0 0.0
      %1940 = vmatpush2.msra.mxu0 0.0
      %1941 = vmatprep.subr.mxu0 0.0
      %1942 = vmatpush2.msra.mxu0 0.0
      %1943 = vmatprep.subr.mxu0 0.0
      %1944 = vmatpush2.msra.mxu0 0.0
      %1945 = vmatprep.subr.mxu0 0.0
      %1946 = vmatpush2.msra.mxu0 0.0
      %1947 = vmatprep.subr.mxu0 0.0
      %1948 = vmatpush2.msra.mxu0 0.0
      %1949 = vmatprep.subr.mxu0 0.0
      %1950 = vmatpush2.msra.mxu0 0.0
      %1951 = vmatprep.subr.mxu0 0.0
      %1952 = vmatpush2.msra.mxu0 0.0
      %1953 = vmatprep.subr.mxu0 0.0
      %1954 = vmatpush2.msra.mxu0 0.0
      %1955 = vmatprep.subr.mxu0 0.0
      %1956 = vmatpush2.msra.mxu0 0.0
      %1957 = vmatprep.subr.mxu0 0.0
      %1958 = vmatpush2.msra.mxu0 0.0
      %1959 = vmatprep.subr.mxu0 0.0
      %1960 = vmatpush2.msra.mxu0 0.0
      %1961 = vmatprep.subr.mxu0 0.0
      %1962 = vmatpush2.msra.mxu0 0.0
      %1963 = vmatprep.subr.mxu0 0.0
      %1964 = vmatpush2.msra.mxu0 0.0
      %1965 = vmatprep.subr.mxu0 0.0
      %1966 = vmatpush2.msra.mxu0 0.0
      %1967 = vmatprep.subr.mxu0 0.0
      %1968 = vmatpush2.msra.mxu0 0.0
      %1969 = vmatprep.subr.mxu0 0.0
      %1970 = vmatpush2.msra.mxu0 0.0
      %1971 = vmatprep.mubr.f32.mxu0 0.0
      %1972 = vmatmul.mubr.f32.gmra.mxu0 %v1587
      %v1973 = vpop.f32.mrf.mxu0
      %v1974 = vadd.f32 %v1749, %v1973
      %v1975 = vpop.f32.mrf.mxu0
      %1976 = vmatprep.mubr.f32.mxu0 0.0
      %1977 = vmatmul.mubr.f32.gmra.mxu0 %v1590
      %v1978 = vpop.f32.mrf.mxu0
      %v1979 = vadd.f32 %v1754, %v1978
      %v1980 = vpop.f32.mrf.mxu0
      %1981 = vmatprep.mubr.f32.mxu0 0.0
      %1982 = vmatmul.mubr.f32.gmra.mxu0 %v1593
      %v1983 = vpop.f32.mrf.mxu0
      %v1984 = vadd.f32 %v1759, %v1983
      %v1985 = vpop.f32.mrf.mxu0
      %1986 = vmatprep.mubr.f32.mxu0 0.0
      %1987 = vmatmul.mubr.f32.gmra.mxu0 %v1596
      %v1988 = vpop.f32.mrf.mxu0
      %v1989 = vadd.f32 %v1764, %v1988
      %v1990 = vpop.f32.mrf.mxu0
      %1991 = vmatprep.mubr.f32.mxu0 0.0
      %1992 = vmatmul.mubr.f32.gmra.mxu0 %v1599
      %v1993 = vpop.f32.mrf.mxu0
      %v1994 = vadd.f32 %v1769, %v1993
      %v1995 = vpop.f32.mrf.mxu0
      %1996 = vmatprep.mubr.f32.mxu0 0.0
      %1997 = vmatmul.mubr.f32.gmra.mxu0 %v1602
      %v1998 = vpop.f32.mrf.mxu0
      %v1999 = vadd.f32 %v1774, %v1998
      %v2000 = vpop.f32.mrf.mxu0
      %2001 = vmatprep.mubr.f32.mxu0 0.0
      %2002 = vmatmul.mubr.f32.gmra.mxu0 %v1605
      %v2003 = vpop.f32.mrf.mxu0
      %v2004 = vadd.f32 %v1779, %v2003
      %v2005 = vpop.f32.mrf.mxu0
      %2006 = vmatprep.mubr.f32.mxu0 0.0
      %2007 = vmatmul.mubr.f32.gmra.mxu0 %v1608
      %v2008 = vpop.f32.mrf.mxu0
      %v2009 = vadd.f32 %v1784, %v2008
      %v2010 = vpop.f32.mrf.mxu0
      %2011 = vmatprep.mubr.f32.mxu0 0.0
      %2012 = vmatmul.mubr.f32.gmra.mxu0 %v1611
      %v2013 = vpop.f32.mrf.mxu0
      %v2014 = vadd.f32 %v1789, %v2013
      %v2015 = vpop.f32.mrf.mxu0
      %2016 = vmatprep.mubr.f32.mxu0 0.0
      %2017 = vmatmul.mubr.f32.gmra.mxu0 %v1614
      %v2018 = vpop.f32.mrf.mxu0
      %v2019 = vadd.f32 %v1794, %v2018
      %v2020 = vpop.f32.mrf.mxu0
      %2021 = vmatprep.mubr.f32.mxu0 0.0
      %2022 = vmatmul.mubr.f32.gmra.mxu0 %v1617
      %v2023 = vpop.f32.mrf.mxu0
      %v2024 = vadd.f32 %v1799, %v2023
      %v2025 = vpop.f32.mrf.mxu0
      %2026 = vmatprep.mubr.f32.mxu0 0.0
      %2027 = vmatmul.mubr.f32.gmra.mxu0 %v1620
      %v2028 = vpop.f32.mrf.mxu0
      %v2029 = vadd.f32 %v1804, %v2028
      %v2030 = vpop.f32.mrf.mxu0
      %2031 = vmatprep.mubr.f32.mxu0 0.0
      %2032 = vmatmul.mubr.f32.gmra.mxu0 %v1623
      %v2033 = vpop.f32.mrf.mxu0
      %v2034 = vadd.f32 %v1809, %v2033
      %v2035 = vpop.f32.mrf.mxu0
      %2036 = vmatprep.mubr.f32.mxu0 0.0
      %2037 = vmatmul.mubr.f32.gmra.mxu0 %v1626
      %v2038 = vpop.f32.mrf.mxu0
      %v2039 = vadd.f32 %v1814, %v2038
      %v2040 = vpop.f32.mrf.mxu0
      %2041 = vmatprep.mubr.f32.mxu0 0.0
      %2042 = vmatmul.mubr.f32.gmra.mxu0 %v1629
      %v2043 = vpop.f32.mrf.mxu0
      %v2044 = vadd.f32 %v1819, %v2043
      %v2045 = vpop.f32.mrf.mxu0
      %2046 = vmatprep.mubr.f32.mxu0 0.0
      %2047 = vmatmul.mubr.f32.gmra.mxu0 %v1632
      %v2048 = vpop.f32.mrf.mxu0
      %v2049 = vadd.f32 %v1824, %v2048
      %v2050 = vpop.f32.mrf.mxu0
      %2051 = vmatprep.mubr.f32.mxu0 0.0
      %2052 = vmatmul.mubr.f32.gmra.mxu0 %v1635
      %v2053 = vpop.f32.mrf.mxu0
      %v2054 = vadd.f32 %v1829, %v2053
      %v2055 = vpop.f32.mrf.mxu0
      %2056 = vmatprep.mubr.f32.mxu0 0.0
      %2057 = vmatmul.mubr.f32.gmra.mxu0 %v1638
      %v2058 = vpop.f32.mrf.mxu0
      %v2059 = vadd.f32 %v1834, %v2058
      %v2060 = vpop.f32.mrf.mxu0
      %2061 = vmatprep.mubr.f32.mxu0 0.0
      %2062 = vmatmul.mubr.f32.gmra.mxu0 %v1641
      %v2063 = vpop.f32.mrf.mxu0
      %v2064 = vadd.f32 %v1839, %v2063
      %v2065 = vpop.f32.mrf.mxu0
      %2066 = vmatprep.mubr.f32.mxu0 0.0
      %2067 = vmatmul.mubr.f32.gmra.mxu0 %v1644
      %v2068 = vpop.f32.mrf.mxu0
      %v2069 = vadd.f32 %v1844, %v2068
      %v2070 = vpop.f32.mrf.mxu0
      %2071 = vmatprep.mubr.f32.mxu0 0.0
      %2072 = vmatmul.mubr.f32.gmra.mxu0 %v1647
      %v2073 = vpop.f32.mrf.mxu0
      %v2074 = vadd.f32 %v1849, %v2073
      %v2075 = vpop.f32.mrf.mxu0
      %2076 = vmatprep.mubr.f32.mxu0 0.0
      %2077 = vmatmul.mubr.f32.gmra.mxu0 %v1650
      %v2078 = vpop.f32.mrf.mxu0
      %v2079 = vadd.f32 %v1854, %v2078
      %v2080 = vpop.f32.mrf.mxu0
      %2081 = vmatprep.mubr.f32.mxu0 0.0
      %2082 = vmatmul.mubr.f32.gmra.mxu0 %v1653
      %v2083 = vpop.f32.mrf.mxu0
      %v2084 = vadd.f32 %v1859, %v2083
      %v2085 = vpop.f32.mrf.mxu0
      %2086 = vmatprep.mubr.f32.mxu0 0.0
      %2087 = vmatmul.mubr.f32.gmra.mxu0 %v1656
      %v2088 = vpop.f32.mrf.mxu0
      %v2089 = vadd.f32 %v1864, %v2088
      %v2090 = vpop.f32.mrf.mxu0
      %2091 = vmatprep.mubr.f32.mxu0 0.0
      %2092 = vmatmul.mubr.f32.gmra.mxu0 %v1659
      %v2093 = vpop.f32.mrf.mxu0
      %v2094 = vadd.f32 %v1869, %v2093
      %v2095 = vpop.f32.mrf.mxu0
      %2096 = vmatprep.mubr.f32.mxu0 0.0
      %2097 = vmatmul.mubr.f32.gmra.mxu0 %v1662
      %v2098 = vpop.f32.mrf.mxu0
      %v2099 = vadd.f32 %v1874, %v2098
      %v2100 = vpop.f32.mrf.mxu0
      %2101 = vmatprep.mubr.f32.mxu0 0.0
      %2102 = vmatmul.mubr.f32.gmra.mxu0 %v1665
      %v2103 = vpop.f32.mrf.mxu0
      %v2104 = vadd.f32 %v1879, %v2103
      %v2105 = vpop.f32.mrf.mxu0
      %2106 = vmatprep.mubr.f32.mxu0 0.0
      %2107 = vmatmul.mubr.f32.gmra.mxu0 %v1668
      %v2108 = vpop.f32.mrf.mxu0
      %v2109 = vadd.f32 %v1884, %v2108
      %v2110 = vpop.f32.mrf.mxu0
      %2111 = vmatprep.mubr.f32.mxu0 0.0
      %2112 = vmatmul.mubr.f32.gmra.mxu0 %v1671
      %v2113 = vpop.f32.mrf.mxu0
      %v2114 = vadd.f32 %v1889, %v2113
      %v2115 = vpop.f32.mrf.mxu0
      %2116 = vmatprep.mubr.f32.mxu0 0.0
      %2117 = vmatmul.mubr.f32.gmra.mxu0 %v1674
      %v2118 = vpop.f32.mrf.mxu0
      %v2119 = vadd.f32 %v1894, %v2118
      %v2120 = vpop.f32.mrf.mxu0
      %2121 = vmatprep.mubr.f32.mxu0 0.0
      %2122 = vmatmul.mubr.f32.gmra.mxu0 %v1677
      %v2123 = vpop.f32.mrf.mxu0
      %v2124 = vadd.f32 %v1899, %v2123
      %v2125 = vpop.f32.mrf.mxu0
      %2126 = vmatprep.mubr.f32.mxu0 0.0
      %2127 = vmatmul.mubr.f32.gmra.mxu0 %v1680
      %v2128 = vpop.f32.mrf.mxu0
      %v2129 = vadd.f32 %v1904, %v2128
      %v2130 = vpop.f32.mrf.mxu0
      %2131 = vdwg.mxu0
      %vm2132 = vcmask 23552
      %2133 = vst.msk [vmem:[%s170] sm:$0xff] %vm2132, %v1974
      %2134 = vst.msk [vmem:[%s170 + $0x8] sm:$0xff] %vm2132, %v1979
      %2135 = vst.msk [vmem:[%s170 + $0x10] sm:$0xff] %vm2132, %v1984
      %2136 = vst.msk [vmem:[%s170 + $0x18] sm:$0xff] %vm2132, %v1989
      %2137 = vst.msk [vmem:[%s170 + $0x20] sm:$0xff] %vm2132, %v1994
      %2138 = vst.msk [vmem:[%s170 + $0x28] sm:$0xff] %vm2132, %v1999
      %2139 = vst.msk [vmem:[%s170 + $0x30] sm:$0xff] %vm2132, %v2004
      %2140 = vst.msk [vmem:[%s170 + $0x38] sm:$0xff] %vm2132, %v2009
      %2141 = vst.msk [vmem:[%s170 + $0x40] sm:$0xff] %vm2132, %v2014
      %2142 = vst.msk [vmem:[%s170 + $0x48] sm:$0xff] %vm2132, %v2019
      %2143 = vst.msk [vmem:[%s170 + $0x50] sm:$0xff] %vm2132, %v2024
      %2144 = vst.msk [vmem:[%s170 + $0x58] sm:$0xff] %vm2132, %v2029
      %2145 = vst.msk [vmem:[%s170 + $0x60] sm:$0xff] %vm2132, %v2034
      %2146 = vst.msk [vmem:[%s170 + $0x68] sm:$0xff] %vm2132, %v2039
      %2147 = vst.msk [vmem:[%s170 + $0x70] sm:$0xff] %vm2132, %v2044
      %2148 = vst.msk [vmem:[%s170 + $0x78] sm:$0xff] %vm2132, %v2049
      %2149 = vst.msk [vmem:[%s170 + $0x80] sm:$0xff] %vm2132, %v2054
      %2150 = vst.msk [vmem:[%s170 + $0x88] sm:$0xff] %vm2132, %v2059
      %2151 = vst.msk [vmem:[%s170 + $0x90] sm:$0xff] %vm2132, %v2064
      %2152 = vst.msk [vmem:[%s170 + $0x98] sm:$0xff] %vm2132, %v2069
      %2153 = vst.msk [vmem:[%s170 + $0xa0] sm:$0xff] %vm2132, %v2074
      %2154 = vst.msk [vmem:[%s170 + $0xa8] sm:$0xff] %vm2132, %v2079
      %2155 = vst.msk [vmem:[%s170 + $0xb0] sm:$0xff] %vm2132, %v2084
      %2156 = vst.msk [vmem:[%s170 + $0xb8] sm:$0xff] %vm2132, %v2089
      %2157 = vst.msk [vmem:[%s170 + $0xc0] sm:$0xff] %vm2132, %v2094
      %2158 = vst.msk [vmem:[%s170 + $0xc8] sm:$0xff] %vm2132, %v2099
      %2159 = vst.msk [vmem:[%s170 + $0xd0] sm:$0xff] %vm2132, %v2104
      %2160 = vst.msk [vmem:[%s170 + $0xd8] sm:$0xff] %vm2132, %v2109
      %2161 = vst.msk [vmem:[%s170 + $0xe0] sm:$0xff] %vm2132, %v2114
      %2162 = vst.msk [vmem:[%s170 + $0xe8] sm:$0xff] %vm2132, %v2119
      %2163 = vst.msk [vmem:[%s170 + $0xf0] sm:$0xff] %vm2132, %v2124
      %2164 = vst.msk [vmem:[%s170 + $0xf8] sm:$0xff] %vm2132, %v2129
      %p2165 = scmp.lt.s32.totalorder %s14, 1
      %s2166 = scalar_select %p2165, %s14, 1
      %s2167 = smul.addr %s2166, 32
      %s2168 = smul.addr %s2167, 8
      %s2169 = scalar_lea.vmem %s3, %s2168
      // Predicated region
      $region33: #{irnet1_forward.7} parent=31 // pred_check
        %p2170 = pneg %p100
      $region34: #{irnet1_forward.7} parent=31 // pred_check_branch
        %2172 = sbr.rel (%p2170) target = $region36
      $region35: #{irnet1_forward.7} parent=31 // pred_region
        _
      $region36: #{irnet1_forward.7} parent=31 // pred_fallthru
        _
    $region32: #{irnet1_forward.7} parent=5 // pred_fallthru
      _
    %p2173 = scmp.le.s32.totalorder 2, %s9
    // Predicated region
    $region37: #{irnet1_forward.7} parent=5 // pred_check
      %p2174 = pneg %p2173
    $region38: #{irnet1_forward.7} parent=5 // pred_check_branch
      %2176 = sbr.rel (%p2174) target = $region40
    $region39: #{irnet1_forward.7} parent=5 // pred_region
      %s2177 = ssub.s32 %s9, 2
      // Predicated region
      $region41: #{irnet1_forward.7} parent=39 // pred_check
        %p2178 = pneg %p106
      $region42: #{irnet1_forward.7} parent=39 // pred_check_branch
        %2180 = sbr.rel (%p2178) target = $region44
      $region43: #{irnet1_forward.7} parent=39 // pred_region
        %p2181 = scmp.lt.s32.totalorder %s15, 1
        %s2182 = scalar_select %p2181, %s15, 1
        %s2183 = smul.addr %s2182, 32
        %s2184 = smul.addr %s2183, 8
        %s2185 = scalar_lea.vmem %s3, %s2184
      $region44: #{irnet1_forward.7} parent=39 // pred_fallthru
        _
    $region40: #{irnet1_forward.7} parent=5 // pred_fallthru
      _
  $region6: #{irnet1_forward.7} parent=0 // loop_footer
    %s13 = sadd.s32 1, %s9
  $region7: #{irnet1_forward.7} parent=0 // loop_footer_branch
    %8 = sbr.rel target = $region3
  $region8: #{irnet1_forward.7} parent=0 // loop_exit
    _

// kernel: irnet1_forward.5
$region0: #{irnet1_forward.5}
  #allocation0 [shape = 'u32[]', space=smem, size = 0x4, offset = 0x4, fixed_abs, tag = 'smem constant byte address 0x4 - core index']
  #allocation1 [shape = 'u32[144,128]{1,0:T(1,128)}', space=vmem, size = 0x12000, scoped, tag = 'internal scratch']
  #allocation2 [shape = 'f32[18,18,32]{2,1,0:T(8,128)}', space=vmem, size = 0x36000, scoped, tag = 'scratch operand']
  %s0 = inlined_call_operand.vmem [shape: f32[2,256,32], index: 0, kind: input, shape index: {}]
  %s1 = inlined_call_operand.vmem [shape: f32[2,256,32], index: 1, kind: input, shape index: {}]
  %s2 = inlined_call_operand.vmem [shape: f32[288,32], index: 2, kind: input, shape index: {}]
  %s3 = inlined_call_operand.vmem [shape: f32[1,32], index: 3, kind: input, shape index: {}]
  %s4 = inlined_call_operand.vmem [shape: f32[32,32], index: 4, kind: input, shape index: {}]
  %s5 = inlined_call_operand.vmem [shape: f32[1,32], index: 5, kind: input, shape index: {}]
  %s6 = inlined_call_operand.vmem [shape: f32[2,256,32], index: 6, kind: output, shape index: {}]
  %s7 = sld [smem:[#allocation0]]
  $region57: #{irnet1_forward.5} parent=0
    _
  %s9 = ssub.s32 1, %s7
  %s10 = scalar_select 0, %s9, %s7
  loop: start=0, step=1, limit=4
  $region2: #{irnet1_forward.5} parent=0 // loop_pre_header
    _
  $region3: #{irnet1_forward.5} parent=0 // loop_header
    %s12 = sphi 0, %s16
    %p13 = scmp.ge.s32.totalorder %s12, 4
    %s22 = sphi 0, %s24
    %s25 = sphi 0, %s22
    %s26 = sphi 0, %s25
    %s42 = sphi 0, %s26
    %s48 = sphi 0, %s50
    %s51 = sphi 0, %s48
    %s52 = sphi 0, %s51
    %s68 = sphi 0, %s52
    %s72 = sphi 0, %s72
    %s74 = sphi 0, %s72
    %s75 = sphi 0, %s74
    %s89 = sphi 0, %s75
    %s93 = sphi 0, %s93
    %s95 = sphi 0, %s93
    %s96 = sphi 0, %s95
    %s110 = sphi 0, %s96
    %s114 = sphi 0, %s114
    %s116 = sphi 0, %s114
    %s117 = sphi 0, %s116
    %s131 = sphi 0, %s117
    %s135 = sphi 0, %s135
    %s137 = sphi 0, %s135
    %s138 = sphi 0, %s137
    %s152 = sphi 0, %s138
    %s158 = sphi 0, %s160
    %s161 = sphi 0, %s158
    %s162 = sphi 0, %s161
    %s178 = sphi 0, %s162
  $region4: #{irnet1_forward.5} parent=0 // loop_header_branch
    %15 = sbr.rel (%p13) target = $region8
  $region5: #{irnet1_forward.5} parent=0 // loop_body
    %s17 = ssub.s32 %s12, 1
    %s18 = ssub.s32 %s12, 2
    %s19 = sadd.s32 %s12, 1
    %s20 = ssub.s32 %s12, %s19
    %p21 = scmp.eq.s32.totalorder %s20, 0
    %s23 = sadd.s32 %s22, 1
    %s24 = scalar_select %p21, %s22, %s23
    %p27 = pneg %p21
    %p28 = scmp.eq.s32.totalorder %s12, 1
    %p29 = por %p27, %p28
    %p30 = scmp.ne.s32.totalorder %s22, %s25
    %p31 = scmp.eq.s32.totalorder %s12, 0
    %p32 = por %p30, %p31
    %p33 = scmp.ne.s32.totalorder %s22, %s25
    %p34 = scmp.eq.s32.totalorder %s17, 1
    %p35 = por %p33, %p34
    %p36 = scmp.ne.s32.totalorder %s25, %s26
    %p37 = scmp.eq.s32.totalorder %s17, 0
    %p38 = por %p36, %p37
    %p39 = scmp.ne.s32.totalorder %s25, %s26
    %p40 = scmp.eq.s32.totalorder %s18, 1
    %p41 = por %p39, %p40
    %p43 = scmp.ne.s32.totalorder %s26, %s42
    %p44 = scmp.eq.s32.totalorder %s18, 0
    %p45 = por %p43, %p44
    %s46 = ssub.s32 %s12, %s19
    %p47 = scmp.eq.s32.totalorder %s46, 0
    %s49 = sadd.s32 %s48, 1
    %s50 = scalar_select %p47, %s48, %s49
    %p53 = pneg %p47
    %p54 = scmp.eq.s32.totalorder %s12, 1
    %p55 = por %p53, %p54
    %p56 = scmp.ne.s32.totalorder %s48, %s51
    %p57 = scmp.eq.s32.totalorder %s12, 0
    %p58 = por %p56, %p57
    %p59 = scmp.ne.s32.totalorder %s48, %s51
    %p60 = scmp.eq.s32.totalorder %s17, 1
    %p61 = por %p59, %p60
    %p62 = scmp.ne.s32.totalorder %s51, %s52
    %p63 = scmp.eq.s32.totalorder %s17, 0
    %p64 = por %p62, %p63
    %p65 = scmp.ne.s32.totalorder %s51, %s52
    %p66 = scmp.eq.s32.totalorder %s18, 1
    %p67 = por %p65, %p66
    %p69 = scmp.ne.s32.totalorder %s52, %s68
    %p70 = scmp.eq.s32.totalorder %s18, 0
    %p71 = por %p69, %p70
    %s73 = sadd.s32 %s72, 1
    %p76 = scmp.eq.s32.totalorder %s12, 1
    %p77 = scmp.ne.s32.totalorder %s72, %s74
    %p78 = scmp.eq.s32.totalorder %s12, 0
    %p79 = por %p77, %p78
    %p80 = scmp.ne.s32.totalorder %s72, %s74
    %p81 = scmp.eq.s32.totalorder %s17, 1
    %p82 = por %p80, %p81
    %p83 = scmp.ne.s32.totalorder %s74, %s75
    %p84 = scmp.eq.s32.totalorder %s17, 0
    %p85 = por %p83, %p84
    %p86 = scmp.ne.s32.totalorder %s74, %s75
    %p87 = scmp.eq.s32.totalorder %s18, 1
    %p88 = por %p86, %p87
    %p90 = scmp.ne.s32.totalorder %s75, %s89
    %p91 = scmp.eq.s32.totalorder %s18, 0
    %p92 = por %p90, %p91
    %s94 = sadd.s32 %s93, 1
    %p97 = scmp.eq.s32.totalorder %s12, 1
    %p98 = scmp.ne.s32.totalorder %s93, %s95
    %p99 = scmp.eq.s32.totalorder %s12, 0
    %p100 = por %p98, %p99
    %p101 = scmp.ne.s32.totalorder %s93, %s95
    %p102 = scmp.eq.s32.totalorder %s17, 1
    %p103 = por %p101, %p102
    %p104 = scmp.ne.s32.totalorder %s95, %s96
    %p105 = scmp.eq.s32.totalorder %s17, 0
    %p106 = por %p104, %p105
    %p107 = scmp.ne.s32.totalorder %s95, %s96
    %p108 = scmp.eq.s32.totalorder %s18, 1
    %p109 = por %p107, %p108
    %p111 = scmp.ne.s32.totalorder %s96, %s110
    %p112 = scmp.eq.s32.totalorder %s18, 0
    %p113 = por %p111, %p112
    %s115 = sadd.s32 %s114, 1
    %p118 = scmp.eq.s32.totalorder %s12, 1
    %p119 = scmp.ne.s32.totalorder %s114, %s116
    %p120 = scmp.eq.s32.totalorder %s12, 0
    %p121 = por %p119, %p120
    %p122 = scmp.ne.s32.totalorder %s114, %s116
    %p123 = scmp.eq.s32.totalorder %s17, 1
    %p124 = por %p122, %p123
    %p125 = scmp.ne.s32.totalorder %s116, %s117
    %p126 = scmp.eq.s32.totalorder %s17, 0
    %p127 = por %p125, %p126
    %p128 = scmp.ne.s32.totalorder %s116, %s117
    %p129 = scmp.eq.s32.totalorder %s18, 1
    %p130 = por %p128, %p129
    %p132 = scmp.ne.s32.totalorder %s117, %s131
    %p133 = scmp.eq.s32.totalorder %s18, 0
    %p134 = por %p132, %p133
    %s136 = sadd.s32 %s135, 1
    %p139 = scmp.eq.s32.totalorder %s12, 1
    %p140 = scmp.ne.s32.totalorder %s135, %s137
    %p141 = scmp.eq.s32.totalorder %s12, 0
    %p142 = por %p140, %p141
    %p143 = scmp.ne.s32.totalorder %s135, %s137
    %p144 = scmp.eq.s32.totalorder %s17, 1
    %p145 = por %p143, %p144
    %p146 = scmp.ne.s32.totalorder %s137, %s138
    %p147 = scmp.eq.s32.totalorder %s17, 0
    %p148 = por %p146, %p147
    %p149 = scmp.ne.s32.totalorder %s137, %s138
    %p150 = scmp.eq.s32.totalorder %s18, 1
    %p151 = por %p149, %p150
    %p153 = scmp.ne.s32.totalorder %s138, %s152
    %p154 = scmp.eq.s32.totalorder %s18, 0
    %p155 = por %p153, %p154
    %s156 = ssub.s32 %s12, %s19
    %p157 = scmp.eq.s32.totalorder %s156, 0
    %s159 = sadd.s32 %s158, 1
    %s160 = scalar_select %p157, %s158, %s159
    %p163 = pneg %p157
    %p164 = scmp.eq.s32.totalorder %s12, 1
    %p165 = por %p163, %p164
    %p166 = scmp.ne.s32.totalorder %s158, %s161
    %p167 = scmp.eq.s32.totalorder %s12, 0
    %p168 = por %p166, %p167
    %p169 = scmp.ne.s32.totalorder %s158, %s161
    %p170 = scmp.eq.s32.totalorder %s17, 1
    %p171 = por %p169, %p170
    %p172 = scmp.ne.s32.totalorder %s161, %s162
    %p173 = scmp.eq.s32.totalorder %s17, 0
    %p174 = por %p172, %p173
    %p175 = scmp.ne.s32.totalorder %s161, %s162
    %p176 = scmp.eq.s32.totalorder %s18, 1
    %p177 = por %p175, %p176
    %p179 = scmp.ne.s32.totalorder %s162, %s178
    %p180 = scmp.eq.s32.totalorder %s18, 0
    %p181 = por %p179, %p180
    %p182 = scmp.le.s32.totalorder 1, %s12
    %p183 = scmp.lt.s32.totalorder %s12, 3
    %p184 = pnand %p182, %p183
    %p185 = pneg %p184
    // Predicated region
    $region9: #{irnet1_forward.5} parent=5 // pred_check
      _
    $region10: #{irnet1_forward.5} parent=5 // pred_check_branch
      %187 = sbr.rel (%p184) target = $region12
    $region11: #{irnet1_forward.5} parent=5 // pred_region
      %s188 = ssub.s32 %s12, 1
      // Predicated region
      $region13: #{irnet1_forward.5} parent=11 // pred_check
        %p189 = pneg %p85
      $region14: #{irnet1_forward.5} parent=11 // pred_check_branch
        %191 = sbr.rel (%p189) target = $region16
      $region15: #{irnet1_forward.5} parent=11 // pred_region
        _
      $region16: #{irnet1_forward.5} parent=11 // pred_fallthru
        _
      // Predicated region
      $region17: #{irnet1_forward.5} parent=11 // pred_check
        %p192 = pneg %p106
      $region18: #{irnet1_forward.5} parent=11 // pred_check_branch
        %194 = sbr.rel (%p192) target = $region20
      $region19: #{irnet1_forward.5} parent=11 // pred_region
        _
      $region20: #{irnet1_forward.5} parent=11 // pred_fallthru
        _
      // Predicated region
      $region21: #{irnet1_forward.5} parent=11 // pred_check
        %p195 = pneg %p127
      $region22: #{irnet1_forward.5} parent=11 // pred_check_branch
        %197 = sbr.rel (%p195) target = $region24
      $region23: #{irnet1_forward.5} parent=11 // pred_region
        _
      $region24: #{irnet1_forward.5} parent=11 // pred_fallthru
        _
      // Predicated region
      $region25: #{irnet1_forward.5} parent=11 // pred_check
        %p198 = pneg %p148
      $region26: #{irnet1_forward.5} parent=11 // pred_check_branch
        %200 = sbr.rel (%p198) target = $region28
      $region27: #{irnet1_forward.5} parent=11 // pred_region
        _
      $region28: #{irnet1_forward.5} parent=11 // pred_fallthru
        _
    $region12: #{irnet1_forward.5} parent=5 // pred_fallthru
      _
    %p201 = scmp.lt.s32.totalorder %s12, 2
    // Predicated region
    $region29: #{irnet1_forward.5} parent=5 // pred_check
      %p202 = pneg %p201
    $region30: #{irnet1_forward.5} parent=5 // pred_check_branch
      %204 = sbr.rel (%p202) target = $region32
    $region31: #{irnet1_forward.5} parent=5 // pred_region
      // Predicated region
      $region33: #{irnet1_forward.5} parent=31 // pred_check
        %p205 = pneg %p32
      $region34: #{irnet1_forward.5} parent=31 // pred_check_branch
        %207 = sbr.rel (%p205) target = $region36
      $region35: #{irnet1_forward.5} parent=31 // pred_region
        %p208 = scmp.lt.s32.totalorder %s12, 1
        %s209 = scalar_select %p208, %s12, 1
        %s210 = smul.addr %s209, 32
        %s211 = smul.addr %s210, 8
        %s212 = scalar_lea.vmem %s0, %s211
      $region36: #{irnet1_forward.5} parent=31 // pred_fallthru
        _
      // Predicated region
      $region37: #{irnet1_forward.5} parent=31 // pred_check
        %p213 = pneg %p58
      $region38: #{irnet1_forward.5} parent=31 // pred_check_branch
        %215 = sbr.rel (%p213) target = $region40
      $region39: #{irnet1_forward.5} parent=31 // pred_region
        %p216 = scmp.lt.s32.totalorder %s12, 1
        %s217 = scalar_select %p216, %s12, 1
        %s218 = smul.addr %s217, 32
        %s219 = smul.addr %s218, 8
        %s220 = scalar_lea.vmem %s1, %s219
      $region40: #{irnet1_forward.5} parent=31 // pred_fallthru
        _
    $region32: #{irnet1_forward.5} parent=5 // pred_fallthru
      _
    %p221 = scmp.le.s32.totalorder 1, %s12
    %p222 = scmp.lt.s32.totalorder %s12, 3
    %p223 = pnand %p221, %p222
    %p224 = pneg %p223
    // Predicated region
    $region41: #{irnet1_forward.5} parent=5 // pred_check
      _
    $region42: #{irnet1_forward.5} parent=5 // pred_check_branch
      %226 = sbr.rel (%p223) target = $region44
    $region43: #{irnet1_forward.5} parent=5 // pred_region
      %s227 = ssub.s32 %s12, 1
      %p228 = scmp.lt.s32.totalorder %s17, 1
      %s229 = scalar_select %p228, %s17, 1
      %s230 = smul.addr %s229, 32
      %s231 = smul.addr %s230, 8
      %s232 = scalar_lea.vmem %s0, %s231
      %p233 = pneg %p38
      %p234 = pneg %p35
      %p235 = scmp.lt.s32.totalorder %s17, 1
      %s236 = scalar_select %p235, %s17, 1
      %s237 = smul.addr %s236, 32
      %s238 = smul.addr %s237, 8
      %s239 = scalar_lea.vmem %s1, %s238
      %p240 = pneg %p64
      %p241 = pneg %p61
      %p242 = pneg %p85
      %p243 = pneg %p82
      %p244 = pneg %p106
      %p245 = pneg %p103
      %p246 = pneg %p127
      %p247 = pneg %p124
      %p248 = pneg %p148
      %p249 = pneg %p145
      %p250 = pneg %p174
      %p251 = pneg %p171
      %p252 = scmp.lt.s32.totalorder %s17, 1
      %s253 = scalar_select %p252, %s17, 1
      %s254 = smul.addr %s253, 32
      %s255 = smul.addr %s254, 8
      %s256 = scalar_lea.vmem %s6, %s255
      %p257 = scmp.lt.s32.totalorder %s17, 1
      %s258 = scalar_select %p257, %s17, 1
      %s259 = smul.addr %s258, 32
      %s260 = smul.addr %s259, 8
      %s261 = scalar_lea.vmem %s0, %s260
      %p262 = scmp.lt.s32.totalorder %s17, 1
      %s263 = scalar_select %p262, %s17, 1
      %s264 = smul.addr %s263, 32
      %s265 = smul.addr %s264, 8
      %s266 = scalar_lea.vmem %s1, %s265
      %p267 = scmp.lt.s32.totalorder %s17, 1
      %s268 = scalar_select %p267, %s17, 1
      %s269 = smul.addr %s268, 32
      %s270 = smul.addr %s269, 8
      %s271 = scalar_lea.vmem %s6, %s270
      %v272 = vld [vmem:[%s261] sm:$0xff]
      %v273 = vld [vmem:[%s261 + $0x8] sm:$0xff]
      %v274 = vld [vmem:[%s261 + $0x10] sm:$0xff]
      %v275 = vld [vmem:[%s261 + $0x18] sm:$0xff]
      %v276 = vld [vmem:[%s261 + $0x20] sm:$0xff]
      %v277 = vld [vmem:[%s261 + $0x28] sm:$0xff]
      %v278 = vld [vmem:[%s261 + $0x30] sm:$0xff]
      %v279 = vld [vmem:[%s261 + $0x38] sm:$0xff]
      %v280 = vld [vmem:[%s261 + $0x40] sm:$0xff]
      %v281 = vld [vmem:[%s261 + $0x48] sm:$0xff]
      %v282 = vld [vmem:[%s261 + $0x50] sm:$0xff]
      %v283 = vld [vmem:[%s261 + $0x58] sm:$0xff]
      %v284 = vld [vmem:[%s261 + $0x60] sm:$0xff]
      %v285 = vld [vmem:[%s261 + $0x68] sm:$0xff]
      %v286 = vld [vmem:[%s261 + $0x70] sm:$0xff]
      %v287 = vld [vmem:[%s261 + $0x78] sm:$0xff]
      %v288 = vld [vmem:[%s261 + $0x80] sm:$0xff]
      %v289 = vld [vmem:[%s261 + $0x88] sm:$0xff]
      %v290 = vld [vmem:[%s261 + $0x90] sm:$0xff]
      %v291 = vld [vmem:[%s261 + $0x98] sm:$0xff]
      %v292 = vld [vmem:[%s261 + $0xa0] sm:$0xff]
      %v293 = vld [vmem:[%s261 + $0xa8] sm:$0xff]
      %v294 = vld [vmem:[%s261 + $0xb0] sm:$0xff]
      %v295 = vld [vmem:[%s261 + $0xb8] sm:$0xff]
      %v296 = vld [vmem:[%s261 + $0xc0] sm:$0xff]
      %v297 = vld [vmem:[%s261 + $0xc8] sm:$0xff]
      %v298 = vld [vmem:[%s261 + $0xd0] sm:$0xff]
      %v299 = vld [vmem:[%s261 + $0xd8] sm:$0xff]
      %v300 = vld [vmem:[%s261 + $0xe0] sm:$0xff]
      %v301 = vld [vmem:[%s261 + $0xe8] sm:$0xff]
      %v302 = vld [vmem:[%s261 + $0xf0] sm:$0xff]
      %v303 = vld [vmem:[%s261 + $0xf8] sm:$0xff]
      %v304 = vld [vmem:[%s2] sm:$0xff]
      %v305 = vld [vmem:[%s2 + $0x8] sm:$0xff]
      %v306 = vld [vmem:[%s2 + $0x10] sm:$0xff]
      %v307 = vld [vmem:[%s2 + $0x18] sm:$0xff]
      %v308 = vld [vmem:[%s2 + $0x20] sm:$0xff]
      %v309 = vld [vmem:[%s2 + $0x28] sm:$0xff]
      %v310 = vld [vmem:[%s2 + $0x30] sm:$0xff]
      %v311 = vld [vmem:[%s2 + $0x38] sm:$0xff]
      %v312 = vld [vmem:[%s2 + $0x40] sm:$0xff]
      %v313 = vld [vmem:[%s2 + $0x48] sm:$0xff]
      %v314 = vld [vmem:[%s2 + $0x50] sm:$0xff]
      %v315 = vld [vmem:[%s2 + $0x58] sm:$0xff]
      %v316 = vld [vmem:[%s2 + $0x60] sm:$0xff]
      %v317 = vld [vmem:[%s2 + $0x68] sm:$0xff]
      %v318 = vld [vmem:[%s2 + $0x70] sm:$0xff]
      %v319 = vld [vmem:[%s2 + $0x78] sm:$0xff]
      %v320 = vld [vmem:[%s2 + $0x80] sm:$0xff]
      %v321 = vld [vmem:[%s2 + $0x88] sm:$0xff]
      %v322 = vld [vmem:[%s2 + $0x90] sm:$0xff]
      %v323 = vld [vmem:[%s2 + $0x98] sm:$0xff]
      %v324 = vld [vmem:[%s2 + $0xa0] sm:$0xff]
      %v325 = vld [vmem:[%s2 + $0xa8] sm:$0xff]
      %v326 = vld [vmem:[%s2 + $0xb0] sm:$0xff]
      %v327 = vld [vmem:[%s2 + $0xb8] sm:$0xff]
      %v328 = vld [vmem:[%s2 + $0xc0] sm:$0xff]
      %v329 = vld [vmem:[%s2 + $0xc8] sm:$0xff]
      %v330 = vld [vmem:[%s2 + $0xd0] sm:$0xff]
      %v331 = vld [vmem:[%s2 + $0xd8] sm:$0xff]
      %v332 = vld [vmem:[%s2 + $0xe0] sm:$0xff]
      %v333 = vld [vmem:[%s2 + $0xe8] sm:$0xff]
      %v334 = vld [vmem:[%s2 + $0xf0] sm:$0xff]
      %v335 = vld [vmem:[%s2 + $0xf8] sm:$0xff]
      %v336 = vld [vmem:[%s2 + $0x100] sm:$0xff]
      %v337 = vld [vmem:[%s2 + $0x108] sm:$0xff]
      %v338 = vld [vmem:[%s2 + $0x110] sm:$0xff]
      %v339 = vld [vmem:[%s2 + $0x118] sm:$0xff]
      %vm340 = vcmask 261120
      %341 = vst.msk [vmem:[#allocation2] sm:$0xff] %vm340, 0.0
      %342 = vst.msk [vmem:[#allocation2 + $0x8] sm:$0xff] %vm340, 0.0
      %vm343 = vcmask 254976
      %344 = vst.msk [vmem:[#allocation2 + $0x10] sm:$0x3] %vm343, 0.0
      %345 = vst.msk [vmem:[#allocation2 + $0x18] sm:$0xff] %vm340, 0.0
      %346 = vst.msk [vmem:[#allocation2 + $0x20] sm:$0xff] %vm340, 0.0
      %347 = vst.msk [vmem:[#allocation2 + $0x28] sm:$0x3] %vm343, 0.0
      %348 = vst.msk [vmem:[#allocation2 + $0x30] sm:$0xff] %vm340, 0.0
      %349 = vst.msk [vmem:[#allocation2 + $0x38] sm:$0xff] %vm340, 0.0
      %350 = vst.msk [vmem:[#allocation2 + $0x40] sm:$0x3] %vm343, 0.0
      %351 = vst.msk [vmem:[#allocation2 + $0x48] sm:$0xff] %vm340, 0.0
      %352 = vst.msk [vmem:[#allocation2 + $0x50] sm:$0xff] %vm340, 0.0
      %353 = vst.msk [vmem:[#allocation2 + $0x58] sm:$0x3] %vm343, 0.0
      %354 = vst.msk [vmem:[#allocation2 + $0x60] sm:$0xff] %vm340, 0.0
      %355 = vst.msk [vmem:[#allocation2 + $0x68] sm:$0xff] %vm340, 0.0
      %356 = vst.msk [vmem:[#allocation2 + $0x70] sm:$0x3] %vm343, 0.0
      %357 = vst.msk [vmem:[#allocation2 + $0x78] sm:$0xff] %vm340, 0.0
      %358 = vst.msk [vmem:[#allocation2 + $0x80] sm:$0xff] %vm340, 0.0
      %359 = vst.msk [vmem:[#allocation2 + $0x88] sm:$0x3] %vm343, 0.0
      %360 = vst.msk [vmem:[#allocation2 + $0x90] sm:$0xff] %vm340, 0.0
      %361 = vst.msk [vmem:[#allocation2 + $0x98] sm:$0xff] %vm340, 0.0
      %362 = vst.msk [vmem:[#allocation2 + $0xa0] sm:$0x3] %vm343, 0.0
      %363 = vst.msk [vmem:[#allocation2 + $0xa8] sm:$0xff] %vm340, 0.0
      %364 = vst.msk [vmem:[#allocation2 + $0xb0] sm:$0xff] %vm340, 0.0
      %365 = vst.msk [vmem:[#allocation2 + $0xb8] sm:$0x3] %vm343, 0.0
      %366 = vst.msk [vmem:[#allocation2 + $0xc0] sm:$0xff] %vm340, 0.0
      %367 = vst.msk [vmem:[#allocation2 + $0xc8] sm:$0xff] %vm340, 0.0
      %368 = vst.msk [vmem:[#allocation2 + $0xd0] sm:$0x3] %vm343, 0.0
      %369 = vst.msk [vmem:[#allocation2 + $0xd8] sm:$0xff] %vm340, 0.0
      %370 = vst.msk [vmem:[#allocation2 + $0xe0] sm:$0xff] %vm340, 0.0
      %371 = vst.msk [vmem:[#allocation2 + $0xe8] sm:$0x3] %vm343, 0.0
      %372 = vst.msk [vmem:[#allocation2 + $0xf0] sm:$0xff] %vm340, 0.0
      %373 = vst.msk [vmem:[#allocation2 + $0xf8] sm:$0xff] %vm340, 0.0
      %374 = vst.msk [vmem:[#allocation2 + $0x100] sm:$0x3] %vm343, 0.0
      %375 = vst.msk [vmem:[#allocation2 + $0x108] sm:$0xff] %vm340, 0.0
      %376 = vst.msk [vmem:[#allocation2 + $0x110] sm:$0xff] %vm340, 0.0
      %377 = vst.msk [vmem:[#allocation2 + $0x118] sm:$0x3] %vm343, 0.0
      %378 = vst.msk [vmem:[#allocation2 + $0x120] sm:$0xff] %vm340, 0.0
      %379 = vst.msk [vmem:[#allocation2 + $0x128] sm:$0xff] %vm340, 0.0
      %380 = vst.msk [vmem:[#allocation2 + $0x130] sm:$0x3] %vm343, 0.0
      %381 = vst.msk [vmem:[#allocation2 + $0x138] sm:$0xff] %vm340, 0.0
      %382 = vst.msk [vmem:[#allocation2 + $0x140] sm:$0xff] %vm340, 0.0
      %383 = vst.msk [vmem:[#allocation2 + $0x148] sm:$0x3] %vm343, 0.0
      %384 = vst.msk [vmem:[#allocation2 + $0x150] sm:$0xff] %vm340, 0.0
      %385 = vst.msk [vmem:[#allocation2 + $0x158] sm:$0xff] %vm340, 0.0
      %386 = vst.msk [vmem:[#allocation2 + $0x160] sm:$0x3] %vm343, 0.0
      %387 = vst.msk [vmem:[#allocation2 + $0x168] sm:$0xff] %vm340, 0.0
      %388 = vst.msk [vmem:[#allocation2 + $0x170] sm:$0xff] %vm340, 0.0
      %389 = vst.msk [vmem:[#allocation2 + $0x178] sm:$0x3] %vm343, 0.0
      %390 = vst.msk [vmem:[#allocation2 + $0x180] sm:$0xff] %vm340, 0.0
      %391 = vst.msk [vmem:[#allocation2 + $0x188] sm:$0xff] %vm340, 0.0
      %392 = vst.msk [vmem:[#allocation2 + $0x190] sm:$0x3] %vm343, 0.0
      %393 = vst.msk [vmem:[#allocation2 + $0x198] sm:$0xff] %vm340, 0.0
      %394 = vst.msk [vmem:[#allocation2 + $0x1a0] sm:$0xff] %vm340, 0.0
      %395 = vst.msk [vmem:[#allocation2 + $0x1a8] sm:$0x3] %vm343, 0.0
      %s396 = scalar_lea.vmem [#allocation2], 24
      %397 = vst.msk [vmem:[%s396 + $0x1] sm:$0xff] %vm340, %v272
      %398 = vst.msk [vmem:[%s396 + $0x9] sm:$0xff] %vm340, %v273
      %399 = vst.msk [vmem:[%s396 + $0x19] sm:$0xff] %vm340, %v274
      %400 = vst.msk [vmem:[%s396 + $0x21] sm:$0xff] %vm340, %v275
      %401 = vst.msk [vmem:[%s396 + $0x31] sm:$0xff] %vm340, %v276
      %402 = vst.msk [vmem:[%s396 + $0x39] sm:$0xff] %vm340, %v277
      %403 = vst.msk [vmem:[%s396 + $0x49] sm:$0xff] %vm340, %v278
      %404 = vst.msk [vmem:[%s396 + $0x51] sm:$0xff] %vm340, %v279
      %405 = vst.msk [vmem:[%s396 + $0x61] sm:$0xff] %vm340, %v280
      %406 = vst.msk [vmem:[%s396 + $0x69] sm:$0xff] %vm340, %v281
      %407 = vst.msk [vmem:[%s396 + $0x79] sm:$0xff] %vm340, %v282
      %408 = vst.msk [vmem:[%s396 + $0x81] sm:$0xff] %vm340, %v283
      %409 = vst.msk [vmem:[%s396 + $0x91] sm:$0xff] %vm340, %v284
      %410 = vst.msk [vmem:[%s396 + $0x99] sm:$0xff] %vm340, %v285
      %411 = vst.msk [vmem:[%s396 + $0xa9] sm:$0xff] %vm340, %v286
      %412 = vst.msk [vmem:[%s396 + $0xb1] sm:$0xff] %vm340, %v287
      %413 = vst.msk [vmem:[%s396 + $0xc1] sm:$0xff] %vm340, %v288
      %414 = vst.msk [vmem:[%s396 + $0xc9] sm:$0xff] %vm340, %v289
      %415 = vst.msk [vmem:[%s396 + $0xd9] sm:$0xff] %vm340, %v290
      %416 = vst.msk [vmem:[%s396 + $0xe1] sm:$0xff] %vm340, %v291
      %417 = vst.msk [vmem:[%s396 + $0xf1] sm:$0xff] %vm340, %v292
      %418 = vst.msk [vmem:[%s396 + $0xf9] sm:$0xff] %vm340, %v293
      %419 = vst.msk [vmem:[%s396 + $0x109] sm:$0xff] %vm340, %v294
      %420 = vst.msk [vmem:[%s396 + $0x111] sm:$0xff] %vm340, %v295
      %421 = vst.msk [vmem:[%s396 + $0x121] sm:$0xff] %vm340, %v296
      %422 = vst.msk [vmem:[%s396 + $0x129] sm:$0xff] %vm340, %v297
      %423 = vst.msk [vmem:[%s396 + $0x139] sm:$0xff] %vm340, %v298
      %424 = vst.msk [vmem:[%s396 + $0x141] sm:$0xff] %vm340, %v299
      %425 = vst.msk [vmem:[%s396 + $0x151] sm:$0xff] %vm340, %v300
      %426 = vst.msk [vmem:[%s396 + $0x159] sm:$0xff] %vm340, %v301
      %427 = vst.msk [vmem:[%s396 + $0x169] sm:$0xff] %vm340, %v302
      %428 = vst.msk [vmem:[%s396 + $0x171] sm:$0xff] %vm340, %v303
      %v429 = vld [vmem:[#allocation2] sm:$0xff]
      %v430 = vld [vmem:[#allocation2 + $0x8] sm:$0xff]
      %v431 = vld [vmem:[#allocation2 + $0x18] sm:$0xff]
      %v432 = vld [vmem:[#allocation2 + $0x20] sm:$0xff]
      %v433 = vld [vmem:[#allocation2 + $0x30] sm:$0xff]
      %v434 = vld [vmem:[#allocation2 + $0x38] sm:$0xff]
      %v435 = vld [vmem:[#allocation2 + $0x48] sm:$0xff]
      %v436 = vld [vmem:[#allocation2 + $0x50] sm:$0xff]
      %v437 = vld [vmem:[#allocation2 + $0x60] sm:$0xff]
      %v438 = vld [vmem:[#allocation2 + $0x68] sm:$0xff]
      %v439 = vld [vmem:[#allocation2 + $0x78] sm:$0xff]
      %v440 = vld [vmem:[#allocation2 + $0x80] sm:$0xff]
      %v441 = vld [vmem:[#allocation2 + $0x90] sm:$0xff]
      %v442 = vld [vmem:[#allocation2 + $0x98] sm:$0xff]
      %v443 = vld [vmem:[#allocation2 + $0xa8] sm:$0xff]
      %v444 = vld [vmem:[#allocation2 + $0xb0] sm:$0xff]
      %v445 = vld [vmem:[#allocation2 + $0xc0] sm:$0xff]
      %v446 = vld [vmem:[#allocation2 + $0xc8] sm:$0xff]
      %v447 = vld [vmem:[#allocation2 + $0xd8] sm:$0xff]
      %v448 = vld [vmem:[#allocation2 + $0xe0] sm:$0xff]
      %v449 = vld [vmem:[#allocation2 + $0xf0] sm:$0xff]
      %v450 = vld [vmem:[#allocation2 + $0xf8] sm:$0xff]
      %v451 = vld [vmem:[#allocation2 + $0x108] sm:$0xff]
      %v452 = vld [vmem:[#allocation2 + $0x110] sm:$0xff]
      %v453 = vld [vmem:[#allocation2 + $0x120] sm:$0xff]
      %v454 = vld [vmem:[#allocation2 + $0x128] sm:$0xff]
      %v455 = vld [vmem:[#allocation2 + $0x138] sm:$0xff]
      %v456 = vld [vmem:[#allocation2 + $0x140] sm:$0xff]
      %v457 = vld [vmem:[#allocation2 + $0x150] sm:$0xff]
      %v458 = vld [vmem:[#allocation2 + $0x158] sm:$0xff]
      %v459 = vld [vmem:[#allocation2 + $0x168] sm:$0xff]
      %v460 = vld [vmem:[#allocation2 + $0x170] sm:$0xff]
      %v461 = vld [vmem:[#allocation2 + $0x1] sm:$0xff]
      %v462 = vld [vmem:[#allocation2 + $0x9] sm:$0xff]
      %v463 = vld [vmem:[#allocation2 + $0x19] sm:$0xff]
      %v464 = vld [vmem:[#allocation2 + $0x21] sm:$0xff]
      %v465 = vld [vmem:[#allocation2 + $0x31] sm:$0xff]
      %v466 = vld [vmem:[#allocation2 + $0x39] sm:$0xff]
      %v467 = vld [vmem:[#allocation2 + $0x49] sm:$0xff]
      %v468 = vld [vmem:[#allocation2 + $0x51] sm:$0xff]
      %v469 = vld [vmem:[#allocation2 + $0x61] sm:$0xff]
      %v470 = vld [vmem:[#allocation2 + $0x69] sm:$0xff]
      %v471 = vld [vmem:[#allocation2 + $0x79] sm:$0xff]
      %v472 = vld [vmem:[#allocation2 + $0x81] sm:$0xff]
      %v473 = vld [vmem:[#allocation2 + $0x91] sm:$0xff]
      %v474 = vld [vmem:[#allocation2 + $0x99] sm:$0xff]
      %v475 = vld [vmem:[#allocation2 + $0xa9] sm:$0xff]
      %v476 = vld [vmem:[#allocation2 + $0xb1] sm:$0xff]
      %v477 = vld [vmem:[#allocation2 + $0xc1] sm:$0xff]
      %v478 = vld [vmem:[#allocation2 + $0xc9] sm:$0xff]
      %v479 = vld [vmem:[#allocation2 + $0xd9] sm:$0xff]
      %v480 = vld [vmem:[#allocation2 + $0xe1] sm:$0xff]
      %v481 = vld [vmem:[#allocation2 + $0xf1] sm:$0xff]
      %v482 = vld [vmem:[#allocation2 + $0xf9] sm:$0xff]
      %v483 = vld [vmem:[#allocation2 + $0x109] sm:$0xff]
      %v484 = vld [vmem:[#allocation2 + $0x111] sm:$0xff]
      %v485 = vld [vmem:[#allocation2 + $0x121] sm:$0xff]
      %v486 = vld [vmem:[#allocation2 + $0x129] sm:$0xff]
      %v487 = vld [vmem:[#allocation2 + $0x139] sm:$0xff]
      %v488 = vld [vmem:[#allocation2 + $0x141] sm:$0xff]
      %v489 = vld [vmem:[#allocation2 + $0x151] sm:$0xff]
      %v490 = vld [vmem:[#allocation2 + $0x159] sm:$0xff]
      %v491 = vld [vmem:[#allocation2 + $0x169] sm:$0xff]
      %v492 = vld [vmem:[#allocation2 + $0x171] sm:$0xff]
      %v493 = vld [vmem:[#allocation2 + $0x2] sm:$0xff]
      %v494 = vld [vmem:[#allocation2 + $0xa] sm:$0xff]
      %v495 = vld [vmem:[#allocation2 + $0x1a] sm:$0xff]
      %v496 = vld [vmem:[#allocation2 + $0x22] sm:$0xff]
      %v497 = vld [vmem:[#allocation2 + $0x32] sm:$0xff]
      %v498 = vld [vmem:[#allocation2 + $0x3a] sm:$0xff]
      %v499 = vld [vmem:[#allocation2 + $0x4a] sm:$0xff]
      %v500 = vld [vmem:[#allocation2 + $0x52] sm:$0xff]
      %v501 = vld [vmem:[#allocation2 + $0x62] sm:$0xff]
      %v502 = vld [vmem:[#allocation2 + $0x6a] sm:$0xff]
      %v503 = vld [vmem:[#allocation2 + $0x7a] sm:$0xff]
      %v504 = vld [vmem:[#allocation2 + $0x82] sm:$0xff]
      %v505 = vld [vmem:[#allocation2 + $0x92] sm:$0xff]
      %v506 = vld [vmem:[#allocation2 + $0x9a] sm:$0xff]
      %v507 = vld [vmem:[#allocation2 + $0xaa] sm:$0xff]
      %v508 = vld [vmem:[#allocation2 + $0xb2] sm:$0xff]
      %v509 = vld [vmem:[#allocation2 + $0xc2] sm:$0xff]
      %v510 = vld [vmem:[#allocation2 + $0xca] sm:$0xff]
      %v511 = vld [vmem:[#allocation2 + $0xda] sm:$0xff]
      %v512 = vld [vmem:[#allocation2 + $0xe2] sm:$0xff]
      %v513 = vld [vmem:[#allocation2 + $0xf2] sm:$0xff]
      %v514 = vld [vmem:[#allocation2 + $0xfa] sm:$0xff]
      %v515 = vld [vmem:[#allocation2 + $0x10a] sm:$0xff]
      %v516 = vld [vmem:[#allocation2 + $0x112] sm:$0xff]
      %v517 = vld [vmem:[#allocation2 + $0x122] sm:$0xff]
      %v518 = vld [vmem:[#allocation2 + $0x12a] sm:$0xff]
      %v519 = vld [vmem:[#allocation2 + $0x13a] sm:$0xff]
      %v520 = vld [vmem:[#allocation2 + $0x142] sm:$0xff]
      %v521 = vld [vmem:[#allocation2 + $0x152] sm:$0xff]
      %v522 = vld [vmem:[#allocation2 + $0x15a] sm:$0xff]
      %v523 = vld [vmem:[#allocation2 + $0x16a] sm:$0xff]
      %v524 = vld [vmem:[#allocation2 + $0x172] sm:$0xff]
      %v525 = vld [vmem:[%s396] sm:$0xff]
      %v526 = vld [vmem:[%s396 + $0x8] sm:$0xff]
      %v527 = vld [vmem:[%s396 + $0x18] sm:$0xff]
      %v528 = vld [vmem:[%s396 + $0x20] sm:$0xff]
      %v529 = vld [vmem:[%s396 + $0x30] sm:$0xff]
      %v530 = vld [vmem:[%s396 + $0x38] sm:$0xff]
      %v531 = vld [vmem:[%s396 + $0x48] sm:$0xff]
      %v532 = vld [vmem:[%s396 + $0x50] sm:$0xff]
      %v533 = vld [vmem:[%s396 + $0x60] sm:$0xff]
      %v534 = vld [vmem:[%s396 + $0x68] sm:$0xff]
      %v535 = vld [vmem:[%s396 + $0x78] sm:$0xff]
      %v536 = vld [vmem:[%s396 + $0x80] sm:$0xff]
      %v537 = vld [vmem:[%s396 + $0x90] sm:$0xff]
      %v538 = vld [vmem:[%s396 + $0x98] sm:$0xff]
      %v539 = vld [vmem:[%s396 + $0xa8] sm:$0xff]
      %v540 = vld [vmem:[%s396 + $0xb0] sm:$0xff]
      %v541 = vld [vmem:[%s396 + $0xc0] sm:$0xff]
      %v542 = vld [vmem:[%s396 + $0xc8] sm:$0xff]
      %v543 = vld [vmem:[%s396 + $0xd8] sm:$0xff]
      %v544 = vld [vmem:[%s396 + $0xe0] sm:$0xff]
      %v545 = vld [vmem:[%s396 + $0xf0] sm:$0xff]
      %v546 = vld [vmem:[%s396 + $0xf8] sm:$0xff]
      %v547 = vld [vmem:[%s396 + $0x108] sm:$0xff]
      %v548 = vld [vmem:[%s396 + $0x110] sm:$0xff]
      %v549 = vld [vmem:[%s396 + $0x120] sm:$0xff]
      %v550 = vld [vmem:[%s396 + $0x128] sm:$0xff]
      %v551 = vld [vmem:[%s396 + $0x138] sm:$0xff]
      %v552 = vld [vmem:[%s396 + $0x140] sm:$0xff]
      %v553 = vld [vmem:[%s396 + $0x150] sm:$0xff]
      %v554 = vld [vmem:[%s396 + $0x158] sm:$0xff]
      %v555 = vld [vmem:[%s396 + $0x168] sm:$0xff]
      %v556 = vld [vmem:[%s396 + $0x170] sm:$0xff]
      %v557 = vld [vmem:[%s396 + $0x1] sm:$0xff]
      %v558 = vld [vmem:[%s396 + $0x9] sm:$0xff]
      %v559 = vld [vmem:[%s396 + $0x19] sm:$0xff]
      %v560 = vld [vmem:[%s396 + $0x21] sm:$0xff]
      %v561 = vld [vmem:[%s396 + $0x31] sm:$0xff]
      %v562 = vld [vmem:[%s396 + $0x39] sm:$0xff]
      %v563 = vld [vmem:[%s396 + $0x49] sm:$0xff]
      %v564 = vld [vmem:[%s396 + $0x51] sm:$0xff]
      %v565 = vld [vmem:[%s396 + $0x61] sm:$0xff]
      %v566 = vld [vmem:[%s396 + $0x69] sm:$0xff]
      %v567 = vld [vmem:[%s396 + $0x79] sm:$0xff]
      %v568 = vld [vmem:[%s396 + $0x81] sm:$0xff]
      %v569 = vld [vmem:[%s396 + $0x91] sm:$0xff]
      %v570 = vld [vmem:[%s396 + $0x99] sm:$0xff]
      %v571 = vld [vmem:[%s396 + $0xa9] sm:$0xff]
      %v572 = vld [vmem:[%s396 + $0xb1] sm:$0xff]
      %v573 = vld [vmem:[%s396 + $0xc1] sm:$0xff]
      %v574 = vld [vmem:[%s396 + $0xc9] sm:$0xff]
      %v575 = vld [vmem:[%s396 + $0xd9] sm:$0xff]
      %v576 = vld [vmem:[%s396 + $0xe1] sm:$0xff]
      %v577 = vld [vmem:[%s396 + $0xf1] sm:$0xff]
      %v578 = vld [vmem:[%s396 + $0xf9] sm:$0xff]
      %v579 = vld [vmem:[%s396 + $0x109] sm:$0xff]
      %v580 = vld [vmem:[%s396 + $0x111] sm:$0xff]
      %v581 = vld [vmem:[%s396 + $0x121] sm:$0xff]
      %v582 = vld [vmem:[%s396 + $0x129] sm:$0xff]
      %v583 = vld [vmem:[%s396 + $0x139] sm:$0xff]
      %v584 = vld [vmem:[%s396 + $0x141] sm:$0xff]
      %v585 = vld [vmem:[%s396 + $0x151] sm:$0xff]
      %v586 = vld [vmem:[%s396 + $0x159] sm:$0xff]
      %v587 = vld [vmem:[%s396 + $0x169] sm:$0xff]
      %v588 = vld [vmem:[%s396 + $0x171] sm:$0xff]
      %v589 = vld [vmem:[%s396 + $0x2] sm:$0xff]
      %v590 = vld [vmem:[%s396 + $0xa] sm:$0xff]
      %v591 = vld [vmem:[%s396 + $0x1a] sm:$0xff]
      %v592 = vld [vmem:[%s396 + $0x22] sm:$0xff]
      %v593 = vld [vmem:[%s396 + $0x32] sm:$0xff]
      %v594 = vld [vmem:[%s396 + $0x3a] sm:$0xff]
      %v595 = vld [vmem:[%s396 + $0x4a] sm:$0xff]
      %v596 = vld [vmem:[%s396 + $0x52] sm:$0xff]
      %v597 = vld [vmem:[%s396 + $0x62] sm:$0xff]
      %v598 = vld [vmem:[%s396 + $0x6a] sm:$0xff]
      %v599 = vld [vmem:[%s396 + $0x7a] sm:$0xff]
      %v600 = vld [vmem:[%s396 + $0x82] sm:$0xff]
      %v601 = vld [vmem:[%s396 + $0x92] sm:$0xff]
      %v602 = vld [vmem:[%s396 + $0x9a] sm:$0xff]
      %v603 = vld [vmem:[%s396 + $0xaa] sm:$0xff]
      %v604 = vld [vmem:[%s396 + $0xb2] sm:$0xff]
      %v605 = vld [vmem:[%s396 + $0xc2] sm:$0xff]
      %v606 = vld [vmem:[%s396 + $0xca] sm:$0xff]
      %v607 = vld [vmem:[%s396 + $0xda] sm:$0xff]
      %v608 = vld [vmem:[%s396 + $0xe2] sm:$0xff]
      %v609 = vld [vmem:[%s396 + $0xf2] sm:$0xff]
      %v610 = vld [vmem:[%s396 + $0xfa] sm:$0xff]
      %v611 = vld [vmem:[%s396 + $0x10a] sm:$0xff]
      %v612 = vld [vmem:[%s396 + $0x112] sm:$0xff]
      %v613 = vld [vmem:[%s396 + $0x122] sm:$0xff]
      %v614 = vld [vmem:[%s396 + $0x12a] sm:$0xff]
      %v615 = vld [vmem:[%s396 + $0x13a] sm:$0xff]
      %v616 = vld [vmem:[%s396 + $0x142] sm:$0xff]
      %v617 = vld [vmem:[%s396 + $0x152] sm:$0xff]
      %v618 = vld [vmem:[%s396 + $0x15a] sm:$0xff]
      %v619 = vld [vmem:[%s396 + $0x16a] sm:$0xff]
      %v620 = vld [vmem:[%s396 + $0x172] sm:$0xff]
      %s621 = scalar_lea.vmem [#allocation2], 48
      %v622 = vld [vmem:[%s621] sm:$0xff]
      %v623 = vld [vmem:[%s621 + $0x8] sm:$0xff]
      %v624 = vld [vmem:[%s621 + $0x18] sm:$0xff]
      %v625 = vld [vmem:[%s621 + $0x20] sm:$0xff]
      %v626 = vld [vmem:[%s621 + $0x30] sm:$0xff]
      %v627 = vld [vmem:[%s621 + $0x38] sm:$0xff]
      %v628 = vld [vmem:[%s621 + $0x48] sm:$0xff]
      %v629 = vld [vmem:[%s621 + $0x50] sm:$0xff]
      %v630 = vld [vmem:[%s621 + $0x60] sm:$0xff]
      %v631 = vld [vmem:[%s621 + $0x68] sm:$0xff]
      %v632 = vld [vmem:[%s621 + $0x78] sm:$0xff]
      %v633 = vld [vmem:[%s621 + $0x80] sm:$0xff]
      %v634 = vld [vmem:[%s621 + $0x90] sm:$0xff]
      %v635 = vld [vmem:[%s621 + $0x98] sm:$0xff]
      %v636 = vld [vmem:[%s621 + $0xa8] sm:$0xff]
      %v637 = vld [vmem:[%s621 + $0xb0] sm:$0xff]
      %v638 = vld [vmem:[%s621 + $0xc0] sm:$0xff]
      %v639 = vld [vmem:[%s621 + $0xc8] sm:$0xff]
      %v640 = vld [vmem:[%s621 + $0xd8] sm:$0xff]
      %v641 = vld [vmem:[%s621 + $0xe0] sm:$0xff]
      %v642 = vld [vmem:[%s621 + $0xf0] sm:$0xff]
      %v643 = vld [vmem:[%s621 + $0xf8] sm:$0xff]
      %v644 = vld [vmem:[%s621 + $0x108] sm:$0xff]
      %v645 = vld [vmem:[%s621 + $0x110] sm:$0xff]
      %v646 = vld [vmem:[%s621 + $0x120] sm:$0xff]
      %v647 = vld [vmem:[%s621 + $0x128] sm:$0xff]
      %v648 = vld [vmem:[%s621 + $0x138] sm:$0xff]
      %v649 = vld [vmem:[%s621 + $0x140] sm:$0xff]
      %v650 = vld [vmem:[%s621 + $0x150] sm:$0xff]
      %v651 = vld [vmem:[%s621 + $0x158] sm:$0xff]
      %v652 = vld [vmem:[%s621 + $0x168] sm:$0xff]
      %v653 = vld [vmem:[%s621 + $0x170] sm:$0xff]
      %v654 = vld [vmem:[%s621 + $0x1] sm:$0xff]
      %v655 = vld [vmem:[%s621 + $0x9] sm:$0xff]
      %v656 = vld [vmem:[%s621 + $0x19] sm:$0xff]
      %v657 = vld [vmem:[%s621 + $0x21] sm:$0xff]
      %v658 = vld [vmem:[%s621 + $0x31] sm:$0xff]
      %v659 = vld [vmem:[%s621 + $0x39] sm:$0xff]
      %v660 = vld [vmem:[%s621 + $0x49] sm:$0xff]
      %v661 = vld [vmem:[%s621 + $0x51] sm:$0xff]
      %v662 = vld [vmem:[%s621 + $0x61] sm:$0xff]
      %v663 = vld [vmem:[%s621 + $0x69] sm:$0xff]
      %v664 = vld [vmem:[%s621 + $0x79] sm:$0xff]
      %v665 = vld [vmem:[%s621 + $0x81] sm:$0xff]
      %v666 = vld [vmem:[%s621 + $0x91] sm:$0xff]
      %v667 = vld [vmem:[%s621 + $0x99] sm:$0xff]
      %v668 = vld [vmem:[%s621 + $0xa9] sm:$0xff]
      %v669 = vld [vmem:[%s621 + $0xb1] sm:$0xff]
      %v670 = vld [vmem:[%s621 + $0xc1] sm:$0xff]
      %v671 = vld [vmem:[%s621 + $0xc9] sm:$0xff]
      %v672 = vld [vmem:[%s621 + $0xd9] sm:$0xff]
      %v673 = vld [vmem:[%s621 + $0xe1] sm:$0xff]
      %v674 = vld [vmem:[%s621 + $0xf1] sm:$0xff]
      %v675 = vld [vmem:[%s621 + $0xf9] sm:$0xff]
      %v676 = vld [vmem:[%s621 + $0x109] sm:$0xff]
      %v677 = vld [vmem:[%s621 + $0x111] sm:$0xff]
      %v678 = vld [vmem:[%s621 + $0x121] sm:$0xff]
      %v679 = vld [vmem:[%s621 + $0x129] sm:$0xff]
      %v680 = vld [vmem:[%s621 + $0x139] sm:$0xff]
      %v681 = vld [vmem:[%s621 + $0x141] sm:$0xff]
      %v682 = vld [vmem:[%s621 + $0x151] sm:$0xff]
      %v683 = vld [vmem:[%s621 + $0x159] sm:$0xff]
      %v684 = vld [vmem:[%s621 + $0x169] sm:$0xff]
      %v685 = vld [vmem:[%s621 + $0x171] sm:$0xff]
      %v686 = vld [vmem:[%s621 + $0x2] sm:$0xff]
      %v687 = vld [vmem:[%s621 + $0xa] sm:$0xff]
      %v688 = vld [vmem:[%s621 + $0x1a] sm:$0xff]
      %v689 = vld [vmem:[%s621 + $0x22] sm:$0xff]
      %v690 = vld [vmem:[%s621 + $0x32] sm:$0xff]
      %v691 = vld [vmem:[%s621 + $0x3a] sm:$0xff]
      %v692 = vld [vmem:[%s621 + $0x4a] sm:$0xff]
      %v693 = vld [vmem:[%s621 + $0x52] sm:$0xff]
      %v694 = vld [vmem:[%s621 + $0x62] sm:$0xff]
      %v695 = vld [vmem:[%s621 + $0x6a] sm:$0xff]
      %v696 = vld [vmem:[%s621 + $0x7a] sm:$0xff]
      %v697 = vld [vmem:[%s621 + $0x82] sm:$0xff]
      %v698 = vld [vmem:[%s621 + $0x92] sm:$0xff]
      %v699 = vld [vmem:[%s621 + $0x9a] sm:$0xff]
      %v700 = vld [vmem:[%s621 + $0xaa] sm:$0xff]
      %v701 = vld [vmem:[%s621 + $0xb2] sm:$0xff]
      %v702 = vld [vmem:[%s621 + $0xc2] sm:$0xff]
      %v703 = vld [vmem:[%s621 + $0xca] sm:$0xff]
      %v704 = vld [vmem:[%s621 + $0xda] sm:$0xff]
      %v705 = vld [vmem:[%s621 + $0xe2] sm:$0xff]
      %v706 = vld [vmem:[%s621 + $0xf2] sm:$0xff]
      %v707 = vld [vmem:[%s621 + $0xfa] sm:$0xff]
      %v708 = vld [vmem:[%s621 + $0x10a] sm:$0xff]
      %v709 = vld [vmem:[%s621 + $0x112] sm:$0xff]
      %v710 = vld [vmem:[%s621 + $0x122] sm:$0xff]
      %v711 = vld [vmem:[%s621 + $0x12a] sm:$0xff]
      %v712 = vld [vmem:[%s621 + $0x13a] sm:$0xff]
      %v713 = vld [vmem:[%s621 + $0x142] sm:$0xff]
      %v714 = vld [vmem:[%s621 + $0x152] sm:$0xff]
      %v715 = vld [vmem:[%s621 + $0x15a] sm:$0xff]
      %v716 = vld [vmem:[%s621 + $0x16a] sm:$0xff]
      %v717 = vld [vmem:[%s621 + $0x172] sm:$0xff]
      %750 = vrot.lane.b32.xlu0 %v461, 32
      %v751 = vpop.permute.xlu0 %750
      %752 = vrot.lane.b32.xlu0 %v462, 32
      %v753 = vpop.permute.xlu0 %752
      %754 = vrot.lane.b32.xlu0 %v463, 32
      %v755 = vpop.permute.xlu0 %754
      %756 = vrot.lane.b32.xlu0 %v464, 32
      %v757 = vpop.permute.xlu0 %756
      %758 = vrot.lane.b32.xlu0 %v465, 32
      %v759 = vpop.permute.xlu0 %758
      %760 = vrot.lane.b32.xlu0 %v466, 32
      %v761 = vpop.permute.xlu0 %760
      %762 = vrot.lane.b32.xlu0 %v467, 32
      %v763 = vpop.permute.xlu0 %762
      %764 = vrot.lane.b32.xlu0 %v468, 32
      %v765 = vpop.permute.xlu0 %764
      %766 = vrot.lane.b32.xlu0 %v469, 32
      %v767 = vpop.permute.xlu0 %766
      %768 = vrot.lane.b32.xlu0 %v470, 32
      %v769 = vpop.permute.xlu0 %768
      %770 = vrot.lane.b32.xlu0 %v471, 32
      %v771 = vpop.permute.xlu0 %770
      %772 = vrot.lane.b32.xlu0 %v472, 32
      %v773 = vpop.permute.xlu0 %772
      %774 = vrot.lane.b32.xlu0 %v473, 32
      %v775 = vpop.permute.xlu0 %774
      %776 = vrot.lane.b32.xlu0 %v474, 32
      %v777 = vpop.permute.xlu0 %776
      %778 = vrot.lane.b32.xlu0 %v475, 32
      %v779 = vpop.permute.xlu0 %778
      %780 = vrot.lane.b32.xlu0 %v476, 32
      %v781 = vpop.permute.xlu0 %780
      %782 = vrot.lane.b32.xlu0 %v477, 32
      %v783 = vpop.permute.xlu0 %782
      %784 = vrot.lane.b32.xlu0 %v478, 32
      %v785 = vpop.permute.xlu0 %784
      %786 = vrot.lane.b32.xlu0 %v479, 32
      %v787 = vpop.permute.xlu0 %786
      %788 = vrot.lane.b32.xlu0 %v480, 32
      %v789 = vpop.permute.xlu0 %788
      %790 = vrot.lane.b32.xlu0 %v481, 32
      %v791 = vpop.permute.xlu0 %790
      %792 = vrot.lane.b32.xlu0 %v482, 32
      %v793 = vpop.permute.xlu0 %792
      %794 = vrot.lane.b32.xlu0 %v483, 32
      %v795 = vpop.permute.xlu0 %794
      %796 = vrot.lane.b32.xlu0 %v484, 32
      %v797 = vpop.permute.xlu0 %796
      %798 = vrot.lane.b32.xlu0 %v485, 32
      %v799 = vpop.permute.xlu0 %798
      %800 = vrot.lane.b32.xlu0 %v486, 32
      %v801 = vpop.permute.xlu0 %800
      %802 = vrot.lane.b32.xlu0 %v487, 32
      %v803 = vpop.permute.xlu0 %802
      %804 = vrot.lane.b32.xlu0 %v488, 32
      %v805 = vpop.permute.xlu0 %804
      %806 = vrot.lane.b32.xlu0 %v489, 32
      %v807 = vpop.permute.xlu0 %806
      %808 = vrot.lane.b32.xlu0 %v490, 32
      %v809 = vpop.permute.xlu0 %808
      %810 = vrot.lane.b32.xlu0 %v491, 32
      %v811 = vpop.permute.xlu0 %810
      %812 = vrot.lane.b32.xlu0 %v492, 32
      %v813 = vpop.permute.xlu0 %812
      %878 = vrot.lane.b32.xlu0 %v493, 64
      %v879 = vpop.permute.xlu0 %878
      %880 = vrot.lane.b32.xlu0 %v494, 64
      %v881 = vpop.permute.xlu0 %880
      %882 = vrot.lane.b32.xlu0 %v495, 64
      %v883 = vpop.permute.xlu0 %882
      %884 = vrot.lane.b32.xlu0 %v496, 64
      %v885 = vpop.permute.xlu0 %884
      %886 = vrot.lane.b32.xlu0 %v497, 64
      %v887 = vpop.permute.xlu0 %886
      %888 = vrot.lane.b32.xlu0 %v498, 64
      %v889 = vpop.permute.xlu0 %888
      %890 = vrot.lane.b32.xlu0 %v499, 64
      %v891 = vpop.permute.xlu0 %890
      %892 = vrot.lane.b32.xlu0 %v500, 64
      %v893 = vpop.permute.xlu0 %892
      %894 = vrot.lane.b32.xlu0 %v501, 64
      %v895 = vpop.permute.xlu0 %894
      %896 = vrot.lane.b32.xlu0 %v502, 64
      %v897 = vpop.permute.xlu0 %896
      %898 = vrot.lane.b32.xlu0 %v503, 64
      %v899 = vpop.permute.xlu0 %898
      %900 = vrot.lane.b32.xlu0 %v504, 64
      %v901 = vpop.permute.xlu0 %900
      %902 = vrot.lane.b32.xlu0 %v505, 64
      %v903 = vpop.permute.xlu0 %902
      %904 = vrot.lane.b32.xlu0 %v506, 64
      %v905 = vpop.permute.xlu0 %904
      %906 = vrot.lane.b32.xlu0 %v507, 64
      %v907 = vpop.permute.xlu0 %906
      %908 = vrot.lane.b32.xlu0 %v508, 64
      %v909 = vpop.permute.xlu0 %908
      %910 = vrot.lane.b32.xlu0 %v509, 64
      %v911 = vpop.permute.xlu0 %910
      %912 = vrot.lane.b32.xlu0 %v510, 64
      %v913 = vpop.permute.xlu0 %912
      %914 = vrot.lane.b32.xlu0 %v511, 64
      %v915 = vpop.permute.xlu0 %914
      %916 = vrot.lane.b32.xlu0 %v512, 64
      %v917 = vpop.permute.xlu0 %916
      %918 = vrot.lane.b32.xlu0 %v513, 64
      %v919 = vpop.permute.xlu0 %918
      %920 = vrot.lane.b32.xlu0 %v514, 64
      %v921 = vpop.permute.xlu0 %920
      %922 = vrot.lane.b32.xlu0 %v515, 64
      %v923 = vpop.permute.xlu0 %922
      %924 = vrot.lane.b32.xlu0 %v516, 64
      %v925 = vpop.permute.xlu0 %924
      %926 = vrot.lane.b32.xlu0 %v517, 64
      %v927 = vpop.permute.xlu0 %926
      %928 = vrot.lane.b32.xlu0 %v518, 64
      %v929 = vpop.permute.xlu0 %928
      %930 = vrot.lane.b32.xlu0 %v519, 64
      %v931 = vpop.permute.xlu0 %930
      %932 = vrot.lane.b32.xlu0 %v520, 64
      %v933 = vpop.permute.xlu0 %932
      %934 = vrot.lane.b32.xlu0 %v521, 64
      %v935 = vpop.permute.xlu0 %934
      %936 = vrot.lane.b32.xlu0 %v522, 64
      %v937 = vpop.permute.xlu0 %936
      %938 = vrot.lane.b32.xlu0 %v523, 64
      %v939 = vpop.permute.xlu0 %938
      %940 = vrot.lane.b32.xlu0 %v524, 64
      %v941 = vpop.permute.xlu0 %940
      %1006 = vrot.lane.b32.xlu0 %v525, 96
      %v1007 = vpop.permute.xlu0 %1006
      %1008 = vrot.lane.b32.xlu0 %v526, 96
      %v1009 = vpop.permute.xlu0 %1008
      %1010 = vrot.lane.b32.xlu0 %v527, 96
      %v1011 = vpop.permute.xlu0 %1010
      %1012 = vrot.lane.b32.xlu0 %v528, 96
      %v1013 = vpop.permute.xlu0 %1012
      %1014 = vrot.lane.b32.xlu0 %v529, 96
      %v1015 = vpop.permute.xlu0 %1014
      %1016 = vrot.lane.b32.xlu0 %v530, 96
      %v1017 = vpop.permute.xlu0 %1016
      %1018 = vrot.lane.b32.xlu0 %v531, 96
      %v1019 = vpop.permute.xlu0 %1018
      %1020 = vrot.lane.b32.xlu0 %v532, 96
      %v1021 = vpop.permute.xlu0 %1020
      %1022 = vrot.lane.b32.xlu0 %v533, 96
      %v1023 = vpop.permute.xlu0 %1022
      %1024 = vrot.lane.b32.xlu0 %v534, 96
      %v1025 = vpop.permute.xlu0 %1024
      %1026 = vrot.lane.b32.xlu0 %v535, 96
      %v1027 = vpop.permute.xlu0 %1026
      %1028 = vrot.lane.b32.xlu0 %v536, 96
      %v1029 = vpop.permute.xlu0 %1028
      %1030 = vrot.lane.b32.xlu0 %v537, 96
      %v1031 = vpop.permute.xlu0 %1030
      %1032 = vrot.lane.b32.xlu0 %v538, 96
      %v1033 = vpop.permute.xlu0 %1032
      %1034 = vrot.lane.b32.xlu0 %v539, 96
      %v1035 = vpop.permute.xlu0 %1034
      %1036 = vrot.lane.b32.xlu0 %v540, 96
      %v1037 = vpop.permute.xlu0 %1036
      %1038 = vrot.lane.b32.xlu0 %v541, 96
      %v1039 = vpop.permute.xlu0 %1038
      %1040 = vrot.lane.b32.xlu0 %v542, 96
      %v1041 = vpop.permute.xlu0 %1040
      %1042 = vrot.lane.b32.xlu0 %v543, 96
      %v1043 = vpop.permute.xlu0 %1042
      %1044 = vrot.lane.b32.xlu0 %v544, 96
      %v1045 = vpop.permute.xlu0 %1044
      %1046 = vrot.lane.b32.xlu0 %v545, 96
      %v1047 = vpop.permute.xlu0 %1046
      %1048 = vrot.lane.b32.xlu0 %v546, 96
      %v1049 = vpop.permute.xlu0 %1048
      %1050 = vrot.lane.b32.xlu0 %v547, 96
      %v1051 = vpop.permute.xlu0 %1050
      %1052 = vrot.lane.b32.xlu0 %v548, 96
      %v1053 = vpop.permute.xlu0 %1052
      %1054 = vrot.lane.b32.xlu0 %v549, 96
      %v1055 = vpop.permute.xlu0 %1054
      %1056 = vrot.lane.b32.xlu0 %v550, 96
      %v1057 = vpop.permute.xlu0 %1056
      %1058 = vrot.lane.b32.xlu0 %v551, 96
      %v1059 = vpop.permute.xlu0 %1058
      %1060 = vrot.lane.b32.xlu0 %v552, 96
      %v1061 = vpop.permute.xlu0 %1060
      %1062 = vrot.lane.b32.xlu0 %v553, 96
      %v1063 = vpop.permute.xlu0 %1062
      %1064 = vrot.lane.b32.xlu0 %v554, 96
      %v1065 = vpop.permute.xlu0 %1064
      %1066 = vrot.lane.b32.xlu0 %v555, 96
      %v1067 = vpop.permute.xlu0 %1066
      %1068 = vrot.lane.b32.xlu0 %v556, 96
      %v1069 = vpop.permute.xlu0 %1068
      %1134 = vrot.lane.b32.xlu0 %v589, 32
      %v1135 = vpop.permute.xlu0 %1134
      %1136 = vrot.lane.b32.xlu0 %v590, 32
      %v1137 = vpop.permute.xlu0 %1136
      %1138 = vrot.lane.b32.xlu0 %v591, 32
      %v1139 = vpop.permute.xlu0 %1138
      %1140 = vrot.lane.b32.xlu0 %v592, 32
      %v1141 = vpop.permute.xlu0 %1140
      %1142 = vrot.lane.b32.xlu0 %v593, 32
      %v1143 = vpop.permute.xlu0 %1142
      %1144 = vrot.lane.b32.xlu0 %v594, 32
      %v1145 = vpop.permute.xlu0 %1144
      %1146 = vrot.lane.b32.xlu0 %v595, 32
      %v1147 = vpop.permute.xlu0 %1146
      %1148 = vrot.lane.b32.xlu0 %v596, 32
      %v1149 = vpop.permute.xlu0 %1148
      %1150 = vrot.lane.b32.xlu0 %v597, 32
      %v1151 = vpop.permute.xlu0 %1150
      %1152 = vrot.lane.b32.xlu0 %v598, 32
      %v1153 = vpop.permute.xlu0 %1152
      %1154 = vrot.lane.b32.xlu0 %v599, 32
      %v1155 = vpop.permute.xlu0 %1154
      %1156 = vrot.lane.b32.xlu0 %v600, 32
      %v1157 = vpop.permute.xlu0 %1156
      %1158 = vrot.lane.b32.xlu0 %v601, 32
      %v1159 = vpop.permute.xlu0 %1158
      %1160 = vrot.lane.b32.xlu0 %v602, 32
      %v1161 = vpop.permute.xlu0 %1160
      %1162 = vrot.lane.b32.xlu0 %v603, 32
      %v1163 = vpop.permute.xlu0 %1162
      %1164 = vrot.lane.b32.xlu0 %v604, 32
      %v1165 = vpop.permute.xlu0 %1164
      %1166 = vrot.lane.b32.xlu0 %v605, 32
      %v1167 = vpop.permute.xlu0 %1166
      %1168 = vrot.lane.b32.xlu0 %v606, 32
      %v1169 = vpop.permute.xlu0 %1168
      %1170 = vrot.lane.b32.xlu0 %v607, 32
      %v1171 = vpop.permute.xlu0 %1170
      %1172 = vrot.lane.b32.xlu0 %v608, 32
      %v1173 = vpop.permute.xlu0 %1172
      %1174 = vrot.lane.b32.xlu0 %v609, 32
      %v1175 = vpop.permute.xlu0 %1174
      %1176 = vrot.lane.b32.xlu0 %v610, 32
      %v1177 = vpop.permute.xlu0 %1176
      %1178 = vrot.lane.b32.xlu0 %v611, 32
      %v1179 = vpop.permute.xlu0 %1178
      %1180 = vrot.lane.b32.xlu0 %v612, 32
      %v1181 = vpop.permute.xlu0 %1180
      %1182 = vrot.lane.b32.xlu0 %v613, 32
      %v1183 = vpop.permute.xlu0 %1182
      %1184 = vrot.lane.b32.xlu0 %v614, 32
      %v1185 = vpop.permute.xlu0 %1184
      %1186 = vrot.lane.b32.xlu0 %v615, 32
      %v1187 = vpop.permute.xlu0 %1186
      %1188 = vrot.lane.b32.xlu0 %v616, 32
      %v1189 = vpop.permute.xlu0 %1188
      %1190 = vrot.lane.b32.xlu0 %v617, 32
      %v1191 = vpop.permute.xlu0 %1190
      %1192 = vrot.lane.b32.xlu0 %v618, 32
      %v1193 = vpop.permute.xlu0 %1192
      %1194 = vrot.lane.b32.xlu0 %v619, 32
      %v1195 = vpop.permute.xlu0 %1194
      %1196 = vrot.lane.b32.xlu0 %v620, 32
      %v1197 = vpop.permute.xlu0 %1196
      %1262 = vrot.lane.b32.xlu0 %v622, 64
      %v1263 = vpop.permute.xlu0 %1262
      %1264 = vrot.lane.b32.xlu0 %v623, 64
      %v1265 = vpop.permute.xlu0 %1264
      %1266 = vrot.lane.b32.xlu0 %v624, 64
      %v1267 = vpop.permute.xlu0 %1266
      %1268 = vrot.lane.b32.xlu0 %v625, 64
      %v1269 = vpop.permute.xlu0 %1268
      %1270 = vrot.lane.b32.xlu0 %v626, 64
      %v1271 = vpop.permute.xlu0 %1270
      %1272 = vrot.lane.b32.xlu0 %v627, 64
      %v1273 = vpop.permute.xlu0 %1272
      %1274 = vrot.lane.b32.xlu0 %v628, 64
      %v1275 = vpop.permute.xlu0 %1274
      %1276 = vrot.lane.b32.xlu0 %v629, 64
      %v1277 = vpop.permute.xlu0 %1276
      %1278 = vrot.lane.b32.xlu0 %v630, 64
      %v1279 = vpop.permute.xlu0 %1278
      %1280 = vrot.lane.b32.xlu0 %v631, 64
      %v1281 = vpop.permute.xlu0 %1280
      %1282 = vrot.lane.b32.xlu0 %v632, 64
      %v1283 = vpop.permute.xlu0 %1282
      %1284 = vrot.lane.b32.xlu0 %v633, 64
      %v1285 = vpop.permute.xlu0 %1284
      %1286 = vrot.lane.b32.xlu0 %v634, 64
      %v1287 = vpop.permute.xlu0 %1286
      %1288 = vrot.lane.b32.xlu0 %v635, 64
      %v1289 = vpop.permute.xlu0 %1288
      %1290 = vrot.lane.b32.xlu0 %v636, 64
      %v1291 = vpop.permute.xlu0 %1290
      %1292 = vrot.lane.b32.xlu0 %v637, 64
      %v1293 = vpop.permute.xlu0 %1292
      %1294 = vrot.lane.b32.xlu0 %v638, 64
      %v1295 = vpop.permute.xlu0 %1294
      %1296 = vrot.lane.b32.xlu0 %v639, 64
      %v1297 = vpop.permute.xlu0 %1296
      %1298 = vrot.lane.b32.xlu0 %v640, 64
      %v1299 = vpop.permute.xlu0 %1298
      %1300 = vrot.lane.b32.xlu0 %v641, 64
      %v1301 = vpop.permute.xlu0 %1300
      %1302 = vrot.lane.b32.xlu0 %v642, 64
      %v1303 = vpop.permute.xlu0 %1302
      %1304 = vrot.lane.b32.xlu0 %v643, 64
      %v1305 = vpop.permute.xlu0 %1304
      %1306 = vrot.lane.b32.xlu0 %v644, 64
      %v1307 = vpop.permute.xlu0 %1306
      %1308 = vrot.lane.b32.xlu0 %v645, 64
      %v1309 = vpop.permute.xlu0 %1308
      %1310 = vrot.lane.b32.xlu0 %v646, 64
      %v1311 = vpop.permute.xlu0 %1310
      %1312 = vrot.lane.b32.xlu0 %v647, 64
      %v1313 = vpop.permute.xlu0 %1312
      %1314 = vrot.lane.b32.xlu0 %v648, 64
      %v1315 = vpop.permute.xlu0 %1314
      %1316 = vrot.lane.b32.xlu0 %v649, 64
      %v1317 = vpop.permute.xlu0 %1316
      %1318 = vrot.lane.b32.xlu0 %v650, 64
      %v1319 = vpop.permute.xlu0 %1318
      %1320 = vrot.lane.b32.xlu0 %v651, 64
      %v1321 = vpop.permute.xlu0 %1320
      %1322 = vrot.lane.b32.xlu0 %v652, 64
      %v1323 = vpop.permute.xlu0 %1322
      %1324 = vrot.lane.b32.xlu0 %v653, 64
      %v1325 = vpop.permute.xlu0 %1324
      %1390 = vrot.lane.b32.xlu0 %v654, 96
      %v1391 = vpop.permute.xlu0 %1390
      %1392 = vrot.lane.b32.xlu0 %v655, 96
      %v1393 = vpop.permute.xlu0 %1392
      %1394 = vrot.lane.b32.xlu0 %v656, 96
      %v1395 = vpop.permute.xlu0 %1394
      %1396 = vrot.lane.b32.xlu0 %v657, 96
      %v1397 = vpop.permute.xlu0 %1396
      %1398 = vrot.lane.b32.xlu0 %v658, 96
      %v1399 = vpop.permute.xlu0 %1398
      %1400 = vrot.lane.b32.xlu0 %v659, 96
      %v1401 = vpop.permute.xlu0 %1400
      %1402 = vrot.lane.b32.xlu0 %v660, 96
      %v1403 = vpop.permute.xlu0 %1402
      %1404 = vrot.lane.b32.xlu0 %v661, 96
      %v1405 = vpop.permute.xlu0 %1404
      %1406 = vrot.lane.b32.xlu0 %v662, 96
      %v1407 = vpop.permute.xlu0 %1406
      %1408 = vrot.lane.b32.xlu0 %v663, 96
      %v1409 = vpop.permute.xlu0 %1408
      %1410 = vrot.lane.b32.xlu0 %v664, 96
      %v1411 = vpop.permute.xlu0 %1410
      %1412 = vrot.lane.b32.xlu0 %v665, 96
      %v1413 = vpop.permute.xlu0 %1412
      %1414 = vrot.lane.b32.xlu0 %v666, 96
      %v1415 = vpop.permute.xlu0 %1414
      %1416 = vrot.lane.b32.xlu0 %v667, 96
      %v1417 = vpop.permute.xlu0 %1416
      %1418 = vrot.lane.b32.xlu0 %v668, 96
      %v1419 = vpop.permute.xlu0 %1418
      %1420 = vrot.lane.b32.xlu0 %v669, 96
      %v1421 = vpop.permute.xlu0 %1420
      %1422 = vrot.lane.b32.xlu0 %v670, 96
      %v1423 = vpop.permute.xlu0 %1422
      %1424 = vrot.lane.b32.xlu0 %v671, 96
      %v1425 = vpop.permute.xlu0 %1424
      %1426 = vrot.lane.b32.xlu0 %v672, 96
      %v1427 = vpop.permute.xlu0 %1426
      %1428 = vrot.lane.b32.xlu0 %v673, 96
      %v1429 = vpop.permute.xlu0 %1428
      %1430 = vrot.lane.b32.xlu0 %v674, 96
      %v1431 = vpop.permute.xlu0 %1430
      %1432 = vrot.lane.b32.xlu0 %v675, 96
      %v1433 = vpop.permute.xlu0 %1432
      %1434 = vrot.lane.b32.xlu0 %v676, 96
      %v1435 = vpop.permute.xlu0 %1434
      %1436 = vrot.lane.b32.xlu0 %v677, 96
      %v1437 = vpop.permute.xlu0 %1436
      %1438 = vrot.lane.b32.xlu0 %v678, 96
      %v1439 = vpop.permute.xlu0 %1438
      %1440 = vrot.lane.b32.xlu0 %v679, 96
      %v1441 = vpop.permute.xlu0 %1440
      %1442 = vrot.lane.b32.xlu0 %v680, 96
      %v1443 = vpop.permute.xlu0 %1442
      %1444 = vrot.lane.b32.xlu0 %v681, 96
      %v1445 = vpop.permute.xlu0 %1444
      %1446 = vrot.lane.b32.xlu0 %v682, 96
      %v1447 = vpop.permute.xlu0 %1446
      %1448 = vrot.lane.b32.xlu0 %v683, 96
      %v1449 = vpop.permute.xlu0 %1448
      %1450 = vrot.lane.b32.xlu0 %v684, 96
      %v1451 = vpop.permute.xlu0 %1450
      %1452 = vrot.lane.b32.xlu0 %v685, 96
      %v1453 = vpop.permute.xlu0 %1452
      %v1486 = vsel %vm340, %v429, %v751
      %v1487 = vsel %vm340, %v430, %v753
      %v1488 = vsel %vm340, %v431, %v755
      %v1489 = vsel %vm340, %v432, %v757
      %v1490 = vsel %vm340, %v433, %v759
      %v1491 = vsel %vm340, %v434, %v761
      %v1492 = vsel %vm340, %v435, %v763
      %v1493 = vsel %vm340, %v436, %v765
      %v1494 = vsel %vm340, %v437, %v767
      %v1495 = vsel %vm340, %v438, %v769
      %v1496 = vsel %vm340, %v439, %v771
      %v1497 = vsel %vm340, %v440, %v773
      %v1498 = vsel %vm340, %v441, %v775
      %v1499 = vsel %vm340, %v442, %v777
      %v1500 = vsel %vm340, %v443, %v779
      %v1501 = vsel %vm340, %v444, %v781
      %v1502 = vsel %vm340, %v445, %v783
      %v1503 = vsel %vm340, %v446, %v785
      %v1504 = vsel %vm340, %v447, %v787
      %v1505 = vsel %vm340, %v448, %v789
      %v1506 = vsel %vm340, %v449, %v791
      %v1507 = vsel %vm340, %v450, %v793
      %v1508 = vsel %vm340, %v451, %v795
      %v1509 = vsel %vm340, %v452, %v797
      %v1510 = vsel %vm340, %v453, %v799
      %v1511 = vsel %vm340, %v454, %v801
      %v1512 = vsel %vm340, %v455, %v803
      %v1513 = vsel %vm340, %v456, %v805
      %v1514 = vsel %vm340, %v457, %v807
      %v1515 = vsel %vm340, %v458, %v809
      %v1516 = vsel %vm340, %v459, %v811
      %v1517 = vsel %vm340, %v460, %v813
      %vm1518 = vcmask 523264
      %v1519 = vsel %vm1518, %v1486, %v879
      %v1520 = vsel %vm1518, %v1487, %v881
      %v1521 = vsel %vm1518, %v1488, %v883
      %v1522 = vsel %vm1518, %v1489, %v885
      %v1523 = vsel %vm1518, %v1490, %v887
      %v1524 = vsel %vm1518, %v1491, %v889
      %v1525 = vsel %vm1518, %v1492, %v891
      %v1526 = vsel %vm1518, %v1493, %v893
      %v1527 = vsel %vm1518, %v1494, %v895
      %v1528 = vsel %vm1518, %v1495, %v897
      %v1529 = vsel %vm1518, %v1496, %v899
      %v1530 = vsel %vm1518, %v1497, %v901
      %v1531 = vsel %vm1518, %v1498, %v903
      %v1532 = vsel %vm1518, %v1499, %v905
      %v1533 = vsel %vm1518, %v1500, %v907
      %v1534 = vsel %vm1518, %v1501, %v909
      %v1535 = vsel %vm1518, %v1502, %v911
      %v1536 = vsel %vm1518, %v1503, %v913
      %v1537 = vsel %vm1518, %v1504, %v915
      %v1538 = vsel %vm1518, %v1505, %v917
      %v1539 = vsel %vm1518, %v1506, %v919
      %v1540 = vsel %vm1518, %v1507, %v921
      %v1541 = vsel %vm1518, %v1508, %v923
      %v1542 = vsel %vm1518, %v1509, %v925
      %v1543 = vsel %vm1518, %v1510, %v927
      %v1544 = vsel %vm1518, %v1511, %v929
      %v1545 = vsel %vm1518, %v1512, %v931
      %v1546 = vsel %vm1518, %v1513, %v933
      %v1547 = vsel %vm1518, %v1514, %v935
      %v1548 = vsel %vm1518, %v1515, %v937
      %v1549 = vsel %vm1518, %v1516, %v939
      %v1550 = vsel %vm1518, %v1517, %v941
      %vm1551 = vcmask 785408
      %v1552 = vsel %vm1551, %v1519, %v1007
      %v1553 = vsel %vm1551, %v1520, %v1009
      %v1554 = vsel %vm1551, %v1521, %v1011
      %v1555 = vsel %vm1551, %v1522, %v1013
      %v1556 = vsel %vm1551, %v1523, %v1015
      %v1557 = vsel %vm1551, %v1524, %v1017
      %v1558 = vsel %vm1551, %v1525, %v1019
      %v1559 = vsel %vm1551, %v1526, %v1021
      %v1560 = vsel %vm1551, %v1527, %v1023
      %v1561 = vsel %vm1551, %v1528, %v1025
      %v1562 = vsel %vm1551, %v1529, %v1027
      %v1563 = vsel %vm1551, %v1530, %v1029
      %v1564 = vsel %vm1551, %v1531, %v1031
      %v1565 = vsel %vm1551, %v1532, %v1033
      %v1566 = vsel %vm1551, %v1533, %v1035
      %v1567 = vsel %vm1551, %v1534, %v1037
      %v1568 = vsel %vm1551, %v1535, %v1039
      %v1569 = vsel %vm1551, %v1536, %v1041
      %v1570 = vsel %vm1551, %v1537, %v1043
      %v1571 = vsel %vm1551, %v1538, %v1045
      %v1572 = vsel %vm1551, %v1539, %v1047
      %v1573 = vsel %vm1551, %v1540, %v1049
      %v1574 = vsel %vm1551, %v1541, %v1051
      %v1575 = vsel %vm1551, %v1542, %v1053
      %v1576 = vsel %vm1551, %v1543, %v1055
      %v1577 = vsel %vm1551, %v1544, %v1057
      %v1578 = vsel %vm1551, %v1545, %v1059
      %v1579 = vsel %vm1551, %v1546, %v1061
      %v1580 = vsel %vm1551, %v1547, %v1063
      %v1581 = vsel %vm1551, %v1548, %v1065
      %v1582 = vsel %vm1551, %v1549, %v1067
      %v1583 = vsel %vm1551, %v1550, %v1069
      %v1584 = vsel %vm340, %v557, %v1135
      %v1585 = vsel %vm340, %v558, %v1137
      %v1586 = vsel %vm340, %v559, %v1139
      %v1587 = vsel %vm340, %v560, %v1141
      %v1588 = vsel %vm340, %v561, %v1143
      %v1589 = vsel %vm340, %v562, %v1145
      %v1590 = vsel %vm340, %v563, %v1147
      %v1591 = vsel %vm340, %v564, %v1149
      %v1592 = vsel %vm340, %v565, %v1151
      %v1593 = vsel %vm340, %v566, %v1153
      %v1594 = vsel %vm340, %v567, %v1155
      %v1595 = vsel %vm340, %v568, %v1157
      %v1596 = vsel %vm340, %v569, %v1159
      %v1597 = vsel %vm340, %v570, %v1161
      %v1598 = vsel %vm340, %v571, %v1163
      %v1599 = vsel %vm340, %v572, %v1165
      %v1600 = vsel %vm340, %v573, %v1167
      %v1601 = vsel %vm340, %v574, %v1169
      %v1602 = vsel %vm340, %v575, %v1171
      %v1603 = vsel %vm340, %v576, %v1173
      %v1604 = vsel %vm340, %v577, %v1175
      %v1605 = vsel %vm340, %v578, %v1177
      %v1606 = vsel %vm340, %v579, %v1179
      %v1607 = vsel %vm340, %v580, %v1181
      %v1608 = vsel %vm340, %v581, %v1183
      %v1609 = vsel %vm340, %v582, %v1185
      %v1610 = vsel %vm340, %v583, %v1187
      %v1611 = vsel %vm340, %v584, %v1189
      %v1612 = vsel %vm340, %v585, %v1191
      %v1613 = vsel %vm340, %v586, %v1193
      %v1614 = vsel %vm340, %v587, %v1195
      %v1615 = vsel %vm340, %v588, %v1197
      %v1616 = vsel %vm1518, %v1584, %v1263
      %v1617 = vsel %vm1518, %v1585, %v1265
      %v1618 = vsel %vm1518, %v1586, %v1267
      %v1619 = vsel %vm1518, %v1587, %v1269
      %v1620 = vsel %vm1518, %v1588, %v1271
      %v1621 = vsel %vm1518, %v1589, %v1273
      %v1622 = vsel %vm1518, %v1590, %v1275
      %v1623 = vsel %vm1518, %v1591, %v1277
      %v1624 = vsel %vm1518, %v1592, %v1279
      %v1625 = vsel %vm1518, %v1593, %v1281
      %v1626 = vsel %vm1518, %v1594, %v1283
      %v1627 = vsel %vm1518, %v1595, %v1285
      %v1628 = vsel %vm1518, %v1596, %v1287
      %v1629 = vsel %vm1518, %v1597, %v1289
      %v1630 = vsel %vm1518, %v1598, %v1291
      %v1631 = vsel %vm1518, %v1599, %v1293
      %v1632 = vsel %vm1518, %v1600, %v1295
      %v1633 = vsel %vm1518, %v1601, %v1297
      %v1634 = vsel %vm1518, %v1602, %v1299
      %v1635 = vsel %vm1518, %v1603, %v1301
      %v1636 = vsel %vm1518, %v1604, %v1303
      %v1637 = vsel %vm1518, %v1605, %v1305
      %v1638 = vsel %vm1518, %v1606, %v1307
      %v1639 = vsel %vm1518, %v1607, %v1309
      %v1640 = vsel %vm1518, %v1608, %v1311
      %v1641 = vsel %vm1518, %v1609, %v1313
      %v1642 = vsel %vm1518, %v1610, %v1315
      %v1643 = vsel %vm1518, %v1611, %v1317
      %v1644 = vsel %vm1518, %v1612, %v1319
      %v1645 = vsel %vm1518, %v1613, %v1321
      %v1646 = vsel %vm1518, %v1614, %v1323
      %v1647 = vsel %vm1518, %v1615, %v1325
      %v1648 = vsel %vm1551, %v1616, %v1391
      %v1649 = vsel %vm1551, %v1617, %v1393
      %v1650 = vsel %vm1551, %v1618, %v1395
      %v1651 = vsel %vm1551, %v1619, %v1397
      %v1652 = vsel %vm1551, %v1620, %v1399
      %v1653 = vsel %vm1551, %v1621, %v1401
      %v1654 = vsel %vm1551, %v1622, %v1403
      %v1655 = vsel %vm1551, %v1623, %v1405
      %v1656 = vsel %vm1551, %v1624, %v1407
      %v1657 = vsel %vm1551, %v1625, %v1409
      %v1658 = vsel %vm1551, %v1626, %v1411
      %v1659 = vsel %vm1551, %v1627, %v1413
      %v1660 = vsel %vm1551, %v1628, %v1415
      %v1661 = vsel %vm1551, %v1629, %v1417
      %v1662 = vsel %vm1551, %v1630, %v1419
      %v1663 = vsel %vm1551, %v1631, %v1421
      %v1664 = vsel %vm1551, %v1632, %v1423
      %v1665 = vsel %vm1551, %v1633, %v1425
      %v1666 = vsel %vm1551, %v1634, %v1427
      %v1667 = vsel %vm1551, %v1635, %v1429
      %v1668 = vsel %vm1551, %v1636, %v1431
      %v1669 = vsel %vm1551, %v1637, %v1433
      %v1670 = vsel %vm1551, %v1638, %v1435
      %v1671 = vsel %vm1551, %v1639, %v1437
      %v1672 = vsel %vm1551, %v1640, %v1439
      %v1673 = vsel %vm1551, %v1641, %v1441
      %v1674 = vsel %vm1551, %v1642, %v1443
      %v1675 = vsel %vm1551, %v1643, %v1445
      %v1676 = vsel %vm1551, %v1644, %v1447
      %v1677 = vsel %vm1551, %v1645, %v1449
      %v1678 = vsel %vm1551, %v1646, %v1451
      %v1679 = vsel %vm1551, %v1647, %v1453
      %v1680 = vld [vmem:[%s3] sm:$0x1]
      %v1682 = vlaneseq
      %v1683 = vshrl.u32 %v1682, 7
      %v1684 = vsub.s32 0, %v1683
      %v1685 = vrot.slane %v1680, %v1684
      %v1688 = vsel %vm340, %v686, 0
      %v1691 = vsel %vm340, %v687, 0
      %v1694 = vsel %vm340, %v688, 0
      %v1697 = vsel %vm340, %v689, 0
      %v1700 = vsel %vm340, %v690, 0
      %v1703 = vsel %vm340, %v691, 0
      %v1706 = vsel %vm340, %v692, 0
      %v1709 = vsel %vm340, %v693, 0
      %v1712 = vsel %vm340, %v694, 0
      %v1715 = vsel %vm340, %v695, 0
      %v1718 = vsel %vm340, %v696, 0
      %v1721 = vsel %vm340, %v697, 0
      %v1724 = vsel %vm340, %v698, 0
      %v1727 = vsel %vm340, %v699, 0
      %v1730 = vsel %vm340, %v700, 0
      %v1733 = vsel %vm340, %v701, 0
      %v1736 = vsel %vm340, %v702, 0
      %v1739 = vsel %vm340, %v703, 0
      %v1742 = vsel %vm340, %v704, 0
      %v1745 = vsel %vm340, %v705, 0
      %v1748 = vsel %vm340, %v706, 0
      %v1751 = vsel %vm340, %v707, 0
      %v1754 = vsel %vm340, %v708, 0
      %v1757 = vsel %vm340, %v709, 0
      %v1760 = vsel %vm340, %v710, 0
      %v1763 = vsel %vm340, %v711, 0
      %v1766 = vsel %vm340, %v712, 0
      %v1769 = vsel %vm340, %v713, 0
      %v1772 = vsel %vm340, %v714, 0
      %v1775 = vsel %vm340, %v715, 0
      %v1778 = vsel %vm340, %v716, 0
      %v1781 = vsel %vm340, %v717, 0
      %1783 = vmatprep.subr.mxu0 0.0
      %1784 = vmatpush1.msra.mxu0 %v319
      %1785 = vmatprep.subr.mxu0 0.0
      %1786 = vmatpush1.msra.mxu0 %v318
      %1787 = vmatprep.subr.mxu0 0.0
      %1788 = vmatpush1.msra.mxu0 %v317
      %1789 = vmatprep.subr.mxu0 0.0
      %1790 = vmatpush1.msra.mxu0 %v316
      %1791 = vmatprep.subr.mxu0 0.0
      %1792 = vmatpush1.msra.mxu0 %v315
      %1793 = vmatprep.subr.mxu0 0.0
      %1794 = vmatpush1.msra.mxu0 %v314
      %1795 = vmatprep.subr.mxu0 0.0
      %1796 = vmatpush1.msra.mxu0 %v313
      %1797 = vmatprep.subr.mxu0 0.0
      %1798 = vmatpush1.msra.mxu0 %v312
      %1799 = vmatprep.subr.mxu0 0.0
      %1800 = vmatpush1.msra.mxu0 %v311
      %1801 = vmatprep.subr.mxu0 0.0
      %1802 = vmatpush1.msra.mxu0 %v310
      %1803 = vmatprep.subr.mxu0 0.0
      %1804 = vmatpush1.msra.mxu0 %v309
      %1805 = vmatprep.subr.mxu0 0.0
      %1806 = vmatpush1.msra.mxu0 %v308
      %1807 = vmatprep.subr.mxu0 0.0
      %1808 = vmatpush1.msra.mxu0 %v307
      %1809 = vmatprep.subr.mxu0 0.0
      %1810 = vmatpush1.msra.mxu0 %v306
      %1811 = vmatprep.subr.mxu0 0.0
      %1812 = vmatpush1.msra.mxu0 %v305
      %1813 = vmatprep.subr.mxu0 0.0
      %1814 = vmatpush1.msra.mxu0 %v304
      %1815 = vmatprep.subr.mxu0 0.0
      %1816 = vmatpush2.msra.mxu0 %v335
      %1817 = vmatprep.subr.mxu0 0.0
      %1818 = vmatpush2.msra.mxu0 %v334
      %1819 = vmatprep.subr.mxu0 0.0
      %1820 = vmatpush2.msra.mxu0 %v333
      %1821 = vmatprep.subr.mxu0 0.0
      %1822 = vmatpush2.msra.mxu0 %v332
      %1823 = vmatprep.subr.mxu0 0.0
      %1824 = vmatpush2.msra.mxu0 %v331
      %1825 = vmatprep.subr.mxu0 0.0
      %1826 = vmatpush2.msra.mxu0 %v330
      %1827 = vmatprep.subr.mxu0 0.0
      %1828 = vmatpush2.msra.mxu0 %v329
      %1829 = vmatprep.subr.mxu0 0.0
      %1830 = vmatpush2.msra.mxu0 %v328
      %1831 = vmatprep.subr.mxu0 0.0
      %1832 = vmatpush2.msra.mxu0 %v327
      %1833 = vmatprep.subr.mxu0 0.0
      %1834 = vmatpush2.msra.mxu0 %v326
      %1835 = vmatprep.subr.mxu0 0.0
      %1836 = vmatpush2.msra.mxu0 %v325
      %1837 = vmatprep.subr.mxu0 0.0
      %1838 = vmatpush2.msra.mxu0 %v324
      %1839 = vmatprep.subr.mxu0 0.0
      %1840 = vmatpush2.msra.mxu0 %v323
      %1841 = vmatprep.subr.mxu0 0.0
      %1842 = vmatpush2.msra.mxu0 %v322
      %1843 = vmatprep.subr.mxu0 0.0
      %1844 = vmatpush2.msra.mxu0 %v321
      %1845 = vmatprep.subr.mxu0 0.0
      %1846 = vmatpush2.msra.mxu0 %v320
      %1847 = vmatprep.mubr.f32.mxu0 %v1648
      %1848 = vmatmul.mubr.f32.gmra.mxu0 %v1552
      %v1849 = vpop.f32.mrf.mxu0
      %v1850 = vadd.f32 %v1685, %v1849
      %v1851 = vpop.f32.mrf.mxu0
      %1852 = vmatprep.mubr.f32.mxu0 %v1649
      %1853 = vmatmul.mubr.f32.gmra.mxu0 %v1553
      %v1854 = vpop.f32.mrf.mxu0
      %v1855 = vadd.f32 %v1685, %v1854
      %v1856 = vpop.f32.mrf.mxu0
      %1857 = vmatprep.mubr.f32.mxu0 %v1650
      %1858 = vmatmul.mubr.f32.gmra.mxu0 %v1554
      %v1859 = vpop.f32.mrf.mxu0
      %v1860 = vadd.f32 %v1685, %v1859
      %v1861 = vpop.f32.mrf.mxu0
      %1862 = vmatprep.mubr.f32.mxu0 %v1651
      %1863 = vmatmul.mubr.f32.gmra.mxu0 %v1555
      %v1864 = vpop.f32.mrf.mxu0
      %v1865 = vadd.f32 %v1685, %v1864
      %v1866 = vpop.f32.mrf.mxu0
      %1867 = vmatprep.mubr.f32.mxu0 %v1652
      %1868 = vmatmul.mubr.f32.gmra.mxu0 %v1556
      %v1869 = vpop.f32.mrf.mxu0
      %v1870 = vadd.f32 %v1685, %v1869
      %v1871 = vpop.f32.mrf.mxu0
      %1872 = vmatprep.mubr.f32.mxu0 %v1653
      %1873 = vmatmul.mubr.f32.gmra.mxu0 %v1557
      %v1874 = vpop.f32.mrf.mxu0
      %v1875 = vadd.f32 %v1685, %v1874
      %v1876 = vpop.f32.mrf.mxu0
      %1877 = vmatprep.mubr.f32.mxu0 %v1654
      %1878 = vmatmul.mubr.f32.gmra.mxu0 %v1558
      %v1879 = vpop.f32.mrf.mxu0
      %v1880 = vadd.f32 %v1685, %v1879
      %v1881 = vpop.f32.mrf.mxu0
      %1882 = vmatprep.mubr.f32.mxu0 %v1655
      %1883 = vmatmul.mubr.f32.gmra.mxu0 %v1559
      %v1884 = vpop.f32.mrf.mxu0
      %v1885 = vadd.f32 %v1685, %v1884
      %v1886 = vpop.f32.mrf.mxu0
      %1887 = vmatprep.mubr.f32.mxu0 %v1656
      %1888 = vmatmul.mubr.f32.gmra.mxu0 %v1560
      %v1889 = vpop.f32.mrf.mxu0
      %v1890 = vadd.f32 %v1685, %v1889
      %v1891 = vpop.f32.mrf.mxu0
      %1892 = vmatprep.mubr.f32.mxu0 %v1657
      %1893 = vmatmul.mubr.f32.gmra.mxu0 %v1561
      %v1894 = vpop.f32.mrf.mxu0
      %v1895 = vadd.f32 %v1685, %v1894
      %v1896 = vpop.f32.mrf.mxu0
      %1897 = vmatprep.mubr.f32.mxu0 %v1658
      %1898 = vmatmul.mubr.f32.gmra.mxu0 %v1562
      %v1899 = vpop.f32.mrf.mxu0
      %v1900 = vadd.f32 %v1685, %v1899
      %v1901 = vpop.f32.mrf.mxu0
      %1902 = vmatprep.mubr.f32.mxu0 %v1659
      %1903 = vmatmul.mubr.f32.gmra.mxu0 %v1563
      %v1904 = vpop.f32.mrf.mxu0
      %v1905 = vadd.f32 %v1685, %v1904
      %v1906 = vpop.f32.mrf.mxu0
      %1907 = vmatprep.mubr.f32.mxu0 %v1660
      %1908 = vmatmul.mubr.f32.gmra.mxu0 %v1564
      %v1909 = vpop.f32.mrf.mxu0
      %v1910 = vadd.f32 %v1685, %v1909
      %v1911 = vpop.f32.mrf.mxu0
      %1912 = vmatprep.mubr.f32.mxu0 %v1661
      %1913 = vmatmul.mubr.f32.gmra.mxu0 %v1565
      %v1914 = vpop.f32.mrf.mxu0
      %v1915 = vadd.f32 %v1685, %v1914
      %v1916 = vpop.f32.mrf.mxu0
      %1917 = vmatprep.mubr.f32.mxu0 %v1662
      %1918 = vmatmul.mubr.f32.gmra.mxu0 %v1566
      %v1919 = vpop.f32.mrf.mxu0
      %v1920 = vadd.f32 %v1685, %v1919
      %v1921 = vpop.f32.mrf.mxu0
      %1922 = vmatprep.mubr.f32.mxu0 %v1663
      %1923 = vmatmul.mubr.f32.gmra.mxu0 %v1567
      %v1924 = vpop.f32.mrf.mxu0
      %v1925 = vadd.f32 %v1685, %v1924
      %v1926 = vpop.f32.mrf.mxu0
      %1927 = vmatprep.mubr.f32.mxu0 %v1664
      %1928 = vmatmul.mubr.f32.gmra.mxu0 %v1568
      %v1929 = vpop.f32.mrf.mxu0
      %v1930 = vadd.f32 %v1685, %v1929
      %v1931 = vpop.f32.mrf.mxu0
      %1932 = vmatprep.mubr.f32.mxu0 %v1665
      %1933 = vmatmul.mubr.f32.gmra.mxu0 %v1569
      %v1934 = vpop.f32.mrf.mxu0
      %v1935 = vadd.f32 %v1685, %v1934
      %v1936 = vpop.f32.mrf.mxu0
      %1937 = vmatprep.mubr.f32.mxu0 %v1666
      %1938 = vmatmul.mubr.f32.gmra.mxu0 %v1570
      %v1939 = vpop.f32.mrf.mxu0
      %v1940 = vadd.f32 %v1685, %v1939
      %v1941 = vpop.f32.mrf.mxu0
      %1942 = vmatprep.mubr.f32.mxu0 %v1667
      %1943 = vmatmul.mubr.f32.gmra.mxu0 %v1571
      %v1944 = vpop.f32.mrf.mxu0
      %v1945 = vadd.f32 %v1685, %v1944
      %v1946 = vpop.f32.mrf.mxu0
      %1947 = vmatprep.mubr.f32.mxu0 %v1668
      %1948 = vmatmul.mubr.f32.gmra.mxu0 %v1572
      %v1949 = vpop.f32.mrf.mxu0
      %v1950 = vadd.f32 %v1685, %v1949
      %v1951 = vpop.f32.mrf.mxu0
      %1952 = vmatprep.mubr.f32.mxu0 %v1669
      %1953 = vmatmul.mubr.f32.gmra.mxu0 %v1573
      %v1954 = vpop.f32.mrf.mxu0
      %v1955 = vadd.f32 %v1685, %v1954
      %v1956 = vpop.f32.mrf.mxu0
      %1957 = vmatprep.mubr.f32.mxu0 %v1670
      %1958 = vmatmul.mubr.f32.gmra.mxu0 %v1574
      %v1959 = vpop.f32.mrf.mxu0
      %v1960 = vadd.f32 %v1685, %v1959
      %v1961 = vpop.f32.mrf.mxu0
      %1962 = vmatprep.mubr.f32.mxu0 %v1671
      %1963 = vmatmul.mubr.f32.gmra.mxu0 %v1575
      %v1964 = vpop.f32.mrf.mxu0
      %v1965 = vadd.f32 %v1685, %v1964
      %v1966 = vpop.f32.mrf.mxu0
      %1967 = vmatprep.mubr.f32.mxu0 %v1672
      %1968 = vmatmul.mubr.f32.gmra.mxu0 %v1576
      %v1969 = vpop.f32.mrf.mxu0
      %v1970 = vadd.f32 %v1685, %v1969
      %v1971 = vpop.f32.mrf.mxu0
      %1972 = vmatprep.mubr.f32.mxu0 %v1673
      %1973 = vmatmul.mubr.f32.gmra.mxu0 %v1577
      %v1974 = vpop.f32.mrf.mxu0
      %v1975 = vadd.f32 %v1685, %v1974
      %v1976 = vpop.f32.mrf.mxu0
      %1977 = vmatprep.mubr.f32.mxu0 %v1674
      %1978 = vmatmul.mubr.f32.gmra.mxu0 %v1578
      %v1979 = vpop.f32.mrf.mxu0
      %v1980 = vadd.f32 %v1685, %v1979
      %v1981 = vpop.f32.mrf.mxu0
      %1982 = vmatprep.mubr.f32.mxu0 %v1675
      %1983 = vmatmul.mubr.f32.gmra.mxu0 %v1579
      %v1984 = vpop.f32.mrf.mxu0
      %v1985 = vadd.f32 %v1685, %v1984
      %v1986 = vpop.f32.mrf.mxu0
      %1987 = vmatprep.mubr.f32.mxu0 %v1676
      %1988 = vmatmul.mubr.f32.gmra.mxu0 %v1580
      %v1989 = vpop.f32.mrf.mxu0
      %v1990 = vadd.f32 %v1685, %v1989
      %v1991 = vpop.f32.mrf.mxu0
      %1992 = vmatprep.mubr.f32.mxu0 %v1677
      %1993 = vmatmul.mubr.f32.gmra.mxu0 %v1581
      %v1994 = vpop.f32.mrf.mxu0
      %v1995 = vadd.f32 %v1685, %v1994
      %v1996 = vpop.f32.mrf.mxu0
      %1997 = vmatprep.mubr.f32.mxu0 %v1678
      %1998 = vmatmul.mubr.f32.gmra.mxu0 %v1582
      %v1999 = vpop.f32.mrf.mxu0
      %v2000 = vadd.f32 %v1685, %v1999
      %v2001 = vpop.f32.mrf.mxu0
      %2002 = vmatprep.mubr.f32.mxu0 %v1679
      %2003 = vmatmul.mubr.f32.gmra.mxu0 %v1583
      %v2004 = vpop.f32.mrf.mxu0
      %v2005 = vadd.f32 %v1685, %v2004
      %v2006 = vpop.f32.mrf.mxu0
      %2007 = vdwg.mxu0
      %2008 = vmatprep.subr.mxu0 0.0
      %2009 = vmatpush1.msra.mxu0 0.0
      %2010 = vmatprep.subr.mxu0 0.0
      %2011 = vmatpush1.msra.mxu0 0.0
      %2012 = vmatprep.subr.mxu0 0.0
      %2013 = vmatpush1.msra.mxu0 0.0
      %2014 = vmatprep.subr.mxu0 0.0
      %2015 = vmatpush1.msra.mxu0 0.0
      %2016 = vmatprep.subr.mxu0 0.0
      %2017 = vmatpush1.msra.mxu0 0.0
      %2018 = vmatprep.subr.mxu0 0.0
      %2019 = vmatpush1.msra.mxu0 0.0
      %2020 = vmatprep.subr.mxu0 0.0
      %2021 = vmatpush1.msra.mxu0 0.0
      %2022 = vmatprep.subr.mxu0 0.0
      %2023 = vmatpush1.msra.mxu0 0.0
      %2024 = vmatprep.subr.mxu0 0.0
      %2025 = vmatpush1.msra.mxu0 0.0
      %2026 = vmatprep.subr.mxu0 0.0
      %2027 = vmatpush1.msra.mxu0 0.0
      %2028 = vmatprep.subr.mxu0 0.0
      %2029 = vmatpush1.msra.mxu0 0.0
      %2030 = vmatprep.subr.mxu0 0.0
      %2031 = vmatpush1.msra.mxu0 0.0
      %2032 = vmatprep.subr.mxu0 0.0
      %2033 = vmatpush1.msra.mxu0 %v339
      %2034 = vmatprep.subr.mxu0 0.0
      %2035 = vmatpush1.msra.mxu0 %v338
      %2036 = vmatprep.subr.mxu0 0.0
      %2037 = vmatpush1.msra.mxu0 %v337
      %2038 = vmatprep.subr.mxu0 0.0
      %2039 = vmatpush1.msra.mxu0 %v336
      %2040 = vmatprep.subr.mxu0 0.0
      %2041 = vmatpush2.msra.mxu0 0.0
      %2042 = vmatprep.subr.mxu0 0.0
      %2043 = vmatpush2.msra.mxu0 0.0
      %2044 = vmatprep.subr.mxu0 0.0
      %2045 = vmatpush2.msra.mxu0 0.0
      %2046 = vmatprep.subr.mxu0 0.0
      %2047 = vmatpush2.msra.mxu0 0.0
      %2048 = vmatprep.subr.mxu0 0.0
      %2049 = vmatpush2.msra.mxu0 0.0
      %2050 = vmatprep.subr.mxu0 0.0
      %2051 = vmatpush2.msra.mxu0 0.0
      %2052 = vmatprep.subr.mxu0 0.0
      %2053 = vmatpush2.msra.mxu0 0.0
      %2054 = vmatprep.subr.mxu0 0.0
      %2055 = vmatpush2.msra.mxu0 0.0
      %2056 = vmatprep.subr.mxu0 0.0
      %2057 = vmatpush2.msra.mxu0 0.0
      %2058 = vmatprep.subr.mxu0 0.0
      %2059 = vmatpush2.msra.mxu0 0.0
      %2060 = vmatprep.subr.mxu0 0.0
      %2061 = vmatpush2.msra.mxu0 0.0
      %2062 = vmatprep.subr.mxu0 0.0
      %2063 = vmatpush2.msra.mxu0 0.0
      %2064 = vmatprep.subr.mxu0 0.0
      %2065 = vmatpush2.msra.mxu0 0.0
      %2066 = vmatprep.subr.mxu0 0.0
      %2067 = vmatpush2.msra.mxu0 0.0
      %2068 = vmatprep.subr.mxu0 0.0
      %2069 = vmatpush2.msra.mxu0 0.0
      %2070 = vmatprep.subr.mxu0 0.0
      %2071 = vmatpush2.msra.mxu0 0.0
      %2072 = vmatprep.mubr.f32.mxu0 0.0
      %2073 = vmatmul.mubr.f32.gmra.mxu0 %v1688
      %v2074 = vpop.f32.mrf.mxu0
      %v2075 = vadd.f32 %v1850, %v2074
      %v2076 = vpop.f32.mrf.mxu0
      %2077 = vmatprep.mubr.f32.mxu0 0.0
      %2078 = vmatmul.mubr.f32.gmra.mxu0 %v1691
      %v2079 = vpop.f32.mrf.mxu0
      %v2080 = vadd.f32 %v1855, %v2079
      %v2081 = vpop.f32.mrf.mxu0
      %2082 = vmatprep.mubr.f32.mxu0 0.0
      %2083 = vmatmul.mubr.f32.gmra.mxu0 %v1694
      %v2084 = vpop.f32.mrf.mxu0
      %v2085 = vadd.f32 %v1860, %v2084
      %v2086 = vpop.f32.mrf.mxu0
      %2087 = vmatprep.mubr.f32.mxu0 0.0
      %2088 = vmatmul.mubr.f32.gmra.mxu0 %v1697
      %v2089 = vpop.f32.mrf.mxu0
      %v2090 = vadd.f32 %v1865, %v2089
      %v2091 = vpop.f32.mrf.mxu0
      %2092 = vmatprep.mubr.f32.mxu0 0.0
      %2093 = vmatmul.mubr.f32.gmra.mxu0 %v1700
      %v2094 = vpop.f32.mrf.mxu0
      %v2095 = vadd.f32 %v1870, %v2094
      %v2096 = vpop.f32.mrf.mxu0
      %2097 = vmatprep.mubr.f32.mxu0 0.0
      %2098 = vmatmul.mubr.f32.gmra.mxu0 %v1703
      %v2099 = vpop.f32.mrf.mxu0
      %v2100 = vadd.f32 %v1875, %v2099
      %v2101 = vpop.f32.mrf.mxu0
      %2102 = vmatprep.mubr.f32.mxu0 0.0
      %2103 = vmatmul.mubr.f32.gmra.mxu0 %v1706
      %v2104 = vpop.f32.mrf.mxu0
      %v2105 = vadd.f32 %v1880, %v2104
      %v2106 = vpop.f32.mrf.mxu0
      %2107 = vmatprep.mubr.f32.mxu0 0.0
      %2108 = vmatmul.mubr.f32.gmra.mxu0 %v1709
      %v2109 = vpop.f32.mrf.mxu0
      %v2110 = vadd.f32 %v1885, %v2109
      %v2111 = vpop.f32.mrf.mxu0
      %2112 = vmatprep.mubr.f32.mxu0 0.0
      %2113 = vmatmul.mubr.f32.gmra.mxu0 %v1712
      %v2114 = vpop.f32.mrf.mxu0
      %v2115 = vadd.f32 %v1890, %v2114
      %v2116 = vpop.f32.mrf.mxu0
      %2117 = vmatprep.mubr.f32.mxu0 0.0
      %2118 = vmatmul.mubr.f32.gmra.mxu0 %v1715
      %v2119 = vpop.f32.mrf.mxu0
      %v2120 = vadd.f32 %v1895, %v2119
      %v2121 = vpop.f32.mrf.mxu0
      %2122 = vmatprep.mubr.f32.mxu0 0.0
      %2123 = vmatmul.mubr.f32.gmra.mxu0 %v1718
      %v2124 = vpop.f32.mrf.mxu0
      %v2125 = vadd.f32 %v1900, %v2124
      %v2126 = vpop.f32.mrf.mxu0
      %2127 = vmatprep.mubr.f32.mxu0 0.0
      %2128 = vmatmul.mubr.f32.gmra.mxu0 %v1721
      %v2129 = vpop.f32.mrf.mxu0
      %v2130 = vadd.f32 %v1905, %v2129
      %v2131 = vpop.f32.mrf.mxu0
      %2132 = vmatprep.mubr.f32.mxu0 0.0
      %2133 = vmatmul.mubr.f32.gmra.mxu0 %v1724
      %v2134 = vpop.f32.mrf.mxu0
      %v2135 = vadd.f32 %v1910, %v2134
      %v2136 = vpop.f32.mrf.mxu0
      %2137 = vmatprep.mubr.f32.mxu0 0.0
      %2138 = vmatmul.mubr.f32.gmra.mxu0 %v1727
      %v2139 = vpop.f32.mrf.mxu0
      %v2140 = vadd.f32 %v1915, %v2139
      %v2141 = vpop.f32.mrf.mxu0
      %2142 = vmatprep.mubr.f32.mxu0 0.0
      %2143 = vmatmul.mubr.f32.gmra.mxu0 %v1730
      %v2144 = vpop.f32.mrf.mxu0
      %v2145 = vadd.f32 %v1920, %v2144
      %v2146 = vpop.f32.mrf.mxu0
      %2147 = vmatprep.mubr.f32.mxu0 0.0
      %2148 = vmatmul.mubr.f32.gmra.mxu0 %v1733
      %v2149 = vpop.f32.mrf.mxu0
      %v2150 = vadd.f32 %v1925, %v2149
      %v2151 = vpop.f32.mrf.mxu0
      %2152 = vmatprep.mubr.f32.mxu0 0.0
      %2153 = vmatmul.mubr.f32.gmra.mxu0 %v1736
      %v2154 = vpop.f32.mrf.mxu0
      %v2155 = vadd.f32 %v1930, %v2154
      %v2156 = vpop.f32.mrf.mxu0
      %2157 = vmatprep.mubr.f32.mxu0 0.0
      %2158 = vmatmul.mubr.f32.gmra.mxu0 %v1739
      %v2159 = vpop.f32.mrf.mxu0
      %v2160 = vadd.f32 %v1935, %v2159
      %v2161 = vpop.f32.mrf.mxu0
      %2162 = vmatprep.mubr.f32.mxu0 0.0
      %2163 = vmatmul.mubr.f32.gmra.mxu0 %v1742
      %v2164 = vpop.f32.mrf.mxu0
      %v2165 = vadd.f32 %v1940, %v2164
      %v2166 = vpop.f32.mrf.mxu0
      %2167 = vmatprep.mubr.f32.mxu0 0.0
      %2168 = vmatmul.mubr.f32.gmra.mxu0 %v1745
      %v2169 = vpop.f32.mrf.mxu0
      %v2170 = vadd.f32 %v1945, %v2169
      %v2171 = vpop.f32.mrf.mxu0
      %2172 = vmatprep.mubr.f32.mxu0 0.0
      %2173 = vmatmul.mubr.f32.gmra.mxu0 %v1748
      %v2174 = vpop.f32.mrf.mxu0
      %v2175 = vadd.f32 %v1950, %v2174
      %v2176 = vpop.f32.mrf.mxu0
      %2177 = vmatprep.mubr.f32.mxu0 0.0
      %2178 = vmatmul.mubr.f32.gmra.mxu0 %v1751
      %v2179 = vpop.f32.mrf.mxu0
      %v2180 = vadd.f32 %v1955, %v2179
      %v2181 = vpop.f32.mrf.mxu0
      %2182 = vmatprep.mubr.f32.mxu0 0.0
      %2183 = vmatmul.mubr.f32.gmra.mxu0 %v1754
      %v2184 = vpop.f32.mrf.mxu0
      %v2185 = vadd.f32 %v1960, %v2184
      %v2186 = vpop.f32.mrf.mxu0
      %2187 = vmatprep.mubr.f32.mxu0 0.0
      %2188 = vmatmul.mubr.f32.gmra.mxu0 %v1757
      %v2189 = vpop.f32.mrf.mxu0
      %v2190 = vadd.f32 %v1965, %v2189
      %v2191 = vpop.f32.mrf.mxu0
      %2192 = vmatprep.mubr.f32.mxu0 0.0
      %2193 = vmatmul.mubr.f32.gmra.mxu0 %v1760
      %v2194 = vpop.f32.mrf.mxu0
      %v2195 = vadd.f32 %v1970, %v2194
      %v2196 = vpop.f32.mrf.mxu0
      %2197 = vmatprep.mubr.f32.mxu0 0.0
      %2198 = vmatmul.mubr.f32.gmra.mxu0 %v1763
      %v2199 = vpop.f32.mrf.mxu0
      %v2200 = vadd.f32 %v1975, %v2199
      %v2201 = vpop.f32.mrf.mxu0
      %2202 = vmatprep.mubr.f32.mxu0 0.0
      %2203 = vmatmul.mubr.f32.gmra.mxu0 %v1766
      %v2204 = vpop.f32.mrf.mxu0
      %v2205 = vadd.f32 %v1980, %v2204
      %v2206 = vpop.f32.mrf.mxu0
      %2207 = vmatprep.mubr.f32.mxu0 0.0
      %2208 = vmatmul.mubr.f32.gmra.mxu0 %v1769
      %v2209 = vpop.f32.mrf.mxu0
      %v2210 = vadd.f32 %v1985, %v2209
      %v2211 = vpop.f32.mrf.mxu0
      %2212 = vmatprep.mubr.f32.mxu0 0.0
      %2213 = vmatmul.mubr.f32.gmra.mxu0 %v1772
      %v2214 = vpop.f32.mrf.mxu0
      %v2215 = vadd.f32 %v1990, %v2214
      %v2216 = vpop.f32.mrf.mxu0
      %2217 = vmatprep.mubr.f32.mxu0 0.0
      %2218 = vmatmul.mubr.f32.gmra.mxu0 %v1775
      %v2219 = vpop.f32.mrf.mxu0
      %v2220 = vadd.f32 %v1995, %v2219
      %v2221 = vpop.f32.mrf.mxu0
      %2222 = vmatprep.mubr.f32.mxu0 0.0
      %2223 = vmatmul.mubr.f32.gmra.mxu0 %v1778
      %v2224 = vpop.f32.mrf.mxu0
      %v2225 = vadd.f32 %v2000, %v2224
      %v2226 = vpop.f32.mrf.mxu0
      %2227 = vmatprep.mubr.f32.mxu0 0.0
      %2228 = vmatmul.mubr.f32.gmra.mxu0 %v1781
      %v2229 = vpop.f32.mrf.mxu0
      %v2230 = vadd.f32 %v2005, %v2229
      %v2231 = vpop.f32.mrf.mxu0
      %2232 = vdwg.mxu0
      %v2233 = vld [vmem:[%s266] sm:$0xff]
      %v2234 = vld [vmem:[%s266 + $0x8] sm:$0xff]
      %v2235 = vld [vmem:[%s266 + $0x10] sm:$0xff]
      %v2236 = vld [vmem:[%s266 + $0x18] sm:$0xff]
      %v2237 = vld [vmem:[%s266 + $0x20] sm:$0xff]
      %v2238 = vld [vmem:[%s266 + $0x28] sm:$0xff]
      %v2239 = vld [vmem:[%s266 + $0x30] sm:$0xff]
      %v2240 = vld [vmem:[%s266 + $0x38] sm:$0xff]
      %v2241 = vld [vmem:[%s266 + $0x40] sm:$0xff]
      %v2242 = vld [vmem:[%s266 + $0x48] sm:$0xff]
      %v2243 = vld [vmem:[%s266 + $0x50] sm:$0xff]
      %v2244 = vld [vmem:[%s266 + $0x58] sm:$0xff]
      %v2245 = vld [vmem:[%s266 + $0x60] sm:$0xff]
      %v2246 = vld [vmem:[%s266 + $0x68] sm:$0xff]
      %v2247 = vld [vmem:[%s266 + $0x70] sm:$0xff]
      %v2248 = vld [vmem:[%s266 + $0x78] sm:$0xff]
      %v2249 = vld [vmem:[%s266 + $0x80] sm:$0xff]
      %v2250 = vld [vmem:[%s266 + $0x88] sm:$0xff]
      %v2251 = vld [vmem:[%s266 + $0x90] sm:$0xff]
      %v2252 = vld [vmem:[%s266 + $0x98] sm:$0xff]
      %v2253 = vld [vmem:[%s266 + $0xa0] sm:$0xff]
      %v2254 = vld [vmem:[%s266 + $0xa8] sm:$0xff]
      %v2255 = vld [vmem:[%s266 + $0xb0] sm:$0xff]
      %v2256 = vld [vmem:[%s266 + $0xb8] sm:$0xff]
      %v2257 = vld [vmem:[%s266 + $0xc0] sm:$0xff]
      %v2258 = vld [vmem:[%s266 + $0xc8] sm:$0xff]
      %v2259 = vld [vmem:[%s266 + $0xd0] sm:$0xff]
      %v2260 = vld [vmem:[%s266 + $0xd8] sm:$0xff]
      %v2261 = vld [vmem:[%s266 + $0xe0] sm:$0xff]
      %v2262 = vld [vmem:[%s266 + $0xe8] sm:$0xff]
      %v2263 = vld [vmem:[%s266 + $0xf0] sm:$0xff]
      %v2264 = vld [vmem:[%s266 + $0xf8] sm:$0xff]
      %v2265 = vadd.f32 %v2075, %v2233
      %v2266 = vadd.f32 %v2080, %v2234
      %v2267 = vadd.f32 %v2085, %v2235
      %v2268 = vadd.f32 %v2090, %v2236
      %v2269 = vadd.f32 %v2095, %v2237
      %v2270 = vadd.f32 %v2100, %v2238
      %v2271 = vadd.f32 %v2105, %v2239
      %v2272 = vadd.f32 %v2110, %v2240
      %v2273 = vadd.f32 %v2115, %v2241
      %v2274 = vadd.f32 %v2120, %v2242
      %v2275 = vadd.f32 %v2125, %v2243
      %v2276 = vadd.f32 %v2130, %v2244
      %v2277 = vadd.f32 %v2135, %v2245
      %v2278 = vadd.f32 %v2140, %v2246
      %v2279 = vadd.f32 %v2145, %v2247
      %v2280 = vadd.f32 %v2150, %v2248
      %v2281 = vadd.f32 %v2155, %v2249
      %v2282 = vadd.f32 %v2160, %v2250
      %v2283 = vadd.f32 %v2165, %v2251
      %v2284 = vadd.f32 %v2170, %v2252
      %v2285 = vadd.f32 %v2175, %v2253
      %v2286 = vadd.f32 %v2180, %v2254
      %v2287 = vadd.f32 %v2185, %v2255
      %v2288 = vadd.f32 %v2190, %v2256
      %v2289 = vadd.f32 %v2195, %v2257
      %v2290 = vadd.f32 %v2200, %v2258
      %v2291 = vadd.f32 %v2205, %v2259
      %v2292 = vadd.f32 %v2210, %v2260
      %v2293 = vadd.f32 %v2215, %v2261
      %v2294 = vadd.f32 %v2220, %v2262
      %v2295 = vadd.f32 %v2225, %v2263
      %v2296 = vadd.f32 %v2230, %v2264
      %v2297 = vld [vmem:[%s4] sm:$0xff]
      %v2298 = vld [vmem:[%s4 + $0x8] sm:$0xff]
      %v2299 = vld [vmem:[%s4 + $0x10] sm:$0xff]
      %v2300 = vld [vmem:[%s4 + $0x18] sm:$0xff]
      %v2301 = vld [vmem:[%s5] sm:$0x1]
      %v2303 = vlaneseq
      %v2304 = vshrl.u32 %v2303, 7
      %v2305 = vsub.s32 0, %v2304
      %v2306 = vrot.slane %v2301, %v2305
      %v2309 = vsel %vm340, %v2265, 0
      %v2312 = vsel %vm340, %v2266, 0
      %v2315 = vsel %vm340, %v2267, 0
      %v2318 = vsel %vm340, %v2268, 0
      %v2321 = vsel %vm340, %v2269, 0
      %v2324 = vsel %vm340, %v2270, 0
      %v2327 = vsel %vm340, %v2271, 0
      %v2330 = vsel %vm340, %v2272, 0
      %v2333 = vsel %vm340, %v2273, 0
      %v2336 = vsel %vm340, %v2274, 0
      %v2339 = vsel %vm340, %v2275, 0
      %v2342 = vsel %vm340, %v2276, 0
      %v2345 = vsel %vm340, %v2277, 0
      %v2348 = vsel %vm340, %v2278, 0
      %v2351 = vsel %vm340, %v2279, 0
      %v2354 = vsel %vm340, %v2280, 0
      %v2357 = vsel %vm340, %v2281, 0
      %v2360 = vsel %vm340, %v2282, 0
      %v2363 = vsel %vm340, %v2283, 0
      %v2366 = vsel %vm340, %v2284, 0
      %v2369 = vsel %vm340, %v2285, 0
      %v2372 = vsel %vm340, %v2286, 0
      %v2375 = vsel %vm340, %v2287, 0
      %v2378 = vsel %vm340, %v2288, 0
      %v2381 = vsel %vm340, %v2289, 0
      %v2384 = vsel %vm340, %v2290, 0
      %v2387 = vsel %vm340, %v2291, 0
      %v2390 = vsel %vm340, %v2292, 0
      %v2393 = vsel %vm340, %v2293, 0
      %v2396 = vsel %vm340, %v2294, 0
      %v2399 = vsel %vm340, %v2295, 0
      %v2402 = vsel %vm340, %v2296, 0
      %2404 = vmatprep.subr.mxu0 0.0
      %2405 = vmatpush1.msra.mxu0 0.0
      %2406 = vmatprep.subr.mxu0 0.0
      %2407 = vmatpush1.msra.mxu0 0.0
      %2408 = vmatprep.subr.mxu0 0.0
      %2409 = vmatpush1.msra.mxu0 0.0
      %2410 = vmatprep.subr.mxu0 0.0
      %2411 = vmatpush1.msra.mxu0 0.0
      %2412 = vmatprep.subr.mxu0 0.0
      %2413 = vmatpush1.msra.mxu0 0.0
      %2414 = vmatprep.subr.mxu0 0.0
      %2415 = vmatpush1.msra.mxu0 0.0
      %2416 = vmatprep.subr.mxu0 0.0
      %2417 = vmatpush1.msra.mxu0 0.0
      %2418 = vmatprep.subr.mxu0 0.0
      %2419 = vmatpush1.msra.mxu0 0.0
      %2420 = vmatprep.subr.mxu0 0.0
      %2421 = vmatpush1.msra.mxu0 0.0
      %2422 = vmatprep.subr.mxu0 0.0
      %2423 = vmatpush1.msra.mxu0 0.0
      %2424 = vmatprep.subr.mxu0 0.0
      %2425 = vmatpush1.msra.mxu0 0.0
      %2426 = vmatprep.subr.mxu0 0.0
      %2427 = vmatpush1.msra.mxu0 0.0
      %2428 = vmatprep.subr.mxu0 0.0
      %2429 = vmatpush1.msra.mxu0 %v2300
      %2430 = vmatprep.subr.mxu0 0.0
      %2431 = vmatpush1.msra.mxu0 %v2299
      %2432 = vmatprep.subr.mxu0 0.0
      %2433 = vmatpush1.msra.mxu0 %v2298
      %2434 = vmatprep.subr.mxu0 0.0
      %2435 = vmatpush1.msra.mxu0 %v2297
      %2436 = vmatprep.subr.mxu0 0.0
      %2437 = vmatpush2.msra.mxu0 0.0
      %2438 = vmatprep.subr.mxu0 0.0
      %2439 = vmatpush2.msra.mxu0 0.0
      %2440 = vmatprep.subr.mxu0 0.0
      %2441 = vmatpush2.msra.mxu0 0.0
      %2442 = vmatprep.subr.mxu0 0.0
      %2443 = vmatpush2.msra.mxu0 0.0
      %2444 = vmatprep.subr.mxu0 0.0
      %2445 = vmatpush2.msra.mxu0 0.0
      %2446 = vmatprep.subr.mxu0 0.0
      %2447 = vmatpush2.msra.mxu0 0.0
      %2448 = vmatprep.subr.mxu0 0.0
      %2449 = vmatpush2.msra.mxu0 0.0
      %2450 = vmatprep.subr.mxu0 0.0
      %2451 = vmatpush2.msra.mxu0 0.0
      %2452 = vmatprep.subr.mxu0 0.0
      %2453 = vmatpush2.msra.mxu0 0.0
      %2454 = vmatprep.subr.mxu0 0.0
      %2455 = vmatpush2.msra.mxu0 0.0
      %2456 = vmatprep.subr.mxu0 0.0
      %2457 = vmatpush2.msra.mxu0 0.0
      %2458 = vmatprep.subr.mxu0 0.0
      %2459 = vmatpush2.msra.mxu0 0.0
      %2460 = vmatprep.subr.mxu0 0.0
      %2461 = vmatpush2.msra.mxu0 0.0
      %2462 = vmatprep.subr.mxu0 0.0
      %2463 = vmatpush2.msra.mxu0 0.0
      %2464 = vmatprep.subr.mxu0 0.0
      %2465 = vmatpush2.msra.mxu0 0.0
      %2466 = vmatprep.subr.mxu0 0.0
      %2467 = vmatpush2.msra.mxu0 0.0
      %2468 = vmatprep.mubr.f32.mxu0 0.0
      %2469 = vmatmul.mubr.f32.gmra.mxu0 %v2309
      %v2470 = vpop.f32.mrf.mxu0
      %v2471 = vadd.f32 %v2306, %v2470
      %v2472 = vpop.f32.mrf.mxu0
      %2473 = vmatprep.mubr.f32.mxu0 0.0
      %2474 = vmatmul.mubr.f32.gmra.mxu0 %v2312
      %v2475 = vpop.f32.mrf.mxu0
      %v2476 = vadd.f32 %v2306, %v2475
      %v2477 = vpop.f32.mrf.mxu0
      %2478 = vmatprep.mubr.f32.mxu0 0.0
      %2479 = vmatmul.mubr.f32.gmra.mxu0 %v2315
      %v2480 = vpop.f32.mrf.mxu0
      %v2481 = vadd.f32 %v2306, %v2480
      %v2482 = vpop.f32.mrf.mxu0
      %2483 = vmatprep.mubr.f32.mxu0 0.0
      %2484 = vmatmul.mubr.f32.gmra.mxu0 %v2318
      %v2485 = vpop.f32.mrf.mxu0
      %v2486 = vadd.f32 %v2306, %v2485
      %v2487 = vpop.f32.mrf.mxu0
      %2488 = vmatprep.mubr.f32.mxu0 0.0
      %2489 = vmatmul.mubr.f32.gmra.mxu0 %v2321
      %v2490 = vpop.f32.mrf.mxu0
      %v2491 = vadd.f32 %v2306, %v2490
      %v2492 = vpop.f32.mrf.mxu0
      %2493 = vmatprep.mubr.f32.mxu0 0.0
      %2494 = vmatmul.mubr.f32.gmra.mxu0 %v2324
      %v2495 = vpop.f32.mrf.mxu0
      %v2496 = vadd.f32 %v2306, %v2495
      %v2497 = vpop.f32.mrf.mxu0
      %2498 = vmatprep.mubr.f32.mxu0 0.0
      %2499 = vmatmul.mubr.f32.gmra.mxu0 %v2327
      %v2500 = vpop.f32.mrf.mxu0
      %v2501 = vadd.f32 %v2306, %v2500
      %v2502 = vpop.f32.mrf.mxu0
      %2503 = vmatprep.mubr.f32.mxu0 0.0
      %2504 = vmatmul.mubr.f32.gmra.mxu0 %v2330
      %v2505 = vpop.f32.mrf.mxu0
      %v2506 = vadd.f32 %v2306, %v2505
      %v2507 = vpop.f32.mrf.mxu0
      %2508 = vmatprep.mubr.f32.mxu0 0.0
      %2509 = vmatmul.mubr.f32.gmra.mxu0 %v2333
      %v2510 = vpop.f32.mrf.mxu0
      %v2511 = vadd.f32 %v2306, %v2510
      %v2512 = vpop.f32.mrf.mxu0
      %2513 = vmatprep.mubr.f32.mxu0 0.0
      %2514 = vmatmul.mubr.f32.gmra.mxu0 %v2336
      %v2515 = vpop.f32.mrf.mxu0
      %v2516 = vadd.f32 %v2306, %v2515
      %v2517 = vpop.f32.mrf.mxu0
      %2518 = vmatprep.mubr.f32.mxu0 0.0
      %2519 = vmatmul.mubr.f32.gmra.mxu0 %v2339
      %v2520 = vpop.f32.mrf.mxu0
      %v2521 = vadd.f32 %v2306, %v2520
      %v2522 = vpop.f32.mrf.mxu0
      %2523 = vmatprep.mubr.f32.mxu0 0.0
      %2524 = vmatmul.mubr.f32.gmra.mxu0 %v2342
      %v2525 = vpop.f32.mrf.mxu0
      %v2526 = vadd.f32 %v2306, %v2525
      %v2527 = vpop.f32.mrf.mxu0
      %2528 = vmatprep.mubr.f32.mxu0 0.0
      %2529 = vmatmul.mubr.f32.gmra.mxu0 %v2345
      %v2530 = vpop.f32.mrf.mxu0
      %v2531 = vadd.f32 %v2306, %v2530
      %v2532 = vpop.f32.mrf.mxu0
      %2533 = vmatprep.mubr.f32.mxu0 0.0
      %2534 = vmatmul.mubr.f32.gmra.mxu0 %v2348
      %v2535 = vpop.f32.mrf.mxu0
      %v2536 = vadd.f32 %v2306, %v2535
      %v2537 = vpop.f32.mrf.mxu0
      %2538 = vmatprep.mubr.f32.mxu0 0.0
      %2539 = vmatmul.mubr.f32.gmra.mxu0 %v2351
      %v2540 = vpop.f32.mrf.mxu0
      %v2541 = vadd.f32 %v2306, %v2540
      %v2542 = vpop.f32.mrf.mxu0
      %2543 = vmatprep.mubr.f32.mxu0 0.0
      %2544 = vmatmul.mubr.f32.gmra.mxu0 %v2354
      %v2545 = vpop.f32.mrf.mxu0
      %v2546 = vadd.f32 %v2306, %v2545
      %v2547 = vpop.f32.mrf.mxu0
      %2548 = vmatprep.mubr.f32.mxu0 0.0
      %2549 = vmatmul.mubr.f32.gmra.mxu0 %v2357
      %v2550 = vpop.f32.mrf.mxu0
      %v2551 = vadd.f32 %v2306, %v2550
      %v2552 = vpop.f32.mrf.mxu0
      %2553 = vmatprep.mubr.f32.mxu0 0.0
      %2554 = vmatmul.mubr.f32.gmra.mxu0 %v2360
      %v2555 = vpop.f32.mrf.mxu0
      %v2556 = vadd.f32 %v2306, %v2555
      %v2557 = vpop.f32.mrf.mxu0
      %2558 = vmatprep.mubr.f32.mxu0 0.0
      %2559 = vmatmul.mubr.f32.gmra.mxu0 %v2363
      %v2560 = vpop.f32.mrf.mxu0
      %v2561 = vadd.f32 %v2306, %v2560
      %v2562 = vpop.f32.mrf.mxu0
      %2563 = vmatprep.mubr.f32.mxu0 0.0
      %2564 = vmatmul.mubr.f32.gmra.mxu0 %v2366
      %v2565 = vpop.f32.mrf.mxu0
      %v2566 = vadd.f32 %v2306, %v2565
      %v2567 = vpop.f32.mrf.mxu0
      %2568 = vmatprep.mubr.f32.mxu0 0.0
      %2569 = vmatmul.mubr.f32.gmra.mxu0 %v2369
      %v2570 = vpop.f32.mrf.mxu0
      %v2571 = vadd.f32 %v2306, %v2570
      %v2572 = vpop.f32.mrf.mxu0
      %2573 = vmatprep.mubr.f32.mxu0 0.0
      %2574 = vmatmul.mubr.f32.gmra.mxu0 %v2372
      %v2575 = vpop.f32.mrf.mxu0
      %v2576 = vadd.f32 %v2306, %v2575
      %v2577 = vpop.f32.mrf.mxu0
      %2578 = vmatprep.mubr.f32.mxu0 0.0
      %2579 = vmatmul.mubr.f32.gmra.mxu0 %v2375
      %v2580 = vpop.f32.mrf.mxu0
      %v2581 = vadd.f32 %v2306, %v2580
      %v2582 = vpop.f32.mrf.mxu0
      %2583 = vmatprep.mubr.f32.mxu0 0.0
      %2584 = vmatmul.mubr.f32.gmra.mxu0 %v2378
      %v2585 = vpop.f32.mrf.mxu0
      %v2586 = vadd.f32 %v2306, %v2585
      %v2587 = vpop.f32.mrf.mxu0
      %2588 = vmatprep.mubr.f32.mxu0 0.0
      %2589 = vmatmul.mubr.f32.gmra.mxu0 %v2381
      %v2590 = vpop.f32.mrf.mxu0
      %v2591 = vadd.f32 %v2306, %v2590
      %v2592 = vpop.f32.mrf.mxu0
      %2593 = vmatprep.mubr.f32.mxu0 0.0
      %2594 = vmatmul.mubr.f32.gmra.mxu0 %v2384
      %v2595 = vpop.f32.mrf.mxu0
      %v2596 = vadd.f32 %v2306, %v2595
      %v2597 = vpop.f32.mrf.mxu0
      %2598 = vmatprep.mubr.f32.mxu0 0.0
      %2599 = vmatmul.mubr.f32.gmra.mxu0 %v2387
      %v2600 = vpop.f32.mrf.mxu0
      %v2601 = vadd.f32 %v2306, %v2600
      %v2602 = vpop.f32.mrf.mxu0
      %2603 = vmatprep.mubr.f32.mxu0 0.0
      %2604 = vmatmul.mubr.f32.gmra.mxu0 %v2390
      %v2605 = vpop.f32.mrf.mxu0
      %v2606 = vadd.f32 %v2306, %v2605
      %v2607 = vpop.f32.mrf.mxu0
      %2608 = vmatprep.mubr.f32.mxu0 0.0
      %2609 = vmatmul.mubr.f32.gmra.mxu0 %v2393
      %v2610 = vpop.f32.mrf.mxu0
      %v2611 = vadd.f32 %v2306, %v2610
      %v2612 = vpop.f32.mrf.mxu0
      %2613 = vmatprep.mubr.f32.mxu0 0.0
      %2614 = vmatmul.mubr.f32.gmra.mxu0 %v2396
      %v2615 = vpop.f32.mrf.mxu0
      %v2616 = vadd.f32 %v2306, %v2615
      %v2617 = vpop.f32.mrf.mxu0
      %2618 = vmatprep.mubr.f32.mxu0 0.0
      %2619 = vmatmul.mubr.f32.gmra.mxu0 %v2399
      %v2620 = vpop.f32.mrf.mxu0
      %v2621 = vadd.f32 %v2306, %v2620
      %v2622 = vpop.f32.mrf.mxu0
      %2623 = vmatprep.mubr.f32.mxu0 0.0
      %2624 = vmatmul.mubr.f32.gmra.mxu0 %v2402
      %v2625 = vpop.f32.mrf.mxu0
      %v2626 = vadd.f32 %v2306, %v2625
      %v2627 = vpop.f32.mrf.mxu0
      %2628 = vdwg.mxu0
      %vm2629 = vcmp.ge.f32.partialorder %v2471, 0.0
      %vm2630 = vcmp.ge.f32.partialorder %v2476, 0.0
      %vm2631 = vcmp.ge.f32.partialorder %v2481, 0.0
      %vm2632 = vcmp.ge.f32.partialorder %v2486, 0.0
      %vm2633 = vcmp.ge.f32.partialorder %v2491, 0.0
      %vm2634 = vcmp.ge.f32.partialorder %v2496, 0.0
      %vm2635 = vcmp.ge.f32.partialorder %v2501, 0.0
      %vm2636 = vcmp.ge.f32.partialorder %v2506, 0.0
      %vm2637 = vcmp.ge.f32.partialorder %v2511, 0.0
      %vm2638 = vcmp.ge.f32.partialorder %v2516, 0.0
      %vm2639 = vcmp.ge.f32.partialorder %v2521, 0.0
      %vm2640 = vcmp.ge.f32.partialorder %v2526, 0.0
      %vm2641 = vcmp.ge.f32.partialorder %v2531, 0.0
      %vm2642 = vcmp.ge.f32.partialorder %v2536, 0.0
      %vm2643 = vcmp.ge.f32.partialorder %v2541, 0.0
      %vm2644 = vcmp.ge.f32.partialorder %v2546, 0.0
      %vm2645 = vcmp.ge.f32.partialorder %v2551, 0.0
      %vm2646 = vcmp.ge.f32.partialorder %v2556, 0.0
      %vm2647 = vcmp.ge.f32.partialorder %v2561, 0.0
      %vm2648 = vcmp.ge.f32.partialorder %v2566, 0.0
      %vm2649 = vcmp.ge.f32.partialorder %v2571, 0.0
      %vm2650 = vcmp.ge.f32.partialorder %v2576, 0.0
      %vm2651 = vcmp.ge.f32.partialorder %v2581, 0.0
      %vm2652 = vcmp.ge.f32.partialorder %v2586, 0.0
      %vm2653 = vcmp.ge.f32.partialorder %v2591, 0.0
      %vm2654 = vcmp.ge.f32.partialorder %v2596, 0.0
      %vm2655 = vcmp.ge.f32.partialorder %v2601, 0.0
      %vm2656 = vcmp.ge.f32.partialorder %v2606, 0.0
      %vm2657 = vcmp.ge.f32.partialorder %v2611, 0.0
      %vm2658 = vcmp.ge.f32.partialorder %v2616, 0.0
      %vm2659 = vcmp.ge.f32.partialorder %v2621, 0.0
      %vm2660 = vcmp.ge.f32.partialorder %v2626, 0.0
      %v2661 = vmul.f32 %v2471, 0.05
      %v2662 = vmul.f32 %v2476, 0.05
      %v2663 = vmul.f32 %v2481, 0.05
      %v2664 = vmul.f32 %v2486, 0.05
      %v2665 = vmul.f32 %v2491, 0.05
      %v2666 = vmul.f32 %v2496, 0.05
      %v2667 = vmul.f32 %v2501, 0.05
      %v2668 = vmul.f32 %v2506, 0.05
      %v2669 = vmul.f32 %v2511, 0.05
      %v2670 = vmul.f32 %v2516, 0.05
      %v2671 = vmul.f32 %v2521, 0.05
      %v2672 = vmul.f32 %v2526, 0.05
      %v2673 = vmul.f32 %v2531, 0.05
      %v2674 = vmul.f32 %v2536, 0.05
      %v2675 = vmul.f32 %v2541, 0.05
      %v2676 = vmul.f32 %v2546, 0.05
      %v2677 = vmul.f32 %v2551, 0.05
      %v2678 = vmul.f32 %v2556, 0.05
      %v2679 = vmul.f32 %v2561, 0.05
      %v2680 = vmul.f32 %v2566, 0.05
      %v2681 = vmul.f32 %v2571, 0.05
      %v2682 = vmul.f32 %v2576, 0.05
      %v2683 = vmul.f32 %v2581, 0.05
      %v2684 = vmul.f32 %v2586, 0.05
      %v2685 = vmul.f32 %v2591, 0.05
      %v2686 = vmul.f32 %v2596, 0.05
      %v2687 = vmul.f32 %v2601, 0.05
      %v2688 = vmul.f32 %v2606, 0.05
      %v2689 = vmul.f32 %v2611, 0.05
      %v2690 = vmul.f32 %v2616, 0.05
      %v2691 = vmul.f32 %v2621, 0.05
      %v2692 = vmul.f32 %v2626, 0.05
      %v2693 = vsel %vm2629, %v2471, %v2661
      %v2694 = vsel %vm2630, %v2476, %v2662
      %v2695 = vsel %vm2631, %v2481, %v2663
      %v2696 = vsel %vm2632, %v2486, %v2664
      %v2697 = vsel %vm2633, %v2491, %v2665
      %v2698 = vsel %vm2634, %v2496, %v2666
      %v2699 = vsel %vm2635, %v2501, %v2667
      %v2700 = vsel %vm2636, %v2506, %v2668
      %v2701 = vsel %vm2637, %v2511, %v2669
      %v2702 = vsel %vm2638, %v2516, %v2670
      %v2703 = vsel %vm2639, %v2521, %v2671
      %v2704 = vsel %vm2640, %v2526, %v2672
      %v2705 = vsel %vm2641, %v2531, %v2673
      %v2706 = vsel %vm2642, %v2536, %v2674
      %v2707 = vsel %vm2643, %v2541, %v2675
      %v2708 = vsel %vm2644, %v2546, %v2676
      %v2709 = vsel %vm2645, %v2551, %v2677
      %v2710 = vsel %vm2646, %v2556, %v2678
      %v2711 = vsel %vm2647, %v2561, %v2679
      %v2712 = vsel %vm2648, %v2566, %v2680
      %v2713 = vsel %vm2649, %v2571, %v2681
      %v2714 = vsel %vm2650, %v2576, %v2682
      %v2715 = vsel %vm2651, %v2581, %v2683
      %v2716 = vsel %vm2652, %v2586, %v2684
      %v2717 = vsel %vm2653, %v2591, %v2685
      %v2718 = vsel %vm2654, %v2596, %v2686
      %v2719 = vsel %vm2655, %v2601, %v2687
      %v2720 = vsel %vm2656, %v2606, %v2688
      %v2721 = vsel %vm2657, %v2611, %v2689
      %v2722 = vsel %vm2658, %v2616, %v2690
      %v2723 = vsel %vm2659, %v2621, %v2691
      %v2724 = vsel %vm2660, %v2626, %v2692
      %2725 = vst.msk [vmem:[%s271] sm:$0xff] %vm340, %v2693
      %2726 = vst.msk [vmem:[%s271 + $0x8] sm:$0xff] %vm340, %v2694
      %2727 = vst.msk [vmem:[%s271 + $0x10] sm:$0xff] %vm340, %v2695
      %2728 = vst.msk [vmem:[%s271 + $0x18] sm:$0xff] %vm340, %v2696
      %2729 = vst.msk [vmem:[%s271 + $0x20] sm:$0xff] %vm340, %v2697
      %2730 = vst.msk [vmem:[%s271 + $0x28] sm:$0xff] %vm340, %v2698
      %2731 = vst.msk [vmem:[%s271 + $0x30] sm:$0xff] %vm340, %v2699
      %2732 = vst.msk [vmem:[%s271 + $0x38] sm:$0xff] %vm340, %v2700
      %2733 = vst.msk [vmem:[%s271 + $0x40] sm:$0xff] %vm340, %v2701
      %2734 = vst.msk [vmem:[%s271 + $0x48] sm:$0xff] %vm340, %v2702
      %2735 = vst.msk [vmem:[%s271 + $0x50] sm:$0xff] %vm340, %v2703
      %2736 = vst.msk [vmem:[%s271 + $0x58] sm:$0xff] %vm340, %v2704
      %2737 = vst.msk [vmem:[%s271 + $0x60] sm:$0xff] %vm340, %v2705
      %2738 = vst.msk [vmem:[%s271 + $0x68] sm:$0xff] %vm340, %v2706
      %2739 = vst.msk [vmem:[%s271 + $0x70] sm:$0xff] %vm340, %v2707
      %2740 = vst.msk [vmem:[%s271 + $0x78] sm:$0xff] %vm340, %v2708
      %2741 = vst.msk [vmem:[%s271 + $0x80] sm:$0xff] %vm340, %v2709
      %2742 = vst.msk [vmem:[%s271 + $0x88] sm:$0xff] %vm340, %v2710
      %2743 = vst.msk [vmem:[%s271 + $0x90] sm:$0xff] %vm340, %v2711
      %2744 = vst.msk [vmem:[%s271 + $0x98] sm:$0xff] %vm340, %v2712
      %2745 = vst.msk [vmem:[%s271 + $0xa0] sm:$0xff] %vm340, %v2713
      %2746 = vst.msk [vmem:[%s271 + $0xa8] sm:$0xff] %vm340, %v2714
      %2747 = vst.msk [vmem:[%s271 + $0xb0] sm:$0xff] %vm340, %v2715
      %2748 = vst.msk [vmem:[%s271 + $0xb8] sm:$0xff] %vm340, %v2716
      %2749 = vst.msk [vmem:[%s271 + $0xc0] sm:$0xff] %vm340, %v2717
      %2750 = vst.msk [vmem:[%s271 + $0xc8] sm:$0xff] %vm340, %v2718
      %2751 = vst.msk [vmem:[%s271 + $0xd0] sm:$0xff] %vm340, %v2719
      %2752 = vst.msk [vmem:[%s271 + $0xd8] sm:$0xff] %vm340, %v2720
      %2753 = vst.msk [vmem:[%s271 + $0xe0] sm:$0xff] %vm340, %v2721
      %2754 = vst.msk [vmem:[%s271 + $0xe8] sm:$0xff] %vm340, %v2722
      %2755 = vst.msk [vmem:[%s271 + $0xf0] sm:$0xff] %vm340, %v2723
      %2756 = vst.msk [vmem:[%s271 + $0xf8] sm:$0xff] %vm340, %v2724
      %p2757 = scmp.lt.s32.totalorder %s17, 1
      %s2758 = scalar_select %p2757, %s17, 1
      %s2759 = smul.addr %s2758, 32
      %s2760 = smul.addr %s2759, 8
      %s2761 = scalar_lea.vmem %s6, %s2760
      // Predicated region
      $region45: #{irnet1_forward.5} parent=43 // pred_check
        %p2762 = pneg %p171
      $region46: #{irnet1_forward.5} parent=43 // pred_check_branch
        %2764 = sbr.rel (%p2762) target = $region48
      $region47: #{irnet1_forward.5} parent=43 // pred_region
        _
      $region48: #{irnet1_forward.5} parent=43 // pred_fallthru
        _
    $region44: #{irnet1_forward.5} parent=5 // pred_fallthru
      _
    %p2765 = scmp.le.s32.totalorder 2, %s12
    // Predicated region
    $region49: #{irnet1_forward.5} parent=5 // pred_check
      %p2766 = pneg %p2765
    $region50: #{irnet1_forward.5} parent=5 // pred_check_branch
      %2768 = sbr.rel (%p2766) target = $region52
    $region51: #{irnet1_forward.5} parent=5 // pred_region
      %s2769 = ssub.s32 %s12, 2
      // Predicated region
      $region53: #{irnet1_forward.5} parent=51 // pred_check
        %p2770 = pneg %p177
      $region54: #{irnet1_forward.5} parent=51 // pred_check_branch
        %2772 = sbr.rel (%p2770) target = $region56
      $region55: #{irnet1_forward.5} parent=51 // pred_region
        %p2773 = scmp.lt.s32.totalorder %s18, 1
        %s2774 = scalar_select %p2773, %s18, 1
        %s2775 = smul.addr %s2774, 32
        %s2776 = smul.addr %s2775, 8
        %s2777 = scalar_lea.vmem %s6, %s2776
      $region56: #{irnet1_forward.5} parent=51 // pred_fallthru
        _
    $region52: #{irnet1_forward.5} parent=5 // pred_fallthru
      _
  $region6: #{irnet1_forward.5} parent=0 // loop_footer
    %s16 = sadd.s32 1, %s12
  $region7: #{irnet1_forward.5} parent=0 // loop_footer_branch
    %11 = sbr.rel target = $region3
  $region8: #{irnet1_forward.5} parent=0 // loop_exit
    _

// kernel: irnet1_forward.6
$region0: #{irnet1_forward.6}
  #allocation0 [shape = 'u32[]', space=smem, size = 0x4, offset = 0x4, fixed_abs, tag = 'smem constant byte address 0x4 - core index']
  #allocation1 [shape = 'u32[144,128]{1,0:T(1,128)}', space=vmem, size = 0x12000, scoped, tag = 'internal scratch']
  #allocation2 [shape = 'f32[18,18,32]{2,1,0:T(8,128)}', space=vmem, size = 0x36000, scoped, tag = 'scratch operand']
  %s0 = inlined_call_operand.vmem [shape: f32[2,256,32], index: 0, kind: input, shape index: {}]
  %s1 = inlined_call_operand.vmem [shape: f32[2,256,32], index: 1, kind: input, shape index: {}]
  %s2 = inlined_call_operand.vmem [shape: f32[288,32], index: 2, kind: input, shape index: {}]
  %s3 = inlined_call_operand.vmem [shape: f32[1,32], index: 3, kind: input, shape index: {}]
  %s4 = inlined_call_operand.vmem [shape: f32[2,256,32], index: 4, kind: output, shape index: {}]
  %s5 = sld [smem:[#allocation0]]
  $region49: #{irnet1_forward.6} parent=0
    _
  %s7 = ssub.s32 1, %s5
  %s8 = scalar_select 0, %s7, %s5
  loop: start=0, step=1, limit=4
  $region2: #{irnet1_forward.6} parent=0 // loop_pre_header
    _
  $region3: #{irnet1_forward.6} parent=0 // loop_header
    %s10 = sphi 0, %s14
    %p11 = scmp.ge.s32.totalorder %s10, 4
    %s20 = sphi 0, %s22
    %s23 = sphi 0, %s20
    %s24 = sphi 0, %s23
    %s40 = sphi 0, %s24
    %s46 = sphi 0, %s48
    %s49 = sphi 0, %s46
    %s50 = sphi 0, %s49
    %s66 = sphi 0, %s50
    %s70 = sphi 0, %s70
    %s72 = sphi 0, %s70
    %s73 = sphi 0, %s72
    %s87 = sphi 0, %s73
    %s91 = sphi 0, %s91
    %s93 = sphi 0, %s91
    %s94 = sphi 0, %s93
    %s108 = sphi 0, %s94
    %s114 = sphi 0, %s116
    %s117 = sphi 0, %s114
    %s118 = sphi 0, %s117
    %s134 = sphi 0, %s118
  $region4: #{irnet1_forward.6} parent=0 // loop_header_branch
    %13 = sbr.rel (%p11) target = $region8
  $region5: #{irnet1_forward.6} parent=0 // loop_body
    %s15 = ssub.s32 %s10, 1
    %s16 = ssub.s32 %s10, 2
    %s17 = sadd.s32 %s10, 1
    %s18 = ssub.s32 %s10, %s17
    %p19 = scmp.eq.s32.totalorder %s18, 0
    %s21 = sadd.s32 %s20, 1
    %s22 = scalar_select %p19, %s20, %s21
    %p25 = pneg %p19
    %p26 = scmp.eq.s32.totalorder %s10, 1
    %p27 = por %p25, %p26
    %p28 = scmp.ne.s32.totalorder %s20, %s23
    %p29 = scmp.eq.s32.totalorder %s10, 0
    %p30 = por %p28, %p29
    %p31 = scmp.ne.s32.totalorder %s20, %s23
    %p32 = scmp.eq.s32.totalorder %s15, 1
    %p33 = por %p31, %p32
    %p34 = scmp.ne.s32.totalorder %s23, %s24
    %p35 = scmp.eq.s32.totalorder %s15, 0
    %p36 = por %p34, %p35
    %p37 = scmp.ne.s32.totalorder %s23, %s24
    %p38 = scmp.eq.s32.totalorder %s16, 1
    %p39 = por %p37, %p38
    %p41 = scmp.ne.s32.totalorder %s24, %s40
    %p42 = scmp.eq.s32.totalorder %s16, 0
    %p43 = por %p41, %p42
    %s44 = ssub.s32 %s10, %s17
    %p45 = scmp.eq.s32.totalorder %s44, 0
    %s47 = sadd.s32 %s46, 1
    %s48 = scalar_select %p45, %s46, %s47
    %p51 = pneg %p45
    %p52 = scmp.eq.s32.totalorder %s10, 1
    %p53 = por %p51, %p52
    %p54 = scmp.ne.s32.totalorder %s46, %s49
    %p55 = scmp.eq.s32.totalorder %s10, 0
    %p56 = por %p54, %p55
    %p57 = scmp.ne.s32.totalorder %s46, %s49
    %p58 = scmp.eq.s32.totalorder %s15, 1
    %p59 = por %p57, %p58
    %p60 = scmp.ne.s32.totalorder %s49, %s50
    %p61 = scmp.eq.s32.totalorder %s15, 0
    %p62 = por %p60, %p61
    %p63 = scmp.ne.s32.totalorder %s49, %s50
    %p64 = scmp.eq.s32.totalorder %s16, 1
    %p65 = por %p63, %p64
    %p67 = scmp.ne.s32.totalorder %s50, %s66
    %p68 = scmp.eq.s32.totalorder %s16, 0
    %p69 = por %p67, %p68
    %s71 = sadd.s32 %s70, 1
    %p74 = scmp.eq.s32.totalorder %s10, 1
    %p75 = scmp.ne.s32.totalorder %s70, %s72
    %p76 = scmp.eq.s32.totalorder %s10, 0
    %p77 = por %p75, %p76
    %p78 = scmp.ne.s32.totalorder %s70, %s72
    %p79 = scmp.eq.s32.totalorder %s15, 1
    %p80 = por %p78, %p79
    %p81 = scmp.ne.s32.totalorder %s72, %s73
    %p82 = scmp.eq.s32.totalorder %s15, 0
    %p83 = por %p81, %p82
    %p84 = scmp.ne.s32.totalorder %s72, %s73
    %p85 = scmp.eq.s32.totalorder %s16, 1
    %p86 = por %p84, %p85
    %p88 = scmp.ne.s32.totalorder %s73, %s87
    %p89 = scmp.eq.s32.totalorder %s16, 0
    %p90 = por %p88, %p89
    %s92 = sadd.s32 %s91, 1
    %p95 = scmp.eq.s32.totalorder %s10, 1
    %p96 = scmp.ne.s32.totalorder %s91, %s93
    %p97 = scmp.eq.s32.totalorder %s10, 0
    %p98 = por %p96, %p97
    %p99 = scmp.ne.s32.totalorder %s91, %s93
    %p100 = scmp.eq.s32.totalorder %s15, 1
    %p101 = por %p99, %p100
    %p102 = scmp.ne.s32.totalorder %s93, %s94
    %p103 = scmp.eq.s32.totalorder %s15, 0
    %p104 = por %p102, %p103
    %p105 = scmp.ne.s32.totalorder %s93, %s94
    %p106 = scmp.eq.s32.totalorder %s16, 1
    %p107 = por %p105, %p106
    %p109 = scmp.ne.s32.totalorder %s94, %s108
    %p110 = scmp.eq.s32.totalorder %s16, 0
    %p111 = por %p109, %p110
    %s112 = ssub.s32 %s10, %s17
    %p113 = scmp.eq.s32.totalorder %s112, 0
    %s115 = sadd.s32 %s114, 1
    %s116 = scalar_select %p113, %s114, %s115
    %p119 = pneg %p113
    %p120 = scmp.eq.s32.totalorder %s10, 1
    %p121 = por %p119, %p120
    %p122 = scmp.ne.s32.totalorder %s114, %s117
    %p123 = scmp.eq.s32.totalorder %s10, 0
    %p124 = por %p122, %p123
    %p125 = scmp.ne.s32.totalorder %s114, %s117
    %p126 = scmp.eq.s32.totalorder %s15, 1
    %p127 = por %p125, %p126
    %p128 = scmp.ne.s32.totalorder %s117, %s118
    %p129 = scmp.eq.s32.totalorder %s15, 0
    %p130 = por %p128, %p129
    %p131 = scmp.ne.s32.totalorder %s117, %s118
    %p132 = scmp.eq.s32.totalorder %s16, 1
    %p133 = por %p131, %p132
    %p135 = scmp.ne.s32.totalorder %s118, %s134
    %p136 = scmp.eq.s32.totalorder %s16, 0
    %p137 = por %p135, %p136
    %p138 = scmp.le.s32.totalorder 1, %s10
    %p139 = scmp.lt.s32.totalorder %s10, 3
    %p140 = pnand %p138, %p139
    %p141 = pneg %p140
    // Predicated region
    $region9: #{irnet1_forward.6} parent=5 // pred_check
      _
    $region10: #{irnet1_forward.6} parent=5 // pred_check_branch
      %143 = sbr.rel (%p140) target = $region12
    $region11: #{irnet1_forward.6} parent=5 // pred_region
      %s144 = ssub.s32 %s10, 1
      // Predicated region
      $region13: #{irnet1_forward.6} parent=11 // pred_check
        %p145 = pneg %p83
      $region14: #{irnet1_forward.6} parent=11 // pred_check_branch
        %147 = sbr.rel (%p145) target = $region16
      $region15: #{irnet1_forward.6} parent=11 // pred_region
        _
      $region16: #{irnet1_forward.6} parent=11 // pred_fallthru
        _
      // Predicated region
      $region17: #{irnet1_forward.6} parent=11 // pred_check
        %p148 = pneg %p104
      $region18: #{irnet1_forward.6} parent=11 // pred_check_branch
        %150 = sbr.rel (%p148) target = $region20
      $region19: #{irnet1_forward.6} parent=11 // pred_region
        _
      $region20: #{irnet1_forward.6} parent=11 // pred_fallthru
        _
    $region12: #{irnet1_forward.6} parent=5 // pred_fallthru
      _
    %p151 = scmp.lt.s32.totalorder %s10, 2
    // Predicated region
    $region21: #{irnet1_forward.6} parent=5 // pred_check
      %p152 = pneg %p151
    $region22: #{irnet1_forward.6} parent=5 // pred_check_branch
      %154 = sbr.rel (%p152) target = $region24
    $region23: #{irnet1_forward.6} parent=5 // pred_region
      // Predicated region
      $region25: #{irnet1_forward.6} parent=23 // pred_check
        %p155 = pneg %p30
      $region26: #{irnet1_forward.6} parent=23 // pred_check_branch
        %157 = sbr.rel (%p155) target = $region28
      $region27: #{irnet1_forward.6} parent=23 // pred_region
        %p158 = scmp.lt.s32.totalorder %s10, 1
        %s159 = scalar_select %p158, %s10, 1
        %s160 = smul.addr %s159, 32
        %s161 = smul.addr %s160, 8
        %s162 = scalar_lea.vmem %s0, %s161
      $region28: #{irnet1_forward.6} parent=23 // pred_fallthru
        _
      // Predicated region
      $region29: #{irnet1_forward.6} parent=23 // pred_check
        %p163 = pneg %p56
      $region30: #{irnet1_forward.6} parent=23 // pred_check_branch
        %165 = sbr.rel (%p163) target = $region32
      $region31: #{irnet1_forward.6} parent=23 // pred_region
        %p166 = scmp.lt.s32.totalorder %s10, 1
        %s167 = scalar_select %p166, %s10, 1
        %s168 = smul.addr %s167, 32
        %s169 = smul.addr %s168, 8
        %s170 = scalar_lea.vmem %s1, %s169
      $region32: #{irnet1_forward.6} parent=23 // pred_fallthru
        _
    $region24: #{irnet1_forward.6} parent=5 // pred_fallthru
      _
    %p171 = scmp.le.s32.totalorder 1, %s10
    %p172 = scmp.lt.s32.totalorder %s10, 3
    %p173 = pnand %p171, %p172
    %p174 = pneg %p173
    // Predicated region
    $region33: #{irnet1_forward.6} parent=5 // pred_check
      _
    $region34: #{irnet1_forward.6} parent=5 // pred_check_branch
      %176 = sbr.rel (%p173) target = $region36
    $region35: #{irnet1_forward.6} parent=5 // pred_region
      %s177 = ssub.s32 %s10, 1
      %p178 = scmp.lt.s32.totalorder %s15, 1
      %s179 = scalar_select %p178, %s15, 1
      %s180 = smul.addr %s179, 32
      %s181 = smul.addr %s180, 8
      %s182 = scalar_lea.vmem %s0, %s181
      %p183 = pneg %p36
      %p184 = pneg %p33
      %p185 = scmp.lt.s32.totalorder %s15, 1
      %s186 = scalar_select %p185, %s15, 1
      %s187 = smul.addr %s186, 32
      %s188 = smul.addr %s187, 8
      %s189 = scalar_lea.vmem %s1, %s188
      %p190 = pneg %p62
      %p191 = pneg %p59
      %p192 = pneg %p83
      %p193 = pneg %p80
      %p194 = pneg %p104
      %p195 = pneg %p101
      %p196 = pneg %p130
      %p197 = pneg %p127
      %p198 = scmp.lt.s32.totalorder %s15, 1
      %s199 = scalar_select %p198, %s15, 1
      %s200 = smul.addr %s199, 32
      %s201 = smul.addr %s200, 8
      %s202 = scalar_lea.vmem %s4, %s201
      %p203 = scmp.lt.s32.totalorder %s15, 1
      %s204 = scalar_select %p203, %s15, 1
      %s205 = smul.addr %s204, 32
      %s206 = smul.addr %s205, 8
      %s207 = scalar_lea.vmem %s0, %s206
      %p208 = scmp.lt.s32.totalorder %s15, 1
      %s209 = scalar_select %p208, %s15, 1
      %s210 = smul.addr %s209, 32
      %s211 = smul.addr %s210, 8
      %s212 = scalar_lea.vmem %s1, %s211
      %p213 = scmp.lt.s32.totalorder %s15, 1
      %s214 = scalar_select %p213, %s15, 1
      %s215 = smul.addr %s214, 32
      %s216 = smul.addr %s215, 8
      %s217 = scalar_lea.vmem %s4, %s216
      %v218 = vld [vmem:[%s207] sm:$0xff]
      %v219 = vld [vmem:[%s207 + $0x8] sm:$0xff]
      %v220 = vld [vmem:[%s207 + $0x10] sm:$0xff]
      %v221 = vld [vmem:[%s207 + $0x18] sm:$0xff]
      %v222 = vld [vmem:[%s207 + $0x20] sm:$0xff]
      %v223 = vld [vmem:[%s207 + $0x28] sm:$0xff]
      %v224 = vld [vmem:[%s207 + $0x30] sm:$0xff]
      %v225 = vld [vmem:[%s207 + $0x38] sm:$0xff]
      %v226 = vld [vmem:[%s207 + $0x40] sm:$0xff]
      %v227 = vld [vmem:[%s207 + $0x48] sm:$0xff]
      %v228 = vld [vmem:[%s207 + $0x50] sm:$0xff]
      %v229 = vld [vmem:[%s207 + $0x58] sm:$0xff]
      %v230 = vld [vmem:[%s207 + $0x60] sm:$0xff]
      %v231 = vld [vmem:[%s207 + $0x68] sm:$0xff]
      %v232 = vld [vmem:[%s207 + $0x70] sm:$0xff]
      %v233 = vld [vmem:[%s207 + $0x78] sm:$0xff]
      %v234 = vld [vmem:[%s207 + $0x80] sm:$0xff]
      %v235 = vld [vmem:[%s207 + $0x88] sm:$0xff]
      %v236 = vld [vmem:[%s207 + $0x90] sm:$0xff]
      %v237 = vld [vmem:[%s207 + $0x98] sm:$0xff]
      %v238 = vld [vmem:[%s207 + $0xa0] sm:$0xff]
      %v239 = vld [vmem:[%s207 + $0xa8] sm:$0xff]
      %v240 = vld [vmem:[%s207 + $0xb0] sm:$0xff]
      %v241 = vld [vmem:[%s207 + $0xb8] sm:$0xff]
      %v242 = vld [vmem:[%s207 + $0xc0] sm:$0xff]
      %v243 = vld [vmem:[%s207 + $0xc8] sm:$0xff]
      %v244 = vld [vmem:[%s207 + $0xd0] sm:$0xff]
      %v245 = vld [vmem:[%s207 + $0xd8] sm:$0xff]
      %v246 = vld [vmem:[%s207 + $0xe0] sm:$0xff]
      %v247 = vld [vmem:[%s207 + $0xe8] sm:$0xff]
      %v248 = vld [vmem:[%s207 + $0xf0] sm:$0xff]
      %v249 = vld [vmem:[%s207 + $0xf8] sm:$0xff]
      %v250 = vld [vmem:[%s2] sm:$0xff]
      %v251 = vld [vmem:[%s2 + $0x8] sm:$0xff]
      %v252 = vld [vmem:[%s2 + $0x10] sm:$0xff]
      %v253 = vld [vmem:[%s2 + $0x18] sm:$0xff]
      %v254 = vld [vmem:[%s2 + $0x20] sm:$0xff]
      %v255 = vld [vmem:[%s2 + $0x28] sm:$0xff]
      %v256 = vld [vmem:[%s2 + $0x30] sm:$0xff]
      %v257 = vld [vmem:[%s2 + $0x38] sm:$0xff]
      %v258 = vld [vmem:[%s2 + $0x40] sm:$0xff]
      %v259 = vld [vmem:[%s2 + $0x48] sm:$0xff]
      %v260 = vld [vmem:[%s2 + $0x50] sm:$0xff]
      %v261 = vld [vmem:[%s2 + $0x58] sm:$0xff]
      %v262 = vld [vmem:[%s2 + $0x60] sm:$0xff]
      %v263 = vld [vmem:[%s2 + $0x68] sm:$0xff]
      %v264 = vld [vmem:[%s2 + $0x70] sm:$0xff]
      %v265 = vld [vmem:[%s2 + $0x78] sm:$0xff]
      %v266 = vld [vmem:[%s2 + $0x80] sm:$0xff]
      %v267 = vld [vmem:[%s2 + $0x88] sm:$0xff]
      %v268 = vld [vmem:[%s2 + $0x90] sm:$0xff]
      %v269 = vld [vmem:[%s2 + $0x98] sm:$0xff]
      %v270 = vld [vmem:[%s2 + $0xa0] sm:$0xff]
      %v271 = vld [vmem:[%s2 + $0xa8] sm:$0xff]
      %v272 = vld [vmem:[%s2 + $0xb0] sm:$0xff]
      %v273 = vld [vmem:[%s2 + $0xb8] sm:$0xff]
      %v274 = vld [vmem:[%s2 + $0xc0] sm:$0xff]
      %v275 = vld [vmem:[%s2 + $0xc8] sm:$0xff]
      %v276 = vld [vmem:[%s2 + $0xd0] sm:$0xff]
      %v277 = vld [vmem:[%s2 + $0xd8] sm:$0xff]
      %v278 = vld [vmem:[%s2 + $0xe0] sm:$0xff]
      %v279 = vld [vmem:[%s2 + $0xe8] sm:$0xff]
      %v280 = vld [vmem:[%s2 + $0xf0] sm:$0xff]
      %v281 = vld [vmem:[%s2 + $0xf8] sm:$0xff]
      %v282 = vld [vmem:[%s2 + $0x100] sm:$0xff]
      %v283 = vld [vmem:[%s2 + $0x108] sm:$0xff]
      %v284 = vld [vmem:[%s2 + $0x110] sm:$0xff]
      %v285 = vld [vmem:[%s2 + $0x118] sm:$0xff]
      %vm286 = vcmask 261120
      %287 = vst.msk [vmem:[#allocation2] sm:$0xff] %vm286, 0.0
      %288 = vst.msk [vmem:[#allocation2 + $0x8] sm:$0xff] %vm286, 0.0
      %vm289 = vcmask 254976
      %290 = vst.msk [vmem:[#allocation2 + $0x10] sm:$0x3] %vm289, 0.0
      %291 = vst.msk [vmem:[#allocation2 + $0x18] sm:$0xff] %vm286, 0.0
      %292 = vst.msk [vmem:[#allocation2 + $0x20] sm:$0xff] %vm286, 0.0
      %293 = vst.msk [vmem:[#allocation2 + $0x28] sm:$0x3] %vm289, 0.0
      %294 = vst.msk [vmem:[#allocation2 + $0x30] sm:$0xff] %vm286, 0.0
      %295 = vst.msk [vmem:[#allocation2 + $0x38] sm:$0xff] %vm286, 0.0
      %296 = vst.msk [vmem:[#allocation2 + $0x40] sm:$0x3] %vm289, 0.0
      %297 = vst.msk [vmem:[#allocation2 + $0x48] sm:$0xff] %vm286, 0.0
      %298 = vst.msk [vmem:[#allocation2 + $0x50] sm:$0xff] %vm286, 0.0
      %299 = vst.msk [vmem:[#allocation2 + $0x58] sm:$0x3] %vm289, 0.0
      %300 = vst.msk [vmem:[#allocation2 + $0x60] sm:$0xff] %vm286, 0.0
      %301 = vst.msk [vmem:[#allocation2 + $0x68] sm:$0xff] %vm286, 0.0
      %302 = vst.msk [vmem:[#allocation2 + $0x70] sm:$0x3] %vm289, 0.0
      %303 = vst.msk [vmem:[#allocation2 + $0x78] sm:$0xff] %vm286, 0.0
      %304 = vst.msk [vmem:[#allocation2 + $0x80] sm:$0xff] %vm286, 0.0
      %305 = vst.msk [vmem:[#allocation2 + $0x88] sm:$0x3] %vm289, 0.0
      %306 = vst.msk [vmem:[#allocation2 + $0x90] sm:$0xff] %vm286, 0.0
      %307 = vst.msk [vmem:[#allocation2 + $0x98] sm:$0xff] %vm286, 0.0
      %308 = vst.msk [vmem:[#allocation2 + $0xa0] sm:$0x3] %vm289, 0.0
      %309 = vst.msk [vmem:[#allocation2 + $0xa8] sm:$0xff] %vm286, 0.0
      %310 = vst.msk [vmem:[#allocation2 + $0xb0] sm:$0xff] %vm286, 0.0
      %311 = vst.msk [vmem:[#allocation2 + $0xb8] sm:$0x3] %vm289, 0.0
      %312 = vst.msk [vmem:[#allocation2 + $0xc0] sm:$0xff] %vm286, 0.0
      %313 = vst.msk [vmem:[#allocation2 + $0xc8] sm:$0xff] %vm286, 0.0
      %314 = vst.msk [vmem:[#allocation2 + $0xd0] sm:$0x3] %vm289, 0.0
      %315 = vst.msk [vmem:[#allocation2 + $0xd8] sm:$0xff] %vm286, 0.0
      %316 = vst.msk [vmem:[#allocation2 + $0xe0] sm:$0xff] %vm286, 0.0
      %317 = vst.msk [vmem:[#allocation2 + $0xe8] sm:$0x3] %vm289, 0.0
      %318 = vst.msk [vmem:[#allocation2 + $0xf0] sm:$0xff] %vm286, 0.0
      %319 = vst.msk [vmem:[#allocation2 + $0xf8] sm:$0xff] %vm286, 0.0
      %320 = vst.msk [vmem:[#allocation2 + $0x100] sm:$0x3] %vm289, 0.0
      %321 = vst.msk [vmem:[#allocation2 + $0x108] sm:$0xff] %vm286, 0.0
      %322 = vst.msk [vmem:[#allocation2 + $0x110] sm:$0xff] %vm286, 0.0
      %323 = vst.msk [vmem:[#allocation2 + $0x118] sm:$0x3] %vm289, 0.0
      %324 = vst.msk [vmem:[#allocation2 + $0x120] sm:$0xff] %vm286, 0.0
      %325 = vst.msk [vmem:[#allocation2 + $0x128] sm:$0xff] %vm286, 0.0
      %326 = vst.msk [vmem:[#allocation2 + $0x130] sm:$0x3] %vm289, 0.0
      %327 = vst.msk [vmem:[#allocation2 + $0x138] sm:$0xff] %vm286, 0.0
      %328 = vst.msk [vmem:[#allocation2 + $0x140] sm:$0xff] %vm286, 0.0
      %329 = vst.msk [vmem:[#allocation2 + $0x148] sm:$0x3] %vm289, 0.0
      %330 = vst.msk [vmem:[#allocation2 + $0x150] sm:$0xff] %vm286, 0.0
      %331 = vst.msk [vmem:[#allocation2 + $0x158] sm:$0xff] %vm286, 0.0
      %332 = vst.msk [vmem:[#allocation2 + $0x160] sm:$0x3] %vm289, 0.0
      %333 = vst.msk [vmem:[#allocation2 + $0x168] sm:$0xff] %vm286, 0.0
      %334 = vst.msk [vmem:[#allocation2 + $0x170] sm:$0xff] %vm286, 0.0
      %335 = vst.msk [vmem:[#allocation2 + $0x178] sm:$0x3] %vm289, 0.0
      %336 = vst.msk [vmem:[#allocation2 + $0x180] sm:$0xff] %vm286, 0.0
      %337 = vst.msk [vmem:[#allocation2 + $0x188] sm:$0xff] %vm286, 0.0
      %338 = vst.msk [vmem:[#allocation2 + $0x190] sm:$0x3] %vm289, 0.0
      %339 = vst.msk [vmem:[#allocation2 + $0x198] sm:$0xff] %vm286, 0.0
      %340 = vst.msk [vmem:[#allocation2 + $0x1a0] sm:$0xff] %vm286, 0.0
      %341 = vst.msk [vmem:[#allocation2 + $0x1a8] sm:$0x3] %vm289, 0.0
      %s342 = scalar_lea.vmem [#allocation2], 24
      %343 = vst.msk [vmem:[%s342 + $0x1] sm:$0xff] %vm286, %v218
      %344 = vst.msk [vmem:[%s342 + $0x9] sm:$0xff] %vm286, %v219
      %345 = vst.msk [vmem:[%s342 + $0x19] sm:$0xff] %vm286, %v220
      %346 = vst.msk [vmem:[%s342 + $0x21] sm:$0xff] %vm286, %v221
      %347 = vst.msk [vmem:[%s342 + $0x31] sm:$0xff] %vm286, %v222
      %348 = vst.msk [vmem:[%s342 + $0x39] sm:$0xff] %vm286, %v223
      %349 = vst.msk [vmem:[%s342 + $0x49] sm:$0xff] %vm286, %v224
      %350 = vst.msk [vmem:[%s342 + $0x51] sm:$0xff] %vm286, %v225
      %351 = vst.msk [vmem:[%s342 + $0x61] sm:$0xff] %vm286, %v226
      %352 = vst.msk [vmem:[%s342 + $0x69] sm:$0xff] %vm286, %v227
      %353 = vst.msk [vmem:[%s342 + $0x79] sm:$0xff] %vm286, %v228
      %354 = vst.msk [vmem:[%s342 + $0x81] sm:$0xff] %vm286, %v229
      %355 = vst.msk [vmem:[%s342 + $0x91] sm:$0xff] %vm286, %v230
      %356 = vst.msk [vmem:[%s342 + $0x99] sm:$0xff] %vm286, %v231
      %357 = vst.msk [vmem:[%s342 + $0xa9] sm:$0xff] %vm286, %v232
      %358 = vst.msk [vmem:[%s342 + $0xb1] sm:$0xff] %vm286, %v233
      %359 = vst.msk [vmem:[%s342 + $0xc1] sm:$0xff] %vm286, %v234
      %360 = vst.msk [vmem:[%s342 + $0xc9] sm:$0xff] %vm286, %v235
      %361 = vst.msk [vmem:[%s342 + $0xd9] sm:$0xff] %vm286, %v236
      %362 = vst.msk [vmem:[%s342 + $0xe1] sm:$0xff] %vm286, %v237
      %363 = vst.msk [vmem:[%s342 + $0xf1] sm:$0xff] %vm286, %v238
      %364 = vst.msk [vmem:[%s342 + $0xf9] sm:$0xff] %vm286, %v239
      %365 = vst.msk [vmem:[%s342 + $0x109] sm:$0xff] %vm286, %v240
      %366 = vst.msk [vmem:[%s342 + $0x111] sm:$0xff] %vm286, %v241
      %367 = vst.msk [vmem:[%s342 + $0x121] sm:$0xff] %vm286, %v242
      %368 = vst.msk [vmem:[%s342 + $0x129] sm:$0xff] %vm286, %v243
      %369 = vst.msk [vmem:[%s342 + $0x139] sm:$0xff] %vm286, %v244
      %370 = vst.msk [vmem:[%s342 + $0x141] sm:$0xff] %vm286, %v245
      %371 = vst.msk [vmem:[%s342 + $0x151] sm:$0xff] %vm286, %v246
      %372 = vst.msk [vmem:[%s342 + $0x159] sm:$0xff] %vm286, %v247
      %373 = vst.msk [vmem:[%s342 + $0x169] sm:$0xff] %vm286, %v248
      %374 = vst.msk [vmem:[%s342 + $0x171] sm:$0xff] %vm286, %v249
      %v375 = vld [vmem:[#allocation2] sm:$0xff]
      %v376 = vld [vmem:[#allocation2 + $0x8] sm:$0xff]
      %v377 = vld [vmem:[#allocation2 + $0x18] sm:$0xff]
      %v378 = vld [vmem:[#allocation2 + $0x20] sm:$0xff]
      %v379 = vld [vmem:[#allocation2 + $0x30] sm:$0xff]
      %v380 = vld [vmem:[#allocation2 + $0x38] sm:$0xff]
      %v381 = vld [vmem:[#allocation2 + $0x48] sm:$0xff]
      %v382 = vld [vmem:[#allocation2 + $0x50] sm:$0xff]
      %v383 = vld [vmem:[#allocation2 + $0x60] sm:$0xff]
      %v384 = vld [vmem:[#allocation2 + $0x68] sm:$0xff]
      %v385 = vld [vmem:[#allocation2 + $0x78] sm:$0xff]
      %v386 = vld [vmem:[#allocation2 + $0x80] sm:$0xff]
      %v387 = vld [vmem:[#allocation2 + $0x90] sm:$0xff]
      %v388 = vld [vmem:[#allocation2 + $0x98] sm:$0xff]
      %v389 = vld [vmem:[#allocation2 + $0xa8] sm:$0xff]
      %v390 = vld [vmem:[#allocation2 + $0xb0] sm:$0xff]
      %v391 = vld [vmem:[#allocation2 + $0xc0] sm:$0xff]
      %v392 = vld [vmem:[#allocation2 + $0xc8] sm:$0xff]
      %v393 = vld [vmem:[#allocation2 + $0xd8] sm:$0xff]
      %v394 = vld [vmem:[#allocation2 + $0xe0] sm:$0xff]
      %v395 = vld [vmem:[#allocation2 + $0xf0] sm:$0xff]
      %v396 = vld [vmem:[#allocation2 + $0xf8] sm:$0xff]
      %v397 = vld [vmem:[#allocation2 + $0x108] sm:$0xff]
      %v398 = vld [vmem:[#allocation2 + $0x110] sm:$0xff]
      %v399 = vld [vmem:[#allocation2 + $0x120] sm:$0xff]
      %v400 = vld [vmem:[#allocation2 + $0x128] sm:$0xff]
      %v401 = vld [vmem:[#allocation2 + $0x138] sm:$0xff]
      %v402 = vld [vmem:[#allocation2 + $0x140] sm:$0xff]
      %v403 = vld [vmem:[#allocation2 + $0x150] sm:$0xff]
      %v404 = vld [vmem:[#allocation2 + $0x158] sm:$0xff]
      %v405 = vld [vmem:[#allocation2 + $0x168] sm:$0xff]
      %v406 = vld [vmem:[#allocation2 + $0x170] sm:$0xff]
      %v407 = vld [vmem:[#allocation2 + $0x1] sm:$0xff]
      %v408 = vld [vmem:[#allocation2 + $0x9] sm:$0xff]
      %v409 = vld [vmem:[#allocation2 + $0x19] sm:$0xff]
      %v410 = vld [vmem:[#allocation2 + $0x21] sm:$0xff]
      %v411 = vld [vmem:[#allocation2 + $0x31] sm:$0xff]
      %v412 = vld [vmem:[#allocation2 + $0x39] sm:$0xff]
      %v413 = vld [vmem:[#allocation2 + $0x49] sm:$0xff]
      %v414 = vld [vmem:[#allocation2 + $0x51] sm:$0xff]
      %v415 = vld [vmem:[#allocation2 + $0x61] sm:$0xff]
      %v416 = vld [vmem:[#allocation2 + $0x69] sm:$0xff]
      %v417 = vld [vmem:[#allocation2 + $0x79] sm:$0xff]
      %v418 = vld [vmem:[#allocation2 + $0x81] sm:$0xff]
      %v419 = vld [vmem:[#allocation2 + $0x91] sm:$0xff]
      %v420 = vld [vmem:[#allocation2 + $0x99] sm:$0xff]
      %v421 = vld [vmem:[#allocation2 + $0xa9] sm:$0xff]
      %v422 = vld [vmem:[#allocation2 + $0xb1] sm:$0xff]
      %v423 = vld [vmem:[#allocation2 + $0xc1] sm:$0xff]
      %v424 = vld [vmem:[#allocation2 + $0xc9] sm:$0xff]
      %v425 = vld [vmem:[#allocation2 + $0xd9] sm:$0xff]
      %v426 = vld [vmem:[#allocation2 + $0xe1] sm:$0xff]
      %v427 = vld [vmem:[#allocation2 + $0xf1] sm:$0xff]
      %v428 = vld [vmem:[#allocation2 + $0xf9] sm:$0xff]
      %v429 = vld [vmem:[#allocation2 + $0x109] sm:$0xff]
      %v430 = vld [vmem:[#allocation2 + $0x111] sm:$0xff]
      %v431 = vld [vmem:[#allocation2 + $0x121] sm:$0xff]
      %v432 = vld [vmem:[#allocation2 + $0x129] sm:$0xff]
      %v433 = vld [vmem:[#allocation2 + $0x139] sm:$0xff]
      %v434 = vld [vmem:[#allocation2 + $0x141] sm:$0xff]
      %v435 = vld [vmem:[#allocation2 + $0x151] sm:$0xff]
      %v436 = vld [vmem:[#allocation2 + $0x159] sm:$0xff]
      %v437 = vld [vmem:[#allocation2 + $0x169] sm:$0xff]
      %v438 = vld [vmem:[#allocation2 + $0x171] sm:$0xff]
      %v439 = vld [vmem:[#allocation2 + $0x2] sm:$0xff]
      %v440 = vld [vmem:[#allocation2 + $0xa] sm:$0xff]
      %v441 = vld [vmem:[#allocation2 + $0x1a] sm:$0xff]
      %v442 = vld [vmem:[#allocation2 + $0x22] sm:$0xff]
      %v443 = vld [vmem:[#allocation2 + $0x32] sm:$0xff]
      %v444 = vld [vmem:[#allocation2 + $0x3a] sm:$0xff]
      %v445 = vld [vmem:[#allocation2 + $0x4a] sm:$0xff]
      %v446 = vld [vmem:[#allocation2 + $0x52] sm:$0xff]
      %v447 = vld [vmem:[#allocation2 + $0x62] sm:$0xff]
      %v448 = vld [vmem:[#allocation2 + $0x6a] sm:$0xff]
      %v449 = vld [vmem:[#allocation2 + $0x7a] sm:$0xff]
      %v450 = vld [vmem:[#allocation2 + $0x82] sm:$0xff]
      %v451 = vld [vmem:[#allocation2 + $0x92] sm:$0xff]
      %v452 = vld [vmem:[#allocation2 + $0x9a] sm:$0xff]
      %v453 = vld [vmem:[#allocation2 + $0xaa] sm:$0xff]
      %v454 = vld [vmem:[#allocation2 + $0xb2] sm:$0xff]
      %v455 = vld [vmem:[#allocation2 + $0xc2] sm:$0xff]
      %v456 = vld [vmem:[#allocation2 + $0xca] sm:$0xff]
      %v457 = vld [vmem:[#allocation2 + $0xda] sm:$0xff]
      %v458 = vld [vmem:[#allocation2 + $0xe2] sm:$0xff]
      %v459 = vld [vmem:[#allocation2 + $0xf2] sm:$0xff]
      %v460 = vld [vmem:[#allocation2 + $0xfa] sm:$0xff]
      %v461 = vld [vmem:[#allocation2 + $0x10a] sm:$0xff]
      %v462 = vld [vmem:[#allocation2 + $0x112] sm:$0xff]
      %v463 = vld [vmem:[#allocation2 + $0x122] sm:$0xff]
      %v464 = vld [vmem:[#allocation2 + $0x12a] sm:$0xff]
      %v465 = vld [vmem:[#allocation2 + $0x13a] sm:$0xff]
      %v466 = vld [vmem:[#allocation2 + $0x142] sm:$0xff]
      %v467 = vld [vmem:[#allocation2 + $0x152] sm:$0xff]
      %v468 = vld [vmem:[#allocation2 + $0x15a] sm:$0xff]
      %v469 = vld [vmem:[#allocation2 + $0x16a] sm:$0xff]
      %v470 = vld [vmem:[#allocation2 + $0x172] sm:$0xff]
      %v471 = vld [vmem:[%s342] sm:$0xff]
      %v472 = vld [vmem:[%s342 + $0x8] sm:$0xff]
      %v473 = vld [vmem:[%s342 + $0x18] sm:$0xff]
      %v474 = vld [vmem:[%s342 + $0x20] sm:$0xff]
      %v475 = vld [vmem:[%s342 + $0x30] sm:$0xff]
      %v476 = vld [vmem:[%s342 + $0x38] sm:$0xff]
      %v477 = vld [vmem:[%s342 + $0x48] sm:$0xff]
      %v478 = vld [vmem:[%s342 + $0x50] sm:$0xff]
      %v479 = vld [vmem:[%s342 + $0x60] sm:$0xff]
      %v480 = vld [vmem:[%s342 + $0x68] sm:$0xff]
      %v481 = vld [vmem:[%s342 + $0x78] sm:$0xff]
      %v482 = vld [vmem:[%s342 + $0x80] sm:$0xff]
      %v483 = vld [vmem:[%s342 + $0x90] sm:$0xff]
      %v484 = vld [vmem:[%s342 + $0x98] sm:$0xff]
      %v485 = vld [vmem:[%s342 + $0xa8] sm:$0xff]
      %v486 = vld [vmem:[%s342 + $0xb0] sm:$0xff]
      %v487 = vld [vmem:[%s342 + $0xc0] sm:$0xff]
      %v488 = vld [vmem:[%s342 + $0xc8] sm:$0xff]
      %v489 = vld [vmem:[%s342 + $0xd8] sm:$0xff]
      %v490 = vld [vmem:[%s342 + $0xe0] sm:$0xff]
      %v491 = vld [vmem:[%s342 + $0xf0] sm:$0xff]
      %v492 = vld [vmem:[%s342 + $0xf8] sm:$0xff]
      %v493 = vld [vmem:[%s342 + $0x108] sm:$0xff]
      %v494 = vld [vmem:[%s342 + $0x110] sm:$0xff]
      %v495 = vld [vmem:[%s342 + $0x120] sm:$0xff]
      %v496 = vld [vmem:[%s342 + $0x128] sm:$0xff]
      %v497 = vld [vmem:[%s342 + $0x138] sm:$0xff]
      %v498 = vld [vmem:[%s342 + $0x140] sm:$0xff]
      %v499 = vld [vmem:[%s342 + $0x150] sm:$0xff]
      %v500 = vld [vmem:[%s342 + $0x158] sm:$0xff]
      %v501 = vld [vmem:[%s342 + $0x168] sm:$0xff]
      %v502 = vld [vmem:[%s342 + $0x170] sm:$0xff]
      %v503 = vld [vmem:[%s342 + $0x1] sm:$0xff]
      %v504 = vld [vmem:[%s342 + $0x9] sm:$0xff]
      %v505 = vld [vmem:[%s342 + $0x19] sm:$0xff]
      %v506 = vld [vmem:[%s342 + $0x21] sm:$0xff]
      %v507 = vld [vmem:[%s342 + $0x31] sm:$0xff]
      %v508 = vld [vmem:[%s342 + $0x39] sm:$0xff]
      %v509 = vld [vmem:[%s342 + $0x49] sm:$0xff]
      %v510 = vld [vmem:[%s342 + $0x51] sm:$0xff]
      %v511 = vld [vmem:[%s342 + $0x61] sm:$0xff]
      %v512 = vld [vmem:[%s342 + $0x69] sm:$0xff]
      %v513 = vld [vmem:[%s342 + $0x79] sm:$0xff]
      %v514 = vld [vmem:[%s342 + $0x81] sm:$0xff]
      %v515 = vld [vmem:[%s342 + $0x91] sm:$0xff]
      %v516 = vld [vmem:[%s342 + $0x99] sm:$0xff]
      %v517 = vld [vmem:[%s342 + $0xa9] sm:$0xff]
      %v518 = vld [vmem:[%s342 + $0xb1] sm:$0xff]
      %v519 = vld [vmem:[%s342 + $0xc1] sm:$0xff]
      %v520 = vld [vmem:[%s342 + $0xc9] sm:$0xff]
      %v521 = vld [vmem:[%s342 + $0xd9] sm:$0xff]
      %v522 = vld [vmem:[%s342 + $0xe1] sm:$0xff]
      %v523 = vld [vmem:[%s342 + $0xf1] sm:$0xff]
      %v524 = vld [vmem:[%s342 + $0xf9] sm:$0xff]
      %v525 = vld [vmem:[%s342 + $0x109] sm:$0xff]
      %v526 = vld [vmem:[%s342 + $0x111] sm:$0xff]
      %v527 = vld [vmem:[%s342 + $0x121] sm:$0xff]
      %v528 = vld [vmem:[%s342 + $0x129] sm:$0xff]
      %v529 = vld [vmem:[%s342 + $0x139] sm:$0xff]
      %v530 = vld [vmem:[%s342 + $0x141] sm:$0xff]
      %v531 = vld [vmem:[%s342 + $0x151] sm:$0xff]
      %v532 = vld [vmem:[%s342 + $0x159] sm:$0xff]
      %v533 = vld [vmem:[%s342 + $0x169] sm:$0xff]
      %v534 = vld [vmem:[%s342 + $0x171] sm:$0xff]
      %v535 = vld [vmem:[%s342 + $0x2] sm:$0xff]
      %v536 = vld [vmem:[%s342 + $0xa] sm:$0xff]
      %v537 = vld [vmem:[%s342 + $0x1a] sm:$0xff]
      %v538 = vld [vmem:[%s342 + $0x22] sm:$0xff]
      %v539 = vld [vmem:[%s342 + $0x32] sm:$0xff]
      %v540 = vld [vmem:[%s342 + $0x3a] sm:$0xff]
      %v541 = vld [vmem:[%s342 + $0x4a] sm:$0xff]
      %v542 = vld [vmem:[%s342 + $0x52] sm:$0xff]
      %v543 = vld [vmem:[%s342 + $0x62] sm:$0xff]
      %v544 = vld [vmem:[%s342 + $0x6a] sm:$0xff]
      %v545 = vld [vmem:[%s342 + $0x7a] sm:$0xff]
      %v546 = vld [vmem:[%s342 + $0x82] sm:$0xff]
      %v547 = vld [vmem:[%s342 + $0x92] sm:$0xff]
      %v548 = vld [vmem:[%s342 + $0x9a] sm:$0xff]
      %v549 = vld [vmem:[%s342 + $0xaa] sm:$0xff]
      %v550 = vld [vmem:[%s342 + $0xb2] sm:$0xff]
      %v551 = vld [vmem:[%s342 + $0xc2] sm:$0xff]
      %v552 = vld [vmem:[%s342 + $0xca] sm:$0xff]
      %v553 = vld [vmem:[%s342 + $0xda] sm:$0xff]
      %v554 = vld [vmem:[%s342 + $0xe2] sm:$0xff]
      %v555 = vld [vmem:[%s342 + $0xf2] sm:$0xff]
      %v556 = vld [vmem:[%s342 + $0xfa] sm:$0xff]
      %v557 = vld [vmem:[%s342 + $0x10a] sm:$0xff]
      %v558 = vld [vmem:[%s342 + $0x112] sm:$0xff]
      %v559 = vld [vmem:[%s342 + $0x122] sm:$0xff]
      %v560 = vld [vmem:[%s342 + $0x12a] sm:$0xff]
      %v561 = vld [vmem:[%s342 + $0x13a] sm:$0xff]
      %v562 = vld [vmem:[%s342 + $0x142] sm:$0xff]
      %v563 = vld [vmem:[%s342 + $0x152] sm:$0xff]
      %v564 = vld [vmem:[%s342 + $0x15a] sm:$0xff]
      %v565 = vld [vmem:[%s342 + $0x16a] sm:$0xff]
      %v566 = vld [vmem:[%s342 + $0x172] sm:$0xff]
      %s567 = scalar_lea.vmem [#allocation2], 48
      %v568 = vld [vmem:[%s567] sm:$0xff]
      %v569 = vld [vmem:[%s567 + $0x8] sm:$0xff]
      %v570 = vld [vmem:[%s567 + $0x18] sm:$0xff]
      %v571 = vld [vmem:[%s567 + $0x20] sm:$0xff]
      %v572 = vld [vmem:[%s567 + $0x30] sm:$0xff]
      %v573 = vld [vmem:[%s567 + $0x38] sm:$0xff]
      %v574 = vld [vmem:[%s567 + $0x48] sm:$0xff]
      %v575 = vld [vmem:[%s567 + $0x50] sm:$0xff]
      %v576 = vld [vmem:[%s567 + $0x60] sm:$0xff]
      %v577 = vld [vmem:[%s567 + $0x68] sm:$0xff]
      %v578 = vld [vmem:[%s567 + $0x78] sm:$0xff]
      %v579 = vld [vmem:[%s567 + $0x80] sm:$0xff]
      %v580 = vld [vmem:[%s567 + $0x90] sm:$0xff]
      %v581 = vld [vmem:[%s567 + $0x98] sm:$0xff]
      %v582 = vld [vmem:[%s567 + $0xa8] sm:$0xff]
      %v583 = vld [vmem:[%s567 + $0xb0] sm:$0xff]
      %v584 = vld [vmem:[%s567 + $0xc0] sm:$0xff]
      %v585 = vld [vmem:[%s567 + $0xc8] sm:$0xff]
      %v586 = vld [vmem:[%s567 + $0xd8] sm:$0xff]
      %v587 = vld [vmem:[%s567 + $0xe0] sm:$0xff]
      %v588 = vld [vmem:[%s567 + $0xf0] sm:$0xff]
      %v589 = vld [vmem:[%s567 + $0xf8] sm:$0xff]
      %v590 = vld [vmem:[%s567 + $0x108] sm:$0xff]
      %v591 = vld [vmem:[%s567 + $0x110] sm:$0xff]
      %v592 = vld [vmem:[%s567 + $0x120] sm:$0xff]
      %v593 = vld [vmem:[%s567 + $0x128] sm:$0xff]
      %v594 = vld [vmem:[%s567 + $0x138] sm:$0xff]
      %v595 = vld [vmem:[%s567 + $0x140] sm:$0xff]
      %v596 = vld [vmem:[%s567 + $0x150] sm:$0xff]
      %v597 = vld [vmem:[%s567 + $0x158] sm:$0xff]
      %v598 = vld [vmem:[%s567 + $0x168] sm:$0xff]
      %v599 = vld [vmem:[%s567 + $0x170] sm:$0xff]
      %v600 = vld [vmem:[%s567 + $0x1] sm:$0xff]
      %v601 = vld [vmem:[%s567 + $0x9] sm:$0xff]
      %v602 = vld [vmem:[%s567 + $0x19] sm:$0xff]
      %v603 = vld [vmem:[%s567 + $0x21] sm:$0xff]
      %v604 = vld [vmem:[%s567 + $0x31] sm:$0xff]
      %v605 = vld [vmem:[%s567 + $0x39] sm:$0xff]
      %v606 = vld [vmem:[%s567 + $0x49] sm:$0xff]
      %v607 = vld [vmem:[%s567 + $0x51] sm:$0xff]
      %v608 = vld [vmem:[%s567 + $0x61] sm:$0xff]
      %v609 = vld [vmem:[%s567 + $0x69] sm:$0xff]
      %v610 = vld [vmem:[%s567 + $0x79] sm:$0xff]
      %v611 = vld [vmem:[%s567 + $0x81] sm:$0xff]
      %v612 = vld [vmem:[%s567 + $0x91] sm:$0xff]
      %v613 = vld [vmem:[%s567 + $0x99] sm:$0xff]
      %v614 = vld [vmem:[%s567 + $0xa9] sm:$0xff]
      %v615 = vld [vmem:[%s567 + $0xb1] sm:$0xff]
      %v616 = vld [vmem:[%s567 + $0xc1] sm:$0xff]
      %v617 = vld [vmem:[%s567 + $0xc9] sm:$0xff]
      %v618 = vld [vmem:[%s567 + $0xd9] sm:$0xff]
      %v619 = vld [vmem:[%s567 + $0xe1] sm:$0xff]
      %v620 = vld [vmem:[%s567 + $0xf1] sm:$0xff]
      %v621 = vld [vmem:[%s567 + $0xf9] sm:$0xff]
      %v622 = vld [vmem:[%s567 + $0x109] sm:$0xff]
      %v623 = vld [vmem:[%s567 + $0x111] sm:$0xff]
      %v624 = vld [vmem:[%s567 + $0x121] sm:$0xff]
      %v625 = vld [vmem:[%s567 + $0x129] sm:$0xff]
      %v626 = vld [vmem:[%s567 + $0x139] sm:$0xff]
      %v627 = vld [vmem:[%s567 + $0x141] sm:$0xff]
      %v628 = vld [vmem:[%s567 + $0x151] sm:$0xff]
      %v629 = vld [vmem:[%s567 + $0x159] sm:$0xff]
      %v630 = vld [vmem:[%s567 + $0x169] sm:$0xff]
      %v631 = vld [vmem:[%s567 + $0x171] sm:$0xff]
      %v632 = vld [vmem:[%s567 + $0x2] sm:$0xff]
      %v633 = vld [vmem:[%s567 + $0xa] sm:$0xff]
      %v634 = vld [vmem:[%s567 + $0x1a] sm:$0xff]
      %v635 = vld [vmem:[%s567 + $0x22] sm:$0xff]
      %v636 = vld [vmem:[%s567 + $0x32] sm:$0xff]
      %v637 = vld [vmem:[%s567 + $0x3a] sm:$0xff]
      %v638 = vld [vmem:[%s567 + $0x4a] sm:$0xff]
      %v639 = vld [vmem:[%s567 + $0x52] sm:$0xff]
      %v640 = vld [vmem:[%s567 + $0x62] sm:$0xff]
      %v641 = vld [vmem:[%s567 + $0x6a] sm:$0xff]
      %v642 = vld [vmem:[%s567 + $0x7a] sm:$0xff]
      %v643 = vld [vmem:[%s567 + $0x82] sm:$0xff]
      %v644 = vld [vmem:[%s567 + $0x92] sm:$0xff]
      %v645 = vld [vmem:[%s567 + $0x9a] sm:$0xff]
      %v646 = vld [vmem:[%s567 + $0xaa] sm:$0xff]
      %v647 = vld [vmem:[%s567 + $0xb2] sm:$0xff]
      %v648 = vld [vmem:[%s567 + $0xc2] sm:$0xff]
      %v649 = vld [vmem:[%s567 + $0xca] sm:$0xff]
      %v650 = vld [vmem:[%s567 + $0xda] sm:$0xff]
      %v651 = vld [vmem:[%s567 + $0xe2] sm:$0xff]
      %v652 = vld [vmem:[%s567 + $0xf2] sm:$0xff]
      %v653 = vld [vmem:[%s567 + $0xfa] sm:$0xff]
      %v654 = vld [vmem:[%s567 + $0x10a] sm:$0xff]
      %v655 = vld [vmem:[%s567 + $0x112] sm:$0xff]
      %v656 = vld [vmem:[%s567 + $0x122] sm:$0xff]
      %v657 = vld [vmem:[%s567 + $0x12a] sm:$0xff]
      %v658 = vld [vmem:[%s567 + $0x13a] sm:$0xff]
      %v659 = vld [vmem:[%s567 + $0x142] sm:$0xff]
      %v660 = vld [vmem:[%s567 + $0x152] sm:$0xff]
      %v661 = vld [vmem:[%s567 + $0x15a] sm:$0xff]
      %v662 = vld [vmem:[%s567 + $0x16a] sm:$0xff]
      %v663 = vld [vmem:[%s567 + $0x172] sm:$0xff]
      %696 = vrot.lane.b32.xlu0 %v407, 32
      %v697 = vpop.permute.xlu0 %696
      %698 = vrot.lane.b32.xlu0 %v408, 32
      %v699 = vpop.permute.xlu0 %698
      %700 = vrot.lane.b32.xlu0 %v409, 32
      %v701 = vpop.permute.xlu0 %700
      %702 = vrot.lane.b32.xlu0 %v410, 32
      %v703 = vpop.permute.xlu0 %702
      %704 = vrot.lane.b32.xlu0 %v411, 32
      %v705 = vpop.permute.xlu0 %704
      %706 = vrot.lane.b32.xlu0 %v412, 32
      %v707 = vpop.permute.xlu0 %706
      %708 = vrot.lane.b32.xlu0 %v413, 32
      %v709 = vpop.permute.xlu0 %708
      %710 = vrot.lane.b32.xlu0 %v414, 32
      %v711 = vpop.permute.xlu0 %710
      %712 = vrot.lane.b32.xlu0 %v415, 32
      %v713 = vpop.permute.xlu0 %712
      %714 = vrot.lane.b32.xlu0 %v416, 32
      %v715 = vpop.permute.xlu0 %714
      %716 = vrot.lane.b32.xlu0 %v417, 32
      %v717 = vpop.permute.xlu0 %716
      %718 = vrot.lane.b32.xlu0 %v418, 32
      %v719 = vpop.permute.xlu0 %718
      %720 = vrot.lane.b32.xlu0 %v419, 32
      %v721 = vpop.permute.xlu0 %720
      %722 = vrot.lane.b32.xlu0 %v420, 32
      %v723 = vpop.permute.xlu0 %722
      %724 = vrot.lane.b32.xlu0 %v421, 32
      %v725 = vpop.permute.xlu0 %724
      %726 = vrot.lane.b32.xlu0 %v422, 32
      %v727 = vpop.permute.xlu0 %726
      %728 = vrot.lane.b32.xlu0 %v423, 32
      %v729 = vpop.permute.xlu0 %728
      %730 = vrot.lane.b32.xlu0 %v424, 32
      %v731 = vpop.permute.xlu0 %730
      %732 = vrot.lane.b32.xlu0 %v425, 32
      %v733 = vpop.permute.xlu0 %732
      %734 = vrot.lane.b32.xlu0 %v426, 32
      %v735 = vpop.permute.xlu0 %734
      %736 = vrot.lane.b32.xlu0 %v427, 32
      %v737 = vpop.permute.xlu0 %736
      %738 = vrot.lane.b32.xlu0 %v428, 32
      %v739 = vpop.permute.xlu0 %738
      %740 = vrot.lane.b32.xlu0 %v429, 32
      %v741 = vpop.permute.xlu0 %740
      %742 = vrot.lane.b32.xlu0 %v430, 32
      %v743 = vpop.permute.xlu0 %742
      %744 = vrot.lane.b32.xlu0 %v431, 32
      %v745 = vpop.permute.xlu0 %744
      %746 = vrot.lane.b32.xlu0 %v432, 32
      %v747 = vpop.permute.xlu0 %746
      %748 = vrot.lane.b32.xlu0 %v433, 32
      %v749 = vpop.permute.xlu0 %748
      %750 = vrot.lane.b32.xlu0 %v434, 32
      %v751 = vpop.permute.xlu0 %750
      %752 = vrot.lane.b32.xlu0 %v435, 32
      %v753 = vpop.permute.xlu0 %752
      %754 = vrot.lane.b32.xlu0 %v436, 32
      %v755 = vpop.permute.xlu0 %754
      %756 = vrot.lane.b32.xlu0 %v437, 32
      %v757 = vpop.permute.xlu0 %756
      %758 = vrot.lane.b32.xlu0 %v438, 32
      %v759 = vpop.permute.xlu0 %758
      %824 = vrot.lane.b32.xlu0 %v439, 64
      %v825 = vpop.permute.xlu0 %824
      %826 = vrot.lane.b32.xlu0 %v440, 64
      %v827 = vpop.permute.xlu0 %826
      %828 = vrot.lane.b32.xlu0 %v441, 64
      %v829 = vpop.permute.xlu0 %828
      %830 = vrot.lane.b32.xlu0 %v442, 64
      %v831 = vpop.permute.xlu0 %830
      %832 = vrot.lane.b32.xlu0 %v443, 64
      %v833 = vpop.permute.xlu0 %832
      %834 = vrot.lane.b32.xlu0 %v444, 64
      %v835 = vpop.permute.xlu0 %834
      %836 = vrot.lane.b32.xlu0 %v445, 64
      %v837 = vpop.permute.xlu0 %836
      %838 = vrot.lane.b32.xlu0 %v446, 64
      %v839 = vpop.permute.xlu0 %838
      %840 = vrot.lane.b32.xlu0 %v447, 64
      %v841 = vpop.permute.xlu0 %840
      %842 = vrot.lane.b32.xlu0 %v448, 64
      %v843 = vpop.permute.xlu0 %842
      %844 = vrot.lane.b32.xlu0 %v449, 64
      %v845 = vpop.permute.xlu0 %844
      %846 = vrot.lane.b32.xlu0 %v450, 64
      %v847 = vpop.permute.xlu0 %846
      %848 = vrot.lane.b32.xlu0 %v451, 64
      %v849 = vpop.permute.xlu0 %848
      %850 = vrot.lane.b32.xlu0 %v452, 64
      %v851 = vpop.permute.xlu0 %850
      %852 = vrot.lane.b32.xlu0 %v453, 64
      %v853 = vpop.permute.xlu0 %852
      %854 = vrot.lane.b32.xlu0 %v454, 64
      %v855 = vpop.permute.xlu0 %854
      %856 = vrot.lane.b32.xlu0 %v455, 64
      %v857 = vpop.permute.xlu0 %856
      %858 = vrot.lane.b32.xlu0 %v456, 64
      %v859 = vpop.permute.xlu0 %858
      %860 = vrot.lane.b32.xlu0 %v457, 64
      %v861 = vpop.permute.xlu0 %860
      %862 = vrot.lane.b32.xlu0 %v458, 64
      %v863 = vpop.permute.xlu0 %862
      %864 = vrot.lane.b32.xlu0 %v459, 64
      %v865 = vpop.permute.xlu0 %864
      %866 = vrot.lane.b32.xlu0 %v460, 64
      %v867 = vpop.permute.xlu0 %866
      %868 = vrot.lane.b32.xlu0 %v461, 64
      %v869 = vpop.permute.xlu0 %868
      %870 = vrot.lane.b32.xlu0 %v462, 64
      %v871 = vpop.permute.xlu0 %870
      %872 = vrot.lane.b32.xlu0 %v463, 64
      %v873 = vpop.permute.xlu0 %872
      %874 = vrot.lane.b32.xlu0 %v464, 64
      %v875 = vpop.permute.xlu0 %874
      %876 = vrot.lane.b32.xlu0 %v465, 64
      %v877 = vpop.permute.xlu0 %876
      %878 = vrot.lane.b32.xlu0 %v466, 64
      %v879 = vpop.permute.xlu0 %878
      %880 = vrot.lane.b32.xlu0 %v467, 64
      %v881 = vpop.permute.xlu0 %880
      %882 = vrot.lane.b32.xlu0 %v468, 64
      %v883 = vpop.permute.xlu0 %882
      %884 = vrot.lane.b32.xlu0 %v469, 64
      %v885 = vpop.permute.xlu0 %884
      %886 = vrot.lane.b32.xlu0 %v470, 64
      %v887 = vpop.permute.xlu0 %886
      %952 = vrot.lane.b32.xlu0 %v471, 96
      %v953 = vpop.permute.xlu0 %952
      %954 = vrot.lane.b32.xlu0 %v472, 96
      %v955 = vpop.permute.xlu0 %954
      %956 = vrot.lane.b32.xlu0 %v473, 96
      %v957 = vpop.permute.xlu0 %956
      %958 = vrot.lane.b32.xlu0 %v474, 96
      %v959 = vpop.permute.xlu0 %958
      %960 = vrot.lane.b32.xlu0 %v475, 96
      %v961 = vpop.permute.xlu0 %960
      %962 = vrot.lane.b32.xlu0 %v476, 96
      %v963 = vpop.permute.xlu0 %962
      %964 = vrot.lane.b32.xlu0 %v477, 96
      %v965 = vpop.permute.xlu0 %964
      %966 = vrot.lane.b32.xlu0 %v478, 96
      %v967 = vpop.permute.xlu0 %966
      %968 = vrot.lane.b32.xlu0 %v479, 96
      %v969 = vpop.permute.xlu0 %968
      %970 = vrot.lane.b32.xlu0 %v480, 96
      %v971 = vpop.permute.xlu0 %970
      %972 = vrot.lane.b32.xlu0 %v481, 96
      %v973 = vpop.permute.xlu0 %972
      %974 = vrot.lane.b32.xlu0 %v482, 96
      %v975 = vpop.permute.xlu0 %974
      %976 = vrot.lane.b32.xlu0 %v483, 96
      %v977 = vpop.permute.xlu0 %976
      %978 = vrot.lane.b32.xlu0 %v484, 96
      %v979 = vpop.permute.xlu0 %978
      %980 = vrot.lane.b32.xlu0 %v485, 96
      %v981 = vpop.permute.xlu0 %980
      %982 = vrot.lane.b32.xlu0 %v486, 96
      %v983 = vpop.permute.xlu0 %982
      %984 = vrot.lane.b32.xlu0 %v487, 96
      %v985 = vpop.permute.xlu0 %984
      %986 = vrot.lane.b32.xlu0 %v488, 96
      %v987 = vpop.permute.xlu0 %986
      %988 = vrot.lane.b32.xlu0 %v489, 96
      %v989 = vpop.permute.xlu0 %988
      %990 = vrot.lane.b32.xlu0 %v490, 96
      %v991 = vpop.permute.xlu0 %990
      %992 = vrot.lane.b32.xlu0 %v491, 96
      %v993 = vpop.permute.xlu0 %992
      %994 = vrot.lane.b32.xlu0 %v492, 96
      %v995 = vpop.permute.xlu0 %994
      %996 = vrot.lane.b32.xlu0 %v493, 96
      %v997 = vpop.permute.xlu0 %996
      %998 = vrot.lane.b32.xlu0 %v494, 96
      %v999 = vpop.permute.xlu0 %998
      %1000 = vrot.lane.b32.xlu0 %v495, 96
      %v1001 = vpop.permute.xlu0 %1000
      %1002 = vrot.lane.b32.xlu0 %v496, 96
      %v1003 = vpop.permute.xlu0 %1002
      %1004 = vrot.lane.b32.xlu0 %v497, 96
      %v1005 = vpop.permute.xlu0 %1004
      %1006 = vrot.lane.b32.xlu0 %v498, 96
      %v1007 = vpop.permute.xlu0 %1006
      %1008 = vrot.lane.b32.xlu0 %v499, 96
      %v1009 = vpop.permute.xlu0 %1008
      %1010 = vrot.lane.b32.xlu0 %v500, 96
      %v1011 = vpop.permute.xlu0 %1010
      %1012 = vrot.lane.b32.xlu0 %v501, 96
      %v1013 = vpop.permute.xlu0 %1012
      %1014 = vrot.lane.b32.xlu0 %v502, 96
      %v1015 = vpop.permute.xlu0 %1014
      %1080 = vrot.lane.b32.xlu0 %v535, 32
      %v1081 = vpop.permute.xlu0 %1080
      %1082 = vrot.lane.b32.xlu0 %v536, 32
      %v1083 = vpop.permute.xlu0 %1082
      %1084 = vrot.lane.b32.xlu0 %v537, 32
      %v1085 = vpop.permute.xlu0 %1084
      %1086 = vrot.lane.b32.xlu0 %v538, 32
      %v1087 = vpop.permute.xlu0 %1086
      %1088 = vrot.lane.b32.xlu0 %v539, 32
      %v1089 = vpop.permute.xlu0 %1088
      %1090 = vrot.lane.b32.xlu0 %v540, 32
      %v1091 = vpop.permute.xlu0 %1090
      %1092 = vrot.lane.b32.xlu0 %v541, 32
      %v1093 = vpop.permute.xlu0 %1092
      %1094 = vrot.lane.b32.xlu0 %v542, 32
      %v1095 = vpop.permute.xlu0 %1094
      %1096 = vrot.lane.b32.xlu0 %v543, 32
      %v1097 = vpop.permute.xlu0 %1096
      %1098 = vrot.lane.b32.xlu0 %v544, 32
      %v1099 = vpop.permute.xlu0 %1098
      %1100 = vrot.lane.b32.xlu0 %v545, 32
      %v1101 = vpop.permute.xlu0 %1100
      %1102 = vrot.lane.b32.xlu0 %v546, 32
      %v1103 = vpop.permute.xlu0 %1102
      %1104 = vrot.lane.b32.xlu0 %v547, 32
      %v1105 = vpop.permute.xlu0 %1104
      %1106 = vrot.lane.b32.xlu0 %v548, 32
      %v1107 = vpop.permute.xlu0 %1106
      %1108 = vrot.lane.b32.xlu0 %v549, 32
      %v1109 = vpop.permute.xlu0 %1108
      %1110 = vrot.lane.b32.xlu0 %v550, 32
      %v1111 = vpop.permute.xlu0 %1110
      %1112 = vrot.lane.b32.xlu0 %v551, 32
      %v1113 = vpop.permute.xlu0 %1112
      %1114 = vrot.lane.b32.xlu0 %v552, 32
      %v1115 = vpop.permute.xlu0 %1114
      %1116 = vrot.lane.b32.xlu0 %v553, 32
      %v1117 = vpop.permute.xlu0 %1116
      %1118 = vrot.lane.b32.xlu0 %v554, 32
      %v1119 = vpop.permute.xlu0 %1118
      %1120 = vrot.lane.b32.xlu0 %v555, 32
      %v1121 = vpop.permute.xlu0 %1120
      %1122 = vrot.lane.b32.xlu0 %v556, 32
      %v1123 = vpop.permute.xlu0 %1122
      %1124 = vrot.lane.b32.xlu0 %v557, 32
      %v1125 = vpop.permute.xlu0 %1124
      %1126 = vrot.lane.b32.xlu0 %v558, 32
      %v1127 = vpop.permute.xlu0 %1126
      %1128 = vrot.lane.b32.xlu0 %v559, 32
      %v1129 = vpop.permute.xlu0 %1128
      %1130 = vrot.lane.b32.xlu0 %v560, 32
      %v1131 = vpop.permute.xlu0 %1130
      %1132 = vrot.lane.b32.xlu0 %v561, 32
      %v1133 = vpop.permute.xlu0 %1132
      %1134 = vrot.lane.b32.xlu0 %v562, 32
      %v1135 = vpop.permute.xlu0 %1134
      %1136 = vrot.lane.b32.xlu0 %v563, 32
      %v1137 = vpop.permute.xlu0 %1136
      %1138 = vrot.lane.b32.xlu0 %v564, 32
      %v1139 = vpop.permute.xlu0 %1138
      %1140 = vrot.lane.b32.xlu0 %v565, 32
      %v1141 = vpop.permute.xlu0 %1140
      %1142 = vrot.lane.b32.xlu0 %v566, 32
      %v1143 = vpop.permute.xlu0 %1142
      %1208 = vrot.lane.b32.xlu0 %v568, 64
      %v1209 = vpop.permute.xlu0 %1208
      %1210 = vrot.lane.b32.xlu0 %v569, 64
      %v1211 = vpop.permute.xlu0 %1210
      %1212 = vrot.lane.b32.xlu0 %v570, 64
      %v1213 = vpop.permute.xlu0 %1212
      %1214 = vrot.lane.b32.xlu0 %v571, 64
      %v1215 = vpop.permute.xlu0 %1214
      %1216 = vrot.lane.b32.xlu0 %v572, 64
      %v1217 = vpop.permute.xlu0 %1216
      %1218 = vrot.lane.b32.xlu0 %v573, 64
      %v1219 = vpop.permute.xlu0 %1218
      %1220 = vrot.lane.b32.xlu0 %v574, 64
      %v1221 = vpop.permute.xlu0 %1220
      %1222 = vrot.lane.b32.xlu0 %v575, 64
      %v1223 = vpop.permute.xlu0 %1222
      %1224 = vrot.lane.b32.xlu0 %v576, 64
      %v1225 = vpop.permute.xlu0 %1224
      %1226 = vrot.lane.b32.xlu0 %v577, 64
      %v1227 = vpop.permute.xlu0 %1226
      %1228 = vrot.lane.b32.xlu0 %v578, 64
      %v1229 = vpop.permute.xlu0 %1228
      %1230 = vrot.lane.b32.xlu0 %v579, 64
      %v1231 = vpop.permute.xlu0 %1230
      %1232 = vrot.lane.b32.xlu0 %v580, 64
      %v1233 = vpop.permute.xlu0 %1232
      %1234 = vrot.lane.b32.xlu0 %v581, 64
      %v1235 = vpop.permute.xlu0 %1234
      %1236 = vrot.lane.b32.xlu0 %v582, 64
      %v1237 = vpop.permute.xlu0 %1236
      %1238 = vrot.lane.b32.xlu0 %v583, 64
      %v1239 = vpop.permute.xlu0 %1238
      %1240 = vrot.lane.b32.xlu0 %v584, 64
      %v1241 = vpop.permute.xlu0 %1240
      %1242 = vrot.lane.b32.xlu0 %v585, 64
      %v1243 = vpop.permute.xlu0 %1242
      %1244 = vrot.lane.b32.xlu0 %v586, 64
      %v1245 = vpop.permute.xlu0 %1244
      %1246 = vrot.lane.b32.xlu0 %v587, 64
      %v1247 = vpop.permute.xlu0 %1246
      %1248 = vrot.lane.b32.xlu0 %v588, 64
      %v1249 = vpop.permute.xlu0 %1248
      %1250 = vrot.lane.b32.xlu0 %v589, 64
      %v1251 = vpop.permute.xlu0 %1250
      %1252 = vrot.lane.b32.xlu0 %v590, 64
      %v1253 = vpop.permute.xlu0 %1252
      %1254 = vrot.lane.b32.xlu0 %v591, 64
      %v1255 = vpop.permute.xlu0 %1254
      %1256 = vrot.lane.b32.xlu0 %v592, 64
      %v1257 = vpop.permute.xlu0 %1256
      %1258 = vrot.lane.b32.xlu0 %v593, 64
      %v1259 = vpop.permute.xlu0 %1258
      %1260 = vrot.lane.b32.xlu0 %v594, 64
      %v1261 = vpop.permute.xlu0 %1260
      %1262 = vrot.lane.b32.xlu0 %v595, 64
      %v1263 = vpop.permute.xlu0 %1262
      %1264 = vrot.lane.b32.xlu0 %v596, 64
      %v1265 = vpop.permute.xlu0 %1264
      %1266 = vrot.lane.b32.xlu0 %v597, 64
      %v1267 = vpop.permute.xlu0 %1266
      %1268 = vrot.lane.b32.xlu0 %v598, 64
      %v1269 = vpop.permute.xlu0 %1268
      %1270 = vrot.lane.b32.xlu0 %v599, 64
      %v1271 = vpop.permute.xlu0 %1270
      %1336 = vrot.lane.b32.xlu0 %v600, 96
      %v1337 = vpop.permute.xlu0 %1336
      %1338 = vrot.lane.b32.xlu0 %v601, 96
      %v1339 = vpop.permute.xlu0 %1338
      %1340 = vrot.lane.b32.xlu0 %v602, 96
      %v1341 = vpop.permute.xlu0 %1340
      %1342 = vrot.lane.b32.xlu0 %v603, 96
      %v1343 = vpop.permute.xlu0 %1342
      %1344 = vrot.lane.b32.xlu0 %v604, 96
      %v1345 = vpop.permute.xlu0 %1344
      %1346 = vrot.lane.b32.xlu0 %v605, 96
      %v1347 = vpop.permute.xlu0 %1346
      %1348 = vrot.lane.b32.xlu0 %v606, 96
      %v1349 = vpop.permute.xlu0 %1348
      %1350 = vrot.lane.b32.xlu0 %v607, 96
      %v1351 = vpop.permute.xlu0 %1350
      %1352 = vrot.lane.b32.xlu0 %v608, 96
      %v1353 = vpop.permute.xlu0 %1352
      %1354 = vrot.lane.b32.xlu0 %v609, 96
      %v1355 = vpop.permute.xlu0 %1354
      %1356 = vrot.lane.b32.xlu0 %v610, 96
      %v1357 = vpop.permute.xlu0 %1356
      %1358 = vrot.lane.b32.xlu0 %v611, 96
      %v1359 = vpop.permute.xlu0 %1358
      %1360 = vrot.lane.b32.xlu0 %v612, 96
      %v1361 = vpop.permute.xlu0 %1360
      %1362 = vrot.lane.b32.xlu0 %v613, 96
      %v1363 = vpop.permute.xlu0 %1362
      %1364 = vrot.lane.b32.xlu0 %v614, 96
      %v1365 = vpop.permute.xlu0 %1364
      %1366 = vrot.lane.b32.xlu0 %v615, 96
      %v1367 = vpop.permute.xlu0 %1366
      %1368 = vrot.lane.b32.xlu0 %v616, 96
      %v1369 = vpop.permute.xlu0 %1368
      %1370 = vrot.lane.b32.xlu0 %v617, 96
      %v1371 = vpop.permute.xlu0 %1370
      %1372 = vrot.lane.b32.xlu0 %v618, 96
      %v1373 = vpop.permute.xlu0 %1372
      %1374 = vrot.lane.b32.xlu0 %v619, 96
      %v1375 = vpop.permute.xlu0 %1374
      %1376 = vrot.lane.b32.xlu0 %v620, 96
      %v1377 = vpop.permute.xlu0 %1376
      %1378 = vrot.lane.b32.xlu0 %v621, 96
      %v1379 = vpop.permute.xlu0 %1378
      %1380 = vrot.lane.b32.xlu0 %v622, 96
      %v1381 = vpop.permute.xlu0 %1380
      %1382 = vrot.lane.b32.xlu0 %v623, 96
      %v1383 = vpop.permute.xlu0 %1382
      %1384 = vrot.lane.b32.xlu0 %v624, 96
      %v1385 = vpop.permute.xlu0 %1384
      %1386 = vrot.lane.b32.xlu0 %v625, 96
      %v1387 = vpop.permute.xlu0 %1386
      %1388 = vrot.lane.b32.xlu0 %v626, 96
      %v1389 = vpop.permute.xlu0 %1388
      %1390 = vrot.lane.b32.xlu0 %v627, 96
      %v1391 = vpop.permute.xlu0 %1390
      %1392 = vrot.lane.b32.xlu0 %v628, 96
      %v1393 = vpop.permute.xlu0 %1392
      %1394 = vrot.lane.b32.xlu0 %v629, 96
      %v1395 = vpop.permute.xlu0 %1394
      %1396 = vrot.lane.b32.xlu0 %v630, 96
      %v1397 = vpop.permute.xlu0 %1396
      %1398 = vrot.lane.b32.xlu0 %v631, 96
      %v1399 = vpop.permute.xlu0 %1398
      %v1432 = vsel %vm286, %v375, %v697
      %v1433 = vsel %vm286, %v376, %v699
      %v1434 = vsel %vm286, %v377, %v701
      %v1435 = vsel %vm286, %v378, %v703
      %v1436 = vsel %vm286, %v379, %v705
      %v1437 = vsel %vm286, %v380, %v707
      %v1438 = vsel %vm286, %v381, %v709
      %v1439 = vsel %vm286, %v382, %v711
      %v1440 = vsel %vm286, %v383, %v713
      %v1441 = vsel %vm286, %v384, %v715
      %v1442 = vsel %vm286, %v385, %v717
      %v1443 = vsel %vm286, %v386, %v719
      %v1444 = vsel %vm286, %v387, %v721
      %v1445 = vsel %vm286, %v388, %v723
      %v1446 = vsel %vm286, %v389, %v725
      %v1447 = vsel %vm286, %v390, %v727
      %v1448 = vsel %vm286, %v391, %v729
      %v1449 = vsel %vm286, %v392, %v731
      %v1450 = vsel %vm286, %v393, %v733
      %v1451 = vsel %vm286, %v394, %v735
      %v1452 = vsel %vm286, %v395, %v737
      %v1453 = vsel %vm286, %v396, %v739
      %v1454 = vsel %vm286, %v397, %v741
      %v1455 = vsel %vm286, %v398, %v743
      %v1456 = vsel %vm286, %v399, %v745
      %v1457 = vsel %vm286, %v400, %v747
      %v1458 = vsel %vm286, %v401, %v749
      %v1459 = vsel %vm286, %v402, %v751
      %v1460 = vsel %vm286, %v403, %v753
      %v1461 = vsel %vm286, %v404, %v755
      %v1462 = vsel %vm286, %v405, %v757
      %v1463 = vsel %vm286, %v406, %v759
      %vm1464 = vcmask 523264
      %v1465 = vsel %vm1464, %v1432, %v825
      %v1466 = vsel %vm1464, %v1433, %v827
      %v1467 = vsel %vm1464, %v1434, %v829
      %v1468 = vsel %vm1464, %v1435, %v831
      %v1469 = vsel %vm1464, %v1436, %v833
      %v1470 = vsel %vm1464, %v1437, %v835
      %v1471 = vsel %vm1464, %v1438, %v837
      %v1472 = vsel %vm1464, %v1439, %v839
      %v1473 = vsel %vm1464, %v1440, %v841
      %v1474 = vsel %vm1464, %v1441, %v843
      %v1475 = vsel %vm1464, %v1442, %v845
      %v1476 = vsel %vm1464, %v1443, %v847
      %v1477 = vsel %vm1464, %v1444, %v849
      %v1478 = vsel %vm1464, %v1445, %v851
      %v1479 = vsel %vm1464, %v1446, %v853
      %v1480 = vsel %vm1464, %v1447, %v855
      %v1481 = vsel %vm1464, %v1448, %v857
      %v1482 = vsel %vm1464, %v1449, %v859
      %v1483 = vsel %vm1464, %v1450, %v861
      %v1484 = vsel %vm1464, %v1451, %v863
      %v1485 = vsel %vm1464, %v1452, %v865
      %v1486 = vsel %vm1464, %v1453, %v867
      %v1487 = vsel %vm1464, %v1454, %v869
      %v1488 = vsel %vm1464, %v1455, %v871
      %v1489 = vsel %vm1464, %v1456, %v873
      %v1490 = vsel %vm1464, %v1457, %v875
      %v1491 = vsel %vm1464, %v1458, %v877
      %v1492 = vsel %vm1464, %v1459, %v879
      %v1493 = vsel %vm1464, %v1460, %v881
      %v1494 = vsel %vm1464, %v1461, %v883
      %v1495 = vsel %vm1464, %v1462, %v885
      %v1496 = vsel %vm1464, %v1463, %v887
      %vm1497 = vcmask 785408
      %v1498 = vsel %vm1497, %v1465, %v953
      %v1499 = vsel %vm1497, %v1466, %v955
      %v1500 = vsel %vm1497, %v1467, %v957
      %v1501 = vsel %vm1497, %v1468, %v959
      %v1502 = vsel %vm1497, %v1469, %v961
      %v1503 = vsel %vm1497, %v1470, %v963
      %v1504 = vsel %vm1497, %v1471, %v965
      %v1505 = vsel %vm1497, %v1472, %v967
      %v1506 = vsel %vm1497, %v1473, %v969
      %v1507 = vsel %vm1497, %v1474, %v971
      %v1508 = vsel %vm1497, %v1475, %v973
      %v1509 = vsel %vm1497, %v1476, %v975
      %v1510 = vsel %vm1497, %v1477, %v977
      %v1511 = vsel %vm1497, %v1478, %v979
      %v1512 = vsel %vm1497, %v1479, %v981
      %v1513 = vsel %vm1497, %v1480, %v983
      %v1514 = vsel %vm1497, %v1481, %v985
      %v1515 = vsel %vm1497, %v1482, %v987
      %v1516 = vsel %vm1497, %v1483, %v989
      %v1517 = vsel %vm1497, %v1484, %v991
      %v1518 = vsel %vm1497, %v1485, %v993
      %v1519 = vsel %vm1497, %v1486, %v995
      %v1520 = vsel %vm1497, %v1487, %v997
      %v1521 = vsel %vm1497, %v1488, %v999
      %v1522 = vsel %vm1497, %v1489, %v1001
      %v1523 = vsel %vm1497, %v1490, %v1003
      %v1524 = vsel %vm1497, %v1491, %v1005
      %v1525 = vsel %vm1497, %v1492, %v1007
      %v1526 = vsel %vm1497, %v1493, %v1009
      %v1527 = vsel %vm1497, %v1494, %v1011
      %v1528 = vsel %vm1497, %v1495, %v1013
      %v1529 = vsel %vm1497, %v1496, %v1015
      %v1530 = vsel %vm286, %v503, %v1081
      %v1531 = vsel %vm286, %v504, %v1083
      %v1532 = vsel %vm286, %v505, %v1085
      %v1533 = vsel %vm286, %v506, %v1087
      %v1534 = vsel %vm286, %v507, %v1089
      %v1535 = vsel %vm286, %v508, %v1091
      %v1536 = vsel %vm286, %v509, %v1093
      %v1537 = vsel %vm286, %v510, %v1095
      %v1538 = vsel %vm286, %v511, %v1097
      %v1539 = vsel %vm286, %v512, %v1099
      %v1540 = vsel %vm286, %v513, %v1101
      %v1541 = vsel %vm286, %v514, %v1103
      %v1542 = vsel %vm286, %v515, %v1105
      %v1543 = vsel %vm286, %v516, %v1107
      %v1544 = vsel %vm286, %v517, %v1109
      %v1545 = vsel %vm286, %v518, %v1111
      %v1546 = vsel %vm286, %v519, %v1113
      %v1547 = vsel %vm286, %v520, %v1115
      %v1548 = vsel %vm286, %v521, %v1117
      %v1549 = vsel %vm286, %v522, %v1119
      %v1550 = vsel %vm286, %v523, %v1121
      %v1551 = vsel %vm286, %v524, %v1123
      %v1552 = vsel %vm286, %v525, %v1125
      %v1553 = vsel %vm286, %v526, %v1127
      %v1554 = vsel %vm286, %v527, %v1129
      %v1555 = vsel %vm286, %v528, %v1131
      %v1556 = vsel %vm286, %v529, %v1133
      %v1557 = vsel %vm286, %v530, %v1135
      %v1558 = vsel %vm286, %v531, %v1137
      %v1559 = vsel %vm286, %v532, %v1139
      %v1560 = vsel %vm286, %v533, %v1141
      %v1561 = vsel %vm286, %v534, %v1143
      %v1562 = vsel %vm1464, %v1530, %v1209
      %v1563 = vsel %vm1464, %v1531, %v1211
      %v1564 = vsel %vm1464, %v1532, %v1213
      %v1565 = vsel %vm1464, %v1533, %v1215
      %v1566 = vsel %vm1464, %v1534, %v1217
      %v1567 = vsel %vm1464, %v1535, %v1219
      %v1568 = vsel %vm1464, %v1536, %v1221
      %v1569 = vsel %vm1464, %v1537, %v1223
      %v1570 = vsel %vm1464, %v1538, %v1225
      %v1571 = vsel %vm1464, %v1539, %v1227
      %v1572 = vsel %vm1464, %v1540, %v1229
      %v1573 = vsel %vm1464, %v1541, %v1231
      %v1574 = vsel %vm1464, %v1542, %v1233
      %v1575 = vsel %vm1464, %v1543, %v1235
      %v1576 = vsel %vm1464, %v1544, %v1237
      %v1577 = vsel %vm1464, %v1545, %v1239
      %v1578 = vsel %vm1464, %v1546, %v1241
      %v1579 = vsel %vm1464, %v1547, %v1243
      %v1580 = vsel %vm1464, %v1548, %v1245
      %v1581 = vsel %vm1464, %v1549, %v1247
      %v1582 = vsel %vm1464, %v1550, %v1249
      %v1583 = vsel %vm1464, %v1551, %v1251
      %v1584 = vsel %vm1464, %v1552, %v1253
      %v1585 = vsel %vm1464, %v1553, %v1255
      %v1586 = vsel %vm1464, %v1554, %v1257
      %v1587 = vsel %vm1464, %v1555, %v1259
      %v1588 = vsel %vm1464, %v1556, %v1261
      %v1589 = vsel %vm1464, %v1557, %v1263
      %v1590 = vsel %vm1464, %v1558, %v1265
      %v1591 = vsel %vm1464, %v1559, %v1267
      %v1592 = vsel %vm1464, %v1560, %v1269
      %v1593 = vsel %vm1464, %v1561, %v1271
      %v1594 = vsel %vm1497, %v1562, %v1337
      %v1595 = vsel %vm1497, %v1563, %v1339
      %v1596 = vsel %vm1497, %v1564, %v1341
      %v1597 = vsel %vm1497, %v1565, %v1343
      %v1598 = vsel %vm1497, %v1566, %v1345
      %v1599 = vsel %vm1497, %v1567, %v1347
      %v1600 = vsel %vm1497, %v1568, %v1349
      %v1601 = vsel %vm1497, %v1569, %v1351
      %v1602 = vsel %vm1497, %v1570, %v1353
      %v1603 = vsel %vm1497, %v1571, %v1355
      %v1604 = vsel %vm1497, %v1572, %v1357
      %v1605 = vsel %vm1497, %v1573, %v1359
      %v1606 = vsel %vm1497, %v1574, %v1361
      %v1607 = vsel %vm1497, %v1575, %v1363
      %v1608 = vsel %vm1497, %v1576, %v1365
      %v1609 = vsel %vm1497, %v1577, %v1367
      %v1610 = vsel %vm1497, %v1578, %v1369
      %v1611 = vsel %vm1497, %v1579, %v1371
      %v1612 = vsel %vm1497, %v1580, %v1373
      %v1613 = vsel %vm1497, %v1581, %v1375
      %v1614 = vsel %vm1497, %v1582, %v1377
      %v1615 = vsel %vm1497, %v1583, %v1379
      %v1616 = vsel %vm1497, %v1584, %v1381
      %v1617 = vsel %vm1497, %v1585, %v1383
      %v1618 = vsel %vm1497, %v1586, %v1385
      %v1619 = vsel %vm1497, %v1587, %v1387
      %v1620 = vsel %vm1497, %v1588, %v1389
      %v1621 = vsel %vm1497, %v1589, %v1391
      %v1622 = vsel %vm1497, %v1590, %v1393
      %v1623 = vsel %vm1497, %v1591, %v1395
      %v1624 = vsel %vm1497, %v1592, %v1397
      %v1625 = vsel %vm1497, %v1593, %v1399
      %v1626 = vld [vmem:[%s3] sm:$0x1]
      %v1628 = vlaneseq
      %v1629 = vshrl.u32 %v1628, 7
      %v1630 = vsub.s32 0, %v1629
      %v1631 = vrot.slane %v1626, %v1630
      %v1634 = vsel %vm286, %v632, 0
      %v1637 = vsel %vm286, %v633, 0
      %v1640 = vsel %vm286, %v634, 0
      %v1643 = vsel %vm286, %v635, 0
      %v1646 = vsel %vm286, %v636, 0
      %v1649 = vsel %vm286, %v637, 0
      %v1652 = vsel %vm286, %v638, 0
      %v1655 = vsel %vm286, %v639, 0
      %v1658 = vsel %vm286, %v640, 0
      %v1661 = vsel %vm286, %v641, 0
      %v1664 = vsel %vm286, %v642, 0
      %v1667 = vsel %vm286, %v643, 0
      %v1670 = vsel %vm286, %v644, 0
      %v1673 = vsel %vm286, %v645, 0
      %v1676 = vsel %vm286, %v646, 0
      %v1679 = vsel %vm286, %v647, 0
      %v1682 = vsel %vm286, %v648, 0
      %v1685 = vsel %vm286, %v649, 0
      %v1688 = vsel %vm286, %v650, 0
      %v1691 = vsel %vm286, %v651, 0
      %v1694 = vsel %vm286, %v652, 0
      %v1697 = vsel %vm286, %v653, 0
      %v1700 = vsel %vm286, %v654, 0
      %v1703 = vsel %vm286, %v655, 0
      %v1706 = vsel %vm286, %v656, 0
      %v1709 = vsel %vm286, %v657, 0
      %v1712 = vsel %vm286, %v658, 0
      %v1715 = vsel %vm286, %v659, 0
      %v1718 = vsel %vm286, %v660, 0
      %v1721 = vsel %vm286, %v661, 0
      %v1724 = vsel %vm286, %v662, 0
      %v1727 = vsel %vm286, %v663, 0
      %1729 = vmatprep.subr.mxu0 0.0
      %1730 = vmatpush1.msra.mxu0 %v265
      %1731 = vmatprep.subr.mxu0 0.0
      %1732 = vmatpush1.msra.mxu0 %v264
      %1733 = vmatprep.subr.mxu0 0.0
      %1734 = vmatpush1.msra.mxu0 %v263
      %1735 = vmatprep.subr.mxu0 0.0
      %1736 = vmatpush1.msra.mxu0 %v262
      %1737 = vmatprep.subr.mxu0 0.0
      %1738 = vmatpush1.msra.mxu0 %v261
      %1739 = vmatprep.subr.mxu0 0.0
      %1740 = vmatpush1.msra.mxu0 %v260
      %1741 = vmatprep.subr.mxu0 0.0
      %1742 = vmatpush1.msra.mxu0 %v259
      %1743 = vmatprep.subr.mxu0 0.0
      %1744 = vmatpush1.msra.mxu0 %v258
      %1745 = vmatprep.subr.mxu0 0.0
      %1746 = vmatpush1.msra.mxu0 %v257
      %1747 = vmatprep.subr.mxu0 0.0
      %1748 = vmatpush1.msra.mxu0 %v256
      %1749 = vmatprep.subr.mxu0 0.0
      %1750 = vmatpush1.msra.mxu0 %v255
      %1751 = vmatprep.subr.mxu0 0.0
      %1752 = vmatpush1.msra.mxu0 %v254
      %1753 = vmatprep.subr.mxu0 0.0
      %1754 = vmatpush1.msra.mxu0 %v253
      %1755 = vmatprep.subr.mxu0 0.0
      %1756 = vmatpush1.msra.mxu0 %v252
      %1757 = vmatprep.subr.mxu0 0.0
      %1758 = vmatpush1.msra.mxu0 %v251
      %1759 = vmatprep.subr.mxu0 0.0
      %1760 = vmatpush1.msra.mxu0 %v250
      %1761 = vmatprep.subr.mxu0 0.0
      %1762 = vmatpush2.msra.mxu0 %v281
      %1763 = vmatprep.subr.mxu0 0.0
      %1764 = vmatpush2.msra.mxu0 %v280
      %1765 = vmatprep.subr.mxu0 0.0
      %1766 = vmatpush2.msra.mxu0 %v279
      %1767 = vmatprep.subr.mxu0 0.0
      %1768 = vmatpush2.msra.mxu0 %v278
      %1769 = vmatprep.subr.mxu0 0.0
      %1770 = vmatpush2.msra.mxu0 %v277
      %1771 = vmatprep.subr.mxu0 0.0
      %1772 = vmatpush2.msra.mxu0 %v276
      %1773 = vmatprep.subr.mxu0 0.0
      %1774 = vmatpush2.msra.mxu0 %v275
      %1775 = vmatprep.subr.mxu0 0.0
      %1776 = vmatpush2.msra.mxu0 %v274
      %1777 = vmatprep.subr.mxu0 0.0
      %1778 = vmatpush2.msra.mxu0 %v273
      %1779 = vmatprep.subr.mxu0 0.0
      %1780 = vmatpush2.msra.mxu0 %v272
      %1781 = vmatprep.subr.mxu0 0.0
      %1782 = vmatpush2.msra.mxu0 %v271
      %1783 = vmatprep.subr.mxu0 0.0
      %1784 = vmatpush2.msra.mxu0 %v270
      %1785 = vmatprep.subr.mxu0 0.0
      %1786 = vmatpush2.msra.mxu0 %v269
      %1787 = vmatprep.subr.mxu0 0.0
      %1788 = vmatpush2.msra.mxu0 %v268
      %1789 = vmatprep.subr.mxu0 0.0
      %1790 = vmatpush2.msra.mxu0 %v267
      %1791 = vmatprep.subr.mxu0 0.0
      %1792 = vmatpush2.msra.mxu0 %v266
      %1793 = vmatprep.mubr.f32.mxu0 %v1594
      %1794 = vmatmul.mubr.f32.gmra.mxu0 %v1498
      %v1795 = vpop.f32.mrf.mxu0
      %v1796 = vadd.f32 %v1631, %v1795
      %v1797 = vpop.f32.mrf.mxu0
      %1798 = vmatprep.mubr.f32.mxu0 %v1595
      %1799 = vmatmul.mubr.f32.gmra.mxu0 %v1499
      %v1800 = vpop.f32.mrf.mxu0
      %v1801 = vadd.f32 %v1631, %v1800
      %v1802 = vpop.f32.mrf.mxu0
      %1803 = vmatprep.mubr.f32.mxu0 %v1596
      %1804 = vmatmul.mubr.f32.gmra.mxu0 %v1500
      %v1805 = vpop.f32.mrf.mxu0
      %v1806 = vadd.f32 %v1631, %v1805
      %v1807 = vpop.f32.mrf.mxu0
      %1808 = vmatprep.mubr.f32.mxu0 %v1597
      %1809 = vmatmul.mubr.f32.gmra.mxu0 %v1501
      %v1810 = vpop.f32.mrf.mxu0
      %v1811 = vadd.f32 %v1631, %v1810
      %v1812 = vpop.f32.mrf.mxu0
      %1813 = vmatprep.mubr.f32.mxu0 %v1598
      %1814 = vmatmul.mubr.f32.gmra.mxu0 %v1502
      %v1815 = vpop.f32.mrf.mxu0
      %v1816 = vadd.f32 %v1631, %v1815
      %v1817 = vpop.f32.mrf.mxu0
      %1818 = vmatprep.mubr.f32.mxu0 %v1599
      %1819 = vmatmul.mubr.f32.gmra.mxu0 %v1503
      %v1820 = vpop.f32.mrf.mxu0
      %v1821 = vadd.f32 %v1631, %v1820
      %v1822 = vpop.f32.mrf.mxu0
      %1823 = vmatprep.mubr.f32.mxu0 %v1600
      %1824 = vmatmul.mubr.f32.gmra.mxu0 %v1504
      %v1825 = vpop.f32.mrf.mxu0
      %v1826 = vadd.f32 %v1631, %v1825
      %v1827 = vpop.f32.mrf.mxu0
      %1828 = vmatprep.mubr.f32.mxu0 %v1601
      %1829 = vmatmul.mubr.f32.gmra.mxu0 %v1505
      %v1830 = vpop.f32.mrf.mxu0
      %v1831 = vadd.f32 %v1631, %v1830
      %v1832 = vpop.f32.mrf.mxu0
      %1833 = vmatprep.mubr.f32.mxu0 %v1602
      %1834 = vmatmul.mubr.f32.gmra.mxu0 %v1506
      %v1835 = vpop.f32.mrf.mxu0
      %v1836 = vadd.f32 %v1631, %v1835
      %v1837 = vpop.f32.mrf.mxu0
      %1838 = vmatprep.mubr.f32.mxu0 %v1603
      %1839 = vmatmul.mubr.f32.gmra.mxu0 %v1507
      %v1840 = vpop.f32.mrf.mxu0
      %v1841 = vadd.f32 %v1631, %v1840
      %v1842 = vpop.f32.mrf.mxu0
      %1843 = vmatprep.mubr.f32.mxu0 %v1604
      %1844 = vmatmul.mubr.f32.gmra.mxu0 %v1508
      %v1845 = vpop.f32.mrf.mxu0
      %v1846 = vadd.f32 %v1631, %v1845
      %v1847 = vpop.f32.mrf.mxu0
      %1848 = vmatprep.mubr.f32.mxu0 %v1605
      %1849 = vmatmul.mubr.f32.gmra.mxu0 %v1509
      %v1850 = vpop.f32.mrf.mxu0
      %v1851 = vadd.f32 %v1631, %v1850
      %v1852 = vpop.f32.mrf.mxu0
      %1853 = vmatprep.mubr.f32.mxu0 %v1606
      %1854 = vmatmul.mubr.f32.gmra.mxu0 %v1510
      %v1855 = vpop.f32.mrf.mxu0
      %v1856 = vadd.f32 %v1631, %v1855
      %v1857 = vpop.f32.mrf.mxu0
      %1858 = vmatprep.mubr.f32.mxu0 %v1607
      %1859 = vmatmul.mubr.f32.gmra.mxu0 %v1511
      %v1860 = vpop.f32.mrf.mxu0
      %v1861 = vadd.f32 %v1631, %v1860
      %v1862 = vpop.f32.mrf.mxu0
      %1863 = vmatprep.mubr.f32.mxu0 %v1608
      %1864 = vmatmul.mubr.f32.gmra.mxu0 %v1512
      %v1865 = vpop.f32.mrf.mxu0
      %v1866 = vadd.f32 %v1631, %v1865
      %v1867 = vpop.f32.mrf.mxu0
      %1868 = vmatprep.mubr.f32.mxu0 %v1609
      %1869 = vmatmul.mubr.f32.gmra.mxu0 %v1513
      %v1870 = vpop.f32.mrf.mxu0
      %v1871 = vadd.f32 %v1631, %v1870
      %v1872 = vpop.f32.mrf.mxu0
      %1873 = vmatprep.mubr.f32.mxu0 %v1610
      %1874 = vmatmul.mubr.f32.gmra.mxu0 %v1514
      %v1875 = vpop.f32.mrf.mxu0
      %v1876 = vadd.f32 %v1631, %v1875
      %v1877 = vpop.f32.mrf.mxu0
      %1878 = vmatprep.mubr.f32.mxu0 %v1611
      %1879 = vmatmul.mubr.f32.gmra.mxu0 %v1515
      %v1880 = vpop.f32.mrf.mxu0
      %v1881 = vadd.f32 %v1631, %v1880
      %v1882 = vpop.f32.mrf.mxu0
      %1883 = vmatprep.mubr.f32.mxu0 %v1612
      %1884 = vmatmul.mubr.f32.gmra.mxu0 %v1516
      %v1885 = vpop.f32.mrf.mxu0
      %v1886 = vadd.f32 %v1631, %v1885
      %v1887 = vpop.f32.mrf.mxu0
      %1888 = vmatprep.mubr.f32.mxu0 %v1613
      %1889 = vmatmul.mubr.f32.gmra.mxu0 %v1517
      %v1890 = vpop.f32.mrf.mxu0
      %v1891 = vadd.f32 %v1631, %v1890
      %v1892 = vpop.f32.mrf.mxu0
      %1893 = vmatprep.mubr.f32.mxu0 %v1614
      %1894 = vmatmul.mubr.f32.gmra.mxu0 %v1518
      %v1895 = vpop.f32.mrf.mxu0
      %v1896 = vadd.f32 %v1631, %v1895
      %v1897 = vpop.f32.mrf.mxu0
      %1898 = vmatprep.mubr.f32.mxu0 %v1615
      %1899 = vmatmul.mubr.f32.gmra.mxu0 %v1519
      %v1900 = vpop.f32.mrf.mxu0
      %v1901 = vadd.f32 %v1631, %v1900
      %v1902 = vpop.f32.mrf.mxu0
      %1903 = vmatprep.mubr.f32.mxu0 %v1616
      %1904 = vmatmul.mubr.f32.gmra.mxu0 %v1520
      %v1905 = vpop.f32.mrf.mxu0
      %v1906 = vadd.f32 %v1631, %v1905
      %v1907 = vpop.f32.mrf.mxu0
      %1908 = vmatprep.mubr.f32.mxu0 %v1617
      %1909 = vmatmul.mubr.f32.gmra.mxu0 %v1521
      %v1910 = vpop.f32.mrf.mxu0
      %v1911 = vadd.f32 %v1631, %v1910
      %v1912 = vpop.f32.mrf.mxu0
      %1913 = vmatprep.mubr.f32.mxu0 %v1618
      %1914 = vmatmul.mubr.f32.gmra.mxu0 %v1522
      %v1915 = vpop.f32.mrf.mxu0
      %v1916 = vadd.f32 %v1631, %v1915
      %v1917 = vpop.f32.mrf.mxu0
      %1918 = vmatprep.mubr.f32.mxu0 %v1619
      %1919 = vmatmul.mubr.f32.gmra.mxu0 %v1523
      %v1920 = vpop.f32.mrf.mxu0
      %v1921 = vadd.f32 %v1631, %v1920
      %v1922 = vpop.f32.mrf.mxu0
      %1923 = vmatprep.mubr.f32.mxu0 %v1620
      %1924 = vmatmul.mubr.f32.gmra.mxu0 %v1524
      %v1925 = vpop.f32.mrf.mxu0
      %v1926 = vadd.f32 %v1631, %v1925
      %v1927 = vpop.f32.mrf.mxu0
      %1928 = vmatprep.mubr.f32.mxu0 %v1621
      %1929 = vmatmul.mubr.f32.gmra.mxu0 %v1525
      %v1930 = vpop.f32.mrf.mxu0
      %v1931 = vadd.f32 %v1631, %v1930
      %v1932 = vpop.f32.mrf.mxu0
      %1933 = vmatprep.mubr.f32.mxu0 %v1622
      %1934 = vmatmul.mubr.f32.gmra.mxu0 %v1526
      %v1935 = vpop.f32.mrf.mxu0
      %v1936 = vadd.f32 %v1631, %v1935
      %v1937 = vpop.f32.mrf.mxu0
      %1938 = vmatprep.mubr.f32.mxu0 %v1623
      %1939 = vmatmul.mubr.f32.gmra.mxu0 %v1527
      %v1940 = vpop.f32.mrf.mxu0
      %v1941 = vadd.f32 %v1631, %v1940
      %v1942 = vpop.f32.mrf.mxu0
      %1943 = vmatprep.mubr.f32.mxu0 %v1624
      %1944 = vmatmul.mubr.f32.gmra.mxu0 %v1528
      %v1945 = vpop.f32.mrf.mxu0
      %v1946 = vadd.f32 %v1631, %v1945
      %v1947 = vpop.f32.mrf.mxu0
      %1948 = vmatprep.mubr.f32.mxu0 %v1625
      %1949 = vmatmul.mubr.f32.gmra.mxu0 %v1529
      %v1950 = vpop.f32.mrf.mxu0
      %v1951 = vadd.f32 %v1631, %v1950
      %v1952 = vpop.f32.mrf.mxu0
      %1953 = vdwg.mxu0
      %1954 = vmatprep.subr.mxu0 0.0
      %1955 = vmatpush1.msra.mxu0 0.0
      %1956 = vmatprep.subr.mxu0 0.0
      %1957 = vmatpush1.msra.mxu0 0.0
      %1958 = vmatprep.subr.mxu0 0.0
      %1959 = vmatpush1.msra.mxu0 0.0
      %1960 = vmatprep.subr.mxu0 0.0
      %1961 = vmatpush1.msra.mxu0 0.0
      %1962 = vmatprep.subr.mxu0 0.0
      %1963 = vmatpush1.msra.mxu0 0.0
      %1964 = vmatprep.subr.mxu0 0.0
      %1965 = vmatpush1.msra.mxu0 0.0
      %1966 = vmatprep.subr.mxu0 0.0
      %1967 = vmatpush1.msra.mxu0 0.0
      %1968 = vmatprep.subr.mxu0 0.0
      %1969 = vmatpush1.msra.mxu0 0.0
      %1970 = vmatprep.subr.mxu0 0.0
      %1971 = vmatpush1.msra.mxu0 0.0
      %1972 = vmatprep.subr.mxu0 0.0
      %1973 = vmatpush1.msra.mxu0 0.0
      %1974 = vmatprep.subr.mxu0 0.0
      %1975 = vmatpush1.msra.mxu0 0.0
      %1976 = vmatprep.subr.mxu0 0.0
      %1977 = vmatpush1.msra.mxu0 0.0
      %1978 = vmatprep.subr.mxu0 0.0
      %1979 = vmatpush1.msra.mxu0 %v285
      %1980 = vmatprep.subr.mxu0 0.0
      %1981 = vmatpush1.msra.mxu0 %v284
      %1982 = vmatprep.subr.mxu0 0.0
      %1983 = vmatpush1.msra.mxu0 %v283
      %1984 = vmatprep.subr.mxu0 0.0
      %1985 = vmatpush1.msra.mxu0 %v282
      %1986 = vmatprep.subr.mxu0 0.0
      %1987 = vmatpush2.msra.mxu0 0.0
      %1988 = vmatprep.subr.mxu0 0.0
      %1989 = vmatpush2.msra.mxu0 0.0
      %1990 = vmatprep.subr.mxu0 0.0
      %1991 = vmatpush2.msra.mxu0 0.0
      %1992 = vmatprep.subr.mxu0 0.0
      %1993 = vmatpush2.msra.mxu0 0.0
      %1994 = vmatprep.subr.mxu0 0.0
      %1995 = vmatpush2.msra.mxu0 0.0
      %1996 = vmatprep.subr.mxu0 0.0
      %1997 = vmatpush2.msra.mxu0 0.0
      %1998 = vmatprep.subr.mxu0 0.0
      %1999 = vmatpush2.msra.mxu0 0.0
      %2000 = vmatprep.subr.mxu0 0.0
      %2001 = vmatpush2.msra.mxu0 0.0
      %2002 = vmatprep.subr.mxu0 0.0
      %2003 = vmatpush2.msra.mxu0 0.0
      %2004 = vmatprep.subr.mxu0 0.0
      %2005 = vmatpush2.msra.mxu0 0.0
      %2006 = vmatprep.subr.mxu0 0.0
      %2007 = vmatpush2.msra.mxu0 0.0
      %2008 = vmatprep.subr.mxu0 0.0
      %2009 = vmatpush2.msra.mxu0 0.0
      %2010 = vmatprep.subr.mxu0 0.0
      %2011 = vmatpush2.msra.mxu0 0.0
      %2012 = vmatprep.subr.mxu0 0.0
      %2013 = vmatpush2.msra.mxu0 0.0
      %2014 = vmatprep.subr.mxu0 0.0
      %2015 = vmatpush2.msra.mxu0 0.0
      %2016 = vmatprep.subr.mxu0 0.0
      %2017 = vmatpush2.msra.mxu0 0.0
      %2018 = vmatprep.mubr.f32.mxu0 0.0
      %2019 = vmatmul.mubr.f32.gmra.mxu0 %v1634
      %v2020 = vpop.f32.mrf.mxu0
      %v2021 = vadd.f32 %v1796, %v2020
      %v2022 = vpop.f32.mrf.mxu0
      %2023 = vmatprep.mubr.f32.mxu0 0.0
      %2024 = vmatmul.mubr.f32.gmra.mxu0 %v1637
      %v2025 = vpop.f32.mrf.mxu0
      %v2026 = vadd.f32 %v1801, %v2025
      %v2027 = vpop.f32.mrf.mxu0
      %2028 = vmatprep.mubr.f32.mxu0 0.0
      %2029 = vmatmul.mubr.f32.gmra.mxu0 %v1640
      %v2030 = vpop.f32.mrf.mxu0
      %v2031 = vadd.f32 %v1806, %v2030
      %v2032 = vpop.f32.mrf.mxu0
      %2033 = vmatprep.mubr.f32.mxu0 0.0
      %2034 = vmatmul.mubr.f32.gmra.mxu0 %v1643
      %v2035 = vpop.f32.mrf.mxu0
      %v2036 = vadd.f32 %v1811, %v2035
      %v2037 = vpop.f32.mrf.mxu0
      %2038 = vmatprep.mubr.f32.mxu0 0.0
      %2039 = vmatmul.mubr.f32.gmra.mxu0 %v1646
      %v2040 = vpop.f32.mrf.mxu0
      %v2041 = vadd.f32 %v1816, %v2040
      %v2042 = vpop.f32.mrf.mxu0
      %2043 = vmatprep.mubr.f32.mxu0 0.0
      %2044 = vmatmul.mubr.f32.gmra.mxu0 %v1649
      %v2045 = vpop.f32.mrf.mxu0
      %v2046 = vadd.f32 %v1821, %v2045
      %v2047 = vpop.f32.mrf.mxu0
      %2048 = vmatprep.mubr.f32.mxu0 0.0
      %2049 = vmatmul.mubr.f32.gmra.mxu0 %v1652
      %v2050 = vpop.f32.mrf.mxu0
      %v2051 = vadd.f32 %v1826, %v2050
      %v2052 = vpop.f32.mrf.mxu0
      %2053 = vmatprep.mubr.f32.mxu0 0.0
      %2054 = vmatmul.mubr.f32.gmra.mxu0 %v1655
      %v2055 = vpop.f32.mrf.mxu0
      %v2056 = vadd.f32 %v1831, %v2055
      %v2057 = vpop.f32.mrf.mxu0
      %2058 = vmatprep.mubr.f32.mxu0 0.0
      %2059 = vmatmul.mubr.f32.gmra.mxu0 %v1658
      %v2060 = vpop.f32.mrf.mxu0
      %v2061 = vadd.f32 %v1836, %v2060
      %v2062 = vpop.f32.mrf.mxu0
      %2063 = vmatprep.mubr.f32.mxu0 0.0
      %2064 = vmatmul.mubr.f32.gmra.mxu0 %v1661
      %v2065 = vpop.f32.mrf.mxu0
      %v2066 = vadd.f32 %v1841, %v2065
      %v2067 = vpop.f32.mrf.mxu0
      %2068 = vmatprep.mubr.f32.mxu0 0.0
      %2069 = vmatmul.mubr.f32.gmra.mxu0 %v1664
      %v2070 = vpop.f32.mrf.mxu0
      %v2071 = vadd.f32 %v1846, %v2070
      %v2072 = vpop.f32.mrf.mxu0
      %2073 = vmatprep.mubr.f32.mxu0 0.0
      %2074 = vmatmul.mubr.f32.gmra.mxu0 %v1667
      %v2075 = vpop.f32.mrf.mxu0
      %v2076 = vadd.f32 %v1851, %v2075
      %v2077 = vpop.f32.mrf.mxu0
      %2078 = vmatprep.mubr.f32.mxu0 0.0
      %2079 = vmatmul.mubr.f32.gmra.mxu0 %v1670
      %v2080 = vpop.f32.mrf.mxu0
      %v2081 = vadd.f32 %v1856, %v2080
      %v2082 = vpop.f32.mrf.mxu0
      %2083 = vmatprep.mubr.f32.mxu0 0.0
      %2084 = vmatmul.mubr.f32.gmra.mxu0 %v1673
      %v2085 = vpop.f32.mrf.mxu0
      %v2086 = vadd.f32 %v1861, %v2085
      %v2087 = vpop.f32.mrf.mxu0
      %2088 = vmatprep.mubr.f32.mxu0 0.0
      %2089 = vmatmul.mubr.f32.gmra.mxu0 %v1676
      %v2090 = vpop.f32.mrf.mxu0
      %v2091 = vadd.f32 %v1866, %v2090
      %v2092 = vpop.f32.mrf.mxu0
      %2093 = vmatprep.mubr.f32.mxu0 0.0
      %2094 = vmatmul.mubr.f32.gmra.mxu0 %v1679
      %v2095 = vpop.f32.mrf.mxu0
      %v2096 = vadd.f32 %v1871, %v2095
      %v2097 = vpop.f32.mrf.mxu0
      %2098 = vmatprep.mubr.f32.mxu0 0.0
      %2099 = vmatmul.mubr.f32.gmra.mxu0 %v1682
      %v2100 = vpop.f32.mrf.mxu0
      %v2101 = vadd.f32 %v1876, %v2100
      %v2102 = vpop.f32.mrf.mxu0
      %2103 = vmatprep.mubr.f32.mxu0 0.0
      %2104 = vmatmul.mubr.f32.gmra.mxu0 %v1685
      %v2105 = vpop.f32.mrf.mxu0
      %v2106 = vadd.f32 %v1881, %v2105
      %v2107 = vpop.f32.mrf.mxu0
      %2108 = vmatprep.mubr.f32.mxu0 0.0
      %2109 = vmatmul.mubr.f32.gmra.mxu0 %v1688
      %v2110 = vpop.f32.mrf.mxu0
      %v2111 = vadd.f32 %v1886, %v2110
      %v2112 = vpop.f32.mrf.mxu0
      %2113 = vmatprep.mubr.f32.mxu0 0.0
      %2114 = vmatmul.mubr.f32.gmra.mxu0 %v1691
      %v2115 = vpop.f32.mrf.mxu0
      %v2116 = vadd.f32 %v1891, %v2115
      %v2117 = vpop.f32.mrf.mxu0
      %2118 = vmatprep.mubr.f32.mxu0 0.0
      %2119 = vmatmul.mubr.f32.gmra.mxu0 %v1694
      %v2120 = vpop.f32.mrf.mxu0
      %v2121 = vadd.f32 %v1896, %v2120
      %v2122 = vpop.f32.mrf.mxu0
      %2123 = vmatprep.mubr.f32.mxu0 0.0
      %2124 = vmatmul.mubr.f32.gmra.mxu0 %v1697
      %v2125 = vpop.f32.mrf.mxu0
      %v2126 = vadd.f32 %v1901, %v2125
      %v2127 = vpop.f32.mrf.mxu0
      %2128 = vmatprep.mubr.f32.mxu0 0.0
      %2129 = vmatmul.mubr.f32.gmra.mxu0 %v1700
      %v2130 = vpop.f32.mrf.mxu0
      %v2131 = vadd.f32 %v1906, %v2130
      %v2132 = vpop.f32.mrf.mxu0
      %2133 = vmatprep.mubr.f32.mxu0 0.0
      %2134 = vmatmul.mubr.f32.gmra.mxu0 %v1703
      %v2135 = vpop.f32.mrf.mxu0
      %v2136 = vadd.f32 %v1911, %v2135
      %v2137 = vpop.f32.mrf.mxu0
      %2138 = vmatprep.mubr.f32.mxu0 0.0
      %2139 = vmatmul.mubr.f32.gmra.mxu0 %v1706
      %v2140 = vpop.f32.mrf.mxu0
      %v2141 = vadd.f32 %v1916, %v2140
      %v2142 = vpop.f32.mrf.mxu0
      %2143 = vmatprep.mubr.f32.mxu0 0.0
      %2144 = vmatmul.mubr.f32.gmra.mxu0 %v1709
      %v2145 = vpop.f32.mrf.mxu0
      %v2146 = vadd.f32 %v1921, %v2145
      %v2147 = vpop.f32.mrf.mxu0
      %2148 = vmatprep.mubr.f32.mxu0 0.0
      %2149 = vmatmul.mubr.f32.gmra.mxu0 %v1712
      %v2150 = vpop.f32.mrf.mxu0
      %v2151 = vadd.f32 %v1926, %v2150
      %v2152 = vpop.f32.mrf.mxu0
      %2153 = vmatprep.mubr.f32.mxu0 0.0
      %2154 = vmatmul.mubr.f32.gmra.mxu0 %v1715
      %v2155 = vpop.f32.mrf.mxu0
      %v2156 = vadd.f32 %v1931, %v2155
      %v2157 = vpop.f32.mrf.mxu0
      %2158 = vmatprep.mubr.f32.mxu0 0.0
      %2159 = vmatmul.mubr.f32.gmra.mxu0 %v1718
      %v2160 = vpop.f32.mrf.mxu0
      %v2161 = vadd.f32 %v1936, %v2160
      %v2162 = vpop.f32.mrf.mxu0
      %2163 = vmatprep.mubr.f32.mxu0 0.0
      %2164 = vmatmul.mubr.f32.gmra.mxu0 %v1721
      %v2165 = vpop.f32.mrf.mxu0
      %v2166 = vadd.f32 %v1941, %v2165
      %v2167 = vpop.f32.mrf.mxu0
      %2168 = vmatprep.mubr.f32.mxu0 0.0
      %2169 = vmatmul.mubr.f32.gmra.mxu0 %v1724
      %v2170 = vpop.f32.mrf.mxu0
      %v2171 = vadd.f32 %v1946, %v2170
      %v2172 = vpop.f32.mrf.mxu0
      %2173 = vmatprep.mubr.f32.mxu0 0.0
      %2174 = vmatmul.mubr.f32.gmra.mxu0 %v1727
      %v2175 = vpop.f32.mrf.mxu0
      %v2176 = vadd.f32 %v1951, %v2175
      %v2177 = vpop.f32.mrf.mxu0
      %2178 = vdwg.mxu0
      %v2179 = vld [vmem:[%s212] sm:$0xff]
      %v2180 = vld [vmem:[%s212 + $0x8] sm:$0xff]
      %v2181 = vld [vmem:[%s212 + $0x10] sm:$0xff]
      %v2182 = vld [vmem:[%s212 + $0x18] sm:$0xff]
      %v2183 = vld [vmem:[%s212 + $0x20] sm:$0xff]
      %v2184 = vld [vmem:[%s212 + $0x28] sm:$0xff]
      %v2185 = vld [vmem:[%s212 + $0x30] sm:$0xff]
      %v2186 = vld [vmem:[%s212 + $0x38] sm:$0xff]
      %v2187 = vld [vmem:[%s212 + $0x40] sm:$0xff]
      %v2188 = vld [vmem:[%s212 + $0x48] sm:$0xff]
      %v2189 = vld [vmem:[%s212 + $0x50] sm:$0xff]
      %v2190 = vld [vmem:[%s212 + $0x58] sm:$0xff]
      %v2191 = vld [vmem:[%s212 + $0x60] sm:$0xff]
      %v2192 = vld [vmem:[%s212 + $0x68] sm:$0xff]
      %v2193 = vld [vmem:[%s212 + $0x70] sm:$0xff]
      %v2194 = vld [vmem:[%s212 + $0x78] sm:$0xff]
      %v2195 = vld [vmem:[%s212 + $0x80] sm:$0xff]
      %v2196 = vld [vmem:[%s212 + $0x88] sm:$0xff]
      %v2197 = vld [vmem:[%s212 + $0x90] sm:$0xff]
      %v2198 = vld [vmem:[%s212 + $0x98] sm:$0xff]
      %v2199 = vld [vmem:[%s212 + $0xa0] sm:$0xff]
      %v2200 = vld [vmem:[%s212 + $0xa8] sm:$0xff]
      %v2201 = vld [vmem:[%s212 + $0xb0] sm:$0xff]
      %v2202 = vld [vmem:[%s212 + $0xb8] sm:$0xff]
      %v2203 = vld [vmem:[%s212 + $0xc0] sm:$0xff]
      %v2204 = vld [vmem:[%s212 + $0xc8] sm:$0xff]
      %v2205 = vld [vmem:[%s212 + $0xd0] sm:$0xff]
      %v2206 = vld [vmem:[%s212 + $0xd8] sm:$0xff]
      %v2207 = vld [vmem:[%s212 + $0xe0] sm:$0xff]
      %v2208 = vld [vmem:[%s212 + $0xe8] sm:$0xff]
      %v2209 = vld [vmem:[%s212 + $0xf0] sm:$0xff]
      %v2210 = vld [vmem:[%s212 + $0xf8] sm:$0xff]
      %v2211 = vadd.f32 %v2021, %v2179
      %v2212 = vadd.f32 %v2026, %v2180
      %v2213 = vadd.f32 %v2031, %v2181
      %v2214 = vadd.f32 %v2036, %v2182
      %v2215 = vadd.f32 %v2041, %v2183
      %v2216 = vadd.f32 %v2046, %v2184
      %v2217 = vadd.f32 %v2051, %v2185
      %v2218 = vadd.f32 %v2056, %v2186
      %v2219 = vadd.f32 %v2061, %v2187
      %v2220 = vadd.f32 %v2066, %v2188
      %v2221 = vadd.f32 %v2071, %v2189
      %v2222 = vadd.f32 %v2076, %v2190
      %v2223 = vadd.f32 %v2081, %v2191
      %v2224 = vadd.f32 %v2086, %v2192
      %v2225 = vadd.f32 %v2091, %v2193
      %v2226 = vadd.f32 %v2096, %v2194
      %v2227 = vadd.f32 %v2101, %v2195
      %v2228 = vadd.f32 %v2106, %v2196
      %v2229 = vadd.f32 %v2111, %v2197
      %v2230 = vadd.f32 %v2116, %v2198
      %v2231 = vadd.f32 %v2121, %v2199
      %v2232 = vadd.f32 %v2126, %v2200
      %v2233 = vadd.f32 %v2131, %v2201
      %v2234 = vadd.f32 %v2136, %v2202
      %v2235 = vadd.f32 %v2141, %v2203
      %v2236 = vadd.f32 %v2146, %v2204
      %v2237 = vadd.f32 %v2151, %v2205
      %v2238 = vadd.f32 %v2156, %v2206
      %v2239 = vadd.f32 %v2161, %v2207
      %v2240 = vadd.f32 %v2166, %v2208
      %v2241 = vadd.f32 %v2171, %v2209
      %v2242 = vadd.f32 %v2176, %v2210
      %2243 = vst.msk [vmem:[%s217] sm:$0xff] %vm286, %v2211
      %2244 = vst.msk [vmem:[%s217 + $0x8] sm:$0xff] %vm286, %v2212
      %2245 = vst.msk [vmem:[%s217 + $0x10] sm:$0xff] %vm286, %v2213
      %2246 = vst.msk [vmem:[%s217 + $0x18] sm:$0xff] %vm286, %v2214
      %2247 = vst.msk [vmem:[%s217 + $0x20] sm:$0xff] %vm286, %v2215
      %2248 = vst.msk [vmem:[%s217 + $0x28] sm:$0xff] %vm286, %v2216
      %2249 = vst.msk [vmem:[%s217 + $0x30] sm:$0xff] %vm286, %v2217
      %2250 = vst.msk [vmem:[%s217 + $0x38] sm:$0xff] %vm286, %v2218
      %2251 = vst.msk [vmem:[%s217 + $0x40] sm:$0xff] %vm286, %v2219
      %2252 = vst.msk [vmem:[%s217 + $0x48] sm:$0xff] %vm286, %v2220
      %2253 = vst.msk [vmem:[%s217 + $0x50] sm:$0xff] %vm286, %v2221
      %2254 = vst.msk [vmem:[%s217 + $0x58] sm:$0xff] %vm286, %v2222
      %2255 = vst.msk [vmem:[%s217 + $0x60] sm:$0xff] %vm286, %v2223
      %2256 = vst.msk [vmem:[%s217 + $0x68] sm:$0xff] %vm286, %v2224
      %2257 = vst.msk [vmem:[%s217 + $0x70] sm:$0xff] %vm286, %v2225
      %2258 = vst.msk [vmem:[%s217 + $0x78] sm:$0xff] %vm286, %v2226
      %2259 = vst.msk [vmem:[%s217 + $0x80] sm:$0xff] %vm286, %v2227
      %2260 = vst.msk [vmem:[%s217 + $0x88] sm:$0xff] %vm286, %v2228
      %2261 = vst.msk [vmem:[%s217 + $0x90] sm:$0xff] %vm286, %v2229
      %2262 = vst.msk [vmem:[%s217 + $0x98] sm:$0xff] %vm286, %v2230
      %2263 = vst.msk [vmem:[%s217 + $0xa0] sm:$0xff] %vm286, %v2231
      %2264 = vst.msk [vmem:[%s217 + $0xa8] sm:$0xff] %vm286, %v2232
      %2265 = vst.msk [vmem:[%s217 + $0xb0] sm:$0xff] %vm286, %v2233
      %2266 = vst.msk [vmem:[%s217 + $0xb8] sm:$0xff] %vm286, %v2234
      %2267 = vst.msk [vmem:[%s217 + $0xc0] sm:$0xff] %vm286, %v2235
      %2268 = vst.msk [vmem:[%s217 + $0xc8] sm:$0xff] %vm286, %v2236
      %2269 = vst.msk [vmem:[%s217 + $0xd0] sm:$0xff] %vm286, %v2237
      %2270 = vst.msk [vmem:[%s217 + $0xd8] sm:$0xff] %vm286, %v2238
      %2271 = vst.msk [vmem:[%s217 + $0xe0] sm:$0xff] %vm286, %v2239
      %2272 = vst.msk [vmem:[%s217 + $0xe8] sm:$0xff] %vm286, %v2240
      %2273 = vst.msk [vmem:[%s217 + $0xf0] sm:$0xff] %vm286, %v2241
      %2274 = vst.msk [vmem:[%s217 + $0xf8] sm:$0xff] %vm286, %v2242
      %p2275 = scmp.lt.s32.totalorder %s15, 1
      %s2276 = scalar_select %p2275, %s15, 1
      %s2277 = smul.addr %s2276, 32
      %s2278 = smul.addr %s2277, 8
      %s2279 = scalar_lea.vmem %s4, %s2278
      // Predicated region
      $region37: #{irnet1_forward.6} parent=35 // pred_check
        %p2280 = pneg %p127
      $region38: #{irnet1_forward.6} parent=35 // pred_check_branch
        %2282 = sbr.rel (%p2280) target = $region40
      $region39: #{irnet1_forward.6} parent=35 // pred_region
        _
      $region40: #{irnet1_forward.6} parent=35 // pred_fallthru
        _
    $region36: #{irnet1_forward.6} parent=5 // pred_fallthru
      _
    %p2283 = scmp.le.s32.totalorder 2, %s10
    // Predicated region
    $region41: #{irnet1_forward.6} parent=5 // pred_check
      %p2284 = pneg %p2283
    $region42: #{irnet1_forward.6} parent=5 // pred_check_branch
      %2286 = sbr.rel (%p2284) target = $region44
    $region43: #{irnet1_forward.6} parent=5 // pred_region
      %s2287 = ssub.s32 %s10, 2
      // Predicated region
      $region45: #{irnet1_forward.6} parent=43 // pred_check
        %p2288 = pneg %p133
      $region46: #{irnet1_forward.6} parent=43 // pred_check_branch
        %2290 = sbr.rel (%p2288) target = $region48
      $region47: #{irnet1_forward.6} parent=43 // pred_region
        %p2291 = scmp.lt.s32.totalorder %s16, 1
        %s2292 = scalar_select %p2291, %s16, 1
        %s2293 = smul.addr %s2292, 32
        %s2294 = smul.addr %s2293, 8
        %s2295 = scalar_lea.vmem %s4, %s2294
      $region48: #{irnet1_forward.6} parent=43 // pred_fallthru
        _
    $region44: #{irnet1_forward.6} parent=5 // pred_fallthru
      _
  $region6: #{irnet1_forward.6} parent=0 // loop_footer
    %s14 = sadd.s32 1, %s10
  $region7: #{irnet1_forward.6} parent=0 // loop_footer_branch
    %9 = sbr.rel target = $region3
  $region8: #{irnet1_forward.6} parent=0 // loop_exit
    _

// kernel: irnet1_forward.4
$region0: #{irnet1_forward.4}
  #allocation0 [shape = 'u32[]', space=smem, size = 0x4, offset = 0x4, fixed_abs, tag = 'smem constant byte address 0x4 - core index']
  #allocation1 [shape = 'u32[144,128]{1,0:T(1,128)}', space=vmem, size = 0x12000, scoped, tag = 'internal scratch']
  #allocation2 [shape = 'f32[18,18,32]{2,1,0:T(8,128)}', space=vmem, size = 0x36000, scoped, tag = 'scratch operand']
  %s0 = inlined_call_operand.vmem [shape: f32[2,256,3], index: 0, kind: input, shape index: {}]
  %s1 = inlined_call_operand.vmem [shape: f32[3,32], index: 1, kind: input, shape index: {}]
  %s2 = inlined_call_operand.vmem [shape: f32[1,32], index: 2, kind: input, shape index: {}]
  %s3 = inlined_call_operand.vmem [shape: f32[288,32], index: 3, kind: input, shape index: {}]
  %s4 = inlined_call_operand.vmem [shape: f32[1,32], index: 4, kind: input, shape index: {}]
  %s5 = inlined_call_operand.vmem [shape: f32[2,256,32], index: 5, kind: output, shape index: {0}]
  %s6 = inlined_call_operand.vmem [shape: f32[2,256,32], index: 6, kind: output, shape index: {1}]
  %7 = xla_tuple %s5, %s6
  %s8 = sld [smem:[#allocation0]]
  $region61: #{irnet1_forward.4} parent=0
    _
  %s10 = ssub.s32 1, %s8
  %s11 = scalar_select 0, %s10, %s8
  loop: start=0, step=1, limit=4
  $region2: #{irnet1_forward.4} parent=0 // loop_pre_header
    _
  $region3: #{irnet1_forward.4} parent=0 // loop_header
    %s13 = sphi 0, %s17
    %p14 = scmp.ge.s32.totalorder %s13, 4
    %s23 = sphi 0, %s25
    %s26 = sphi 0, %s23
    %s27 = sphi 0, %s26
    %s43 = sphi 0, %s27
    %s47 = sphi 0, %s47
    %s49 = sphi 0, %s47
    %s50 = sphi 0, %s49
    %s64 = sphi 0, %s50
    %s68 = sphi 0, %s68
    %s70 = sphi 0, %s68
    %s71 = sphi 0, %s70
    %s85 = sphi 0, %s71
    %s89 = sphi 0, %s89
    %s91 = sphi 0, %s89
    %s92 = sphi 0, %s91
    %s106 = sphi 0, %s92
    %s110 = sphi 0, %s110
    %s112 = sphi 0, %s110
    %s113 = sphi 0, %s112
    %s127 = sphi 0, %s113
    %s133 = sphi 0, %s135
    %s136 = sphi 0, %s133
    %s137 = sphi 0, %s136
    %s153 = sphi 0, %s137
    %s159 = sphi 0, %s161
    %s162 = sphi 0, %s159
    %s163 = sphi 0, %s162
    %s179 = sphi 0, %s163
  $region4: #{irnet1_forward.4} parent=0 // loop_header_branch
    %16 = sbr.rel (%p14) target = $region8
  $region5: #{irnet1_forward.4} parent=0 // loop_body
    %s18 = ssub.s32 %s13, 1
    %s19 = ssub.s32 %s13, 2
    %s20 = sadd.s32 %s13, 1
    %s21 = ssub.s32 %s13, %s20
    %p22 = scmp.eq.s32.totalorder %s21, 0
    %s24 = sadd.s32 %s23, 1
    %s25 = scalar_select %p22, %s23, %s24
    %p28 = pneg %p22
    %p29 = scmp.eq.s32.totalorder %s13, 1
    %p30 = por %p28, %p29
    %p31 = scmp.ne.s32.totalorder %s23, %s26
    %p32 = scmp.eq.s32.totalorder %s13, 0
    %p33 = por %p31, %p32
    %p34 = scmp.ne.s32.totalorder %s23, %s26
    %p35 = scmp.eq.s32.totalorder %s18, 1
    %p36 = por %p34, %p35
    %p37 = scmp.ne.s32.totalorder %s26, %s27
    %p38 = scmp.eq.s32.totalorder %s18, 0
    %p39 = por %p37, %p38
    %p40 = scmp.ne.s32.totalorder %s26, %s27
    %p41 = scmp.eq.s32.totalorder %s19, 1
    %p42 = por %p40, %p41
    %p44 = scmp.ne.s32.totalorder %s27, %s43
    %p45 = scmp.eq.s32.totalorder %s19, 0
    %p46 = por %p44, %p45
    %s48 = sadd.s32 %s47, 1
    %p51 = scmp.eq.s32.totalorder %s13, 1
    %p52 = scmp.ne.s32.totalorder %s47, %s49
    %p53 = scmp.eq.s32.totalorder %s13, 0
    %p54 = por %p52, %p53
    %p55 = scmp.ne.s32.totalorder %s47, %s49
    %p56 = scmp.eq.s32.totalorder %s18, 1
    %p57 = por %p55, %p56
    %p58 = scmp.ne.s32.totalorder %s49, %s50
    %p59 = scmp.eq.s32.totalorder %s18, 0
    %p60 = por %p58, %p59
    %p61 = scmp.ne.s32.totalorder %s49, %s50
    %p62 = scmp.eq.s32.totalorder %s19, 1
    %p63 = por %p61, %p62
    %p65 = scmp.ne.s32.totalorder %s50, %s64
    %p66 = scmp.eq.s32.totalorder %s19, 0
    %p67 = por %p65, %p66
    %s69 = sadd.s32 %s68, 1
    %p72 = scmp.eq.s32.totalorder %s13, 1
    %p73 = scmp.ne.s32.totalorder %s68, %s70
    %p74 = scmp.eq.s32.totalorder %s13, 0
    %p75 = por %p73, %p74
    %p76 = scmp.ne.s32.totalorder %s68, %s70
    %p77 = scmp.eq.s32.totalorder %s18, 1
    %p78 = por %p76, %p77
    %p79 = scmp.ne.s32.totalorder %s70, %s71
    %p80 = scmp.eq.s32.totalorder %s18, 0
    %p81 = por %p79, %p80
    %p82 = scmp.ne.s32.totalorder %s70, %s71
    %p83 = scmp.eq.s32.totalorder %s19, 1
    %p84 = por %p82, %p83
    %p86 = scmp.ne.s32.totalorder %s71, %s85
    %p87 = scmp.eq.s32.totalorder %s19, 0
    %p88 = por %p86, %p87
    %s90 = sadd.s32 %s89, 1
    %p93 = scmp.eq.s32.totalorder %s13, 1
    %p94 = scmp.ne.s32.totalorder %s89, %s91
    %p95 = scmp.eq.s32.totalorder %s13, 0
    %p96 = por %p94, %p95
    %p97 = scmp.ne.s32.totalorder %s89, %s91
    %p98 = scmp.eq.s32.totalorder %s18, 1
    %p99 = por %p97, %p98
    %p100 = scmp.ne.s32.totalorder %s91, %s92
    %p101 = scmp.eq.s32.totalorder %s18, 0
    %p102 = por %p100, %p101
    %p103 = scmp.ne.s32.totalorder %s91, %s92
    %p104 = scmp.eq.s32.totalorder %s19, 1
    %p105 = por %p103, %p104
    %p107 = scmp.ne.s32.totalorder %s92, %s106
    %p108 = scmp.eq.s32.totalorder %s19, 0
    %p109 = por %p107, %p108
    %s111 = sadd.s32 %s110, 1
    %p114 = scmp.eq.s32.totalorder %s13, 1
    %p115 = scmp.ne.s32.totalorder %s110, %s112
    %p116 = scmp.eq.s32.totalorder %s13, 0
    %p117 = por %p115, %p116
    %p118 = scmp.ne.s32.totalorder %s110, %s112
    %p119 = scmp.eq.s32.totalorder %s18, 1
    %p120 = por %p118, %p119
    %p121 = scmp.ne.s32.totalorder %s112, %s113
    %p122 = scmp.eq.s32.totalorder %s18, 0
    %p123 = por %p121, %p122
    %p124 = scmp.ne.s32.totalorder %s112, %s113
    %p125 = scmp.eq.s32.totalorder %s19, 1
    %p126 = por %p124, %p125
    %p128 = scmp.ne.s32.totalorder %s113, %s127
    %p129 = scmp.eq.s32.totalorder %s19, 0
    %p130 = por %p128, %p129
    %s131 = ssub.s32 %s13, %s20
    %p132 = scmp.eq.s32.totalorder %s131, 0
    %s134 = sadd.s32 %s133, 1
    %s135 = scalar_select %p132, %s133, %s134
    %p138 = pneg %p132
    %p139 = scmp.eq.s32.totalorder %s13, 1
    %p140 = por %p138, %p139
    %p141 = scmp.ne.s32.totalorder %s133, %s136
    %p142 = scmp.eq.s32.totalorder %s13, 0
    %p143 = por %p141, %p142
    %p144 = scmp.ne.s32.totalorder %s133, %s136
    %p145 = scmp.eq.s32.totalorder %s18, 1
    %p146 = por %p144, %p145
    %p147 = scmp.ne.s32.totalorder %s136, %s137
    %p148 = scmp.eq.s32.totalorder %s18, 0
    %p149 = por %p147, %p148
    %p150 = scmp.ne.s32.totalorder %s136, %s137
    %p151 = scmp.eq.s32.totalorder %s19, 1
    %p152 = por %p150, %p151
    %p154 = scmp.ne.s32.totalorder %s137, %s153
    %p155 = scmp.eq.s32.totalorder %s19, 0
    %p156 = por %p154, %p155
    %s157 = ssub.s32 %s13, %s20
    %p158 = scmp.eq.s32.totalorder %s157, 0
    %s160 = sadd.s32 %s159, 1
    %s161 = scalar_select %p158, %s159, %s160
    %p164 = pneg %p158
    %p165 = scmp.eq.s32.totalorder %s13, 1
    %p166 = por %p164, %p165
    %p167 = scmp.ne.s32.totalorder %s159, %s162
    %p168 = scmp.eq.s32.totalorder %s13, 0
    %p169 = por %p167, %p168
    %p170 = scmp.ne.s32.totalorder %s159, %s162
    %p171 = scmp.eq.s32.totalorder %s18, 1
    %p172 = por %p170, %p171
    %p173 = scmp.ne.s32.totalorder %s162, %s163
    %p174 = scmp.eq.s32.totalorder %s18, 0
    %p175 = por %p173, %p174
    %p176 = scmp.ne.s32.totalorder %s162, %s163
    %p177 = scmp.eq.s32.totalorder %s19, 1
    %p178 = por %p176, %p177
    %p180 = scmp.ne.s32.totalorder %s163, %s179
    %p181 = scmp.eq.s32.totalorder %s19, 0
    %p182 = por %p180, %p181
    %p183 = scmp.le.s32.totalorder 1, %s13
    %p184 = scmp.lt.s32.totalorder %s13, 3
    %p185 = pnand %p183, %p184
    %p186 = pneg %p185
    // Predicated region
    $region9: #{irnet1_forward.4} parent=5 // pred_check
      _
    $region10: #{irnet1_forward.4} parent=5 // pred_check_branch
      %188 = sbr.rel (%p185) target = $region12
    $region11: #{irnet1_forward.4} parent=5 // pred_region
      %s189 = ssub.s32 %s13, 1
      // Predicated region
      $region13: #{irnet1_forward.4} parent=11 // pred_check
        %p190 = pneg %p60
      $region14: #{irnet1_forward.4} parent=11 // pred_check_branch
        %192 = sbr.rel (%p190) target = $region16
      $region15: #{irnet1_forward.4} parent=11 // pred_region
        _
      $region16: #{irnet1_forward.4} parent=11 // pred_fallthru
        _
      // Predicated region
      $region17: #{irnet1_forward.4} parent=11 // pred_check
        %p193 = pneg %p81
      $region18: #{irnet1_forward.4} parent=11 // pred_check_branch
        %195 = sbr.rel (%p193) target = $region20
      $region19: #{irnet1_forward.4} parent=11 // pred_region
        _
      $region20: #{irnet1_forward.4} parent=11 // pred_fallthru
        _
      // Predicated region
      $region21: #{irnet1_forward.4} parent=11 // pred_check
        %p196 = pneg %p102
      $region22: #{irnet1_forward.4} parent=11 // pred_check_branch
        %198 = sbr.rel (%p196) target = $region24
      $region23: #{irnet1_forward.4} parent=11 // pred_region
        _
      $region24: #{irnet1_forward.4} parent=11 // pred_fallthru
        _
      // Predicated region
      $region25: #{irnet1_forward.4} parent=11 // pred_check
        %p199 = pneg %p123
      $region26: #{irnet1_forward.4} parent=11 // pred_check_branch
        %201 = sbr.rel (%p199) target = $region28
      $region27: #{irnet1_forward.4} parent=11 // pred_region
        _
      $region28: #{irnet1_forward.4} parent=11 // pred_fallthru
        _
    $region12: #{irnet1_forward.4} parent=5 // pred_fallthru
      _
    %p202 = scmp.lt.s32.totalorder %s13, 2
    // Predicated region
    $region29: #{irnet1_forward.4} parent=5 // pred_check
      %p203 = pneg %p202
    $region30: #{irnet1_forward.4} parent=5 // pred_check_branch
      %205 = sbr.rel (%p203) target = $region32
    $region31: #{irnet1_forward.4} parent=5 // pred_region
      // Predicated region
      $region33: #{irnet1_forward.4} parent=31 // pred_check
        %p206 = pneg %p33
      $region34: #{irnet1_forward.4} parent=31 // pred_check_branch
        %208 = sbr.rel (%p206) target = $region36
      $region35: #{irnet1_forward.4} parent=31 // pred_region
        %p209 = scmp.lt.s32.totalorder %s13, 1
        %s210 = scalar_select %p209, %s13, 1
        %s211 = smul.addr %s210, 32
        %s212 = smul.addr %s211, 8
        %s213 = scalar_lea.vmem %s0, %s212
      $region36: #{irnet1_forward.4} parent=31 // pred_fallthru
        _
    $region32: #{irnet1_forward.4} parent=5 // pred_fallthru
      _
    %p214 = scmp.le.s32.totalorder 1, %s13
    %p215 = scmp.lt.s32.totalorder %s13, 3
    %p216 = pnand %p214, %p215
    %p217 = pneg %p216
    // Predicated region
    $region37: #{irnet1_forward.4} parent=5 // pred_check
      _
    $region38: #{irnet1_forward.4} parent=5 // pred_check_branch
      %219 = sbr.rel (%p216) target = $region40
    $region39: #{irnet1_forward.4} parent=5 // pred_region
      %s220 = ssub.s32 %s13, 1
      %p221 = scmp.lt.s32.totalorder %s18, 1
      %s222 = scalar_select %p221, %s18, 1
      %s223 = smul.addr %s222, 32
      %s224 = smul.addr %s223, 8
      %s225 = scalar_lea.vmem %s0, %s224
      %p226 = pneg %p39
      %p227 = pneg %p36
      %p228 = pneg %p60
      %p229 = pneg %p57
      %p230 = pneg %p81
      %p231 = pneg %p78
      %p232 = pneg %p102
      %p233 = pneg %p99
      %p234 = pneg %p123
      %p235 = pneg %p120
      %p236 = pneg %p149
      %p237 = pneg %p146
      %p238 = scmp.lt.s32.totalorder %s18, 1
      %s239 = scalar_select %p238, %s18, 1
      %s240 = smul.addr %s239, 32
      %s241 = smul.addr %s240, 8
      %s242 = scalar_lea.vmem %s5, %s241
      %p243 = pneg %p175
      %p244 = pneg %p172
      %p245 = scmp.lt.s32.totalorder %s18, 1
      %s246 = scalar_select %p245, %s18, 1
      %s247 = smul.addr %s246, 32
      %s248 = smul.addr %s247, 8
      %s249 = scalar_lea.vmem %s6, %s248
      %p250 = scmp.lt.s32.totalorder %s18, 1
      %s251 = scalar_select %p250, %s18, 1
      %s252 = smul.addr %s251, 32
      %s253 = smul.addr %s252, 8
      %s254 = scalar_lea.vmem %s0, %s253
      %p255 = scmp.lt.s32.totalorder %s18, 1
      %s256 = scalar_select %p255, %s18, 1
      %s257 = smul.addr %s256, 32
      %s258 = smul.addr %s257, 8
      %s259 = scalar_lea.vmem %s5, %s258
      %p260 = scmp.lt.s32.totalorder %s18, 1
      %s261 = scalar_select %p260, %s18, 1
      %s262 = smul.addr %s261, 32
      %s263 = smul.addr %s262, 8
      %s264 = scalar_lea.vmem %s6, %s263
      %v265 = vld [vmem:[%s254] sm:$0xff]
      %v266 = vld [vmem:[%s254 + $0x8] sm:$0xff]
      %v267 = vld [vmem:[%s254 + $0x10] sm:$0xff]
      %v268 = vld [vmem:[%s254 + $0x18] sm:$0xff]
      %v269 = vld [vmem:[%s254 + $0x20] sm:$0xff]
      %v270 = vld [vmem:[%s254 + $0x28] sm:$0xff]
      %v271 = vld [vmem:[%s254 + $0x30] sm:$0xff]
      %v272 = vld [vmem:[%s254 + $0x38] sm:$0xff]
      %v273 = vld [vmem:[%s254 + $0x40] sm:$0xff]
      %v274 = vld [vmem:[%s254 + $0x48] sm:$0xff]
      %v275 = vld [vmem:[%s254 + $0x50] sm:$0xff]
      %v276 = vld [vmem:[%s254 + $0x58] sm:$0xff]
      %v277 = vld [vmem:[%s254 + $0x60] sm:$0xff]
      %v278 = vld [vmem:[%s254 + $0x68] sm:$0xff]
      %v279 = vld [vmem:[%s254 + $0x70] sm:$0xff]
      %v280 = vld [vmem:[%s254 + $0x78] sm:$0xff]
      %v281 = vld [vmem:[%s254 + $0x80] sm:$0xff]
      %v282 = vld [vmem:[%s254 + $0x88] sm:$0xff]
      %v283 = vld [vmem:[%s254 + $0x90] sm:$0xff]
      %v284 = vld [vmem:[%s254 + $0x98] sm:$0xff]
      %v285 = vld [vmem:[%s254 + $0xa0] sm:$0xff]
      %v286 = vld [vmem:[%s254 + $0xa8] sm:$0xff]
      %v287 = vld [vmem:[%s254 + $0xb0] sm:$0xff]
      %v288 = vld [vmem:[%s254 + $0xb8] sm:$0xff]
      %v289 = vld [vmem:[%s254 + $0xc0] sm:$0xff]
      %v290 = vld [vmem:[%s254 + $0xc8] sm:$0xff]
      %v291 = vld [vmem:[%s254 + $0xd0] sm:$0xff]
      %v292 = vld [vmem:[%s254 + $0xd8] sm:$0xff]
      %v293 = vld [vmem:[%s254 + $0xe0] sm:$0xff]
      %v294 = vld [vmem:[%s254 + $0xe8] sm:$0xff]
      %v295 = vld [vmem:[%s254 + $0xf0] sm:$0xff]
      %v296 = vld [vmem:[%s254 + $0xf8] sm:$0xff]
      %v297 = vld [vmem:[%s1] sm:$0x7]
      %v298 = vld [vmem:[%s2] sm:$0x1]
      %v300 = vlaneseq
      %v301 = vshrl.u32 %v300, 7
      %v302 = vsub.s32 0, %v301
      %v303 = vrot.slane %v298, %v302
      %vm305 = vcmask 23552
      %v307 = vsel %vm305, %v265, 0
      %v310 = vsel %vm305, %v266, 0
      %v313 = vsel %vm305, %v267, 0
      %v316 = vsel %vm305, %v268, 0
      %v319 = vsel %vm305, %v269, 0
      %v322 = vsel %vm305, %v270, 0
      %v325 = vsel %vm305, %v271, 0
      %v328 = vsel %vm305, %v272, 0
      %v331 = vsel %vm305, %v273, 0
      %v334 = vsel %vm305, %v274, 0
      %v337 = vsel %vm305, %v275, 0
      %v340 = vsel %vm305, %v276, 0
      %v343 = vsel %vm305, %v277, 0
      %v346 = vsel %vm305, %v278, 0
      %v349 = vsel %vm305, %v279, 0
      %v352 = vsel %vm305, %v280, 0
      %v355 = vsel %vm305, %v281, 0
      %v358 = vsel %vm305, %v282, 0
      %v361 = vsel %vm305, %v283, 0
      %v364 = vsel %vm305, %v284, 0
      %v367 = vsel %vm305, %v285, 0
      %v370 = vsel %vm305, %v286, 0
      %v373 = vsel %vm305, %v287, 0
      %v376 = vsel %vm305, %v288, 0
      %v379 = vsel %vm305, %v289, 0
      %v382 = vsel %vm305, %v290, 0
      %v385 = vsel %vm305, %v291, 0
      %v388 = vsel %vm305, %v292, 0
      %v391 = vsel %vm305, %v293, 0
      %v394 = vsel %vm305, %v294, 0
      %v397 = vsel %vm305, %v295, 0
      %v400 = vsel %vm305, %v296, 0
      %vm402 = vcmask 1042432
      %v404 = vsel %vm402, %v297, 0
      %406 = vmatprep.subr.mxu0 0.0
      %407 = vmatpush1.msra.mxu0 0.0
      %408 = vmatprep.subr.mxu0 0.0
      %409 = vmatpush1.msra.mxu0 0.0
      %410 = vmatprep.subr.mxu0 0.0
      %411 = vmatpush1.msra.mxu0 0.0
      %412 = vmatprep.subr.mxu0 0.0
      %413 = vmatpush1.msra.mxu0 0.0
      %414 = vmatprep.subr.mxu0 0.0
      %415 = vmatpush1.msra.mxu0 0.0
      %416 = vmatprep.subr.mxu0 0.0
      %417 = vmatpush1.msra.mxu0 0.0
      %418 = vmatprep.subr.mxu0 0.0
      %419 = vmatpush1.msra.mxu0 0.0
      %420 = vmatprep.subr.mxu0 0.0
      %421 = vmatpush1.msra.mxu0 0.0
      %422 = vmatprep.subr.mxu0 0.0
      %423 = vmatpush1.msra.mxu0 0.0
      %424 = vmatprep.subr.mxu0 0.0
      %425 = vmatpush1.msra.mxu0 0.0
      %426 = vmatprep.subr.mxu0 0.0
      %427 = vmatpush1.msra.mxu0 0.0
      %428 = vmatprep.subr.mxu0 0.0
      %429 = vmatpush1.msra.mxu0 0.0
      %430 = vmatprep.subr.mxu0 0.0
      %431 = vmatpush1.msra.mxu0 0.0
      %432 = vmatprep.subr.mxu0 0.0
      %433 = vmatpush1.msra.mxu0 0.0
      %434 = vmatprep.subr.mxu0 0.0
      %435 = vmatpush1.msra.mxu0 0.0
      %436 = vmatprep.subr.mxu0 0.0
      %437 = vmatpush1.msra.mxu0 %v404
      %438 = vmatprep.subr.mxu0 0.0
      %439 = vmatpush2.msra.mxu0 0.0
      %440 = vmatprep.subr.mxu0 0.0
      %441 = vmatpush2.msra.mxu0 0.0
      %442 = vmatprep.subr.mxu0 0.0
      %443 = vmatpush2.msra.mxu0 0.0
      %444 = vmatprep.subr.mxu0 0.0
      %445 = vmatpush2.msra.mxu0 0.0
      %446 = vmatprep.subr.mxu0 0.0
      %447 = vmatpush2.msra.mxu0 0.0
      %448 = vmatprep.subr.mxu0 0.0
      %449 = vmatpush2.msra.mxu0 0.0
      %450 = vmatprep.subr.mxu0 0.0
      %451 = vmatpush2.msra.mxu0 0.0
      %452 = vmatprep.subr.mxu0 0.0
      %453 = vmatpush2.msra.mxu0 0.0
      %454 = vmatprep.subr.mxu0 0.0
      %455 = vmatpush2.msra.mxu0 0.0
      %456 = vmatprep.subr.mxu0 0.0
      %457 = vmatpush2.msra.mxu0 0.0
      %458 = vmatprep.subr.mxu0 0.0
      %459 = vmatpush2.msra.mxu0 0.0
      %460 = vmatprep.subr.mxu0 0.0
      %461 = vmatpush2.msra.mxu0 0.0
      %462 = vmatprep.subr.mxu0 0.0
      %463 = vmatpush2.msra.mxu0 0.0
      %464 = vmatprep.subr.mxu0 0.0
      %465 = vmatpush2.msra.mxu0 0.0
      %466 = vmatprep.subr.mxu0 0.0
      %467 = vmatpush2.msra.mxu0 0.0
      %468 = vmatprep.subr.mxu0 0.0
      %469 = vmatpush2.msra.mxu0 0.0
      %470 = vmatprep.mubr.f32.mxu0 0.0
      %471 = vmatmul.mubr.f32.gmra.mxu0 %v307
      %v472 = vpop.f32.mrf.mxu0
      %v473 = vadd.f32 %v303, %v472
      %v474 = vpop.f32.mrf.mxu0
      %475 = vmatprep.mubr.f32.mxu0 0.0
      %476 = vmatmul.mubr.f32.gmra.mxu0 %v310
      %v477 = vpop.f32.mrf.mxu0
      %v478 = vadd.f32 %v303, %v477
      %v479 = vpop.f32.mrf.mxu0
      %480 = vmatprep.mubr.f32.mxu0 0.0
      %481 = vmatmul.mubr.f32.gmra.mxu0 %v313
      %v482 = vpop.f32.mrf.mxu0
      %v483 = vadd.f32 %v303, %v482
      %v484 = vpop.f32.mrf.mxu0
      %485 = vmatprep.mubr.f32.mxu0 0.0
      %486 = vmatmul.mubr.f32.gmra.mxu0 %v316
      %v487 = vpop.f32.mrf.mxu0
      %v488 = vadd.f32 %v303, %v487
      %v489 = vpop.f32.mrf.mxu0
      %490 = vmatprep.mubr.f32.mxu0 0.0
      %491 = vmatmul.mubr.f32.gmra.mxu0 %v319
      %v492 = vpop.f32.mrf.mxu0
      %v493 = vadd.f32 %v303, %v492
      %v494 = vpop.f32.mrf.mxu0
      %495 = vmatprep.mubr.f32.mxu0 0.0
      %496 = vmatmul.mubr.f32.gmra.mxu0 %v322
      %v497 = vpop.f32.mrf.mxu0
      %v498 = vadd.f32 %v303, %v497
      %v499 = vpop.f32.mrf.mxu0
      %500 = vmatprep.mubr.f32.mxu0 0.0
      %501 = vmatmul.mubr.f32.gmra.mxu0 %v325
      %v502 = vpop.f32.mrf.mxu0
      %v503 = vadd.f32 %v303, %v502
      %v504 = vpop.f32.mrf.mxu0
      %505 = vmatprep.mubr.f32.mxu0 0.0
      %506 = vmatmul.mubr.f32.gmra.mxu0 %v328
      %v507 = vpop.f32.mrf.mxu0
      %v508 = vadd.f32 %v303, %v507
      %v509 = vpop.f32.mrf.mxu0
      %510 = vmatprep.mubr.f32.mxu0 0.0
      %511 = vmatmul.mubr.f32.gmra.mxu0 %v331
      %v512 = vpop.f32.mrf.mxu0
      %v513 = vadd.f32 %v303, %v512
      %v514 = vpop.f32.mrf.mxu0
      %515 = vmatprep.mubr.f32.mxu0 0.0
      %516 = vmatmul.mubr.f32.gmra.mxu0 %v334
      %v517 = vpop.f32.mrf.mxu0
      %v518 = vadd.f32 %v303, %v517
      %v519 = vpop.f32.mrf.mxu0
      %520 = vmatprep.mubr.f32.mxu0 0.0
      %521 = vmatmul.mubr.f32.gmra.mxu0 %v337
      %v522 = vpop.f32.mrf.mxu0
      %v523 = vadd.f32 %v303, %v522
      %v524 = vpop.f32.mrf.mxu0
      %525 = vmatprep.mubr.f32.mxu0 0.0
      %526 = vmatmul.mubr.f32.gmra.mxu0 %v340
      %v527 = vpop.f32.mrf.mxu0
      %v528 = vadd.f32 %v303, %v527
      %v529 = vpop.f32.mrf.mxu0
      %530 = vmatprep.mubr.f32.mxu0 0.0
      %531 = vmatmul.mubr.f32.gmra.mxu0 %v343
      %v532 = vpop.f32.mrf.mxu0
      %v533 = vadd.f32 %v303, %v532
      %v534 = vpop.f32.mrf.mxu0
      %535 = vmatprep.mubr.f32.mxu0 0.0
      %536 = vmatmul.mubr.f32.gmra.mxu0 %v346
      %v537 = vpop.f32.mrf.mxu0
      %v538 = vadd.f32 %v303, %v537
      %v539 = vpop.f32.mrf.mxu0
      %540 = vmatprep.mubr.f32.mxu0 0.0
      %541 = vmatmul.mubr.f32.gmra.mxu0 %v349
      %v542 = vpop.f32.mrf.mxu0
      %v543 = vadd.f32 %v303, %v542
      %v544 = vpop.f32.mrf.mxu0
      %545 = vmatprep.mubr.f32.mxu0 0.0
      %546 = vmatmul.mubr.f32.gmra.mxu0 %v352
      %v547 = vpop.f32.mrf.mxu0
      %v548 = vadd.f32 %v303, %v547
      %v549 = vpop.f32.mrf.mxu0
      %550 = vmatprep.mubr.f32.mxu0 0.0
      %551 = vmatmul.mubr.f32.gmra.mxu0 %v355
      %v552 = vpop.f32.mrf.mxu0
      %v553 = vadd.f32 %v303, %v552
      %v554 = vpop.f32.mrf.mxu0
      %555 = vmatprep.mubr.f32.mxu0 0.0
      %556 = vmatmul.mubr.f32.gmra.mxu0 %v358
      %v557 = vpop.f32.mrf.mxu0
      %v558 = vadd.f32 %v303, %v557
      %v559 = vpop.f32.mrf.mxu0
      %560 = vmatprep.mubr.f32.mxu0 0.0
      %561 = vmatmul.mubr.f32.gmra.mxu0 %v361
      %v562 = vpop.f32.mrf.mxu0
      %v563 = vadd.f32 %v303, %v562
      %v564 = vpop.f32.mrf.mxu0
      %565 = vmatprep.mubr.f32.mxu0 0.0
      %566 = vmatmul.mubr.f32.gmra.mxu0 %v364
      %v567 = vpop.f32.mrf.mxu0
      %v568 = vadd.f32 %v303, %v567
      %v569 = vpop.f32.mrf.mxu0
      %570 = vmatprep.mubr.f32.mxu0 0.0
      %571 = vmatmul.mubr.f32.gmra.mxu0 %v367
      %v572 = vpop.f32.mrf.mxu0
      %v573 = vadd.f32 %v303, %v572
      %v574 = vpop.f32.mrf.mxu0
      %575 = vmatprep.mubr.f32.mxu0 0.0
      %576 = vmatmul.mubr.f32.gmra.mxu0 %v370
      %v577 = vpop.f32.mrf.mxu0
      %v578 = vadd.f32 %v303, %v577
      %v579 = vpop.f32.mrf.mxu0
      %580 = vmatprep.mubr.f32.mxu0 0.0
      %581 = vmatmul.mubr.f32.gmra.mxu0 %v373
      %v582 = vpop.f32.mrf.mxu0
      %v583 = vadd.f32 %v303, %v582
      %v584 = vpop.f32.mrf.mxu0
      %585 = vmatprep.mubr.f32.mxu0 0.0
      %586 = vmatmul.mubr.f32.gmra.mxu0 %v376
      %v587 = vpop.f32.mrf.mxu0
      %v588 = vadd.f32 %v303, %v587
      %v589 = vpop.f32.mrf.mxu0
      %590 = vmatprep.mubr.f32.mxu0 0.0
      %591 = vmatmul.mubr.f32.gmra.mxu0 %v379
      %v592 = vpop.f32.mrf.mxu0
      %v593 = vadd.f32 %v303, %v592
      %v594 = vpop.f32.mrf.mxu0
      %595 = vmatprep.mubr.f32.mxu0 0.0
      %596 = vmatmul.mubr.f32.gmra.mxu0 %v382
      %v597 = vpop.f32.mrf.mxu0
      %v598 = vadd.f32 %v303, %v597
      %v599 = vpop.f32.mrf.mxu0
      %600 = vmatprep.mubr.f32.mxu0 0.0
      %601 = vmatmul.mubr.f32.gmra.mxu0 %v385
      %v602 = vpop.f32.mrf.mxu0
      %v603 = vadd.f32 %v303, %v602
      %v604 = vpop.f32.mrf.mxu0
      %605 = vmatprep.mubr.f32.mxu0 0.0
      %606 = vmatmul.mubr.f32.gmra.mxu0 %v388
      %v607 = vpop.f32.mrf.mxu0
      %v608 = vadd.f32 %v303, %v607
      %v609 = vpop.f32.mrf.mxu0
      %610 = vmatprep.mubr.f32.mxu0 0.0
      %611 = vmatmul.mubr.f32.gmra.mxu0 %v391
      %v612 = vpop.f32.mrf.mxu0
      %v613 = vadd.f32 %v303, %v612
      %v614 = vpop.f32.mrf.mxu0
      %615 = vmatprep.mubr.f32.mxu0 0.0
      %616 = vmatmul.mubr.f32.gmra.mxu0 %v394
      %v617 = vpop.f32.mrf.mxu0
      %v618 = vadd.f32 %v303, %v617
      %v619 = vpop.f32.mrf.mxu0
      %620 = vmatprep.mubr.f32.mxu0 0.0
      %621 = vmatmul.mubr.f32.gmra.mxu0 %v397
      %v622 = vpop.f32.mrf.mxu0
      %v623 = vadd.f32 %v303, %v622
      %v624 = vpop.f32.mrf.mxu0
      %625 = vmatprep.mubr.f32.mxu0 0.0
      %626 = vmatmul.mubr.f32.gmra.mxu0 %v400
      %v627 = vpop.f32.mrf.mxu0
      %v628 = vadd.f32 %v303, %v627
      %v629 = vpop.f32.mrf.mxu0
      %630 = vdwg.mxu0
      %vm631 = vcmask 261120
      %632 = vst.msk [vmem:[%s259] sm:$0xff] %vm631, %v473
      %633 = vst.msk [vmem:[%s259 + $0x8] sm:$0xff] %vm631, %v478
      %634 = vst.msk [vmem:[%s259 + $0x10] sm:$0xff] %vm631, %v483
      %635 = vst.msk [vmem:[%s259 + $0x18] sm:$0xff] %vm631, %v488
      %636 = vst.msk [vmem:[%s259 + $0x20] sm:$0xff] %vm631, %v493
      %637 = vst.msk [vmem:[%s259 + $0x28] sm:$0xff] %vm631, %v498
      %638 = vst.msk [vmem:[%s259 + $0x30] sm:$0xff] %vm631, %v503
      %639 = vst.msk [vmem:[%s259 + $0x38] sm:$0xff] %vm631, %v508
      %640 = vst.msk [vmem:[%s259 + $0x40] sm:$0xff] %vm631, %v513
      %641 = vst.msk [vmem:[%s259 + $0x48] sm:$0xff] %vm631, %v518
      %642 = vst.msk [vmem:[%s259 + $0x50] sm:$0xff] %vm631, %v523
      %643 = vst.msk [vmem:[%s259 + $0x58] sm:$0xff] %vm631, %v528
      %644 = vst.msk [vmem:[%s259 + $0x60] sm:$0xff] %vm631, %v533
      %645 = vst.msk [vmem:[%s259 + $0x68] sm:$0xff] %vm631, %v538
      %646 = vst.msk [vmem:[%s259 + $0x70] sm:$0xff] %vm631, %v543
      %647 = vst.msk [vmem:[%s259 + $0x78] sm:$0xff] %vm631, %v548
      %648 = vst.msk [vmem:[%s259 + $0x80] sm:$0xff] %vm631, %v553
      %649 = vst.msk [vmem:[%s259 + $0x88] sm:$0xff] %vm631, %v558
      %650 = vst.msk [vmem:[%s259 + $0x90] sm:$0xff] %vm631, %v563
      %651 = vst.msk [vmem:[%s259 + $0x98] sm:$0xff] %vm631, %v568
      %652 = vst.msk [vmem:[%s259 + $0xa0] sm:$0xff] %vm631, %v573
      %653 = vst.msk [vmem:[%s259 + $0xa8] sm:$0xff] %vm631, %v578
      %654 = vst.msk [vmem:[%s259 + $0xb0] sm:$0xff] %vm631, %v583
      %655 = vst.msk [vmem:[%s259 + $0xb8] sm:$0xff] %vm631, %v588
      %656 = vst.msk [vmem:[%s259 + $0xc0] sm:$0xff] %vm631, %v593
      %657 = vst.msk [vmem:[%s259 + $0xc8] sm:$0xff] %vm631, %v598
      %658 = vst.msk [vmem:[%s259 + $0xd0] sm:$0xff] %vm631, %v603
      %659 = vst.msk [vmem:[%s259 + $0xd8] sm:$0xff] %vm631, %v608
      %660 = vst.msk [vmem:[%s259 + $0xe0] sm:$0xff] %vm631, %v613
      %661 = vst.msk [vmem:[%s259 + $0xe8] sm:$0xff] %vm631, %v618
      %662 = vst.msk [vmem:[%s259 + $0xf0] sm:$0xff] %vm631, %v623
      %663 = vst.msk [vmem:[%s259 + $0xf8] sm:$0xff] %vm631, %v628
      %v664 = vld [vmem:[%s3] sm:$0xff]
      %v665 = vld [vmem:[%s3 + $0x8] sm:$0xff]
      %v666 = vld [vmem:[%s3 + $0x10] sm:$0xff]
      %v667 = vld [vmem:[%s3 + $0x18] sm:$0xff]
      %v668 = vld [vmem:[%s3 + $0x20] sm:$0xff]
      %v669 = vld [vmem:[%s3 + $0x28] sm:$0xff]
      %v670 = vld [vmem:[%s3 + $0x30] sm:$0xff]
      %v671 = vld [vmem:[%s3 + $0x38] sm:$0xff]
      %v672 = vld [vmem:[%s3 + $0x40] sm:$0xff]
      %v673 = vld [vmem:[%s3 + $0x48] sm:$0xff]
      %v674 = vld [vmem:[%s3 + $0x50] sm:$0xff]
      %v675 = vld [vmem:[%s3 + $0x58] sm:$0xff]
      %v676 = vld [vmem:[%s3 + $0x60] sm:$0xff]
      %v677 = vld [vmem:[%s3 + $0x68] sm:$0xff]
      %v678 = vld [vmem:[%s3 + $0x70] sm:$0xff]
      %v679 = vld [vmem:[%s3 + $0x78] sm:$0xff]
      %v680 = vld [vmem:[%s3 + $0x80] sm:$0xff]
      %v681 = vld [vmem:[%s3 + $0x88] sm:$0xff]
      %v682 = vld [vmem:[%s3 + $0x90] sm:$0xff]
      %v683 = vld [vmem:[%s3 + $0x98] sm:$0xff]
      %v684 = vld [vmem:[%s3 + $0xa0] sm:$0xff]
      %v685 = vld [vmem:[%s3 + $0xa8] sm:$0xff]
      %v686 = vld [vmem:[%s3 + $0xb0] sm:$0xff]
      %v687 = vld [vmem:[%s3 + $0xb8] sm:$0xff]
      %v688 = vld [vmem:[%s3 + $0xc0] sm:$0xff]
      %v689 = vld [vmem:[%s3 + $0xc8] sm:$0xff]
      %v690 = vld [vmem:[%s3 + $0xd0] sm:$0xff]
      %v691 = vld [vmem:[%s3 + $0xd8] sm:$0xff]
      %v692 = vld [vmem:[%s3 + $0xe0] sm:$0xff]
      %v693 = vld [vmem:[%s3 + $0xe8] sm:$0xff]
      %v694 = vld [vmem:[%s3 + $0xf0] sm:$0xff]
      %v695 = vld [vmem:[%s3 + $0xf8] sm:$0xff]
      %v696 = vld [vmem:[%s3 + $0x100] sm:$0xff]
      %v697 = vld [vmem:[%s3 + $0x108] sm:$0xff]
      %v698 = vld [vmem:[%s3 + $0x110] sm:$0xff]
      %v699 = vld [vmem:[%s3 + $0x118] sm:$0xff]
      %700 = vst.msk [vmem:[#allocation2] sm:$0xff] %vm631, 0.0
      %701 = vst.msk [vmem:[#allocation2 + $0x8] sm:$0xff] %vm631, 0.0
      %vm702 = vcmask 254976
      %703 = vst.msk [vmem:[#allocation2 + $0x10] sm:$0x3] %vm702, 0.0
      %704 = vst.msk [vmem:[#allocation2 + $0x18] sm:$0xff] %vm631, 0.0
      %705 = vst.msk [vmem:[#allocation2 + $0x20] sm:$0xff] %vm631, 0.0
      %706 = vst.msk [vmem:[#allocation2 + $0x28] sm:$0x3] %vm702, 0.0
      %707 = vst.msk [vmem:[#allocation2 + $0x30] sm:$0xff] %vm631, 0.0
      %708 = vst.msk [vmem:[#allocation2 + $0x38] sm:$0xff] %vm631, 0.0
      %709 = vst.msk [vmem:[#allocation2 + $0x40] sm:$0x3] %vm702, 0.0
      %710 = vst.msk [vmem:[#allocation2 + $0x48] sm:$0xff] %vm631, 0.0
      %711 = vst.msk [vmem:[#allocation2 + $0x50] sm:$0xff] %vm631, 0.0
      %712 = vst.msk [vmem:[#allocation2 + $0x58] sm:$0x3] %vm702, 0.0
      %713 = vst.msk [vmem:[#allocation2 + $0x60] sm:$0xff] %vm631, 0.0
      %714 = vst.msk [vmem:[#allocation2 + $0x68] sm:$0xff] %vm631, 0.0
      %715 = vst.msk [vmem:[#allocation2 + $0x70] sm:$0x3] %vm702, 0.0
      %716 = vst.msk [vmem:[#allocation2 + $0x78] sm:$0xff] %vm631, 0.0
      %717 = vst.msk [vmem:[#allocation2 + $0x80] sm:$0xff] %vm631, 0.0
      %718 = vst.msk [vmem:[#allocation2 + $0x88] sm:$0x3] %vm702, 0.0
      %719 = vst.msk [vmem:[#allocation2 + $0x90] sm:$0xff] %vm631, 0.0
      %720 = vst.msk [vmem:[#allocation2 + $0x98] sm:$0xff] %vm631, 0.0
      %721 = vst.msk [vmem:[#allocation2 + $0xa0] sm:$0x3] %vm702, 0.0
      %722 = vst.msk [vmem:[#allocation2 + $0xa8] sm:$0xff] %vm631, 0.0
      %723 = vst.msk [vmem:[#allocation2 + $0xb0] sm:$0xff] %vm631, 0.0
      %724 = vst.msk [vmem:[#allocation2 + $0xb8] sm:$0x3] %vm702, 0.0
      %725 = vst.msk [vmem:[#allocation2 + $0xc0] sm:$0xff] %vm631, 0.0
      %726 = vst.msk [vmem:[#allocation2 + $0xc8] sm:$0xff] %vm631, 0.0
      %727 = vst.msk [vmem:[#allocation2 + $0xd0] sm:$0x3] %vm702, 0.0
      %728 = vst.msk [vmem:[#allocation2 + $0xd8] sm:$0xff] %vm631, 0.0
      %729 = vst.msk [vmem:[#allocation2 + $0xe0] sm:$0xff] %vm631, 0.0
      %730 = vst.msk [vmem:[#allocation2 + $0xe8] sm:$0x3] %vm702, 0.0
      %731 = vst.msk [vmem:[#allocation2 + $0xf0] sm:$0xff] %vm631, 0.0
      %732 = vst.msk [vmem:[#allocation2 + $0xf8] sm:$0xff] %vm631, 0.0
      %733 = vst.msk [vmem:[#allocation2 + $0x100] sm:$0x3] %vm702, 0.0
      %734 = vst.msk [vmem:[#allocation2 + $0x108] sm:$0xff] %vm631, 0.0
      %735 = vst.msk [vmem:[#allocation2 + $0x110] sm:$0xff] %vm631, 0.0
      %736 = vst.msk [vmem:[#allocation2 + $0x118] sm:$0x3] %vm702, 0.0
      %737 = vst.msk [vmem:[#allocation2 + $0x120] sm:$0xff] %vm631, 0.0
      %738 = vst.msk [vmem:[#allocation2 + $0x128] sm:$0xff] %vm631, 0.0
      %739 = vst.msk [vmem:[#allocation2 + $0x130] sm:$0x3] %vm702, 0.0
      %740 = vst.msk [vmem:[#allocation2 + $0x138] sm:$0xff] %vm631, 0.0
      %741 = vst.msk [vmem:[#allocation2 + $0x140] sm:$0xff] %vm631, 0.0
      %742 = vst.msk [vmem:[#allocation2 + $0x148] sm:$0x3] %vm702, 0.0
      %743 = vst.msk [vmem:[#allocation2 + $0x150] sm:$0xff] %vm631, 0.0
      %744 = vst.msk [vmem:[#allocation2 + $0x158] sm:$0xff] %vm631, 0.0
      %745 = vst.msk [vmem:[#allocation2 + $0x160] sm:$0x3] %vm702, 0.0
      %746 = vst.msk [vmem:[#allocation2 + $0x168] sm:$0xff] %vm631, 0.0
      %747 = vst.msk [vmem:[#allocation2 + $0x170] sm:$0xff] %vm631, 0.0
      %748 = vst.msk [vmem:[#allocation2 + $0x178] sm:$0x3] %vm702, 0.0
      %749 = vst.msk [vmem:[#allocation2 + $0x180] sm:$0xff] %vm631, 0.0
      %750 = vst.msk [vmem:[#allocation2 + $0x188] sm:$0xff] %vm631, 0.0
      %751 = vst.msk [vmem:[#allocation2 + $0x190] sm:$0x3] %vm702, 0.0
      %752 = vst.msk [vmem:[#allocation2 + $0x198] sm:$0xff] %vm631, 0.0
      %753 = vst.msk [vmem:[#allocation2 + $0x1a0] sm:$0xff] %vm631, 0.0
      %754 = vst.msk [vmem:[#allocation2 + $0x1a8] sm:$0x3] %vm702, 0.0
      %s755 = scalar_lea.vmem [#allocation2], 24
      %756 = vst.msk [vmem:[%s755 + $0x1] sm:$0xff] %vm631, %v473
      %757 = vst.msk [vmem:[%s755 + $0x9] sm:$0xff] %vm631, %v478
      %758 = vst.msk [vmem:[%s755 + $0x19] sm:$0xff] %vm631, %v483
      %759 = vst.msk [vmem:[%s755 + $0x21] sm:$0xff] %vm631, %v488
      %760 = vst.msk [vmem:[%s755 + $0x31] sm:$0xff] %vm631, %v493
      %761 = vst.msk [vmem:[%s755 + $0x39] sm:$0xff] %vm631, %v498
      %762 = vst.msk [vmem:[%s755 + $0x49] sm:$0xff] %vm631, %v503
      %763 = vst.msk [vmem:[%s755 + $0x51] sm:$0xff] %vm631, %v508
      %764 = vst.msk [vmem:[%s755 + $0x61] sm:$0xff] %vm631, %v513
      %765 = vst.msk [vmem:[%s755 + $0x69] sm:$0xff] %vm631, %v518
      %766 = vst.msk [vmem:[%s755 + $0x79] sm:$0xff] %vm631, %v523
      %767 = vst.msk [vmem:[%s755 + $0x81] sm:$0xff] %vm631, %v528
      %768 = vst.msk [vmem:[%s755 + $0x91] sm:$0xff] %vm631, %v533
      %769 = vst.msk [vmem:[%s755 + $0x99] sm:$0xff] %vm631, %v538
      %770 = vst.msk [vmem:[%s755 + $0xa9] sm:$0xff] %vm631, %v543
      %771 = vst.msk [vmem:[%s755 + $0xb1] sm:$0xff] %vm631, %v548
      %772 = vst.msk [vmem:[%s755 + $0xc1] sm:$0xff] %vm631, %v553
      %773 = vst.msk [vmem:[%s755 + $0xc9] sm:$0xff] %vm631, %v558
      %774 = vst.msk [vmem:[%s755 + $0xd9] sm:$0xff] %vm631, %v563
      %775 = vst.msk [vmem:[%s755 + $0xe1] sm:$0xff] %vm631, %v568
      %776 = vst.msk [vmem:[%s755 + $0xf1] sm:$0xff] %vm631, %v573
      %777 = vst.msk [vmem:[%s755 + $0xf9] sm:$0xff] %vm631, %v578
      %778 = vst.msk [vmem:[%s755 + $0x109] sm:$0xff] %vm631, %v583
      %779 = vst.msk [vmem:[%s755 + $0x111] sm:$0xff] %vm631, %v588
      %780 = vst.msk [vmem:[%s755 + $0x121] sm:$0xff] %vm631, %v593
      %781 = vst.msk [vmem:[%s755 + $0x129] sm:$0xff] %vm631, %v598
      %782 = vst.msk [vmem:[%s755 + $0x139] sm:$0xff] %vm631, %v603
      %783 = vst.msk [vmem:[%s755 + $0x141] sm:$0xff] %vm631, %v608
      %784 = vst.msk [vmem:[%s755 + $0x151] sm:$0xff] %vm631, %v613
      %785 = vst.msk [vmem:[%s755 + $0x159] sm:$0xff] %vm631, %v618
      %786 = vst.msk [vmem:[%s755 + $0x169] sm:$0xff] %vm631, %v623
      %787 = vst.msk [vmem:[%s755 + $0x171] sm:$0xff] %vm631, %v628
      %v788 = vld [vmem:[#allocation2] sm:$0xff]
      %v789 = vld [vmem:[#allocation2 + $0x8] sm:$0xff]
      %v790 = vld [vmem:[#allocation2 + $0x18] sm:$0xff]
      %v791 = vld [vmem:[#allocation2 + $0x20] sm:$0xff]
      %v792 = vld [vmem:[#allocation2 + $0x30] sm:$0xff]
      %v793 = vld [vmem:[#allocation2 + $0x38] sm:$0xff]
      %v794 = vld [vmem:[#allocation2 + $0x48] sm:$0xff]
      %v795 = vld [vmem:[#allocation2 + $0x50] sm:$0xff]
      %v796 = vld [vmem:[#allocation2 + $0x60] sm:$0xff]
      %v797 = vld [vmem:[#allocation2 + $0x68] sm:$0xff]
      %v798 = vld [vmem:[#allocation2 + $0x78] sm:$0xff]
      %v799 = vld [vmem:[#allocation2 + $0x80] sm:$0xff]
      %v800 = vld [vmem:[#allocation2 + $0x90] sm:$0xff]
      %v801 = vld [vmem:[#allocation2 + $0x98] sm:$0xff]
      %v802 = vld [vmem:[#allocation2 + $0xa8] sm:$0xff]
      %v803 = vld [vmem:[#allocation2 + $0xb0] sm:$0xff]
      %v804 = vld [vmem:[#allocation2 + $0xc0] sm:$0xff]
      %v805 = vld [vmem:[#allocation2 + $0xc8] sm:$0xff]
      %v806 = vld [vmem:[#allocation2 + $0xd8] sm:$0xff]
      %v807 = vld [vmem:[#allocation2 + $0xe0] sm:$0xff]
      %v808 = vld [vmem:[#allocation2 + $0xf0] sm:$0xff]
      %v809 = vld [vmem:[#allocation2 + $0xf8] sm:$0xff]
      %v810 = vld [vmem:[#allocation2 + $0x108] sm:$0xff]
      %v811 = vld [vmem:[#allocation2 + $0x110] sm:$0xff]
      %v812 = vld [vmem:[#allocation2 + $0x120] sm:$0xff]
      %v813 = vld [vmem:[#allocation2 + $0x128] sm:$0xff]
      %v814 = vld [vmem:[#allocation2 + $0x138] sm:$0xff]
      %v815 = vld [vmem:[#allocation2 + $0x140] sm:$0xff]
      %v816 = vld [vmem:[#allocation2 + $0x150] sm:$0xff]
      %v817 = vld [vmem:[#allocation2 + $0x158] sm:$0xff]
      %v818 = vld [vmem:[#allocation2 + $0x168] sm:$0xff]
      %v819 = vld [vmem:[#allocation2 + $0x170] sm:$0xff]
      %v820 = vld [vmem:[#allocation2 + $0x1] sm:$0xff]
      %v821 = vld [vmem:[#allocation2 + $0x9] sm:$0xff]
      %v822 = vld [vmem:[#allocation2 + $0x19] sm:$0xff]
      %v823 = vld [vmem:[#allocation2 + $0x21] sm:$0xff]
      %v824 = vld [vmem:[#allocation2 + $0x31] sm:$0xff]
      %v825 = vld [vmem:[#allocation2 + $0x39] sm:$0xff]
      %v826 = vld [vmem:[#allocation2 + $0x49] sm:$0xff]
      %v827 = vld [vmem:[#allocation2 + $0x51] sm:$0xff]
      %v828 = vld [vmem:[#allocation2 + $0x61] sm:$0xff]
      %v829 = vld [vmem:[#allocation2 + $0x69] sm:$0xff]
      %v830 = vld [vmem:[#allocation2 + $0x79] sm:$0xff]
      %v831 = vld [vmem:[#allocation2 + $0x81] sm:$0xff]
      %v832 = vld [vmem:[#allocation2 + $0x91] sm:$0xff]
      %v833 = vld [vmem:[#allocation2 + $0x99] sm:$0xff]
      %v834 = vld [vmem:[#allocation2 + $0xa9] sm:$0xff]
      %v835 = vld [vmem:[#allocation2 + $0xb1] sm:$0xff]
      %v836 = vld [vmem:[#allocation2 + $0xc1] sm:$0xff]
      %v837 = vld [vmem:[#allocation2 + $0xc9] sm:$0xff]
      %v838 = vld [vmem:[#allocation2 + $0xd9] sm:$0xff]
      %v839 = vld [vmem:[#allocation2 + $0xe1] sm:$0xff]
      %v840 = vld [vmem:[#allocation2 + $0xf1] sm:$0xff]
      %v841 = vld [vmem:[#allocation2 + $0xf9] sm:$0xff]
      %v842 = vld [vmem:[#allocation2 + $0x109] sm:$0xff]
      %v843 = vld [vmem:[#allocation2 + $0x111] sm:$0xff]
      %v844 = vld [vmem:[#allocation2 + $0x121] sm:$0xff]
      %v845 = vld [vmem:[#allocation2 + $0x129] sm:$0xff]
      %v846 = vld [vmem:[#allocation2 + $0x139] sm:$0xff]
      %v847 = vld [vmem:[#allocation2 + $0x141] sm:$0xff]
      %v848 = vld [vmem:[#allocation2 + $0x151] sm:$0xff]
      %v849 = vld [vmem:[#allocation2 + $0x159] sm:$0xff]
      %v850 = vld [vmem:[#allocation2 + $0x169] sm:$0xff]
      %v851 = vld [vmem:[#allocation2 + $0x171] sm:$0xff]
      %v852 = vld [vmem:[#allocation2 + $0x2] sm:$0xff]
      %v853 = vld [vmem:[#allocation2 + $0xa] sm:$0xff]
      %v854 = vld [vmem:[#allocation2 + $0x1a] sm:$0xff]
      %v855 = vld [vmem:[#allocation2 + $0x22] sm:$0xff]
      %v856 = vld [vmem:[#allocation2 + $0x32] sm:$0xff]
      %v857 = vld [vmem:[#allocation2 + $0x3a] sm:$0xff]
      %v858 = vld [vmem:[#allocation2 + $0x4a] sm:$0xff]
      %v859 = vld [vmem:[#allocation2 + $0x52] sm:$0xff]
      %v860 = vld [vmem:[#allocation2 + $0x62] sm:$0xff]
      %v861 = vld [vmem:[#allocation2 + $0x6a] sm:$0xff]
      %v862 = vld [vmem:[#allocation2 + $0x7a] sm:$0xff]
      %v863 = vld [vmem:[#allocation2 + $0x82] sm:$0xff]
      %v864 = vld [vmem:[#allocation2 + $0x92] sm:$0xff]
      %v865 = vld [vmem:[#allocation2 + $0x9a] sm:$0xff]
      %v866 = vld [vmem:[#allocation2 + $0xaa] sm:$0xff]
      %v867 = vld [vmem:[#allocation2 + $0xb2] sm:$0xff]
      %v868 = vld [vmem:[#allocation2 + $0xc2] sm:$0xff]
      %v869 = vld [vmem:[#allocation2 + $0xca] sm:$0xff]
      %v870 = vld [vmem:[#allocation2 + $0xda] sm:$0xff]
      %v871 = vld [vmem:[#allocation2 + $0xe2] sm:$0xff]
      %v872 = vld [vmem:[#allocation2 + $0xf2] sm:$0xff]
      %v873 = vld [vmem:[#allocation2 + $0xfa] sm:$0xff]
      %v874 = vld [vmem:[#allocation2 + $0x10a] sm:$0xff]
      %v875 = vld [vmem:[#allocation2 + $0x112] sm:$0xff]
      %v876 = vld [vmem:[#allocation2 + $0x122] sm:$0xff]
      %v877 = vld [vmem:[#allocation2 + $0x12a] sm:$0xff]
      %v878 = vld [vmem:[#allocation2 + $0x13a] sm:$0xff]
      %v879 = vld [vmem:[#allocation2 + $0x142] sm:$0xff]
      %v880 = vld [vmem:[#allocation2 + $0x152] sm:$0xff]
      %v881 = vld [vmem:[#allocation2 + $0x15a] sm:$0xff]
      %v882 = vld [vmem:[#allocation2 + $0x16a] sm:$0xff]
      %v883 = vld [vmem:[#allocation2 + $0x172] sm:$0xff]
      %v884 = vld [vmem:[%s755] sm:$0xff]
      %v885 = vld [vmem:[%s755 + $0x8] sm:$0xff]
      %v886 = vld [vmem:[%s755 + $0x18] sm:$0xff]
      %v887 = vld [vmem:[%s755 + $0x20] sm:$0xff]
      %v888 = vld [vmem:[%s755 + $0x30] sm:$0xff]
      %v889 = vld [vmem:[%s755 + $0x38] sm:$0xff]
      %v890 = vld [vmem:[%s755 + $0x48] sm:$0xff]
      %v891 = vld [vmem:[%s755 + $0x50] sm:$0xff]
      %v892 = vld [vmem:[%s755 + $0x60] sm:$0xff]
      %v893 = vld [vmem:[%s755 + $0x68] sm:$0xff]
      %v894 = vld [vmem:[%s755 + $0x78] sm:$0xff]
      %v895 = vld [vmem:[%s755 + $0x80] sm:$0xff]
      %v896 = vld [vmem:[%s755 + $0x90] sm:$0xff]
      %v897 = vld [vmem:[%s755 + $0x98] sm:$0xff]
      %v898 = vld [vmem:[%s755 + $0xa8] sm:$0xff]
      %v899 = vld [vmem:[%s755 + $0xb0] sm:$0xff]
      %v900 = vld [vmem:[%s755 + $0xc0] sm:$0xff]
      %v901 = vld [vmem:[%s755 + $0xc8] sm:$0xff]
      %v902 = vld [vmem:[%s755 + $0xd8] sm:$0xff]
      %v903 = vld [vmem:[%s755 + $0xe0] sm:$0xff]
      %v904 = vld [vmem:[%s755 + $0xf0] sm:$0xff]
      %v905 = vld [vmem:[%s755 + $0xf8] sm:$0xff]
      %v906 = vld [vmem:[%s755 + $0x108] sm:$0xff]
      %v907 = vld [vmem:[%s755 + $0x110] sm:$0xff]
      %v908 = vld [vmem:[%s755 + $0x120] sm:$0xff]
      %v909 = vld [vmem:[%s755 + $0x128] sm:$0xff]
      %v910 = vld [vmem:[%s755 + $0x138] sm:$0xff]
      %v911 = vld [vmem:[%s755 + $0x140] sm:$0xff]
      %v912 = vld [vmem:[%s755 + $0x150] sm:$0xff]
      %v913 = vld [vmem:[%s755 + $0x158] sm:$0xff]
      %v914 = vld [vmem:[%s755 + $0x168] sm:$0xff]
      %v915 = vld [vmem:[%s755 + $0x170] sm:$0xff]
      %v916 = vld [vmem:[%s755 + $0x1] sm:$0xff]
      %v917 = vld [vmem:[%s755 + $0x9] sm:$0xff]
      %v918 = vld [vmem:[%s755 + $0x19] sm:$0xff]
      %v919 = vld [vmem:[%s755 + $0x21] sm:$0xff]
      %v920 = vld [vmem:[%s755 + $0x31] sm:$0xff]
      %v921 = vld [vmem:[%s755 + $0x39] sm:$0xff]
      %v922 = vld [vmem:[%s755 + $0x49] sm:$0xff]
      %v923 = vld [vmem:[%s755 + $0x51] sm:$0xff]
      %v924 = vld [vmem:[%s755 + $0x61] sm:$0xff]
      %v925 = vld [vmem:[%s755 + $0x69] sm:$0xff]
      %v926 = vld [vmem:[%s755 + $0x79] sm:$0xff]
      %v927 = vld [vmem:[%s755 + $0x81] sm:$0xff]
      %v928 = vld [vmem:[%s755 + $0x91] sm:$0xff]
      %v929 = vld [vmem:[%s755 + $0x99] sm:$0xff]
      %v930 = vld [vmem:[%s755 + $0xa9] sm:$0xff]
      %v931 = vld [vmem:[%s755 + $0xb1] sm:$0xff]
      %v932 = vld [vmem:[%s755 + $0xc1] sm:$0xff]
      %v933 = vld [vmem:[%s755 + $0xc9] sm:$0xff]
      %v934 = vld [vmem:[%s755 + $0xd9] sm:$0xff]
      %v935 = vld [vmem:[%s755 + $0xe1] sm:$0xff]
      %v936 = vld [vmem:[%s755 + $0xf1] sm:$0xff]
      %v937 = vld [vmem:[%s755 + $0xf9] sm:$0xff]
      %v938 = vld [vmem:[%s755 + $0x109] sm:$0xff]
      %v939 = vld [vmem:[%s755 + $0x111] sm:$0xff]
      %v940 = vld [vmem:[%s755 + $0x121] sm:$0xff]
      %v941 = vld [vmem:[%s755 + $0x129] sm:$0xff]
      %v942 = vld [vmem:[%s755 + $0x139] sm:$0xff]
      %v943 = vld [vmem:[%s755 + $0x141] sm:$0xff]
      %v944 = vld [vmem:[%s755 + $0x151] sm:$0xff]
      %v945 = vld [vmem:[%s755 + $0x159] sm:$0xff]
      %v946 = vld [vmem:[%s755 + $0x169] sm:$0xff]
      %v947 = vld [vmem:[%s755 + $0x171] sm:$0xff]
      %v948 = vld [vmem:[%s755 + $0x2] sm:$0xff]
      %v949 = vld [vmem:[%s755 + $0xa] sm:$0xff]
      %v950 = vld [vmem:[%s755 + $0x1a] sm:$0xff]
      %v951 = vld [vmem:[%s755 + $0x22] sm:$0xff]
      %v952 = vld [vmem:[%s755 + $0x32] sm:$0xff]
      %v953 = vld [vmem:[%s755 + $0x3a] sm:$0xff]
      %v954 = vld [vmem:[%s755 + $0x4a] sm:$0xff]
      %v955 = vld [vmem:[%s755 + $0x52] sm:$0xff]
      %v956 = vld [vmem:[%s755 + $0x62] sm:$0xff]
      %v957 = vld [vmem:[%s755 + $0x6a] sm:$0xff]
      %v958 = vld [vmem:[%s755 + $0x7a] sm:$0xff]
      %v959 = vld [vmem:[%s755 + $0x82] sm:$0xff]
      %v960 = vld [vmem:[%s755 + $0x92] sm:$0xff]
      %v961 = vld [vmem:[%s755 + $0x9a] sm:$0xff]
      %v962 = vld [vmem:[%s755 + $0xaa] sm:$0xff]
      %v963 = vld [vmem:[%s755 + $0xb2] sm:$0xff]
      %v964 = vld [vmem:[%s755 + $0xc2] sm:$0xff]
      %v965 = vld [vmem:[%s755 + $0xca] sm:$0xff]
      %v966 = vld [vmem:[%s755 + $0xda] sm:$0xff]
      %v967 = vld [vmem:[%s755 + $0xe2] sm:$0xff]
      %v968 = vld [vmem:[%s755 + $0xf2] sm:$0xff]
      %v969 = vld [vmem:[%s755 + $0xfa] sm:$0xff]
      %v970 = vld [vmem:[%s755 + $0x10a] sm:$0xff]
      %v971 = vld [vmem:[%s755 + $0x112] sm:$0xff]
      %v972 = vld [vmem:[%s755 + $0x122] sm:$0xff]
      %v973 = vld [vmem:[%s755 + $0x12a] sm:$0xff]
      %v974 = vld [vmem:[%s755 + $0x13a] sm:$0xff]
      %v975 = vld [vmem:[%s755 + $0x142] sm:$0xff]
      %v976 = vld [vmem:[%s755 + $0x152] sm:$0xff]
      %v977 = vld [vmem:[%s755 + $0x15a] sm:$0xff]
      %v978 = vld [vmem:[%s755 + $0x16a] sm:$0xff]
      %v979 = vld [vmem:[%s755 + $0x172] sm:$0xff]
      %s980 = scalar_lea.vmem [#allocation2], 48
      %v981 = vld [vmem:[%s980] sm:$0xff]
      %v982 = vld [vmem:[%s980 + $0x8] sm:$0xff]
      %v983 = vld [vmem:[%s980 + $0x18] sm:$0xff]
      %v984 = vld [vmem:[%s980 + $0x20] sm:$0xff]
      %v985 = vld [vmem:[%s980 + $0x30] sm:$0xff]
      %v986 = vld [vmem:[%s980 + $0x38] sm:$0xff]
      %v987 = vld [vmem:[%s980 + $0x48] sm:$0xff]
      %v988 = vld [vmem:[%s980 + $0x50] sm:$0xff]
      %v989 = vld [vmem:[%s980 + $0x60] sm:$0xff]
      %v990 = vld [vmem:[%s980 + $0x68] sm:$0xff]
      %v991 = vld [vmem:[%s980 + $0x78] sm:$0xff]
      %v992 = vld [vmem:[%s980 + $0x80] sm:$0xff]
      %v993 = vld [vmem:[%s980 + $0x90] sm:$0xff]
      %v994 = vld [vmem:[%s980 + $0x98] sm:$0xff]
      %v995 = vld [vmem:[%s980 + $0xa8] sm:$0xff]
      %v996 = vld [vmem:[%s980 + $0xb0] sm:$0xff]
      %v997 = vld [vmem:[%s980 + $0xc0] sm:$0xff]
      %v998 = vld [vmem:[%s980 + $0xc8] sm:$0xff]
      %v999 = vld [vmem:[%s980 + $0xd8] sm:$0xff]
      %v1000 = vld [vmem:[%s980 + $0xe0] sm:$0xff]
      %v1001 = vld [vmem:[%s980 + $0xf0] sm:$0xff]
      %v1002 = vld [vmem:[%s980 + $0xf8] sm:$0xff]
      %v1003 = vld [vmem:[%s980 + $0x108] sm:$0xff]
      %v1004 = vld [vmem:[%s980 + $0x110] sm:$0xff]
      %v1005 = vld [vmem:[%s980 + $0x120] sm:$0xff]
      %v1006 = vld [vmem:[%s980 + $0x128] sm:$0xff]
      %v1007 = vld [vmem:[%s980 + $0x138] sm:$0xff]
      %v1008 = vld [vmem:[%s980 + $0x140] sm:$0xff]
      %v1009 = vld [vmem:[%s980 + $0x150] sm:$0xff]
      %v1010 = vld [vmem:[%s980 + $0x158] sm:$0xff]
      %v1011 = vld [vmem:[%s980 + $0x168] sm:$0xff]
      %v1012 = vld [vmem:[%s980 + $0x170] sm:$0xff]
      %v1013 = vld [vmem:[%s980 + $0x1] sm:$0xff]
      %v1014 = vld [vmem:[%s980 + $0x9] sm:$0xff]
      %v1015 = vld [vmem:[%s980 + $0x19] sm:$0xff]
      %v1016 = vld [vmem:[%s980 + $0x21] sm:$0xff]
      %v1017 = vld [vmem:[%s980 + $0x31] sm:$0xff]
      %v1018 = vld [vmem:[%s980 + $0x39] sm:$0xff]
      %v1019 = vld [vmem:[%s980 + $0x49] sm:$0xff]
      %v1020 = vld [vmem:[%s980 + $0x51] sm:$0xff]
      %v1021 = vld [vmem:[%s980 + $0x61] sm:$0xff]
      %v1022 = vld [vmem:[%s980 + $0x69] sm:$0xff]
      %v1023 = vld [vmem:[%s980 + $0x79] sm:$0xff]
      %v1024 = vld [vmem:[%s980 + $0x81] sm:$0xff]
      %v1025 = vld [vmem:[%s980 + $0x91] sm:$0xff]
      %v1026 = vld [vmem:[%s980 + $0x99] sm:$0xff]
      %v1027 = vld [vmem:[%s980 + $0xa9] sm:$0xff]
      %v1028 = vld [vmem:[%s980 + $0xb1] sm:$0xff]
      %v1029 = vld [vmem:[%s980 + $0xc1] sm:$0xff]
      %v1030 = vld [vmem:[%s980 + $0xc9] sm:$0xff]
      %v1031 = vld [vmem:[%s980 + $0xd9] sm:$0xff]
      %v1032 = vld [vmem:[%s980 + $0xe1] sm:$0xff]
      %v1033 = vld [vmem:[%s980 + $0xf1] sm:$0xff]
      %v1034 = vld [vmem:[%s980 + $0xf9] sm:$0xff]
      %v1035 = vld [vmem:[%s980 + $0x109] sm:$0xff]
      %v1036 = vld [vmem:[%s980 + $0x111] sm:$0xff]
      %v1037 = vld [vmem:[%s980 + $0x121] sm:$0xff]
      %v1038 = vld [vmem:[%s980 + $0x129] sm:$0xff]
      %v1039 = vld [vmem:[%s980 + $0x139] sm:$0xff]
      %v1040 = vld [vmem:[%s980 + $0x141] sm:$0xff]
      %v1041 = vld [vmem:[%s980 + $0x151] sm:$0xff]
      %v1042 = vld [vmem:[%s980 + $0x159] sm:$0xff]
      %v1043 = vld [vmem:[%s980 + $0x169] sm:$0xff]
      %v1044 = vld [vmem:[%s980 + $0x171] sm:$0xff]
      %v1045 = vld [vmem:[%s980 + $0x2] sm:$0xff]
      %v1046 = vld [vmem:[%s980 + $0xa] sm:$0xff]
      %v1047 = vld [vmem:[%s980 + $0x1a] sm:$0xff]
      %v1048 = vld [vmem:[%s980 + $0x22] sm:$0xff]
      %v1049 = vld [vmem:[%s980 + $0x32] sm:$0xff]
      %v1050 = vld [vmem:[%s980 + $0x3a] sm:$0xff]
      %v1051 = vld [vmem:[%s980 + $0x4a] sm:$0xff]
      %v1052 = vld [vmem:[%s980 + $0x52] sm:$0xff]
      %v1053 = vld [vmem:[%s980 + $0x62] sm:$0xff]
      %v1054 = vld [vmem:[%s980 + $0x6a] sm:$0xff]
      %v1055 = vld [vmem:[%s980 + $0x7a] sm:$0xff]
      %v1056 = vld [vmem:[%s980 + $0x82] sm:$0xff]
      %v1057 = vld [vmem:[%s980 + $0x92] sm:$0xff]
      %v1058 = vld [vmem:[%s980 + $0x9a] sm:$0xff]
      %v1059 = vld [vmem:[%s980 + $0xaa] sm:$0xff]
      %v1060 = vld [vmem:[%s980 + $0xb2] sm:$0xff]
      %v1061 = vld [vmem:[%s980 + $0xc2] sm:$0xff]
      %v1062 = vld [vmem:[%s980 + $0xca] sm:$0xff]
      %v1063 = vld [vmem:[%s980 + $0xda] sm:$0xff]
      %v1064 = vld [vmem:[%s980 + $0xe2] sm:$0xff]
      %v1065 = vld [vmem:[%s980 + $0xf2] sm:$0xff]
      %v1066 = vld [vmem:[%s980 + $0xfa] sm:$0xff]
      %v1067 = vld [vmem:[%s980 + $0x10a] sm:$0xff]
      %v1068 = vld [vmem:[%s980 + $0x112] sm:$0xff]
      %v1069 = vld [vmem:[%s980 + $0x122] sm:$0xff]
      %v1070 = vld [vmem:[%s980 + $0x12a] sm:$0xff]
      %v1071 = vld [vmem:[%s980 + $0x13a] sm:$0xff]
      %v1072 = vld [vmem:[%s980 + $0x142] sm:$0xff]
      %v1073 = vld [vmem:[%s980 + $0x152] sm:$0xff]
      %v1074 = vld [vmem:[%s980 + $0x15a] sm:$0xff]
      %v1075 = vld [vmem:[%s980 + $0x16a] sm:$0xff]
      %v1076 = vld [vmem:[%s980 + $0x172] sm:$0xff]
      %1109 = vrot.lane.b32.xlu0 %v820, 32
      %v1110 = vpop.permute.xlu0 %1109
      %1111 = vrot.lane.b32.xlu0 %v821, 32
      %v1112 = vpop.permute.xlu0 %1111
      %1113 = vrot.lane.b32.xlu0 %v822, 32
      %v1114 = vpop.permute.xlu0 %1113
      %1115 = vrot.lane.b32.xlu0 %v823, 32
      %v1116 = vpop.permute.xlu0 %1115
      %1117 = vrot.lane.b32.xlu0 %v824, 32
      %v1118 = vpop.permute.xlu0 %1117
      %1119 = vrot.lane.b32.xlu0 %v825, 32
      %v1120 = vpop.permute.xlu0 %1119
      %1121 = vrot.lane.b32.xlu0 %v826, 32
      %v1122 = vpop.permute.xlu0 %1121
      %1123 = vrot.lane.b32.xlu0 %v827, 32
      %v1124 = vpop.permute.xlu0 %1123
      %1125 = vrot.lane.b32.xlu0 %v828, 32
      %v1126 = vpop.permute.xlu0 %1125
      %1127 = vrot.lane.b32.xlu0 %v829, 32
      %v1128 = vpop.permute.xlu0 %1127
      %1129 = vrot.lane.b32.xlu0 %v830, 32
      %v1130 = vpop.permute.xlu0 %1129
      %1131 = vrot.lane.b32.xlu0 %v831, 32
      %v1132 = vpop.permute.xlu0 %1131
      %1133 = vrot.lane.b32.xlu0 %v832, 32
      %v1134 = vpop.permute.xlu0 %1133
      %1135 = vrot.lane.b32.xlu0 %v833, 32
      %v1136 = vpop.permute.xlu0 %1135
      %1137 = vrot.lane.b32.xlu0 %v834, 32
      %v1138 = vpop.permute.xlu0 %1137
      %1139 = vrot.lane.b32.xlu0 %v835, 32
      %v1140 = vpop.permute.xlu0 %1139
      %1141 = vrot.lane.b32.xlu0 %v836, 32
      %v1142 = vpop.permute.xlu0 %1141
      %1143 = vrot.lane.b32.xlu0 %v837, 32
      %v1144 = vpop.permute.xlu0 %1143
      %1145 = vrot.lane.b32.xlu0 %v838, 32
      %v1146 = vpop.permute.xlu0 %1145
      %1147 = vrot.lane.b32.xlu0 %v839, 32
      %v1148 = vpop.permute.xlu0 %1147
      %1149 = vrot.lane.b32.xlu0 %v840, 32
      %v1150 = vpop.permute.xlu0 %1149
      %1151 = vrot.lane.b32.xlu0 %v841, 32
      %v1152 = vpop.permute.xlu0 %1151
      %1153 = vrot.lane.b32.xlu0 %v842, 32
      %v1154 = vpop.permute.xlu0 %1153
      %1155 = vrot.lane.b32.xlu0 %v843, 32
      %v1156 = vpop.permute.xlu0 %1155
      %1157 = vrot.lane.b32.xlu0 %v844, 32
      %v1158 = vpop.permute.xlu0 %1157
      %1159 = vrot.lane.b32.xlu0 %v845, 32
      %v1160 = vpop.permute.xlu0 %1159
      %1161 = vrot.lane.b32.xlu0 %v846, 32
      %v1162 = vpop.permute.xlu0 %1161
      %1163 = vrot.lane.b32.xlu0 %v847, 32
      %v1164 = vpop.permute.xlu0 %1163
      %1165 = vrot.lane.b32.xlu0 %v848, 32
      %v1166 = vpop.permute.xlu0 %1165
      %1167 = vrot.lane.b32.xlu0 %v849, 32
      %v1168 = vpop.permute.xlu0 %1167
      %1169 = vrot.lane.b32.xlu0 %v850, 32
      %v1170 = vpop.permute.xlu0 %1169
      %1171 = vrot.lane.b32.xlu0 %v851, 32
      %v1172 = vpop.permute.xlu0 %1171
      %1237 = vrot.lane.b32.xlu0 %v852, 64
      %v1238 = vpop.permute.xlu0 %1237
      %1239 = vrot.lane.b32.xlu0 %v853, 64
      %v1240 = vpop.permute.xlu0 %1239
      %1241 = vrot.lane.b32.xlu0 %v854, 64
      %v1242 = vpop.permute.xlu0 %1241
      %1243 = vrot.lane.b32.xlu0 %v855, 64
      %v1244 = vpop.permute.xlu0 %1243
      %1245 = vrot.lane.b32.xlu0 %v856, 64
      %v1246 = vpop.permute.xlu0 %1245
      %1247 = vrot.lane.b32.xlu0 %v857, 64
      %v1248 = vpop.permute.xlu0 %1247
      %1249 = vrot.lane.b32.xlu0 %v858, 64
      %v1250 = vpop.permute.xlu0 %1249
      %1251 = vrot.lane.b32.xlu0 %v859, 64
      %v1252 = vpop.permute.xlu0 %1251
      %1253 = vrot.lane.b32.xlu0 %v860, 64
      %v1254 = vpop.permute.xlu0 %1253
      %1255 = vrot.lane.b32.xlu0 %v861, 64
      %v1256 = vpop.permute.xlu0 %1255
      %1257 = vrot.lane.b32.xlu0 %v862, 64
      %v1258 = vpop.permute.xlu0 %1257
      %1259 = vrot.lane.b32.xlu0 %v863, 64
      %v1260 = vpop.permute.xlu0 %1259
      %1261 = vrot.lane.b32.xlu0 %v864, 64
      %v1262 = vpop.permute.xlu0 %1261
      %1263 = vrot.lane.b32.xlu0 %v865, 64
      %v1264 = vpop.permute.xlu0 %1263
      %1265 = vrot.lane.b32.xlu0 %v866, 64
      %v1266 = vpop.permute.xlu0 %1265
      %1267 = vrot.lane.b32.xlu0 %v867, 64
      %v1268 = vpop.permute.xlu0 %1267
      %1269 = vrot.lane.b32.xlu0 %v868, 64
      %v1270 = vpop.permute.xlu0 %1269
      %1271 = vrot.lane.b32.xlu0 %v869, 64
      %v1272 = vpop.permute.xlu0 %1271
      %1273 = vrot.lane.b32.xlu0 %v870, 64
      %v1274 = vpop.permute.xlu0 %1273
      %1275 = vrot.lane.b32.xlu0 %v871, 64
      %v1276 = vpop.permute.xlu0 %1275
      %1277 = vrot.lane.b32.xlu0 %v872, 64
      %v1278 = vpop.permute.xlu0 %1277
      %1279 = vrot.lane.b32.xlu0 %v873, 64
      %v1280 = vpop.permute.xlu0 %1279
      %1281 = vrot.lane.b32.xlu0 %v874, 64
      %v1282 = vpop.permute.xlu0 %1281
      %1283 = vrot.lane.b32.xlu0 %v875, 64
      %v1284 = vpop.permute.xlu0 %1283
      %1285 = vrot.lane.b32.xlu0 %v876, 64
      %v1286 = vpop.permute.xlu0 %1285
      %1287 = vrot.lane.b32.xlu0 %v877, 64
      %v1288 = vpop.permute.xlu0 %1287
      %1289 = vrot.lane.b32.xlu0 %v878, 64
      %v1290 = vpop.permute.xlu0 %1289
      %1291 = vrot.lane.b32.xlu0 %v879, 64
      %v1292 = vpop.permute.xlu0 %1291
      %1293 = vrot.lane.b32.xlu0 %v880, 64
      %v1294 = vpop.permute.xlu0 %1293
      %1295 = vrot.lane.b32.xlu0 %v881, 64
      %v1296 = vpop.permute.xlu0 %1295
      %1297 = vrot.lane.b32.xlu0 %v882, 64
      %v1298 = vpop.permute.xlu0 %1297
      %1299 = vrot.lane.b32.xlu0 %v883, 64
      %v1300 = vpop.permute.xlu0 %1299
      %1365 = vrot.lane.b32.xlu0 %v884, 96
      %v1366 = vpop.permute.xlu0 %1365
      %1367 = vrot.lane.b32.xlu0 %v885, 96
      %v1368 = vpop.permute.xlu0 %1367
      %1369 = vrot.lane.b32.xlu0 %v886, 96
      %v1370 = vpop.permute.xlu0 %1369
      %1371 = vrot.lane.b32.xlu0 %v887, 96
      %v1372 = vpop.permute.xlu0 %1371
      %1373 = vrot.lane.b32.xlu0 %v888, 96
      %v1374 = vpop.permute.xlu0 %1373
      %1375 = vrot.lane.b32.xlu0 %v889, 96
      %v1376 = vpop.permute.xlu0 %1375
      %1377 = vrot.lane.b32.xlu0 %v890, 96
      %v1378 = vpop.permute.xlu0 %1377
      %1379 = vrot.lane.b32.xlu0 %v891, 96
      %v1380 = vpop.permute.xlu0 %1379
      %1381 = vrot.lane.b32.xlu0 %v892, 96
      %v1382 = vpop.permute.xlu0 %1381
      %1383 = vrot.lane.b32.xlu0 %v893, 96
      %v1384 = vpop.permute.xlu0 %1383
      %1385 = vrot.lane.b32.xlu0 %v894, 96
      %v1386 = vpop.permute.xlu0 %1385
      %1387 = vrot.lane.b32.xlu0 %v895, 96
      %v1388 = vpop.permute.xlu0 %1387
      %1389 = vrot.lane.b32.xlu0 %v896, 96
      %v1390 = vpop.permute.xlu0 %1389
      %1391 = vrot.lane.b32.xlu0 %v897, 96
      %v1392 = vpop.permute.xlu0 %1391
      %1393 = vrot.lane.b32.xlu0 %v898, 96
      %v1394 = vpop.permute.xlu0 %1393
      %1395 = vrot.lane.b32.xlu0 %v899, 96
      %v1396 = vpop.permute.xlu0 %1395
      %1397 = vrot.lane.b32.xlu0 %v900, 96
      %v1398 = vpop.permute.xlu0 %1397
      %1399 = vrot.lane.b32.xlu0 %v901, 96
      %v1400 = vpop.permute.xlu0 %1399
      %1401 = vrot.lane.b32.xlu0 %v902, 96
      %v1402 = vpop.permute.xlu0 %1401
      %1403 = vrot.lane.b32.xlu0 %v903, 96
      %v1404 = vpop.permute.xlu0 %1403
      %1405 = vrot.lane.b32.xlu0 %v904, 96
      %v1406 = vpop.permute.xlu0 %1405
      %1407 = vrot.lane.b32.xlu0 %v905, 96
      %v1408 = vpop.permute.xlu0 %1407
      %1409 = vrot.lane.b32.xlu0 %v906, 96
      %v1410 = vpop.permute.xlu0 %1409
      %1411 = vrot.lane.b32.xlu0 %v907, 96
      %v1412 = vpop.permute.xlu0 %1411
      %1413 = vrot.lane.b32.xlu0 %v908, 96
      %v1414 = vpop.permute.xlu0 %1413
      %1415 = vrot.lane.b32.xlu0 %v909, 96
      %v1416 = vpop.permute.xlu0 %1415
      %1417 = vrot.lane.b32.xlu0 %v910, 96
      %v1418 = vpop.permute.xlu0 %1417
      %1419 = vrot.lane.b32.xlu0 %v911, 96
      %v1420 = vpop.permute.xlu0 %1419
      %1421 = vrot.lane.b32.xlu0 %v912, 96
      %v1422 = vpop.permute.xlu0 %1421
      %1423 = vrot.lane.b32.xlu0 %v913, 96
      %v1424 = vpop.permute.xlu0 %1423
      %1425 = vrot.lane.b32.xlu0 %v914, 96
      %v1426 = vpop.permute.xlu0 %1425
      %1427 = vrot.lane.b32.xlu0 %v915, 96
      %v1428 = vpop.permute.xlu0 %1427
      %1493 = vrot.lane.b32.xlu0 %v948, 32
      %v1494 = vpop.permute.xlu0 %1493
      %1495 = vrot.lane.b32.xlu0 %v949, 32
      %v1496 = vpop.permute.xlu0 %1495
      %1497 = vrot.lane.b32.xlu0 %v950, 32
      %v1498 = vpop.permute.xlu0 %1497
      %1499 = vrot.lane.b32.xlu0 %v951, 32
      %v1500 = vpop.permute.xlu0 %1499
      %1501 = vrot.lane.b32.xlu0 %v952, 32
      %v1502 = vpop.permute.xlu0 %1501
      %1503 = vrot.lane.b32.xlu0 %v953, 32
      %v1504 = vpop.permute.xlu0 %1503
      %1505 = vrot.lane.b32.xlu0 %v954, 32
      %v1506 = vpop.permute.xlu0 %1505
      %1507 = vrot.lane.b32.xlu0 %v955, 32
      %v1508 = vpop.permute.xlu0 %1507
      %1509 = vrot.lane.b32.xlu0 %v956, 32
      %v1510 = vpop.permute.xlu0 %1509
      %1511 = vrot.lane.b32.xlu0 %v957, 32
      %v1512 = vpop.permute.xlu0 %1511
      %1513 = vrot.lane.b32.xlu0 %v958, 32
      %v1514 = vpop.permute.xlu0 %1513
      %1515 = vrot.lane.b32.xlu0 %v959, 32
      %v1516 = vpop.permute.xlu0 %1515
      %1517 = vrot.lane.b32.xlu0 %v960, 32
      %v1518 = vpop.permute.xlu0 %1517
      %1519 = vrot.lane.b32.xlu0 %v961, 32
      %v1520 = vpop.permute.xlu0 %1519
      %1521 = vrot.lane.b32.xlu0 %v962, 32
      %v1522 = vpop.permute.xlu0 %1521
      %1523 = vrot.lane.b32.xlu0 %v963, 32
      %v1524 = vpop.permute.xlu0 %1523
      %1525 = vrot.lane.b32.xlu0 %v964, 32
      %v1526 = vpop.permute.xlu0 %1525
      %1527 = vrot.lane.b32.xlu0 %v965, 32
      %v1528 = vpop.permute.xlu0 %1527
      %1529 = vrot.lane.b32.xlu0 %v966, 32
      %v1530 = vpop.permute.xlu0 %1529
      %1531 = vrot.lane.b32.xlu0 %v967, 32
      %v1532 = vpop.permute.xlu0 %1531
      %1533 = vrot.lane.b32.xlu0 %v968, 32
      %v1534 = vpop.permute.xlu0 %1533
      %1535 = vrot.lane.b32.xlu0 %v969, 32
      %v1536 = vpop.permute.xlu0 %1535
      %1537 = vrot.lane.b32.xlu0 %v970, 32
      %v1538 = vpop.permute.xlu0 %1537
      %1539 = vrot.lane.b32.xlu0 %v971, 32
      %v1540 = vpop.permute.xlu0 %1539
      %1541 = vrot.lane.b32.xlu0 %v972, 32
      %v1542 = vpop.permute.xlu0 %1541
      %1543 = vrot.lane.b32.xlu0 %v973, 32
      %v1544 = vpop.permute.xlu0 %1543
      %1545 = vrot.lane.b32.xlu0 %v974, 32
      %v1546 = vpop.permute.xlu0 %1545
      %1547 = vrot.lane.b32.xlu0 %v975, 32
      %v1548 = vpop.permute.xlu0 %1547
      %1549 = vrot.lane.b32.xlu0 %v976, 32
      %v1550 = vpop.permute.xlu0 %1549
      %1551 = vrot.lane.b32.xlu0 %v977, 32
      %v1552 = vpop.permute.xlu0 %1551
      %1553 = vrot.lane.b32.xlu0 %v978, 32
      %v1554 = vpop.permute.xlu0 %1553
      %1555 = vrot.lane.b32.xlu0 %v979, 32
      %v1556 = vpop.permute.xlu0 %1555
      %1621 = vrot.lane.b32.xlu0 %v981, 64
      %v1622 = vpop.permute.xlu0 %1621
      %1623 = vrot.lane.b32.xlu0 %v982, 64
      %v1624 = vpop.permute.xlu0 %1623
      %1625 = vrot.lane.b32.xlu0 %v983, 64
      %v1626 = vpop.permute.xlu0 %1625
      %1627 = vrot.lane.b32.xlu0 %v984, 64
      %v1628 = vpop.permute.xlu0 %1627
      %1629 = vrot.lane.b32.xlu0 %v985, 64
      %v1630 = vpop.permute.xlu0 %1629
      %1631 = vrot.lane.b32.xlu0 %v986, 64
      %v1632 = vpop.permute.xlu0 %1631
      %1633 = vrot.lane.b32.xlu0 %v987, 64
      %v1634 = vpop.permute.xlu0 %1633
      %1635 = vrot.lane.b32.xlu0 %v988, 64
      %v1636 = vpop.permute.xlu0 %1635
      %1637 = vrot.lane.b32.xlu0 %v989, 64
      %v1638 = vpop.permute.xlu0 %1637
      %1639 = vrot.lane.b32.xlu0 %v990, 64
      %v1640 = vpop.permute.xlu0 %1639
      %1641 = vrot.lane.b32.xlu0 %v991, 64
      %v1642 = vpop.permute.xlu0 %1641
      %1643 = vrot.lane.b32.xlu0 %v992, 64
      %v1644 = vpop.permute.xlu0 %1643
      %1645 = vrot.lane.b32.xlu0 %v993, 64
      %v1646 = vpop.permute.xlu0 %1645
      %1647 = vrot.lane.b32.xlu0 %v994, 64
      %v1648 = vpop.permute.xlu0 %1647
      %1649 = vrot.lane.b32.xlu0 %v995, 64
      %v1650 = vpop.permute.xlu0 %1649
      %1651 = vrot.lane.b32.xlu0 %v996, 64
      %v1652 = vpop.permute.xlu0 %1651
      %1653 = vrot.lane.b32.xlu0 %v997, 64
      %v1654 = vpop.permute.xlu0 %1653
      %1655 = vrot.lane.b32.xlu0 %v998, 64
      %v1656 = vpop.permute.xlu0 %1655
      %1657 = vrot.lane.b32.xlu0 %v999, 64
      %v1658 = vpop.permute.xlu0 %1657
      %1659 = vrot.lane.b32.xlu0 %v1000, 64
      %v1660 = vpop.permute.xlu0 %1659
      %1661 = vrot.lane.b32.xlu0 %v1001, 64
      %v1662 = vpop.permute.xlu0 %1661
      %1663 = vrot.lane.b32.xlu0 %v1002, 64
      %v1664 = vpop.permute.xlu0 %1663
      %1665 = vrot.lane.b32.xlu0 %v1003, 64
      %v1666 = vpop.permute.xlu0 %1665
      %1667 = vrot.lane.b32.xlu0 %v1004, 64
      %v1668 = vpop.permute.xlu0 %1667
      %1669 = vrot.lane.b32.xlu0 %v1005, 64
      %v1670 = vpop.permute.xlu0 %1669
      %1671 = vrot.lane.b32.xlu0 %v1006, 64
      %v1672 = vpop.permute.xlu0 %1671
      %1673 = vrot.lane.b32.xlu0 %v1007, 64
      %v1674 = vpop.permute.xlu0 %1673
      %1675 = vrot.lane.b32.xlu0 %v1008, 64
      %v1676 = vpop.permute.xlu0 %1675
      %1677 = vrot.lane.b32.xlu0 %v1009, 64
      %v1678 = vpop.permute.xlu0 %1677
      %1679 = vrot.lane.b32.xlu0 %v1010, 64
      %v1680 = vpop.permute.xlu0 %1679
      %1681 = vrot.lane.b32.xlu0 %v1011, 64
      %v1682 = vpop.permute.xlu0 %1681
      %1683 = vrot.lane.b32.xlu0 %v1012, 64
      %v1684 = vpop.permute.xlu0 %1683
      %1749 = vrot.lane.b32.xlu0 %v1013, 96
      %v1750 = vpop.permute.xlu0 %1749
      %1751 = vrot.lane.b32.xlu0 %v1014, 96
      %v1752 = vpop.permute.xlu0 %1751
      %1753 = vrot.lane.b32.xlu0 %v1015, 96
      %v1754 = vpop.permute.xlu0 %1753
      %1755 = vrot.lane.b32.xlu0 %v1016, 96
      %v1756 = vpop.permute.xlu0 %1755
      %1757 = vrot.lane.b32.xlu0 %v1017, 96
      %v1758 = vpop.permute.xlu0 %1757
      %1759 = vrot.lane.b32.xlu0 %v1018, 96
      %v1760 = vpop.permute.xlu0 %1759
      %1761 = vrot.lane.b32.xlu0 %v1019, 96
      %v1762 = vpop.permute.xlu0 %1761
      %1763 = vrot.lane.b32.xlu0 %v1020, 96
      %v1764 = vpop.permute.xlu0 %1763
      %1765 = vrot.lane.b32.xlu0 %v1021, 96
      %v1766 = vpop.permute.xlu0 %1765
      %1767 = vrot.lane.b32.xlu0 %v1022, 96
      %v1768 = vpop.permute.xlu0 %1767
      %1769 = vrot.lane.b32.xlu0 %v1023, 96
      %v1770 = vpop.permute.xlu0 %1769
      %1771 = vrot.lane.b32.xlu0 %v1024, 96
      %v1772 = vpop.permute.xlu0 %1771
      %1773 = vrot.lane.b32.xlu0 %v1025, 96
      %v1774 = vpop.permute.xlu0 %1773
      %1775 = vrot.lane.b32.xlu0 %v1026, 96
      %v1776 = vpop.permute.xlu0 %1775
      %1777 = vrot.lane.b32.xlu0 %v1027, 96
      %v1778 = vpop.permute.xlu0 %1777
      %1779 = vrot.lane.b32.xlu0 %v1028, 96
      %v1780 = vpop.permute.xlu0 %1779
      %1781 = vrot.lane.b32.xlu0 %v1029, 96
      %v1782 = vpop.permute.xlu0 %1781
      %1783 = vrot.lane.b32.xlu0 %v1030, 96
      %v1784 = vpop.permute.xlu0 %1783
      %1785 = vrot.lane.b32.xlu0 %v1031, 96
      %v1786 = vpop.permute.xlu0 %1785
      %1787 = vrot.lane.b32.xlu0 %v1032, 96
      %v1788 = vpop.permute.xlu0 %1787
      %1789 = vrot.lane.b32.xlu0 %v1033, 96
      %v1790 = vpop.permute.xlu0 %1789
      %1791 = vrot.lane.b32.xlu0 %v1034, 96
      %v1792 = vpop.permute.xlu0 %1791
      %1793 = vrot.lane.b32.xlu0 %v1035, 96
      %v1794 = vpop.permute.xlu0 %1793
      %1795 = vrot.lane.b32.xlu0 %v1036, 96
      %v1796 = vpop.permute.xlu0 %1795
      %1797 = vrot.lane.b32.xlu0 %v1037, 96
      %v1798 = vpop.permute.xlu0 %1797
      %1799 = vrot.lane.b32.xlu0 %v1038, 96
      %v1800 = vpop.permute.xlu0 %1799
      %1801 = vrot.lane.b32.xlu0 %v1039, 96
      %v1802 = vpop.permute.xlu0 %1801
      %1803 = vrot.lane.b32.xlu0 %v1040, 96
      %v1804 = vpop.permute.xlu0 %1803
      %1805 = vrot.lane.b32.xlu0 %v1041, 96
      %v1806 = vpop.permute.xlu0 %1805
      %1807 = vrot.lane.b32.xlu0 %v1042, 96
      %v1808 = vpop.permute.xlu0 %1807
      %1809 = vrot.lane.b32.xlu0 %v1043, 96
      %v1810 = vpop.permute.xlu0 %1809
      %1811 = vrot.lane.b32.xlu0 %v1044, 96
      %v1812 = vpop.permute.xlu0 %1811
      %v1845 = vsel %vm631, %v788, %v1110
      %v1846 = vsel %vm631, %v789, %v1112
      %v1847 = vsel %vm631, %v790, %v1114
      %v1848 = vsel %vm631, %v791, %v1116
      %v1849 = vsel %vm631, %v792, %v1118
      %v1850 = vsel %vm631, %v793, %v1120
      %v1851 = vsel %vm631, %v794, %v1122
      %v1852 = vsel %vm631, %v795, %v1124
      %v1853 = vsel %vm631, %v796, %v1126
      %v1854 = vsel %vm631, %v797, %v1128
      %v1855 = vsel %vm631, %v798, %v1130
      %v1856 = vsel %vm631, %v799, %v1132
      %v1857 = vsel %vm631, %v800, %v1134
      %v1858 = vsel %vm631, %v801, %v1136
      %v1859 = vsel %vm631, %v802, %v1138
      %v1860 = vsel %vm631, %v803, %v1140
      %v1861 = vsel %vm631, %v804, %v1142
      %v1862 = vsel %vm631, %v805, %v1144
      %v1863 = vsel %vm631, %v806, %v1146
      %v1864 = vsel %vm631, %v807, %v1148
      %v1865 = vsel %vm631, %v808, %v1150
      %v1866 = vsel %vm631, %v809, %v1152
      %v1867 = vsel %vm631, %v810, %v1154
      %v1868 = vsel %vm631, %v811, %v1156
      %v1869 = vsel %vm631, %v812, %v1158
      %v1870 = vsel %vm631, %v813, %v1160
      %v1871 = vsel %vm631, %v814, %v1162
      %v1872 = vsel %vm631, %v815, %v1164
      %v1873 = vsel %vm631, %v816, %v1166
      %v1874 = vsel %vm631, %v817, %v1168
      %v1875 = vsel %vm631, %v818, %v1170
      %v1876 = vsel %vm631, %v819, %v1172
      %vm1877 = vcmask 523264
      %v1878 = vsel %vm1877, %v1845, %v1238
      %v1879 = vsel %vm1877, %v1846, %v1240
      %v1880 = vsel %vm1877, %v1847, %v1242
      %v1881 = vsel %vm1877, %v1848, %v1244
      %v1882 = vsel %vm1877, %v1849, %v1246
      %v1883 = vsel %vm1877, %v1850, %v1248
      %v1884 = vsel %vm1877, %v1851, %v1250
      %v1885 = vsel %vm1877, %v1852, %v1252
      %v1886 = vsel %vm1877, %v1853, %v1254
      %v1887 = vsel %vm1877, %v1854, %v1256
      %v1888 = vsel %vm1877, %v1855, %v1258
      %v1889 = vsel %vm1877, %v1856, %v1260
      %v1890 = vsel %vm1877, %v1857, %v1262
      %v1891 = vsel %vm1877, %v1858, %v1264
      %v1892 = vsel %vm1877, %v1859, %v1266
      %v1893 = vsel %vm1877, %v1860, %v1268
      %v1894 = vsel %vm1877, %v1861, %v1270
      %v1895 = vsel %vm1877, %v1862, %v1272
      %v1896 = vsel %vm1877, %v1863, %v1274
      %v1897 = vsel %vm1877, %v1864, %v1276
      %v1898 = vsel %vm1877, %v1865, %v1278
      %v1899 = vsel %vm1877, %v1866, %v1280
      %v1900 = vsel %vm1877, %v1867, %v1282
      %v1901 = vsel %vm1877, %v1868, %v1284
      %v1902 = vsel %vm1877, %v1869, %v1286
      %v1903 = vsel %vm1877, %v1870, %v1288
      %v1904 = vsel %vm1877, %v1871, %v1290
      %v1905 = vsel %vm1877, %v1872, %v1292
      %v1906 = vsel %vm1877, %v1873, %v1294
      %v1907 = vsel %vm1877, %v1874, %v1296
      %v1908 = vsel %vm1877, %v1875, %v1298
      %v1909 = vsel %vm1877, %v1876, %v1300
      %vm1910 = vcmask 785408
      %v1911 = vsel %vm1910, %v1878, %v1366
      %v1912 = vsel %vm1910, %v1879, %v1368
      %v1913 = vsel %vm1910, %v1880, %v1370
      %v1914 = vsel %vm1910, %v1881, %v1372
      %v1915 = vsel %vm1910, %v1882, %v1374
      %v1916 = vsel %vm1910, %v1883, %v1376
      %v1917 = vsel %vm1910, %v1884, %v1378
      %v1918 = vsel %vm1910, %v1885, %v1380
      %v1919 = vsel %vm1910, %v1886, %v1382
      %v1920 = vsel %vm1910, %v1887, %v1384
      %v1921 = vsel %vm1910, %v1888, %v1386
      %v1922 = vsel %vm1910, %v1889, %v1388
      %v1923 = vsel %vm1910, %v1890, %v1390
      %v1924 = vsel %vm1910, %v1891, %v1392
      %v1925 = vsel %vm1910, %v1892, %v1394
      %v1926 = vsel %vm1910, %v1893, %v1396
      %v1927 = vsel %vm1910, %v1894, %v1398
      %v1928 = vsel %vm1910, %v1895, %v1400
      %v1929 = vsel %vm1910, %v1896, %v1402
      %v1930 = vsel %vm1910, %v1897, %v1404
      %v1931 = vsel %vm1910, %v1898, %v1406
      %v1932 = vsel %vm1910, %v1899, %v1408
      %v1933 = vsel %vm1910, %v1900, %v1410
      %v1934 = vsel %vm1910, %v1901, %v1412
      %v1935 = vsel %vm1910, %v1902, %v1414
      %v1936 = vsel %vm1910, %v1903, %v1416
      %v1937 = vsel %vm1910, %v1904, %v1418
      %v1938 = vsel %vm1910, %v1905, %v1420
      %v1939 = vsel %vm1910, %v1906, %v1422
      %v1940 = vsel %vm1910, %v1907, %v1424
      %v1941 = vsel %vm1910, %v1908, %v1426
      %v1942 = vsel %vm1910, %v1909, %v1428
      %v1943 = vsel %vm631, %v916, %v1494
      %v1944 = vsel %vm631, %v917, %v1496
      %v1945 = vsel %vm631, %v918, %v1498
      %v1946 = vsel %vm631, %v919, %v1500
      %v1947 = vsel %vm631, %v920, %v1502
      %v1948 = vsel %vm631, %v921, %v1504
      %v1949 = vsel %vm631, %v922, %v1506
      %v1950 = vsel %vm631, %v923, %v1508
      %v1951 = vsel %vm631, %v924, %v1510
      %v1952 = vsel %vm631, %v925, %v1512
      %v1953 = vsel %vm631, %v926, %v1514
      %v1954 = vsel %vm631, %v927, %v1516
      %v1955 = vsel %vm631, %v928, %v1518
      %v1956 = vsel %vm631, %v929, %v1520
      %v1957 = vsel %vm631, %v930, %v1522
      %v1958 = vsel %vm631, %v931, %v1524
      %v1959 = vsel %vm631, %v932, %v1526
      %v1960 = vsel %vm631, %v933, %v1528
      %v1961 = vsel %vm631, %v934, %v1530
      %v1962 = vsel %vm631, %v935, %v1532
      %v1963 = vsel %vm631, %v936, %v1534
      %v1964 = vsel %vm631, %v937, %v1536
      %v1965 = vsel %vm631, %v938, %v1538
      %v1966 = vsel %vm631, %v939, %v1540
      %v1967 = vsel %vm631, %v940, %v1542
      %v1968 = vsel %vm631, %v941, %v1544
      %v1969 = vsel %vm631, %v942, %v1546
      %v1970 = vsel %vm631, %v943, %v1548
      %v1971 = vsel %vm631, %v944, %v1550
      %v1972 = vsel %vm631, %v945, %v1552
      %v1973 = vsel %vm631, %v946, %v1554
      %v1974 = vsel %vm631, %v947, %v1556
      %v1975 = vsel %vm1877, %v1943, %v1622
      %v1976 = vsel %vm1877, %v1944, %v1624
      %v1977 = vsel %vm1877, %v1945, %v1626
      %v1978 = vsel %vm1877, %v1946, %v1628
      %v1979 = vsel %vm1877, %v1947, %v1630
      %v1980 = vsel %vm1877, %v1948, %v1632
      %v1981 = vsel %vm1877, %v1949, %v1634
      %v1982 = vsel %vm1877, %v1950, %v1636
      %v1983 = vsel %vm1877, %v1951, %v1638
      %v1984 = vsel %vm1877, %v1952, %v1640
      %v1985 = vsel %vm1877, %v1953, %v1642
      %v1986 = vsel %vm1877, %v1954, %v1644
      %v1987 = vsel %vm1877, %v1955, %v1646
      %v1988 = vsel %vm1877, %v1956, %v1648
      %v1989 = vsel %vm1877, %v1957, %v1650
      %v1990 = vsel %vm1877, %v1958, %v1652
      %v1991 = vsel %vm1877, %v1959, %v1654
      %v1992 = vsel %vm1877, %v1960, %v1656
      %v1993 = vsel %vm1877, %v1961, %v1658
      %v1994 = vsel %vm1877, %v1962, %v1660
      %v1995 = vsel %vm1877, %v1963, %v1662
      %v1996 = vsel %vm1877, %v1964, %v1664
      %v1997 = vsel %vm1877, %v1965, %v1666
      %v1998 = vsel %vm1877, %v1966, %v1668
      %v1999 = vsel %vm1877, %v1967, %v1670
      %v2000 = vsel %vm1877, %v1968, %v1672
      %v2001 = vsel %vm1877, %v1969, %v1674
      %v2002 = vsel %vm1877, %v1970, %v1676
      %v2003 = vsel %vm1877, %v1971, %v1678
      %v2004 = vsel %vm1877, %v1972, %v1680
      %v2005 = vsel %vm1877, %v1973, %v1682
      %v2006 = vsel %vm1877, %v1974, %v1684
      %v2007 = vsel %vm1910, %v1975, %v1750
      %v2008 = vsel %vm1910, %v1976, %v1752
      %v2009 = vsel %vm1910, %v1977, %v1754
      %v2010 = vsel %vm1910, %v1978, %v1756
      %v2011 = vsel %vm1910, %v1979, %v1758
      %v2012 = vsel %vm1910, %v1980, %v1760
      %v2013 = vsel %vm1910, %v1981, %v1762
      %v2014 = vsel %vm1910, %v1982, %v1764
      %v2015 = vsel %vm1910, %v1983, %v1766
      %v2016 = vsel %vm1910, %v1984, %v1768
      %v2017 = vsel %vm1910, %v1985, %v1770
      %v2018 = vsel %vm1910, %v1986, %v1772
      %v2019 = vsel %vm1910, %v1987, %v1774
      %v2020 = vsel %vm1910, %v1988, %v1776
      %v2021 = vsel %vm1910, %v1989, %v1778
      %v2022 = vsel %vm1910, %v1990, %v1780
      %v2023 = vsel %vm1910, %v1991, %v1782
      %v2024 = vsel %vm1910, %v1992, %v1784
      %v2025 = vsel %vm1910, %v1993, %v1786
      %v2026 = vsel %vm1910, %v1994, %v1788
      %v2027 = vsel %vm1910, %v1995, %v1790
      %v2028 = vsel %vm1910, %v1996, %v1792
      %v2029 = vsel %vm1910, %v1997, %v1794
      %v2030 = vsel %vm1910, %v1998, %v1796
      %v2031 = vsel %vm1910, %v1999, %v1798
      %v2032 = vsel %vm1910, %v2000, %v1800
      %v2033 = vsel %vm1910, %v2001, %v1802
      %v2034 = vsel %vm1910, %v2002, %v1804
      %v2035 = vsel %vm1910, %v2003, %v1806
      %v2036 = vsel %vm1910, %v2004, %v1808
      %v2037 = vsel %vm1910, %v2005, %v1810
      %v2038 = vsel %vm1910, %v2006, %v1812
      %v2039 = vld [vmem:[%s4] sm:$0x1]
      %v2041 = vlaneseq
      %v2042 = vshrl.u32 %v2041, 7
      %v2043 = vsub.s32 0, %v2042
      %v2044 = vrot.slane %v2039, %v2043
      %v2047 = vsel %vm631, %v1045, 0
      %v2050 = vsel %vm631, %v1046, 0
      %v2053 = vsel %vm631, %v1047, 0
      %v2056 = vsel %vm631, %v1048, 0
      %v2059 = vsel %vm631, %v1049, 0
      %v2062 = vsel %vm631, %v1050, 0
      %v2065 = vsel %vm631, %v1051, 0
      %v2068 = vsel %vm631, %v1052, 0
      %v2071 = vsel %vm631, %v1053, 0
      %v2074 = vsel %vm631, %v1054, 0
      %v2077 = vsel %vm631, %v1055, 0
      %v2080 = vsel %vm631, %v1056, 0
      %v2083 = vsel %vm631, %v1057, 0
      %v2086 = vsel %vm631, %v1058, 0
      %v2089 = vsel %vm631, %v1059, 0
      %v2092 = vsel %vm631, %v1060, 0
      %v2095 = vsel %vm631, %v1061, 0
      %v2098 = vsel %vm631, %v1062, 0
      %v2101 = vsel %vm631, %v1063, 0
      %v2104 = vsel %vm631, %v1064, 0
      %v2107 = vsel %vm631, %v1065, 0
      %v2110 = vsel %vm631, %v1066, 0
      %v2113 = vsel %vm631, %v1067, 0
      %v2116 = vsel %vm631, %v1068, 0
      %v2119 = vsel %vm631, %v1069, 0
      %v2122 = vsel %vm631, %v1070, 0
      %v2125 = vsel %vm631, %v1071, 0
      %v2128 = vsel %vm631, %v1072, 0
      %v2131 = vsel %vm631, %v1073, 0
      %v2134 = vsel %vm631, %v1074, 0
      %v2137 = vsel %vm631, %v1075, 0
      %v2140 = vsel %vm631, %v1076, 0
      %2142 = vmatprep.subr.mxu0 0.0
      %2143 = vmatpush1.msra.mxu0 %v679
      %2144 = vmatprep.subr.mxu0 0.0
      %2145 = vmatpush1.msra.mxu0 %v678
      %2146 = vmatprep.subr.mxu0 0.0
      %2147 = vmatpush1.msra.mxu0 %v677
      %2148 = vmatprep.subr.mxu0 0.0
      %2149 = vmatpush1.msra.mxu0 %v676
      %2150 = vmatprep.subr.mxu0 0.0
      %2151 = vmatpush1.msra.mxu0 %v675
      %2152 = vmatprep.subr.mxu0 0.0
      %2153 = vmatpush1.msra.mxu0 %v674
      %2154 = vmatprep.subr.mxu0 0.0
      %2155 = vmatpush1.msra.mxu0 %v673
      %2156 = vmatprep.subr.mxu0 0.0
      %2157 = vmatpush1.msra.mxu0 %v672
      %2158 = vmatprep.subr.mxu0 0.0
      %2159 = vmatpush1.msra.mxu0 %v671
      %2160 = vmatprep.subr.mxu0 0.0
      %2161 = vmatpush1.msra.mxu0 %v670
      %2162 = vmatprep.subr.mxu0 0.0
      %2163 = vmatpush1.msra.mxu0 %v669
      %2164 = vmatprep.subr.mxu0 0.0
      %2165 = vmatpush1.msra.mxu0 %v668
      %2166 = vmatprep.subr.mxu0 0.0
      %2167 = vmatpush1.msra.mxu0 %v667
      %2168 = vmatprep.subr.mxu0 0.0
      %2169 = vmatpush1.msra.mxu0 %v666
      %2170 = vmatprep.subr.mxu0 0.0
      %2171 = vmatpush1.msra.mxu0 %v665
      %2172 = vmatprep.subr.mxu0 0.0
      %2173 = vmatpush1.msra.mxu0 %v664
      %2174 = vmatprep.subr.mxu0 0.0
      %2175 = vmatpush2.msra.mxu0 %v695
      %2176 = vmatprep.subr.mxu0 0.0
      %2177 = vmatpush2.msra.mxu0 %v694
      %2178 = vmatprep.subr.mxu0 0.0
      %2179 = vmatpush2.msra.mxu0 %v693
      %2180 = vmatprep.subr.mxu0 0.0
      %2181 = vmatpush2.msra.mxu0 %v692
      %2182 = vmatprep.subr.mxu0 0.0
      %2183 = vmatpush2.msra.mxu0 %v691
      %2184 = vmatprep.subr.mxu0 0.0
      %2185 = vmatpush2.msra.mxu0 %v690
      %2186 = vmatprep.subr.mxu0 0.0
      %2187 = vmatpush2.msra.mxu0 %v689
      %2188 = vmatprep.subr.mxu0 0.0
      %2189 = vmatpush2.msra.mxu0 %v688
      %2190 = vmatprep.subr.mxu0 0.0
      %2191 = vmatpush2.msra.mxu0 %v687
      %2192 = vmatprep.subr.mxu0 0.0
      %2193 = vmatpush2.msra.mxu0 %v686
      %2194 = vmatprep.subr.mxu0 0.0
      %2195 = vmatpush2.msra.mxu0 %v685
      %2196 = vmatprep.subr.mxu0 0.0
      %2197 = vmatpush2.msra.mxu0 %v684
      %2198 = vmatprep.subr.mxu0 0.0
      %2199 = vmatpush2.msra.mxu0 %v683
      %2200 = vmatprep.subr.mxu0 0.0
      %2201 = vmatpush2.msra.mxu0 %v682
      %2202 = vmatprep.subr.mxu0 0.0
      %2203 = vmatpush2.msra.mxu0 %v681
      %2204 = vmatprep.subr.mxu0 0.0
      %2205 = vmatpush2.msra.mxu0 %v680
      %2206 = vmatprep.mubr.f32.mxu0 %v2007
      %2207 = vmatmul.mubr.f32.gmra.mxu0 %v1911
      %v2208 = vpop.f32.mrf.mxu0
      %v2209 = vadd.f32 %v2044, %v2208
      %v2210 = vpop.f32.mrf.mxu0
      %2211 = vmatprep.mubr.f32.mxu0 %v2008
      %2212 = vmatmul.mubr.f32.gmra.mxu0 %v1912
      %v2213 = vpop.f32.mrf.mxu0
      %v2214 = vadd.f32 %v2044, %v2213
      %v2215 = vpop.f32.mrf.mxu0
      %2216 = vmatprep.mubr.f32.mxu0 %v2009
      %2217 = vmatmul.mubr.f32.gmra.mxu0 %v1913
      %v2218 = vpop.f32.mrf.mxu0
      %v2219 = vadd.f32 %v2044, %v2218
      %v2220 = vpop.f32.mrf.mxu0
      %2221 = vmatprep.mubr.f32.mxu0 %v2010
      %2222 = vmatmul.mubr.f32.gmra.mxu0 %v1914
      %v2223 = vpop.f32.mrf.mxu0
      %v2224 = vadd.f32 %v2044, %v2223
      %v2225 = vpop.f32.mrf.mxu0
      %2226 = vmatprep.mubr.f32.mxu0 %v2011
      %2227 = vmatmul.mubr.f32.gmra.mxu0 %v1915
      %v2228 = vpop.f32.mrf.mxu0
      %v2229 = vadd.f32 %v2044, %v2228
      %v2230 = vpop.f32.mrf.mxu0
      %2231 = vmatprep.mubr.f32.mxu0 %v2012
      %2232 = vmatmul.mubr.f32.gmra.mxu0 %v1916
      %v2233 = vpop.f32.mrf.mxu0
      %v2234 = vadd.f32 %v2044, %v2233
      %v2235 = vpop.f32.mrf.mxu0
      %2236 = vmatprep.mubr.f32.mxu0 %v2013
      %2237 = vmatmul.mubr.f32.gmra.mxu0 %v1917
      %v2238 = vpop.f32.mrf.mxu0
      %v2239 = vadd.f32 %v2044, %v2238
      %v2240 = vpop.f32.mrf.mxu0
      %2241 = vmatprep.mubr.f32.mxu0 %v2014
      %2242 = vmatmul.mubr.f32.gmra.mxu0 %v1918
      %v2243 = vpop.f32.mrf.mxu0
      %v2244 = vadd.f32 %v2044, %v2243
      %v2245 = vpop.f32.mrf.mxu0
      %2246 = vmatprep.mubr.f32.mxu0 %v2015
      %2247 = vmatmul.mubr.f32.gmra.mxu0 %v1919
      %v2248 = vpop.f32.mrf.mxu0
      %v2249 = vadd.f32 %v2044, %v2248
      %v2250 = vpop.f32.mrf.mxu0
      %2251 = vmatprep.mubr.f32.mxu0 %v2016
      %2252 = vmatmul.mubr.f32.gmra.mxu0 %v1920
      %v2253 = vpop.f32.mrf.mxu0
      %v2254 = vadd.f32 %v2044, %v2253
      %v2255 = vpop.f32.mrf.mxu0
      %2256 = vmatprep.mubr.f32.mxu0 %v2017
      %2257 = vmatmul.mubr.f32.gmra.mxu0 %v1921
      %v2258 = vpop.f32.mrf.mxu0
      %v2259 = vadd.f32 %v2044, %v2258
      %v2260 = vpop.f32.mrf.mxu0
      %2261 = vmatprep.mubr.f32.mxu0 %v2018
      %2262 = vmatmul.mubr.f32.gmra.mxu0 %v1922
      %v2263 = vpop.f32.mrf.mxu0
      %v2264 = vadd.f32 %v2044, %v2263
      %v2265 = vpop.f32.mrf.mxu0
      %2266 = vmatprep.mubr.f32.mxu0 %v2019
      %2267 = vmatmul.mubr.f32.gmra.mxu0 %v1923
      %v2268 = vpop.f32.mrf.mxu0
      %v2269 = vadd.f32 %v2044, %v2268
      %v2270 = vpop.f32.mrf.mxu0
      %2271 = vmatprep.mubr.f32.mxu0 %v2020
      %2272 = vmatmul.mubr.f32.gmra.mxu0 %v1924
      %v2273 = vpop.f32.mrf.mxu0
      %v2274 = vadd.f32 %v2044, %v2273
      %v2275 = vpop.f32.mrf.mxu0
      %2276 = vmatprep.mubr.f32.mxu0 %v2021
      %2277 = vmatmul.mubr.f32.gmra.mxu0 %v1925
      %v2278 = vpop.f32.mrf.mxu0
      %v2279 = vadd.f32 %v2044, %v2278
      %v2280 = vpop.f32.mrf.mxu0
      %2281 = vmatprep.mubr.f32.mxu0 %v2022
      %2282 = vmatmul.mubr.f32.gmra.mxu0 %v1926
      %v2283 = vpop.f32.mrf.mxu0
      %v2284 = vadd.f32 %v2044, %v2283
      %v2285 = vpop.f32.mrf.mxu0
      %2286 = vmatprep.mubr.f32.mxu0 %v2023
      %2287 = vmatmul.mubr.f32.gmra.mxu0 %v1927
      %v2288 = vpop.f32.mrf.mxu0
      %v2289 = vadd.f32 %v2044, %v2288
      %v2290 = vpop.f32.mrf.mxu0
      %2291 = vmatprep.mubr.f32.mxu0 %v2024
      %2292 = vmatmul.mubr.f32.gmra.mxu0 %v1928
      %v2293 = vpop.f32.mrf.mxu0
      %v2294 = vadd.f32 %v2044, %v2293
      %v2295 = vpop.f32.mrf.mxu0
      %2296 = vmatprep.mubr.f32.mxu0 %v2025
      %2297 = vmatmul.mubr.f32.gmra.mxu0 %v1929
      %v2298 = vpop.f32.mrf.mxu0
      %v2299 = vadd.f32 %v2044, %v2298
      %v2300 = vpop.f32.mrf.mxu0
      %2301 = vmatprep.mubr.f32.mxu0 %v2026
      %2302 = vmatmul.mubr.f32.gmra.mxu0 %v1930
      %v2303 = vpop.f32.mrf.mxu0
      %v2304 = vadd.f32 %v2044, %v2303
      %v2305 = vpop.f32.mrf.mxu0
      %2306 = vmatprep.mubr.f32.mxu0 %v2027
      %2307 = vmatmul.mubr.f32.gmra.mxu0 %v1931
      %v2308 = vpop.f32.mrf.mxu0
      %v2309 = vadd.f32 %v2044, %v2308
      %v2310 = vpop.f32.mrf.mxu0
      %2311 = vmatprep.mubr.f32.mxu0 %v2028
      %2312 = vmatmul.mubr.f32.gmra.mxu0 %v1932
      %v2313 = vpop.f32.mrf.mxu0
      %v2314 = vadd.f32 %v2044, %v2313
      %v2315 = vpop.f32.mrf.mxu0
      %2316 = vmatprep.mubr.f32.mxu0 %v2029
      %2317 = vmatmul.mubr.f32.gmra.mxu0 %v1933
      %v2318 = vpop.f32.mrf.mxu0
      %v2319 = vadd.f32 %v2044, %v2318
      %v2320 = vpop.f32.mrf.mxu0
      %2321 = vmatprep.mubr.f32.mxu0 %v2030
      %2322 = vmatmul.mubr.f32.gmra.mxu0 %v1934
      %v2323 = vpop.f32.mrf.mxu0
      %v2324 = vadd.f32 %v2044, %v2323
      %v2325 = vpop.f32.mrf.mxu0
      %2326 = vmatprep.mubr.f32.mxu0 %v2031
      %2327 = vmatmul.mubr.f32.gmra.mxu0 %v1935
      %v2328 = vpop.f32.mrf.mxu0
      %v2329 = vadd.f32 %v2044, %v2328
      %v2330 = vpop.f32.mrf.mxu0
      %2331 = vmatprep.mubr.f32.mxu0 %v2032
      %2332 = vmatmul.mubr.f32.gmra.mxu0 %v1936
      %v2333 = vpop.f32.mrf.mxu0
      %v2334 = vadd.f32 %v2044, %v2333
      %v2335 = vpop.f32.mrf.mxu0
      %2336 = vmatprep.mubr.f32.mxu0 %v2033
      %2337 = vmatmul.mubr.f32.gmra.mxu0 %v1937
      %v2338 = vpop.f32.mrf.mxu0
      %v2339 = vadd.f32 %v2044, %v2338
      %v2340 = vpop.f32.mrf.mxu0
      %2341 = vmatprep.mubr.f32.mxu0 %v2034
      %2342 = vmatmul.mubr.f32.gmra.mxu0 %v1938
      %v2343 = vpop.f32.mrf.mxu0
      %v2344 = vadd.f32 %v2044, %v2343
      %v2345 = vpop.f32.mrf.mxu0
      %2346 = vmatprep.mubr.f32.mxu0 %v2035
      %2347 = vmatmul.mubr.f32.gmra.mxu0 %v1939
      %v2348 = vpop.f32.mrf.mxu0
      %v2349 = vadd.f32 %v2044, %v2348
      %v2350 = vpop.f32.mrf.mxu0
      %2351 = vmatprep.mubr.f32.mxu0 %v2036
      %2352 = vmatmul.mubr.f32.gmra.mxu0 %v1940
      %v2353 = vpop.f32.mrf.mxu0
      %v2354 = vadd.f32 %v2044, %v2353
      %v2355 = vpop.f32.mrf.mxu0
      %2356 = vmatprep.mubr.f32.mxu0 %v2037
      %2357 = vmatmul.mubr.f32.gmra.mxu0 %v1941
      %v2358 = vpop.f32.mrf.mxu0
      %v2359 = vadd.f32 %v2044, %v2358
      %v2360 = vpop.f32.mrf.mxu0
      %2361 = vmatprep.mubr.f32.mxu0 %v2038
      %2362 = vmatmul.mubr.f32.gmra.mxu0 %v1942
      %v2363 = vpop.f32.mrf.mxu0
      %v2364 = vadd.f32 %v2044, %v2363
      %v2365 = vpop.f32.mrf.mxu0
      %2366 = vdwg.mxu0
      %2367 = vmatprep.subr.mxu0 0.0
      %2368 = vmatpush1.msra.mxu0 0.0
      %2369 = vmatprep.subr.mxu0 0.0
      %2370 = vmatpush1.msra.mxu0 0.0
      %2371 = vmatprep.subr.mxu0 0.0
      %2372 = vmatpush1.msra.mxu0 0.0
      %2373 = vmatprep.subr.mxu0 0.0
      %2374 = vmatpush1.msra.mxu0 0.0
      %2375 = vmatprep.subr.mxu0 0.0
      %2376 = vmatpush1.msra.mxu0 0.0
      %2377 = vmatprep.subr.mxu0 0.0
      %2378 = vmatpush1.msra.mxu0 0.0
      %2379 = vmatprep.subr.mxu0 0.0
      %2380 = vmatpush1.msra.mxu0 0.0
      %2381 = vmatprep.subr.mxu0 0.0
      %2382 = vmatpush1.msra.mxu0 0.0
      %2383 = vmatprep.subr.mxu0 0.0
      %2384 = vmatpush1.msra.mxu0 0.0
      %2385 = vmatprep.subr.mxu0 0.0
      %2386 = vmatpush1.msra.mxu0 0.0
      %2387 = vmatprep.subr.mxu0 0.0
      %2388 = vmatpush1.msra.mxu0 0.0
      %2389 = vmatprep.subr.mxu0 0.0
      %2390 = vmatpush1.msra.mxu0 0.0
      %2391 = vmatprep.subr.mxu0 0.0
      %2392 = vmatpush1.msra.mxu0 %v699
      %2393 = vmatprep.subr.mxu0 0.0
      %2394 = vmatpush1.msra.mxu0 %v698
      %2395 = vmatprep.subr.mxu0 0.0
      %2396 = vmatpush1.msra.mxu0 %v697
      %2397 = vmatprep.subr.mxu0 0.0
      %2398 = vmatpush1.msra.mxu0 %v696
      %2399 = vmatprep.subr.mxu0 0.0
      %2400 = vmatpush2.msra.mxu0 0.0
      %2401 = vmatprep.subr.mxu0 0.0
      %2402 = vmatpush2.msra.mxu0 0.0
      %2403 = vmatprep.subr.mxu0 0.0
      %2404 = vmatpush2.msra.mxu0 0.0
      %2405 = vmatprep.subr.mxu0 0.0
      %2406 = vmatpush2.msra.mxu0 0.0
      %2407 = vmatprep.subr.mxu0 0.0
      %2408 = vmatpush2.msra.mxu0 0.0
      %2409 = vmatprep.subr.mxu0 0.0
      %2410 = vmatpush2.msra.mxu0 0.0
      %2411 = vmatprep.subr.mxu0 0.0
      %2412 = vmatpush2.msra.mxu0 0.0
      %2413 = vmatprep.subr.mxu0 0.0
      %2414 = vmatpush2.msra.mxu0 0.0
      %2415 = vmatprep.subr.mxu0 0.0
      %2416 = vmatpush2.msra.mxu0 0.0
      %2417 = vmatprep.subr.mxu0 0.0
      %2418 = vmatpush2.msra.mxu0 0.0
      %2419 = vmatprep.subr.mxu0 0.0
      %2420 = vmatpush2.msra.mxu0 0.0
      %2421 = vmatprep.subr.mxu0 0.0
      %2422 = vmatpush2.msra.mxu0 0.0
      %2423 = vmatprep.subr.mxu0 0.0
      %2424 = vmatpush2.msra.mxu0 0.0
      %2425 = vmatprep.subr.mxu0 0.0
      %2426 = vmatpush2.msra.mxu0 0.0
      %2427 = vmatprep.subr.mxu0 0.0
      %2428 = vmatpush2.msra.mxu0 0.0
      %2429 = vmatprep.subr.mxu0 0.0
      %2430 = vmatpush2.msra.mxu0 0.0
      %2431 = vmatprep.mubr.f32.mxu0 0.0
      %2432 = vmatmul.mubr.f32.gmra.mxu0 %v2047
      %v2433 = vpop.f32.mrf.mxu0
      %v2434 = vadd.f32 %v2209, %v2433
      %v2435 = vpop.f32.mrf.mxu0
      %2436 = vmatprep.mubr.f32.mxu0 0.0
      %2437 = vmatmul.mubr.f32.gmra.mxu0 %v2050
      %v2438 = vpop.f32.mrf.mxu0
      %v2439 = vadd.f32 %v2214, %v2438
      %v2440 = vpop.f32.mrf.mxu0
      %2441 = vmatprep.mubr.f32.mxu0 0.0
      %2442 = vmatmul.mubr.f32.gmra.mxu0 %v2053
      %v2443 = vpop.f32.mrf.mxu0
      %v2444 = vadd.f32 %v2219, %v2443
      %v2445 = vpop.f32.mrf.mxu0
      %2446 = vmatprep.mubr.f32.mxu0 0.0
      %2447 = vmatmul.mubr.f32.gmra.mxu0 %v2056
      %v2448 = vpop.f32.mrf.mxu0
      %v2449 = vadd.f32 %v2224, %v2448
      %v2450 = vpop.f32.mrf.mxu0
      %2451 = vmatprep.mubr.f32.mxu0 0.0
      %2452 = vmatmul.mubr.f32.gmra.mxu0 %v2059
      %v2453 = vpop.f32.mrf.mxu0
      %v2454 = vadd.f32 %v2229, %v2453
      %v2455 = vpop.f32.mrf.mxu0
      %2456 = vmatprep.mubr.f32.mxu0 0.0
      %2457 = vmatmul.mubr.f32.gmra.mxu0 %v2062
      %v2458 = vpop.f32.mrf.mxu0
      %v2459 = vadd.f32 %v2234, %v2458
      %v2460 = vpop.f32.mrf.mxu0
      %2461 = vmatprep.mubr.f32.mxu0 0.0
      %2462 = vmatmul.mubr.f32.gmra.mxu0 %v2065
      %v2463 = vpop.f32.mrf.mxu0
      %v2464 = vadd.f32 %v2239, %v2463
      %v2465 = vpop.f32.mrf.mxu0
      %2466 = vmatprep.mubr.f32.mxu0 0.0
      %2467 = vmatmul.mubr.f32.gmra.mxu0 %v2068
      %v2468 = vpop.f32.mrf.mxu0
      %v2469 = vadd.f32 %v2244, %v2468
      %v2470 = vpop.f32.mrf.mxu0
      %2471 = vmatprep.mubr.f32.mxu0 0.0
      %2472 = vmatmul.mubr.f32.gmra.mxu0 %v2071
      %v2473 = vpop.f32.mrf.mxu0
      %v2474 = vadd.f32 %v2249, %v2473
      %v2475 = vpop.f32.mrf.mxu0
      %2476 = vmatprep.mubr.f32.mxu0 0.0
      %2477 = vmatmul.mubr.f32.gmra.mxu0 %v2074
      %v2478 = vpop.f32.mrf.mxu0
      %v2479 = vadd.f32 %v2254, %v2478
      %v2480 = vpop.f32.mrf.mxu0
      %2481 = vmatprep.mubr.f32.mxu0 0.0
      %2482 = vmatmul.mubr.f32.gmra.mxu0 %v2077
      %v2483 = vpop.f32.mrf.mxu0
      %v2484 = vadd.f32 %v2259, %v2483
      %v2485 = vpop.f32.mrf.mxu0
      %2486 = vmatprep.mubr.f32.mxu0 0.0
      %2487 = vmatmul.mubr.f32.gmra.mxu0 %v2080
      %v2488 = vpop.f32.mrf.mxu0
      %v2489 = vadd.f32 %v2264, %v2488
      %v2490 = vpop.f32.mrf.mxu0
      %2491 = vmatprep.mubr.f32.mxu0 0.0
      %2492 = vmatmul.mubr.f32.gmra.mxu0 %v2083
      %v2493 = vpop.f32.mrf.mxu0
      %v2494 = vadd.f32 %v2269, %v2493
      %v2495 = vpop.f32.mrf.mxu0
      %2496 = vmatprep.mubr.f32.mxu0 0.0
      %2497 = vmatmul.mubr.f32.gmra.mxu0 %v2086
      %v2498 = vpop.f32.mrf.mxu0
      %v2499 = vadd.f32 %v2274, %v2498
      %v2500 = vpop.f32.mrf.mxu0
      %2501 = vmatprep.mubr.f32.mxu0 0.0
      %2502 = vmatmul.mubr.f32.gmra.mxu0 %v2089
      %v2503 = vpop.f32.mrf.mxu0
      %v2504 = vadd.f32 %v2279, %v2503
      %v2505 = vpop.f32.mrf.mxu0
      %2506 = vmatprep.mubr.f32.mxu0 0.0
      %2507 = vmatmul.mubr.f32.gmra.mxu0 %v2092
      %v2508 = vpop.f32.mrf.mxu0
      %v2509 = vadd.f32 %v2284, %v2508
      %v2510 = vpop.f32.mrf.mxu0
      %2511 = vmatprep.mubr.f32.mxu0 0.0
      %2512 = vmatmul.mubr.f32.gmra.mxu0 %v2095
      %v2513 = vpop.f32.mrf.mxu0
      %v2514 = vadd.f32 %v2289, %v2513
      %v2515 = vpop.f32.mrf.mxu0
      %2516 = vmatprep.mubr.f32.mxu0 0.0
      %2517 = vmatmul.mubr.f32.gmra.mxu0 %v2098
      %v2518 = vpop.f32.mrf.mxu0
      %v2519 = vadd.f32 %v2294, %v2518
      %v2520 = vpop.f32.mrf.mxu0
      %2521 = vmatprep.mubr.f32.mxu0 0.0
      %2522 = vmatmul.mubr.f32.gmra.mxu0 %v2101
      %v2523 = vpop.f32.mrf.mxu0
      %v2524 = vadd.f32 %v2299, %v2523
      %v2525 = vpop.f32.mrf.mxu0
      %2526 = vmatprep.mubr.f32.mxu0 0.0
      %2527 = vmatmul.mubr.f32.gmra.mxu0 %v2104
      %v2528 = vpop.f32.mrf.mxu0
      %v2529 = vadd.f32 %v2304, %v2528
      %v2530 = vpop.f32.mrf.mxu0
      %2531 = vmatprep.mubr.f32.mxu0 0.0
      %2532 = vmatmul.mubr.f32.gmra.mxu0 %v2107
      %v2533 = vpop.f32.mrf.mxu0
      %v2534 = vadd.f32 %v2309, %v2533
      %v2535 = vpop.f32.mrf.mxu0
      %2536 = vmatprep.mubr.f32.mxu0 0.0
      %2537 = vmatmul.mubr.f32.gmra.mxu0 %v2110
      %v2538 = vpop.f32.mrf.mxu0
      %v2539 = vadd.f32 %v2314, %v2538
      %v2540 = vpop.f32.mrf.mxu0
      %2541 = vmatprep.mubr.f32.mxu0 0.0
      %2542 = vmatmul.mubr.f32.gmra.mxu0 %v2113
      %v2543 = vpop.f32.mrf.mxu0
      %v2544 = vadd.f32 %v2319, %v2543
      %v2545 = vpop.f32.mrf.mxu0
      %2546 = vmatprep.mubr.f32.mxu0 0.0
      %2547 = vmatmul.mubr.f32.gmra.mxu0 %v2116
      %v2548 = vpop.f32.mrf.mxu0
      %v2549 = vadd.f32 %v2324, %v2548
      %v2550 = vpop.f32.mrf.mxu0
      %2551 = vmatprep.mubr.f32.mxu0 0.0
      %2552 = vmatmul.mubr.f32.gmra.mxu0 %v2119
      %v2553 = vpop.f32.mrf.mxu0
      %v2554 = vadd.f32 %v2329, %v2553
      %v2555 = vpop.f32.mrf.mxu0
      %2556 = vmatprep.mubr.f32.mxu0 0.0
      %2557 = vmatmul.mubr.f32.gmra.mxu0 %v2122
      %v2558 = vpop.f32.mrf.mxu0
      %v2559 = vadd.f32 %v2334, %v2558
      %v2560 = vpop.f32.mrf.mxu0
      %2561 = vmatprep.mubr.f32.mxu0 0.0
      %2562 = vmatmul.mubr.f32.gmra.mxu0 %v2125
      %v2563 = vpop.f32.mrf.mxu0
      %v2564 = vadd.f32 %v2339, %v2563
      %v2565 = vpop.f32.mrf.mxu0
      %2566 = vmatprep.mubr.f32.mxu0 0.0
      %2567 = vmatmul.mubr.f32.gmra.mxu0 %v2128
      %v2568 = vpop.f32.mrf.mxu0
      %v2569 = vadd.f32 %v2344, %v2568
      %v2570 = vpop.f32.mrf.mxu0
      %2571 = vmatprep.mubr.f32.mxu0 0.0
      %2572 = vmatmul.mubr.f32.gmra.mxu0 %v2131
      %v2573 = vpop.f32.mrf.mxu0
      %v2574 = vadd.f32 %v2349, %v2573
      %v2575 = vpop.f32.mrf.mxu0
      %2576 = vmatprep.mubr.f32.mxu0 0.0
      %2577 = vmatmul.mubr.f32.gmra.mxu0 %v2134
      %v2578 = vpop.f32.mrf.mxu0
      %v2579 = vadd.f32 %v2354, %v2578
      %v2580 = vpop.f32.mrf.mxu0
      %2581 = vmatprep.mubr.f32.mxu0 0.0
      %2582 = vmatmul.mubr.f32.gmra.mxu0 %v2137
      %v2583 = vpop.f32.mrf.mxu0
      %v2584 = vadd.f32 %v2359, %v2583
      %v2585 = vpop.f32.mrf.mxu0
      %2586 = vmatprep.mubr.f32.mxu0 0.0
      %2587 = vmatmul.mubr.f32.gmra.mxu0 %v2140
      %v2588 = vpop.f32.mrf.mxu0
      %v2589 = vadd.f32 %v2364, %v2588
      %v2590 = vpop.f32.mrf.mxu0
      %2591 = vdwg.mxu0
      %vm2592 = vcmp.ge.f32.partialorder %v2434, 0.0
      %vm2593 = vcmp.ge.f32.partialorder %v2439, 0.0
      %vm2594 = vcmp.ge.f32.partialorder %v2444, 0.0
      %vm2595 = vcmp.ge.f32.partialorder %v2449, 0.0
      %vm2596 = vcmp.ge.f32.partialorder %v2454, 0.0
      %vm2597 = vcmp.ge.f32.partialorder %v2459, 0.0
      %vm2598 = vcmp.ge.f32.partialorder %v2464, 0.0
      %vm2599 = vcmp.ge.f32.partialorder %v2469, 0.0
      %vm2600 = vcmp.ge.f32.partialorder %v2474, 0.0
      %vm2601 = vcmp.ge.f32.partialorder %v2479, 0.0
      %vm2602 = vcmp.ge.f32.partialorder %v2484, 0.0
      %vm2603 = vcmp.ge.f32.partialorder %v2489, 0.0
      %vm2604 = vcmp.ge.f32.partialorder %v2494, 0.0
      %vm2605 = vcmp.ge.f32.partialorder %v2499, 0.0
      %vm2606 = vcmp.ge.f32.partialorder %v2504, 0.0
      %vm2607 = vcmp.ge.f32.partialorder %v2509, 0.0
      %vm2608 = vcmp.ge.f32.partialorder %v2514, 0.0
      %vm2609 = vcmp.ge.f32.partialorder %v2519, 0.0
      %vm2610 = vcmp.ge.f32.partialorder %v2524, 0.0
      %vm2611 = vcmp.ge.f32.partialorder %v2529, 0.0
      %vm2612 = vcmp.ge.f32.partialorder %v2534, 0.0
      %vm2613 = vcmp.ge.f32.partialorder %v2539, 0.0
      %vm2614 = vcmp.ge.f32.partialorder %v2544, 0.0
      %vm2615 = vcmp.ge.f32.partialorder %v2549, 0.0
      %vm2616 = vcmp.ge.f32.partialorder %v2554, 0.0
      %vm2617 = vcmp.ge.f32.partialorder %v2559, 0.0
      %vm2618 = vcmp.ge.f32.partialorder %v2564, 0.0
      %vm2619 = vcmp.ge.f32.partialorder %v2569, 0.0
      %vm2620 = vcmp.ge.f32.partialorder %v2574, 0.0
      %vm2621 = vcmp.ge.f32.partialorder %v2579, 0.0
      %vm2622 = vcmp.ge.f32.partialorder %v2584, 0.0
      %vm2623 = vcmp.ge.f32.partialorder %v2589, 0.0
      %v2624 = vmul.f32 %v2434, 0.05
      %v2625 = vmul.f32 %v2439, 0.05
      %v2626 = vmul.f32 %v2444, 0.05
      %v2627 = vmul.f32 %v2449, 0.05
      %v2628 = vmul.f32 %v2454, 0.05
      %v2629 = vmul.f32 %v2459, 0.05
      %v2630 = vmul.f32 %v2464, 0.05
      %v2631 = vmul.f32 %v2469, 0.05
      %v2632 = vmul.f32 %v2474, 0.05
      %v2633 = vmul.f32 %v2479, 0.05
      %v2634 = vmul.f32 %v2484, 0.05
      %v2635 = vmul.f32 %v2489, 0.05
      %v2636 = vmul.f32 %v2494, 0.05
      %v2637 = vmul.f32 %v2499, 0.05
      %v2638 = vmul.f32 %v2504, 0.05
      %v2639 = vmul.f32 %v2509, 0.05
      %v2640 = vmul.f32 %v2514, 0.05
      %v2641 = vmul.f32 %v2519, 0.05
      %v2642 = vmul.f32 %v2524, 0.05
      %v2643 = vmul.f32 %v2529, 0.05
      %v2644 = vmul.f32 %v2534, 0.05
      %v2645 = vmul.f32 %v2539, 0.05
      %v2646 = vmul.f32 %v2544, 0.05
      %v2647 = vmul.f32 %v2549, 0.05
      %v2648 = vmul.f32 %v2554, 0.05
      %v2649 = vmul.f32 %v2559, 0.05
      %v2650 = vmul.f32 %v2564, 0.05
      %v2651 = vmul.f32 %v2569, 0.05
      %v2652 = vmul.f32 %v2574, 0.05
      %v2653 = vmul.f32 %v2579, 0.05
      %v2654 = vmul.f32 %v2584, 0.05
      %v2655 = vmul.f32 %v2589, 0.05
      %v2656 = vsel %vm2592, %v2434, %v2624
      %v2657 = vsel %vm2593, %v2439, %v2625
      %v2658 = vsel %vm2594, %v2444, %v2626
      %v2659 = vsel %vm2595, %v2449, %v2627
      %v2660 = vsel %vm2596, %v2454, %v2628
      %v2661 = vsel %vm2597, %v2459, %v2629
      %v2662 = vsel %vm2598, %v2464, %v2630
      %v2663 = vsel %vm2599, %v2469, %v2631
      %v2664 = vsel %vm2600, %v2474, %v2632
      %v2665 = vsel %vm2601, %v2479, %v2633
      %v2666 = vsel %vm2602, %v2484, %v2634
      %v2667 = vsel %vm2603, %v2489, %v2635
      %v2668 = vsel %vm2604, %v2494, %v2636
      %v2669 = vsel %vm2605, %v2499, %v2637
      %v2670 = vsel %vm2606, %v2504, %v2638
      %v2671 = vsel %vm2607, %v2509, %v2639
      %v2672 = vsel %vm2608, %v2514, %v2640
      %v2673 = vsel %vm2609, %v2519, %v2641
      %v2674 = vsel %vm2610, %v2524, %v2642
      %v2675 = vsel %vm2611, %v2529, %v2643
      %v2676 = vsel %vm2612, %v2534, %v2644
      %v2677 = vsel %vm2613, %v2539, %v2645
      %v2678 = vsel %vm2614, %v2544, %v2646
      %v2679 = vsel %vm2615, %v2549, %v2647
      %v2680 = vsel %vm2616, %v2554, %v2648
      %v2681 = vsel %vm2617, %v2559, %v2649
      %v2682 = vsel %vm2618, %v2564, %v2650
      %v2683 = vsel %vm2619, %v2569, %v2651
      %v2684 = vsel %vm2620, %v2574, %v2652
      %v2685 = vsel %vm2621, %v2579, %v2653
      %v2686 = vsel %vm2622, %v2584, %v2654
      %v2687 = vsel %vm2623, %v2589, %v2655
      %2688 = vst.msk [vmem:[%s264] sm:$0xff] %vm631, %v2656
      %2689 = vst.msk [vmem:[%s264 + $0x8] sm:$0xff] %vm631, %v2657
      %2690 = vst.msk [vmem:[%s264 + $0x10] sm:$0xff] %vm631, %v2658
      %2691 = vst.msk [vmem:[%s264 + $0x18] sm:$0xff] %vm631, %v2659
      %2692 = vst.msk [vmem:[%s264 + $0x20] sm:$0xff] %vm631, %v2660
      %2693 = vst.msk [vmem:[%s264 + $0x28] sm:$0xff] %vm631, %v2661
      %2694 = vst.msk [vmem:[%s264 + $0x30] sm:$0xff] %vm631, %v2662
      %2695 = vst.msk [vmem:[%s264 + $0x38] sm:$0xff] %vm631, %v2663
      %2696 = vst.msk [vmem:[%s264 + $0x40] sm:$0xff] %vm631, %v2664
      %2697 = vst.msk [vmem:[%s264 + $0x48] sm:$0xff] %vm631, %v2665
      %2698 = vst.msk [vmem:[%s264 + $0x50] sm:$0xff] %vm631, %v2666
      %2699 = vst.msk [vmem:[%s264 + $0x58] sm:$0xff] %vm631, %v2667
      %2700 = vst.msk [vmem:[%s264 + $0x60] sm:$0xff] %vm631, %v2668
      %2701 = vst.msk [vmem:[%s264 + $0x68] sm:$0xff] %vm631, %v2669
      %2702 = vst.msk [vmem:[%s264 + $0x70] sm:$0xff] %vm631, %v2670
      %2703 = vst.msk [vmem:[%s264 + $0x78] sm:$0xff] %vm631, %v2671
      %2704 = vst.msk [vmem:[%s264 + $0x80] sm:$0xff] %vm631, %v2672
      %2705 = vst.msk [vmem:[%s264 + $0x88] sm:$0xff] %vm631, %v2673
      %2706 = vst.msk [vmem:[%s264 + $0x90] sm:$0xff] %vm631, %v2674
      %2707 = vst.msk [vmem:[%s264 + $0x98] sm:$0xff] %vm631, %v2675
      %2708 = vst.msk [vmem:[%s264 + $0xa0] sm:$0xff] %vm631, %v2676
      %2709 = vst.msk [vmem:[%s264 + $0xa8] sm:$0xff] %vm631, %v2677
      %2710 = vst.msk [vmem:[%s264 + $0xb0] sm:$0xff] %vm631, %v2678
      %2711 = vst.msk [vmem:[%s264 + $0xb8] sm:$0xff] %vm631, %v2679
      %2712 = vst.msk [vmem:[%s264 + $0xc0] sm:$0xff] %vm631, %v2680
      %2713 = vst.msk [vmem:[%s264 + $0xc8] sm:$0xff] %vm631, %v2681
      %2714 = vst.msk [vmem:[%s264 + $0xd0] sm:$0xff] %vm631, %v2682
      %2715 = vst.msk [vmem:[%s264 + $0xd8] sm:$0xff] %vm631, %v2683
      %2716 = vst.msk [vmem:[%s264 + $0xe0] sm:$0xff] %vm631, %v2684
      %2717 = vst.msk [vmem:[%s264 + $0xe8] sm:$0xff] %vm631, %v2685
      %2718 = vst.msk [vmem:[%s264 + $0xf0] sm:$0xff] %vm631, %v2686
      %2719 = vst.msk [vmem:[%s264 + $0xf8] sm:$0xff] %vm631, %v2687
      %p2720 = scmp.lt.s32.totalorder %s18, 1
      %s2721 = scalar_select %p2720, %s18, 1
      %s2722 = smul.addr %s2721, 32
      %s2723 = smul.addr %s2722, 8
      %s2724 = scalar_lea.vmem %s5, %s2723
      %p2725 = scmp.lt.s32.totalorder %s18, 1
      %s2726 = scalar_select %p2725, %s18, 1
      %s2727 = smul.addr %s2726, 32
      %s2728 = smul.addr %s2727, 8
      %s2729 = scalar_lea.vmem %s6, %s2728
      // Predicated region
      $region41: #{irnet1_forward.4} parent=39 // pred_check
        %p2730 = pneg %p146
      $region42: #{irnet1_forward.4} parent=39 // pred_check_branch
        %2732 = sbr.rel (%p2730) target = $region44
      $region43: #{irnet1_forward.4} parent=39 // pred_region
        _
      $region44: #{irnet1_forward.4} parent=39 // pred_fallthru
        _
      // Predicated region
      $region45: #{irnet1_forward.4} parent=39 // pred_check
        %p2733 = pneg %p172
      $region46: #{irnet1_forward.4} parent=39 // pred_check_branch
        %2735 = sbr.rel (%p2733) target = $region48
      $region47: #{irnet1_forward.4} parent=39 // pred_region
        _
      $region48: #{irnet1_forward.4} parent=39 // pred_fallthru
        _
    $region40: #{irnet1_forward.4} parent=5 // pred_fallthru
      _
    %p2736 = scmp.le.s32.totalorder 2, %s13
    // Predicated region
    $region49: #{irnet1_forward.4} parent=5 // pred_check
      %p2737 = pneg %p2736
    $region50: #{irnet1_forward.4} parent=5 // pred_check_branch
      %2739 = sbr.rel (%p2737) target = $region52
    $region51: #{irnet1_forward.4} parent=5 // pred_region
      %s2740 = ssub.s32 %s13, 2
      // Predicated region
      $region53: #{irnet1_forward.4} parent=51 // pred_check
        %p2741 = pneg %p152
      $region54: #{irnet1_forward.4} parent=51 // pred_check_branch
        %2743 = sbr.rel (%p2741) target = $region56
      $region55: #{irnet1_forward.4} parent=51 // pred_region
        %p2744 = scmp.lt.s32.totalorder %s19, 1
        %s2745 = scalar_select %p2744, %s19, 1
        %s2746 = smul.addr %s2745, 32
        %s2747 = smul.addr %s2746, 8
        %s2748 = scalar_lea.vmem %s5, %s2747
      $region56: #{irnet1_forward.4} parent=51 // pred_fallthru
        _
      // Predicated region
      $region57: #{irnet1_forward.4} parent=51 // pred_check
        %p2749 = pneg %p178
      $region58: #{irnet1_forward.4} parent=51 // pred_check_branch
        %2751 = sbr.rel (%p2749) target = $region60
      $region59: #{irnet1_forward.4} parent=51 // pred_region
        %p2752 = scmp.lt.s32.totalorder %s19, 1
        %s2753 = scalar_select %p2752, %s19, 1
        %s2754 = smul.addr %s2753, 32
        %s2755 = smul.addr %s2754, 8
        %s2756 = scalar_lea.vmem %s6, %s2755
      $region60: #{irnet1_forward.4} parent=51 // pred_fallthru
        _
    $region52: #{irnet1_forward.4} parent=5 // pred_fallthru
      _
  $region6: #{irnet1_forward.4} parent=0 // loop_footer
    %s17 = sadd.s32 1, %s13
  $region7: #{irnet1_forward.4} parent=0 // loop_footer_branch
    %12 = sbr.rel target = $region3
  $region8: #{irnet1_forward.4} parent=0 // loop_exit
    _

</llo_original>
